<compile_context>
chip_gen: v7x
topology: tpu7x:2x2x1
jax: 0.10.0
libtpu: 0.0.40
codegen_flags: <defaults>
</compile_context>

<pallas_src>
import math
from functools import partial

import jax
import jax.numpy as jnp
from jax.experimental import pallas as pl
from jax.experimental.pallas import tpu as pltpu

# ---------------- hyper-parameters (small, consistent with the module) ----------
TGT_VOCAB = 32
EMBED_DIM = 32
NUM_LAYERS = 2
NUM_HEADS = 4
D_K = EMBED_DIM // NUM_HEADS          # = d_v
D_FF = 64
LN_EPS = 1e-5                         # PyTorch nn.LayerNorm default

ATTN_NAMES = ("wq", "wk", "wv", "bq", "bk", "bv", "wo", "bo", "ln_g", "ln_b")
FFN_NAMES = ("w1", "b1", "w2", "b2", "ln_g", "ln_b")
N_WEIGHTS = 2 * len(ATTN_NAMES) + len(FFN_NAMES)     # 26 stacked weight arrays


# ================================ fused Pallas kernel ===========================

def decoder_kernel(*refs, L, H, d_k, B, T, S, scale_emb):
    # ref layout: [emb, pe, dec_pad, enc_pad, enc_flat] + 26 stacked weights
    #             + out_ref + ctx_scratch
    emb_ref, pe_ref, dpad_ref, epad_ref, enc_ref = refs[:5]
    (sa_wq, sa_wk, sa_wv, sa_bq, sa_bk, sa_bv, sa_wo, sa_bo, sa_g, sa_b,
     ca_wq, ca_wk, ca_wv, ca_bq, ca_bk, ca_bv, ca_wo, ca_bo, ca_g, ca_b,
     ff_w1, ff_b1, ff_w2, ff_b2, ff_g, ff_b) = refs[5:5 + N_WEIGHTS]
    out_ref = refs[5 + N_WEIGHTS]
    ctx_ref = refs[5 + N_WEIGHTS + 1]          # VMEM scratch (B*T, D)

    def layernorm(y, g, bia):
        mean = jnp.mean(y, axis=-1, keepdims=True)
        var = jnp.mean((y - mean) ** 2, axis=-1, keepdims=True)
        return (y - mean) * jax.lax.rsqrt(var + LN_EPS) * g + bia

    def attend(x_q, x_kv, pad, Tk, wq, wk, wv, bq, bk, bv, wo, bo, g, bia):
        # Concatenated-head projections: single full-width matmuls (B*T, D)@(D, D).
        Q = jnp.dot(x_q, wq, preferred_element_type=jnp.float32) + bq
        K = jnp.dot(x_kv, wk, preferred_element_type=jnp.float32) + bk
        V = jnp.dot(x_kv, wv, preferred_element_type=jnp.float32) + bv

        # In-kernel mask: causal (subsequent) part from iota, pad part from pad vec.
        rows = jax.lax.broadcasted_iota(jnp.int32, (T, Tk), 0)
        cols = jax.lax.broadcasted_iota(jnp.int32, (T, Tk), 1)
        causal = cols > rows
        scale = 1.0 / math.sqrt(d_k)

        for b in range(B):                                     # static, B = 2
            maskb = jnp.logical_or(causal, pad[b:b + 1, :] > 0.0)   # (T, Tk)
            Qb = Q[b * T:(b + 1) * T, :]
            Kb = K[b * Tk:(b + 1) * Tk, :]
            Vb = V[b * Tk:(b + 1) * Tk, :]
            for h in range(H):                                  # static, H = 4
                qh = Qb[:, h * d_k:(h + 1) * d_k]
                kh = Kb[:, h * d_k:(h + 1) * d_k]
                vh = Vb[:, h * d_k:(h + 1) * d_k]
                s = jax.lax.dot_general(                        # qh @ kh.T
                    qh, kh, (((1,), (1,)), ((), ())),
                    preferred_element_type=jnp.float32) * scale
                s = jnp.where(maskb, -1e9, s)                   # masked_fill
                s = s - jnp.max(s, axis=-1, keepdims=True)
                p = jnp.exp(s)
                attn = p * pl.reciprocal(jnp.sum(p, axis=-1, keepdims=True),
                                         approx=True)
                ctx_ref[b * T:(b + 1) * T, h * d_k:(h + 1) * d_k] = jnp.dot(
                    attn, vh, preferred_element_type=jnp.float32)

        # single output projection on the concatenated context + residual + LN
        y = jnp.dot(ctx_ref[...], wo, preferred_element_type=jnp.float32) + bo + x_q
        return layernorm(y, g, bia)

    def ffn_block(x, w1, b1, w2, b2, g, bia):
        hdn = jnp.dot(x, w1, preferred_element_type=jnp.float32) + b1
        hdn = jnp.maximum(hdn, 0.0)                             # ReLU
        y = jnp.dot(hdn, w2, preferred_element_type=jnp.float32) + b2 + x
        return layernorm(y, g, bia)

    # embedding scale + positional encoding (gather itself done outside kernel)
    x = emb_ref[...] * scale_emb + pe_ref[...]                  # (B*T, D)
    dpad = dpad_ref[...]                                        # (B, T)
    epad = epad_ref[...]                                        # (B, S)
    enc = enc_ref[...]                                          # (B*S, D)

    for l in range(L):                                          # static, L = 2
        x = attend(x, x, dpad, T,
                   sa_wq[l], sa_wk[l], sa_wv[l], sa_bq[l], sa_bk[l], sa_bv[l],
                   sa_wo[l], sa_bo[l], sa_g[l], sa_b[l])        # masked self-attn
        x = attend(x, enc, epad, S,
                   ca_wq[l], ca_wk[l], ca_wv[l], ca_bq[l], ca_bk[l], ca_bv[l],
                   ca_wo[l], ca_bo[l], ca_g[l], ca_b[l])        # enc-dec attn
        x = ffn_block(x, ff_w1[l], ff_b1[l], ff_w2[l], ff_b2[l],
                      ff_g[l], ff_b[l])                         # position-wise FFN

    out_ref[...] = x.astype(out_ref.dtype)


# ================================ wrapper =======================================

def decoder_forward(dec_inputs, enc_inputs, enc_outputs, params):
    B, T = dec_inputs.shape
    S = enc_inputs.shape[1]
    D = EMBED_DIM

    # glue outside the kernel (cheap, O(B*T*D)):
    # TODO(synk): in-kernel gather (scalar-prefetch of token ids + row DMA) skipped
    # at this toy vocab; jnp.take is the embedding lookup.
    emb_rows = jnp.take(params["emb"], dec_inputs, axis=0).reshape(B * T, D)
    pe_tiled = jnp.tile(params["pe"][:T], (B, 1))               # (B*T, D)
    dec_pad = (dec_inputs == 0).astype(jnp.float32)             # (B, T)
    enc_pad = (enc_inputs == 0).astype(jnp.float32)             # (B, S)
    enc_flat = enc_outputs.reshape(B * S, D).astype(jnp.float32)

    stk = params["stacked"]
    weight_keys = ([f"sa_{n}" for n in ATTN_NAMES] +
                   [f"ca_{n}" for n in ATTN_NAMES] +
                   [f"ff_{n}" for n in FFN_NAMES])
    inputs = [emb_rows, pe_tiled, dec_pad, enc_pad, enc_flat] + \
             [stk[k] for k in weight_keys]

    # No grid, no per-array BlockSpecs: every (tiny) operand is placed whole in
    # VMEM by default; activations never round-trip HBM between sub-layers.
    out = pl.pallas_call(
        partial(decoder_kernel, L=NUM_LAYERS, H=NUM_HEADS, d_k=D_K,
                B=B, T=T, S=S, scale_emb=math.sqrt(D)),
        out_shape=jax.ShapeDtypeStruct((B * T, D), jnp.float32),
        scratch_shapes=[pltpu.VMEM((B * T, D), jnp.float32)],   # context assembly
    )(*inputs)
    return out.reshape(B, T, D)


# ------------------------------ parameter init ----------------------------------

def sinusoidal_pe(max_len, d):
    pos = jnp.arange(max_len, dtype=jnp.float32)[:, None]
    div = jnp.exp(jnp.arange(0, d, 2, dtype=jnp.float32) * (-math.log(10000.0) / d))
    pe = jnp.zeros((max_len, d), jnp.float32)
    pe = pe.at[:, 0::2].set(jnp.sin(pos * div))
    pe = pe.at[:, 1::2].set(jnp.cos(pos * div))
    return pe


def init_params(key, max_len):
    # exact key budget: per layer 2 attn blocks x 8 random tensors + ffn x 4, plus emb
    n_rand = 1 + NUM_LAYERS * (2 * 8 + 4)
    ks = iter(jax.random.split(key, n_rand))
    n = lambda shape, s=0.05: s * jax.random.normal(next(ks), shape, jnp.float32)

    def attn_params():
        return dict(
            wq=n((EMBED_DIM, EMBED_DIM)), wk=n((EMBED_DIM, EMBED_DIM)),
            wv=n((EMBED_DIM, EMBED_DIM)),
            bq=n((1, EMBED_DIM)), bk=n((1, EMBED_DIM)), bv=n((1, EMBED_DIM)),
            wo=n((EMBED_DIM, EMBED_DIM)), bo=n((1, EMBED_DIM)),
            ln_g=jnp.ones((1, EMBED_DIM), jnp.float32),
            ln_b=jnp.zeros((1, EMBED_DIM), jnp.float32))

    def ffn_params():
        return dict(
            w1=n((EMBED_DIM, D_FF)), b1=n((1, D_FF)),
            w2=n((D_FF, EMBED_DIM)), b2=n((1, EMBED_DIM)),
            ln_g=jnp.ones((1, EMBED_DIM), jnp.float32),
            ln_b=jnp.zeros((1, EMBED_DIM), jnp.float32))

    layers = [dict(self_attn=attn_params(), cross_attn=attn_params(), ffn=ffn_params())
              for _ in range(NUM_LAYERS)]

    # stack each parameter across layers -> one (L, ...) array per name
    stacked = {}
    for prefix, sel in (("sa", "self_attn"), ("ca", "cross_attn")):
        for name in ATTN_NAMES:
            stacked[f"{prefix}_{name}"] = jnp.stack([ly[sel][name] for ly in layers])
    for name in FFN_NAMES:
        stacked[f"ff_{name}"] = jnp.stack([ly["ffn"][name] for ly in layers])

    return dict(emb=n((TGT_VOCAB, EMBED_DIM), 0.1),
                pe=sinusoidal_pe(max_len, EMBED_DIM),
                stacked=stacked)


# ================================== main ========================================

if __name__ == "__main__":
    B, TGT_LEN, SRC_LEN = 2, 8, 8
    key = jax.random.PRNGKey(0)
    k_tok, k_src, k_enc, k_par = jax.random.split(key, 4)

    dec_inputs = jax.random.randint(k_tok, (B, TGT_LEN), 1, TGT_VOCAB, dtype=jnp.int32)
    dec_inputs = dec_inputs.at[:, -2:].set(0)                   # trailing pad tokens
    enc_inputs = jax.random.randint(k_src, (B, SRC_LEN), 1, TGT_VOCAB, dtype=jnp.int32)
    enc_inputs = enc_inputs.at[:, -1:].set(0)
    enc_outputs = jax.random.normal(k_enc, (B, SRC_LEN, EMBED_DIM), jnp.float32)

    params = init_params(k_par, max_len=max(TGT_LEN, SRC_LEN))

    fwd = jax.jit(decoder_forward)
    out = fwd(dec_inputs, enc_inputs, enc_outputs, params)
    out = jax.block_until_ready(out)
    assert out.shape == (B, TGT_LEN, EMBED_DIM) and bool(jnp.all(jnp.isfinite(out)))
    print("KERNEL_OK")
</pallas_src>

<mosaic_0001>
module attributes {stable_mosaic.version = 11 : i64} {
  func.func @decoder_kernel(%arg0: memref<16x32xf32, #tpu.memory_space<vmem>>, %arg1: memref<16x32xf32, #tpu.memory_space<vmem>>, %arg2: memref<2x8xf32, #tpu.memory_space<vmem>>, %arg3: memref<2x8xf32, #tpu.memory_space<vmem>>, %arg4: memref<16x32xf32, #tpu.memory_space<vmem>>, %arg5: memref<2x32x32xf32, #tpu.memory_space<vmem>>, %arg6: memref<2x32x32xf32, #tpu.memory_space<vmem>>, %arg7: memref<2x32x32xf32, #tpu.memory_space<vmem>>, %arg8: memref<2x1x32xf32, #tpu.memory_space<vmem>>, %arg9: memref<2x1x32xf32, #tpu.memory_space<vmem>>, %arg10: memref<2x1x32xf32, #tpu.memory_space<vmem>>, %arg11: memref<2x32x32xf32, #tpu.memory_space<vmem>>, %arg12: memref<2x1x32xf32, #tpu.memory_space<vmem>>, %arg13: memref<2x1x32xf32, #tpu.memory_space<vmem>>, %arg14: memref<2x1x32xf32, #tpu.memory_space<vmem>>, %arg15: memref<2x32x32xf32, #tpu.memory_space<vmem>>, %arg16: memref<2x32x32xf32, #tpu.memory_space<vmem>>, %arg17: memref<2x32x32xf32, #tpu.memory_space<vmem>>, %arg18: memref<2x1x32xf32, #tpu.memory_space<vmem>>, %arg19: memref<2x1x32xf32, #tpu.memory_space<vmem>>, %arg20: memref<2x1x32xf32, #tpu.memory_space<vmem>>, %arg21: memref<2x32x32xf32, #tpu.memory_space<vmem>>, %arg22: memref<2x1x32xf32, #tpu.memory_space<vmem>>, %arg23: memref<2x1x32xf32, #tpu.memory_space<vmem>>, %arg24: memref<2x1x32xf32, #tpu.memory_space<vmem>>, %arg25: memref<2x32x64xf32, #tpu.memory_space<vmem>>, %arg26: memref<2x1x64xf32, #tpu.memory_space<vmem>>, %arg27: memref<2x64x32xf32, #tpu.memory_space<vmem>>, %arg28: memref<2x1x32xf32, #tpu.memory_space<vmem>>, %arg29: memref<2x1x32xf32, #tpu.memory_space<vmem>>, %arg30: memref<2x1x32xf32, #tpu.memory_space<vmem>>, %arg31: memref<16x32xf32, #tpu.memory_space<vmem>>, %arg32: memref<16x32xf32, #tpu.memory_space<vmem>>) attributes {dimension_semantics = [], scalar_prefetch = 0 : i64, scratch_operands = 1 : i64, tpu.core_type = #tpu.core_type<tc>} {
    %c0 = arith.constant 0 : index
    %c0_0 = arith.constant 0 : index
    %0 = vector.load %arg0[%c0, %c0_0] : memref<16x32xf32, #tpu.memory_space<vmem>>, vector<16x32xf32>
    %cst = arith.constant 5.65685415 : f32
    %1 = vector.broadcast %cst : f32 to vector<16x32xf32>
    %2 = arith.mulf %0, %1 : vector<16x32xf32>
    %c0_1 = arith.constant 0 : index
    %c0_2 = arith.constant 0 : index
    %3 = vector.load %arg1[%c0_1, %c0_2] : memref<16x32xf32, #tpu.memory_space<vmem>>, vector<16x32xf32>
    %4 = arith.addf %2, %3 : vector<16x32xf32>
    %c0_3 = arith.constant 0 : index
    %c0_4 = arith.constant 0 : index
    %5 = vector.load %arg2[%c0_3, %c0_4] : memref<2x8xf32, #tpu.memory_space<vmem>>, vector<2x8xf32>
    %c0_5 = arith.constant 0 : index
    %c0_6 = arith.constant 0 : index
    %6 = vector.load %arg3[%c0_5, %c0_6] : memref<2x8xf32, #tpu.memory_space<vmem>>, vector<2x8xf32>
    %c0_7 = arith.constant 0 : index
    %c0_8 = arith.constant 0 : index
    %7 = vector.load %arg4[%c0_7, %c0_8] : memref<16x32xf32, #tpu.memory_space<vmem>>, vector<16x32xf32>
    %c0_9 = arith.constant 0 : index
    %c0_10 = arith.constant 0 : index
    %c0_11 = arith.constant 0 : index
    %8 = vector.load %arg5[%c0_9, %c0_10, %c0_11] : memref<2x32x32xf32, #tpu.memory_space<vmem>>, vector<1x32x32xf32>
    %9 = vector.shape_cast %8 : vector<1x32x32xf32> to vector<32x32xf32>
    %c0_12 = arith.constant 0 : index
    %c0_13 = arith.constant 0 : index
    %c0_14 = arith.constant 0 : index
    %10 = vector.load %arg6[%c0_12, %c0_13, %c0_14] : memref<2x32x32xf32, #tpu.memory_space<vmem>>, vector<1x32x32xf32>
    %11 = vector.shape_cast %10 : vector<1x32x32xf32> to vector<32x32xf32>
    %c0_15 = arith.constant 0 : index
    %c0_16 = arith.constant 0 : index
    %c0_17 = arith.constant 0 : index
    %12 = vector.load %arg7[%c0_15, %c0_16, %c0_17] : memref<2x32x32xf32, #tpu.memory_space<vmem>>, vector<1x32x32xf32>
    %13 = vector.shape_cast %12 : vector<1x32x32xf32> to vector<32x32xf32>
    %c0_18 = arith.constant 0 : index
    %c0_19 = arith.constant 0 : index
    %c0_20 = arith.constant 0 : index
    %14 = vector.load %arg8[%c0_18, %c0_19, %c0_20] : memref<2x1x32xf32, #tpu.memory_space<vmem>>, vector<1x1x32xf32>
    %15 = vector.shape_cast %14 : vector<1x1x32xf32> to vector<1x32xf32>
    %c0_21 = arith.constant 0 : index
    %c0_22 = arith.constant 0 : index
    %c0_23 = arith.constant 0 : index
    %16 = vector.load %arg9[%c0_21, %c0_22, %c0_23] : memref<2x1x32xf32, #tpu.memory_space<vmem>>, vector<1x1x32xf32>
    %17 = vector.shape_cast %16 : vector<1x1x32xf32> to vector<1x32xf32>
    %c0_24 = arith.constant 0 : index
    %c0_25 = arith.constant 0 : index
    %c0_26 = arith.constant 0 : index
    %18 = vector.load %arg10[%c0_24, %c0_25, %c0_26] : memref<2x1x32xf32, #tpu.memory_space<vmem>>, vector<1x1x32xf32>
    %19 = vector.shape_cast %18 : vector<1x1x32xf32> to vector<1x32xf32>
    %c0_27 = arith.constant 0 : index
    %c0_28 = arith.constant 0 : index
    %c0_29 = arith.constant 0 : index
    %20 = vector.load %arg11[%c0_27, %c0_28, %c0_29] : memref<2x32x32xf32, #tpu.memory_space<vmem>>, vector<1x32x32xf32>
    %21 = vector.shape_cast %20 : vector<1x32x32xf32> to vector<32x32xf32>
    %c0_30 = arith.constant 0 : index
    %c0_31 = arith.constant 0 : index
    %c0_32 = arith.constant 0 : index
    %22 = vector.load %arg12[%c0_30, %c0_31, %c0_32] : memref<2x1x32xf32, #tpu.memory_space<vmem>>, vector<1x1x32xf32>
    %23 = vector.shape_cast %22 : vector<1x1x32xf32> to vector<1x32xf32>
    %c0_33 = arith.constant 0 : index
    %c0_34 = arith.constant 0 : index
    %c0_35 = arith.constant 0 : index
    %24 = vector.load %arg13[%c0_33, %c0_34, %c0_35] : memref<2x1x32xf32, #tpu.memory_space<vmem>>, vector<1x1x32xf32>
    %25 = vector.shape_cast %24 : vector<1x1x32xf32> to vector<1x32xf32>
    %c0_36 = arith.constant 0 : index
    %c0_37 = arith.constant 0 : index
    %c0_38 = arith.constant 0 : index
    %26 = vector.load %arg14[%c0_36, %c0_37, %c0_38] : memref<2x1x32xf32, #tpu.memory_space<vmem>>, vector<1x1x32xf32>
    %27 = vector.shape_cast %26 : vector<1x1x32xf32> to vector<1x32xf32>
    %cst_39 = arith.constant dense<0.000000e+00> : vector<16x32xf32>
    %28 = tpu.matmul %4, %9, %cst_39 {dimension_numbers = #tpu.dot_dimension_numbers<[1], [0], [0], [1], [0, 0, 1, 1], [], []>} : vector<16x32xf32>, vector<32x32xf32>, vector<16x32xf32> -> vector<16x32xf32>
    %29 = vector.broadcast %15 : vector<1x32xf32> to vector<16x32xf32>
    %30 = arith.addf %28, %29 : vector<16x32xf32>
    %cst_40 = arith.constant dense<0.000000e+00> : vector<16x32xf32>
    %31 = tpu.matmul %4, %11, %cst_40 {dimension_numbers = #tpu.dot_dimension_numbers<[1], [0], [0], [1], [0, 0, 1, 1], [], []>} : vector<16x32xf32>, vector<32x32xf32>, vector<16x32xf32> -> vector<16x32xf32>
    %32 = vector.broadcast %17 : vector<1x32xf32> to vector<16x32xf32>
    %33 = arith.addf %31, %32 : vector<16x32xf32>
    %cst_41 = arith.constant dense<0.000000e+00> : vector<16x32xf32>
    %34 = tpu.matmul %4, %13, %cst_41 {dimension_numbers = #tpu.dot_dimension_numbers<[1], [0], [0], [1], [0, 0, 1, 1], [], []>} : vector<16x32xf32>, vector<32x32xf32>, vector<16x32xf32> -> vector<16x32xf32>
    %35 = vector.broadcast %19 : vector<1x32xf32> to vector<16x32xf32>
    %36 = arith.addf %34, %35 : vector<16x32xf32>
    %37 = tpu.iota {dimensions = array<i32: 0>} : vector<8x8xi32>
    %38 = tpu.iota {dimensions = array<i32: 1>} : vector<8x8xi32>
    %39 = arith.cmpi sgt, %38, %37 : vector<8x8xi32>
    %40 = vector.extract_strided_slice %5 {offsets = [0, 0], sizes = [1, 8], strides = [1, 1]} : vector<2x8xf32> to vector<1x8xf32>
    %cst_42 = arith.constant 0.000000e+00 : f32
    %41 = vector.broadcast %cst_42 : f32 to vector<1x8xf32>
    %42 = arith.cmpf ogt, %40, %41 : vector<1x8xf32>
    %43 = vector.broadcast %42 : vector<1x8xi1> to vector<8x8xi1>
    %44 = arith.ori %39, %43 : vector<8x8xi1>
    %45 = vector.extract_strided_slice %30 {offsets = [0, 0], sizes = [8, 32], strides = [1, 1]} : vector<16x32xf32> to vector<8x32xf32>
    %46 = vector.extract_strided_slice %33 {offsets = [0, 0], sizes = [8, 32], strides = [1, 1]} : vector<16x32xf32> to vector<8x32xf32>
    %47 = vector.extract_strided_slice %36 {offsets = [0, 0], sizes = [8, 32], strides = [1, 1]} : vector<16x32xf32> to vector<8x32xf32>
    %48 = vector.extract_strided_slice %45 {offsets = [0, 0], sizes = [8, 8], strides = [1, 1]} : vector<8x32xf32> to vector<8x8xf32>
    %49 = vector.extract_strided_slice %46 {offsets = [0, 0], sizes = [8, 8], strides = [1, 1]} : vector<8x32xf32> to vector<8x8xf32>
    %50 = vector.extract_strided_slice %47 {offsets = [0, 0], sizes = [8, 8], strides = [1, 1]} : vector<8x32xf32> to vector<8x8xf32>
    %cst_43 = arith.constant dense<0.000000e+00> : vector<8x8xf32>
    %51 = tpu.matmul %48, %49, %cst_43 {dimension_numbers = #tpu.dot_dimension_numbers<[1], [1], [0], [0], [0, 0, 1, 0], [], []>} : vector<8x8xf32>, vector<8x8xf32>, vector<8x8xf32> -> vector<8x8xf32>
    %cst_44 = arith.constant 0.353553385 : f32
    %52 = vector.broadcast %cst_44 : f32 to vector<8x8xf32>
    %53 = arith.mulf %51, %52 : vector<8x8xf32>
    %cst_45 = arith.constant -1.000000e+09 : f32
    %54 = vector.broadcast %cst_45 : f32 to vector<8x8xf32>
    %55 = arith.select %44, %54, %53 : vector<8x8xi1>, vector<8x8xf32>
    %cst_46 = arith.constant dense<0xFF800000> : vector<8xf32>
    %56 = vector.multi_reduction <maximumf>, %55, %cst_46 [1] : vector<8x8xf32> to vector<8xf32>
    %57 = vector.shape_cast %56 : vector<8xf32> to vector<8x1xf32>
    %58 = vector.broadcast %57 : vector<8x1xf32> to vector<8x8xf32>
    %59 = arith.subf %55, %58 : vector<8x8xf32>
    %60 = math.exp %59 : vector<8x8xf32>
    %cst_47 = arith.constant dense<0.000000e+00> : vector<8xf32>
    %61 = vector.multi_reduction <add>, %60, %cst_47 [1] : vector<8x8xf32> to vector<8xf32>
    %62 = vector.shape_cast %61 : vector<8xf32> to vector<8x1xf32>
    %63 = tpu.reciprocal %62 {approx = true} : vector<8x1xf32> -> vector<8x1xf32>
    %64 = vector.broadcast %63 : vector<8x1xf32> to vector<8x8xf32>
    %65 = arith.mulf %60, %64 : vector<8x8xf32>
    %cst_48 = arith.constant dense<0.000000e+00> : vector<8x8xf32>
    %66 = tpu.matmul %65, %50, %cst_48 {dimension_numbers = #tpu.dot_dimension_numbers<[1], [0], [0], [1], [0, 0, 1, 1], [], []>} : vector<8x8xf32>, vector<8x8xf32>, vector<8x8xf32> -> vector<8x8xf32>
    %c0_49 = arith.constant 0 : index
    %c0_50 = arith.constant 0 : index
    %67 = vector.load %arg32[%c0_49, %c0_50] : memref<16x32xf32, #tpu.memory_space<vmem>>, vector<8x8xf32>
    tpu.vector_store %arg32[%c0_49, %c0_50], %66 {strides = array<i32>} : memref<16x32xf32, #tpu.memory_space<vmem>>, vector<8x8xf32>,
    %68 = vector.extract_strided_slice %45 {offsets = [0, 8], sizes = [8, 8], strides = [1, 1]} : vector<8x32xf32> to vector<8x8xf32>
    %69 = vector.extract_strided_slice %46 {offsets = [0, 8], sizes = [8, 8], strides = [1, 1]} : vector<8x32xf32> to vector<8x8xf32>
    %70 = vector.extract_strided_slice %47 {offsets = [0, 8], sizes = [8, 8], strides = [1, 1]} : vector<8x32xf32> to vector<8x8xf32>
    %cst_51 = arith.constant dense<0.000000e+00> : vector<8x8xf32>
    %71 = tpu.matmul %68, %69, %cst_51 {dimension_numbers = #tpu.dot_dimension_numbers<[1], [1], [0], [0], [0, 0, 1, 0], [], []>} : vector<8x8xf32>, vector<8x8xf32>, vector<8x8xf32> -> vector<8x8xf32>
    %cst_52 = arith.constant 0.353553385 : f32
    %72 = vector.broadcast %cst_52 : f32 to vector<8x8xf32>
    %73 = arith.mulf %71, %72 : vector<8x8xf32>
    %cst_53 = arith.constant -1.000000e+09 : f32
    %74 = vector.broadcast %cst_53 : f32 to vector<8x8xf32>
    %75 = arith.select %44, %74, %73 : vector<8x8xi1>, vector<8x8xf32>
    %cst_54 = arith.constant dense<0xFF800000> : vector<8xf32>
    %76 = vector.multi_reduction <maximumf>, %75, %cst_54 [1] : vector<8x8xf32> to vector<8xf32>
    %77 = vector.shape_cast %76 : vector<8xf32> to vector<8x1xf32>
    %78 = vector.broadcast %77 : vector<8x1xf32> to vector<8x8xf32>
    %79 = arith.subf %75, %78 : vector<8x8xf32>
    %80 = math.exp %79 : vector<8x8xf32>
    %cst_55 = arith.constant dense<0.000000e+00> : vector<8xf32>
    %81 = vector.multi_reduction <add>, %80, %cst_55 [1] : vector<8x8xf32> to vector<8xf32>
    %82 = vector.shape_cast %81 : vector<8xf32> to vector<8x1xf32>
    %83 = tpu.reciprocal %82 {approx = true} : vector<8x1xf32> -> vector<8x1xf32>
    %84 = vector.broadcast %83 : vector<8x1xf32> to vector<8x8xf32>
    %85 = arith.mulf %80, %84 : vector<8x8xf32>
    %cst_56 = arith.constant dense<0.000000e+00> : vector<8x8xf32>
    %86 = tpu.matmul %85, %70, %cst_56 {dimension_numbers = #tpu.dot_dimension_numbers<[1], [0], [0], [1], [0, 0, 1, 1], [], []>} : vector<8x8xf32>, vector<8x8xf32>, vector<8x8xf32> -> vector<8x8xf32>
    %c0_57 = arith.constant 0 : index
    %c8 = arith.constant 8 : index
    %87 = vector.load %arg32[%c0_57, %c8] : memref<16x32xf32, #tpu.memory_space<vmem>>, vector<8x8xf32>
    tpu.vector_store %arg32[%c0_57, %c8], %86 {strides = array<i32>} : memref<16x32xf32, #tpu.memory_space<vmem>>, vector<8x8xf32>,
    %88 = vector.extract_strided_slice %45 {offsets = [0, 16], sizes = [8, 8], strides = [1, 1]} : vector<8x32xf32> to vector<8x8xf32>
    %89 = vector.extract_strided_slice %46 {offsets = [0, 16], sizes = [8, 8], strides = [1, 1]} : vector<8x32xf32> to vector<8x8xf32>
    %90 = vector.extract_strided_slice %47 {offsets = [0, 16], sizes = [8, 8], strides = [1, 1]} : vector<8x32xf32> to vector<8x8xf32>
    %cst_58 = arith.constant dense<0.000000e+00> : vector<8x8xf32>
    %91 = tpu.matmul %88, %89, %cst_58 {dimension_numbers = #tpu.dot_dimension_numbers<[1], [1], [0], [0], [0, 0, 1, 0], [], []>} : vector<8x8xf32>, vector<8x8xf32>, vector<8x8xf32> -> vector<8x8xf32>
    %cst_59 = arith.constant 0.353553385 : f32
    %92 = vector.broadcast %cst_59 : f32 to vector<8x8xf32>
    %93 = arith.mulf %91, %92 : vector<8x8xf32>
    %cst_60 = arith.constant -1.000000e+09 : f32
    %94 = vector.broadcast %cst_60 : f32 to vector<8x8xf32>
    %95 = arith.select %44, %94, %93 : vector<8x8xi1>, vector<8x8xf32>
    %cst_61 = arith.constant dense<0xFF800000> : vector<8xf32>
    %96 = vector.multi_reduction <maximumf>, %95, %cst_61 [1] : vector<8x8xf32> to vector<8xf32>
    %97 = vector.shape_cast %96 : vector<8xf32> to vector<8x1xf32>
    %98 = vector.broadcast %97 : vector<8x1xf32> to vector<8x8xf32>
    %99 = arith.subf %95, %98 : vector<8x8xf32>
    %100 = math.exp %99 : vector<8x8xf32>
    %cst_62 = arith.constant dense<0.000000e+00> : vector<8xf32>
    %101 = vector.multi_reduction <add>, %100, %cst_62 [1] : vector<8x8xf32> to vector<8xf32>
    %102 = vector.shape_cast %101 : vector<8xf32> to vector<8x1xf32>
    %103 = tpu.reciprocal %102 {approx = true} : vector<8x1xf32> -> vector<8x1xf32>
    %104 = vector.broadcast %103 : vector<8x1xf32> to vector<8x8xf32>
    %105 = arith.mulf %100, %104 : vector<8x8xf32>
    %cst_63 = arith.constant dense<0.000000e+00> : vector<8x8xf32>
    %106 = tpu.matmul %105, %90, %cst_63 {dimension_numbers = #tpu.dot_dimension_numbers<[1], [0], [0], [1], [0, 0, 1, 1], [], []>} : vector<8x8xf32>, vector<8x8xf32>, vector<8x8xf32> -> vector<8x8xf32>
    %c0_64 = arith.constant 0 : index
    %c16 = arith.constant 16 : index
    %107 = vector.load %arg32[%c0_64, %c16] : memref<16x32xf32, #tpu.memory_space<vmem>>, vector<8x8xf32>
    tpu.vector_store %arg32[%c0_64, %c16], %106 {strides = array<i32>} : memref<16x32xf32, #tpu.memory_space<vmem>>, vector<8x8xf32>,
    %108 = vector.extract_strided_slice %45 {offsets = [0, 24], sizes = [8, 8], strides = [1, 1]} : vector<8x32xf32> to vector<8x8xf32>
    %109 = vector.extract_strided_slice %46 {offsets = [0, 24], sizes = [8, 8], strides = [1, 1]} : vector<8x32xf32> to vector<8x8xf32>
    %110 = vector.extract_strided_slice %47 {offsets = [0, 24], sizes = [8, 8], strides = [1, 1]} : vector<8x32xf32> to vector<8x8xf32>
    %cst_65 = arith.constant dense<0.000000e+00> : vector<8x8xf32>
    %111 = tpu.matmul %108, %109, %cst_65 {dimension_numbers = #tpu.dot_dimension_numbers<[1], [1], [0], [0], [0, 0, 1, 0], [], []>} : vector<8x8xf32>, vector<8x8xf32>, vector<8x8xf32> -> vector<8x8xf32>
    %cst_66 = arith.constant 0.353553385 : f32
    %112 = vector.broadcast %cst_66 : f32 to vector<8x8xf32>
    %113 = arith.mulf %111, %112 : vector<8x8xf32>
    %cst_67 = arith.constant -1.000000e+09 : f32
    %114 = vector.broadcast %cst_67 : f32 to vector<8x8xf32>
    %115 = arith.select %44, %114, %113 : vector<8x8xi1>, vector<8x8xf32>
    %cst_68 = arith.constant dense<0xFF800000> : vector<8xf32>
    %116 = vector.multi_reduction <maximumf>, %115, %cst_68 [1] : vector<8x8xf32> to vector<8xf32>
    %117 = vector.shape_cast %116 : vector<8xf32> to vector<8x1xf32>
    %118 = vector.broadcast %117 : vector<8x1xf32> to vector<8x8xf32>
    %119 = arith.subf %115, %118 : vector<8x8xf32>
    %120 = math.exp %119 : vector<8x8xf32>
    %cst_69 = arith.constant dense<0.000000e+00> : vector<8xf32>
    %121 = vector.multi_reduction <add>, %120, %cst_69 [1] : vector<8x8xf32> to vector<8xf32>
    %122 = vector.shape_cast %121 : vector<8xf32> to vector<8x1xf32>
    %123 = tpu.reciprocal %122 {approx = true} : vector<8x1xf32> -> vector<8x1xf32>
    %124 = vector.broadcast %123 : vector<8x1xf32> to vector<8x8xf32>
    %125 = arith.mulf %120, %124 : vector<8x8xf32>
    %cst_70 = arith.constant dense<0.000000e+00> : vector<8x8xf32>
    %126 = tpu.matmul %125, %110, %cst_70 {dimension_numbers = #tpu.dot_dimension_numbers<[1], [0], [0], [1], [0, 0, 1, 1], [], []>} : vector<8x8xf32>, vector<8x8xf32>, vector<8x8xf32> -> vector<8x8xf32>
    %c0_71 = arith.constant 0 : index
    %c24 = arith.constant 24 : index
    %127 = vector.load %arg32[%c0_71, %c24] : memref<16x32xf32, #tpu.memory_space<vmem>>, vector<8x8xf32>
    tpu.vector_store %arg32[%c0_71, %c24], %126 {strides = array<i32>} : memref<16x32xf32, #tpu.memory_space<vmem>>, vector<8x8xf32>,
    %128 = vector.extract_strided_slice %5 {offsets = [1, 0], sizes = [1, 8], strides = [1, 1]} : vector<2x8xf32> to vector<1x8xf32>
    %cst_72 = arith.constant 0.000000e+00 : f32
    %129 = vector.broadcast %cst_72 : f32 to vector<1x8xf32>
    %130 = arith.cmpf ogt, %128, %129 : vector<1x8xf32>
    %131 = vector.broadcast %130 : vector<1x8xi1> to vector<8x8xi1>
    %132 = arith.ori %39, %131 : vector<8x8xi1>
    %133 = vector.extract_strided_slice %30 {offsets = [8, 0], sizes = [8, 32], strides = [1, 1]} : vector<16x32xf32> to vector<8x32xf32>
    %134 = vector.extract_strided_slice %33 {offsets = [8, 0], sizes = [8, 32], strides = [1, 1]} : vector<16x32xf32> to vector<8x32xf32>
    %135 = vector.extract_strided_slice %36 {offsets = [8, 0], sizes = [8, 32], strides = [1, 1]} : vector<16x32xf32> to vector<8x32xf32>
    %136 = vector.extract_strided_slice %133 {offsets = [0, 0], sizes = [8, 8], strides = [1, 1]} : vector<8x32xf32> to vector<8x8xf32>
    %137 = vector.extract_strided_slice %134 {offsets = [0, 0], sizes = [8, 8], strides = [1, 1]} : vector<8x32xf32> to vector<8x8xf32>
    %138 = vector.extract_strided_slice %135 {offsets = [0, 0], sizes = [8, 8], strides = [1, 1]} : vector<8x32xf32> to vector<8x8xf32>
    %cst_73 = arith.constant dense<0.000000e+00> : vector<8x8xf32>
    %139 = tpu.matmul %136, %137, %cst_73 {dimension_numbers = #tpu.dot_dimension_numbers<[1], [1], [0], [0], [0, 0, 1, 0], [], []>} : vector<8x8xf32>, vector<8x8xf32>, vector<8x8xf32> -> vector<8x8xf32>
    %cst_74 = arith.constant 0.353553385 : f32
    %140 = vector.broadcast %cst_74 : f32 to vector<8x8xf32>
    %141 = arith.mulf %139, %140 : vector<8x8xf32>
    %cst_75 = arith.constant -1.000000e+09 : f32
    %142 = vector.broadcast %cst_75 : f32 to vector<8x8xf32>
    %143 = arith.select %132, %142, %141 : vector<8x8xi1>, vector<8x8xf32>
    %cst_76 = arith.constant dense<0xFF800000> : vector<8xf32>
    %144 = vector.multi_reduction <maximumf>, %143, %cst_76 [1] : vector<8x8xf32> to vector<8xf32>
    %145 = vector.shape_cast %144 : vector<8xf32> to vector<8x1xf32>
    %146 = vector.broadcast %145 : vector<8x1xf32> to vector<8x8xf32>
    %147 = arith.subf %143, %146 : vector<8x8xf32>
    %148 = math.exp %147 : vector<8x8xf32>
    %cst_77 = arith.constant dense<0.000000e+00> : vector<8xf32>
    %149 = vector.multi_reduction <add>, %148, %cst_77 [1] : vector<8x8xf32> to vector<8xf32>
    %150 = vector.shape_cast %149 : vector<8xf32> to vector<8x1xf32>
    %151 = tpu.reciprocal %150 {approx = true} : vector<8x1xf32> -> vector<8x1xf32>
    %152 = vector.broadcast %151 : vector<8x1xf32> to vector<8x8xf32>
    %153 = arith.mulf %148, %152 : vector<8x8xf32>
    %cst_78 = arith.constant dense<0.000000e+00> : vector<8x8xf32>
    %154 = tpu.matmul %153, %138, %cst_78 {dimension_numbers = #tpu.dot_dimension_numbers<[1], [0], [0], [1], [0, 0, 1, 1], [], []>} : vector<8x8xf32>, vector<8x8xf32>, vector<8x8xf32> -> vector<8x8xf32>
    %c8_79 = arith.constant 8 : index
    %c0_80 = arith.constant 0 : index
    %155 = vector.load %arg32[%c8_79, %c0_80] : memref<16x32xf32, #tpu.memory_space<vmem>>, vector<8x8xf32>
    tpu.vector_store %arg32[%c8_79, %c0_80], %154 {strides = array<i32>} : memref<16x32xf32, #tpu.memory_space<vmem>>, vector<8x8xf32>,
    %156 = vector.extract_strided_slice %133 {offsets = [0, 8], sizes = [8, 8], strides = [1, 1]} : vector<8x32xf32> to vector<8x8xf32>
    %157 = vector.extract_strided_slice %134 {offsets = [0, 8], sizes = [8, 8], strides = [1, 1]} : vector<8x32xf32> to vector<8x8xf32>
    %158 = vector.extract_strided_slice %135 {offsets = [0, 8], sizes = [8, 8], strides = [1, 1]} : vector<8x32xf32> to vector<8x8xf32>
    %cst_81 = arith.constant dense<0.000000e+00> : vector<8x8xf32>
    %159 = tpu.matmul %156, %157, %cst_81 {dimension_numbers = #tpu.dot_dimension_numbers<[1], [1], [0], [0], [0, 0, 1, 0], [], []>} : vector<8x8xf32>, vector<8x8xf32>, vector<8x8xf32> -> vector<8x8xf32>
    %cst_82 = arith.constant 0.353553385 : f32
    %160 = vector.broadcast %cst_82 : f32 to vector<8x8xf32>
    %161 = arith.mulf %159, %160 : vector<8x8xf32>
    %cst_83 = arith.constant -1.000000e+09 : f32
    %162 = vector.broadcast %cst_83 : f32 to vector<8x8xf32>
    %163 = arith.select %132, %162, %161 : vector<8x8xi1>, vector<8x8xf32>
    %cst_84 = arith.constant dense<0xFF800000> : vector<8xf32>
    %164 = vector.multi_reduction <maximumf>, %163, %cst_84 [1] : vector<8x8xf32> to vector<8xf32>
    %165 = vector.shape_cast %164 : vector<8xf32> to vector<8x1xf32>
    %166 = vector.broadcast %165 : vector<8x1xf32> to vector<8x8xf32>
    %167 = arith.subf %163, %166 : vector<8x8xf32>
    %168 = math.exp %167 : vector<8x8xf32>
    %cst_85 = arith.constant dense<0.000000e+00> : vector<8xf32>
    %169 = vector.multi_reduction <add>, %168, %cst_85 [1] : vector<8x8xf32> to vector<8xf32>
    %170 = vector.shape_cast %169 : vector<8xf32> to vector<8x1xf32>
    %171 = tpu.reciprocal %170 {approx = true} : vector<8x1xf32> -> vector<8x1xf32>
    %172 = vector.broadcast %171 : vector<8x1xf32> to vector<8x8xf32>
    %173 = arith.mulf %168, %172 : vector<8x8xf32>
    %cst_86 = arith.constant dense<0.000000e+00> : vector<8x8xf32>
    %174 = tpu.matmul %173, %158, %cst_86 {dimension_numbers = #tpu.dot_dimension_numbers<[1], [0], [0], [1], [0, 0, 1, 1], [], []>} : vector<8x8xf32>, vector<8x8xf32>, vector<8x8xf32> -> vector<8x8xf32>
    %c8_87 = arith.constant 8 : index
    %c8_88 = arith.constant 8 : index
    %175 = vector.load %arg32[%c8_87, %c8_88] : memref<16x32xf32, #tpu.memory_space<vmem>>, vector<8x8xf32>
    tpu.vector_store %arg32[%c8_87, %c8_88], %174 {strides = array<i32>} : memref<16x32xf32, #tpu.memory_space<vmem>>, vector<8x8xf32>,
    %176 = vector.extract_strided_slice %133 {offsets = [0, 16], sizes = [8, 8], strides = [1, 1]} : vector<8x32xf32> to vector<8x8xf32>
    %177 = vector.extract_strided_slice %134 {offsets = [0, 16], sizes = [8, 8], strides = [1, 1]} : vector<8x32xf32> to vector<8x8xf32>
    %178 = vector.extract_strided_slice %135 {offsets = [0, 16], sizes = [8, 8], strides = [1, 1]} : vector<8x32xf32> to vector<8x8xf32>
    %cst_89 = arith.constant dense<0.000000e+00> : vector<8x8xf32>
    %179 = tpu.matmul %176, %177, %cst_89 {dimension_numbers = #tpu.dot_dimension_numbers<[1], [1], [0], [0], [0, 0, 1, 0], [], []>} : vector<8x8xf32>, vector<8x8xf32>, vector<8x8xf32> -> vector<8x8xf32>
    %cst_90 = arith.constant 0.353553385 : f32
    %180 = vector.broadcast %cst_90 : f32 to vector<8x8xf32>
    %181 = arith.mulf %179, %180 : vector<8x8xf32>
    %cst_91 = arith.constant -1.000000e+09 : f32
    %182 = vector.broadcast %cst_91 : f32 to vector<8x8xf32>
    %183 = arith.select %132, %182, %181 : vector<8x8xi1>, vector<8x8xf32>
    %cst_92 = arith.constant dense<0xFF800000> : vector<8xf32>
    %184 = vector.multi_reduction <maximumf>, %183, %cst_92 [1] : vector<8x8xf32> to vector<8xf32>
    %185 = vector.shape_cast %184 : vector<8xf32> to vector<8x1xf32>
    %186 = vector.broadcast %185 : vector<8x1xf32> to vector<8x8xf32>
    %187 = arith.subf %183, %186 : vector<8x8xf32>
    %188 = math.exp %187 : vector<8x8xf32>
    %cst_93 = arith.constant dense<0.000000e+00> : vector<8xf32>
    %189 = vector.multi_reduction <add>, %188, %cst_93 [1] : vector<8x8xf32> to vector<8xf32>
    %190 = vector.shape_cast %189 : vector<8xf32> to vector<8x1xf32>
    %191 = tpu.reciprocal %190 {approx = true} : vector<8x1xf32> -> vector<8x1xf32>
    %192 = vector.broadcast %191 : vector<8x1xf32> to vector<8x8xf32>
    %193 = arith.mulf %188, %192 : vector<8x8xf32>
    %cst_94 = arith.constant dense<0.000000e+00> : vector<8x8xf32>
    %194 = tpu.matmul %193, %178, %cst_94 {dimension_numbers = #tpu.dot_dimension_numbers<[1], [0], [0], [1], [0, 0, 1, 1], [], []>} : vector<8x8xf32>, vector<8x8xf32>, vector<8x8xf32> -> vector<8x8xf32>
    %c8_95 = arith.constant 8 : index
    %c16_96 = arith.constant 16 : index
    %195 = vector.load %arg32[%c8_95, %c16_96] : memref<16x32xf32, #tpu.memory_space<vmem>>, vector<8x8xf32>
    tpu.vector_store %arg32[%c8_95, %c16_96], %194 {strides = array<i32>} : memref<16x32xf32, #tpu.memory_space<vmem>>, vector<8x8xf32>,
    %196 = vector.extract_strided_slice %133 {offsets = [0, 24], sizes = [8, 8], strides = [1, 1]} : vector<8x32xf32> to vector<8x8xf32>
    %197 = vector.extract_strided_slice %134 {offsets = [0, 24], sizes = [8, 8], strides = [1, 1]} : vector<8x32xf32> to vector<8x8xf32>
    %198 = vector.extract_strided_slice %135 {offsets = [0, 24], sizes = [8, 8], strides = [1, 1]} : vector<8x32xf32> to vector<8x8xf32>
    %cst_97 = arith.constant dense<0.000000e+00> : vector<8x8xf32>
    %199 = tpu.matmul %196, %197, %cst_97 {dimension_numbers = #tpu.dot_dimension_numbers<[1], [1], [0], [0], [0, 0, 1, 0], [], []>} : vector<8x8xf32>, vector<8x8xf32>, vector<8x8xf32> -> vector<8x8xf32>
    %cst_98 = arith.constant 0.353553385 : f32
    %200 = vector.broadcast %cst_98 : f32 to vector<8x8xf32>
    %201 = arith.mulf %199, %200 : vector<8x8xf32>
    %cst_99 = arith.constant -1.000000e+09 : f32
    %202 = vector.broadcast %cst_99 : f32 to vector<8x8xf32>
    %203 = arith.select %132, %202, %201 : vector<8x8xi1>, vector<8x8xf32>
    %cst_100 = arith.constant dense<0xFF800000> : vector<8xf32>
    %204 = vector.multi_reduction <maximumf>, %203, %cst_100 [1] : vector<8x8xf32> to vector<8xf32>
    %205 = vector.shape_cast %204 : vector<8xf32> to vector<8x1xf32>
    %206 = vector.broadcast %205 : vector<8x1xf32> to vector<8x8xf32>
    %207 = arith.subf %203, %206 : vector<8x8xf32>
    %208 = math.exp %207 : vector<8x8xf32>
    %cst_101 = arith.constant dense<0.000000e+00> : vector<8xf32>
    %209 = vector.multi_reduction <add>, %208, %cst_101 [1] : vector<8x8xf32> to vector<8xf32>
    %210 = vector.shape_cast %209 : vector<8xf32> to vector<8x1xf32>
    %211 = tpu.reciprocal %210 {approx = true} : vector<8x1xf32> -> vector<8x1xf32>
    %212 = vector.broadcast %211 : vector<8x1xf32> to vector<8x8xf32>
    %213 = arith.mulf %208, %212 : vector<8x8xf32>
    %cst_102 = arith.constant dense<0.000000e+00> : vector<8x8xf32>
    %214 = tpu.matmul %213, %198, %cst_102 {dimension_numbers = #tpu.dot_dimension_numbers<[1], [0], [0], [1], [0, 0, 1, 1], [], []>} : vector<8x8xf32>, vector<8x8xf32>, vector<8x8xf32> -> vector<8x8xf32>
    %c8_103 = arith.constant 8 : index
    %c24_104 = arith.constant 24 : index
    %215 = vector.load %arg32[%c8_103, %c24_104] : memref<16x32xf32, #tpu.memory_space<vmem>>, vector<8x8xf32>
    tpu.vector_store %arg32[%c8_103, %c24_104], %214 {strides = array<i32>} : memref<16x32xf32, #tpu.memory_space<vmem>>, vector<8x8xf32>,
    %c0_105 = arith.constant 0 : index
    %c0_106 = arith.constant 0 : index
    %216 = vector.load %arg32[%c0_105, %c0_106] : memref<16x32xf32, #tpu.memory_space<vmem>>, vector<16x32xf32>
    %cst_107 = arith.constant dense<0.000000e+00> : vector<16x32xf32>
    %217 = tpu.matmul %216, %21, %cst_107 {dimension_numbers = #tpu.dot_dimension_numbers<[1], [0], [0], [1], [0, 0, 1, 1], [], []>} : vector<16x32xf32>, vector<32x32xf32>, vector<16x32xf32> -> vector<16x32xf32>
    %218 = vector.broadcast %23 : vector<1x32xf32> to vector<16x32xf32>
    %219 = arith.addf %217, %218 : vector<16x32xf32>
    %220 = arith.addf %219, %4 : vector<16x32xf32>
    %cst_108 = arith.constant dense<0.000000e+00> : vector<16xf32>
    %221 = vector.multi_reduction <add>, %220, %cst_108 [1] : vector<16x32xf32> to vector<16xf32>
    %222 = vector.shape_cast %221 : vector<16xf32> to vector<16x1xf32>
    %cst_109 = arith.constant 3.200000e+01 : f32
    %223 = vector.broadcast %cst_109 : f32 to vector<16x1xf32>
    %224 = arith.divf %222, %223 : vector<16x1xf32>
    %225 = vector.broadcast %224 : vector<16x1xf32> to vector<16x32xf32>
    %226 = arith.subf %220, %225 : vector<16x32xf32>
    %227 = arith.mulf %226, %226 : vector<16x32xf32>
    %cst_110 = arith.constant dense<0.000000e+00> : vector<16xf32>
    %228 = vector.multi_reduction <add>, %227, %cst_110 [1] : vector<16x32xf32> to vector<16xf32>
    %229 = vector.shape_cast %228 : vector<16xf32> to vector<16x1xf32>
    %cst_111 = arith.constant 3.200000e+01 : f32
    %230 = vector.broadcast %cst_111 : f32 to vector<16x1xf32>
    %231 = arith.divf %229, %230 : vector<16x1xf32>
    %232 = vector.broadcast %224 : vector<16x1xf32> to vector<16x32xf32>
    %233 = arith.subf %220, %232 : vector<16x32xf32>
    %cst_112 = arith.constant 9.99999974E-6 : f32
    %234 = vector.broadcast %cst_112 : f32 to vector<16x1xf32>
    %235 = arith.addf %231, %234 : vector<16x1xf32>
    %236 = math.rsqrt %235 : vector<16x1xf32>
    %237 = vector.broadcast %236 : vector<16x1xf32> to vector<16x32xf32>
    %238 = arith.mulf %233, %237 : vector<16x32xf32>
    %239 = vector.broadcast %25 : vector<1x32xf32> to vector<16x32xf32>
    %240 = arith.mulf %238, %239 : vector<16x32xf32>
    %241 = vector.broadcast %27 : vector<1x32xf32> to vector<16x32xf32>
    %242 = arith.addf %240, %241 : vector<16x32xf32>
    %c0_113 = arith.constant 0 : index
    %c0_114 = arith.constant 0 : index
    %c0_115 = arith.constant 0 : index
    %243 = vector.load %arg15[%c0_113, %c0_114, %c0_115] : memref<2x32x32xf32, #tpu.memory_space<vmem>>, vector<1x32x32xf32>
    %244 = vector.shape_cast %243 : vector<1x32x32xf32> to vector<32x32xf32>
    %c0_116 = arith.constant 0 : index
    %c0_117 = arith.constant 0 : index
    %c0_118 = arith.constant 0 : index
    %245 = vector.load %arg16[%c0_116, %c0_117, %c0_118] : memref<2x32x32xf32, #tpu.memory_space<vmem>>, vector<1x32x32xf32>
    %246 = vector.shape_cast %245 : vector<1x32x32xf32> to vector<32x32xf32>
    %c0_119 = arith.constant 0 : index
    %c0_120 = arith.constant 0 : index
    %c0_121 = arith.constant 0 : index
    %247 = vector.load %arg17[%c0_119, %c0_120, %c0_121] : memref<2x32x32xf32, #tpu.memory_space<vmem>>, vector<1x32x32xf32>
    %248 = vector.shape_cast %247 : vector<1x32x32xf32> to vector<32x32xf32>
    %c0_122 = arith.constant 0 : index
    %c0_123 = arith.constant 0 : index
    %c0_124 = arith.constant 0 : index
    %249 = vector.load %arg18[%c0_122, %c0_123, %c0_124] : memref<2x1x32xf32, #tpu.memory_space<vmem>>, vector<1x1x32xf32>
    %250 = vector.shape_cast %249 : vector<1x1x32xf32> to vector<1x32xf32>
    %c0_125 = arith.constant 0 : index
    %c0_126 = arith.constant 0 : index
    %c0_127 = arith.constant 0 : index
    %251 = vector.load %arg19[%c0_125, %c0_126, %c0_127] : memref<2x1x32xf32, #tpu.memory_space<vmem>>, vector<1x1x32xf32>
    %252 = vector.shape_cast %251 : vector<1x1x32xf32> to vector<1x32xf32>
    %c0_128 = arith.constant 0 : index
    %c0_129 = arith.constant 0 : index
    %c0_130 = arith.constant 0 : index
    %253 = vector.load %arg20[%c0_128, %c0_129, %c0_130] : memref<2x1x32xf32, #tpu.memory_space<vmem>>, vector<1x1x32xf32>
    %254 = vector.shape_cast %253 : vector<1x1x32xf32> to vector<1x32xf32>
    %c0_131 = arith.constant 0 : index
    %c0_132 = arith.constant 0 : index
    %c0_133 = arith.constant 0 : index
    %255 = vector.load %arg21[%c0_131, %c0_132, %c0_133] : memref<2x32x32xf32, #tpu.memory_space<vmem>>, vector<1x32x32xf32>
    %256 = vector.shape_cast %255 : vector<1x32x32xf32> to vector<32x32xf32>
    %c0_134 = arith.constant 0 : index
    %c0_135 = arith.constant 0 : index
    %c0_136 = arith.constant 0 : index
    %257 = vector.load %arg22[%c0_134, %c0_135, %c0_136] : memref<2x1x32xf32, #tpu.memory_space<vmem>>, vector<1x1x32xf32>
    %258 = vector.shape_cast %257 : vector<1x1x32xf32> to vector<1x32xf32>
    %c0_137 = arith.constant 0 : index
    %c0_138 = arith.constant 0 : index
    %c0_139 = arith.constant 0 : index
    %259 = vector.load %arg23[%c0_137, %c0_138, %c0_139] : memref<2x1x32xf32, #tpu.memory_space<vmem>>, vector<1x1x32xf32>
    %260 = vector.shape_cast %259 : vector<1x1x32xf32> to vector<1x32xf32>
    %c0_140 = arith.constant 0 : index
    %c0_141 = arith.constant 0 : index
    %c0_142 = arith.constant 0 : index
    %261 = vector.load %arg24[%c0_140, %c0_141, %c0_142] : memref<2x1x32xf32, #tpu.memory_space<vmem>>, vector<1x1x32xf32>
    %262 = vector.shape_cast %261 : vector<1x1x32xf32> to vector<1x32xf32>
    %cst_143 = arith.constant dense<0.000000e+00> : vector<16x32xf32>
    %263 = tpu.matmul %242, %244, %cst_143 {dimension_numbers = #tpu.dot_dimension_numbers<[1], [0], [0], [1], [0, 0, 1, 1], [], []>} : vector<16x32xf32>, vector<32x32xf32>, vector<16x32xf32> -> vector<16x32xf32>
    %264 = vector.broadcast %250 : vector<1x32xf32> to vector<16x32xf32>
    %265 = arith.addf %263, %264 : vector<16x32xf32>
    %cst_144 = arith.constant dense<0.000000e+00> : vector<16x32xf32>
    %266 = tpu.matmul %7, %246, %cst_144 {dimension_numbers = #tpu.dot_dimension_numbers<[1], [0], [0], [1], [0, 0, 1, 1], [], []>} : vector<16x32xf32>, vector<32x32xf32>, vector<16x32xf32> -> vector<16x32xf32>
    %267 = vector.broadcast %252 : vector<1x32xf32> to vector<16x32xf32>
    %268 = arith.addf %266, %267 : vector<16x32xf32>
    %cst_145 = arith.constant dense<0.000000e+00> : vector<16x32xf32>
    %269 = tpu.matmul %7, %248, %cst_145 {dimension_numbers = #tpu.dot_dimension_numbers<[1], [0], [0], [1], [0, 0, 1, 1], [], []>} : vector<16x32xf32>, vector<32x32xf32>, vector<16x32xf32> -> vector<16x32xf32>
    %270 = vector.broadcast %254 : vector<1x32xf32> to vector<16x32xf32>
    %271 = arith.addf %269, %270 : vector<16x32xf32>
    %272 = tpu.iota {dimensions = array<i32: 0>} : vector<8x8xi32>
    %273 = tpu.iota {dimensions = array<i32: 1>} : vector<8x8xi32>
    %274 = arith.cmpi sgt, %273, %272 : vector<8x8xi32>
    %275 = vector.extract_strided_slice %6 {offsets = [0, 0], sizes = [1, 8], strides = [1, 1]} : vector<2x8xf32> to vector<1x8xf32>
    %cst_146 = arith.constant 0.000000e+00 : f32
    %276 = vector.broadcast %cst_146 : f32 to vector<1x8xf32>
    %277 = arith.cmpf ogt, %275, %276 : vector<1x8xf32>
    %278 = vector.broadcast %277 : vector<1x8xi1> to vector<8x8xi1>
    %279 = arith.ori %274, %278 : vector<8x8xi1>
    %280 = vector.extract_strided_slice %265 {offsets = [0, 0], sizes = [8, 32], strides = [1, 1]} : vector<16x32xf32> to vector<8x32xf32>
    %281 = vector.extract_strided_slice %268 {offsets = [0, 0], sizes = [8, 32], strides = [1, 1]} : vector<16x32xf32> to vector<8x32xf32>
    %282 = vector.extract_strided_slice %271 {offsets = [0, 0], sizes = [8, 32], strides = [1, 1]} : vector<16x32xf32> to vector<8x32xf32>
    %283 = vector.extract_strided_slice %280 {offsets = [0, 0], sizes = [8, 8], strides = [1, 1]} : vector<8x32xf32> to vector<8x8xf32>
    %284 = vector.extract_strided_slice %281 {offsets = [0, 0], sizes = [8, 8], strides = [1, 1]} : vector<8x32xf32> to vector<8x8xf32>
    %285 = vector.extract_strided_slice %282 {offsets = [0, 0], sizes = [8, 8], strides = [1, 1]} : vector<8x32xf32> to vector<8x8xf32>
    %cst_147 = arith.constant dense<0.000000e+00> : vector<8x8xf32>
    %286 = tpu.matmul %283, %284, %cst_147 {dimension_numbers = #tpu.dot_dimension_numbers<[1], [1], [0], [0], [0, 0, 1, 0], [], []>} : vector<8x8xf32>, vector<8x8xf32>, vector<8x8xf32> -> vector<8x8xf32>
    %cst_148 = arith.constant 0.353553385 : f32
    %287 = vector.broadcast %cst_148 : f32 to vector<8x8xf32>
    %288 = arith.mulf %286, %287 : vector<8x8xf32>
    %cst_149 = arith.constant -1.000000e+09 : f32
    %289 = vector.broadcast %cst_149 : f32 to vector<8x8xf32>
    %290 = arith.select %279, %289, %288 : vector<8x8xi1>, vector<8x8xf32>
    %cst_150 = arith.constant dense<0xFF800000> : vector<8xf32>
    %291 = vector.multi_reduction <maximumf>, %290, %cst_150 [1] : vector<8x8xf32> to vector<8xf32>
    %292 = vector.shape_cast %291 : vector<8xf32> to vector<8x1xf32>
    %293 = vector.broadcast %292 : vector<8x1xf32> to vector<8x8xf32>
    %294 = arith.subf %290, %293 : vector<8x8xf32>
    %295 = math.exp %294 : vector<8x8xf32>
    %cst_151 = arith.constant dense<0.000000e+00> : vector<8xf32>
    %296 = vector.multi_reduction <add>, %295, %cst_151 [1] : vector<8x8xf32> to vector<8xf32>
    %297 = vector.shape_cast %296 : vector<8xf32> to vector<8x1xf32>
    %298 = tpu.reciprocal %297 {approx = true} : vector<8x1xf32> -> vector<8x1xf32>
    %299 = vector.broadcast %298 : vector<8x1xf32> to vector<8x8xf32>
    %300 = arith.mulf %295, %299 : vector<8x8xf32>
    %cst_152 = arith.constant dense<0.000000e+00> : vector<8x8xf32>
    %301 = tpu.matmul %300, %285, %cst_152 {dimension_numbers = #tpu.dot_dimension_numbers<[1], [0], [0], [1], [0, 0, 1, 1], [], []>} : vector<8x8xf32>, vector<8x8xf32>, vector<8x8xf32> -> vector<8x8xf32>
    %c0_153 = arith.constant 0 : index
    %c0_154 = arith.constant 0 : index
    %302 = vector.load %arg32[%c0_153, %c0_154] : memref<16x32xf32, #tpu.memory_space<vmem>>, vector<8x8xf32>
    tpu.vector_store %arg32[%c0_153, %c0_154], %301 {strides = array<i32>} : memref<16x32xf32, #tpu.memory_space<vmem>>, vector<8x8xf32>,
    %303 = vector.extract_strided_slice %280 {offsets = [0, 8], sizes = [8, 8], strides = [1, 1]} : vector<8x32xf32> to vector<8x8xf32>
    %304 = vector.extract_strided_slice %281 {offsets = [0, 8], sizes = [8, 8], strides = [1, 1]} : vector<8x32xf32> to vector<8x8xf32>
    %305 = vector.extract_strided_slice %282 {offsets = [0, 8], sizes = [8, 8], strides = [1, 1]} : vector<8x32xf32> to vector<8x8xf32>
    %cst_155 = arith.constant dense<0.000000e+00> : vector<8x8xf32>
    %306 = tpu.matmul %303, %304, %cst_155 {dimension_numbers = #tpu.dot_dimension_numbers<[1], [1], [0], [0], [0, 0, 1, 0], [], []>} : vector<8x8xf32>, vector<8x8xf32>, vector<8x8xf32> -> vector<8x8xf32>
    %cst_156 = arith.constant 0.353553385 : f32
    %307 = vector.broadcast %cst_156 : f32 to vector<8x8xf32>
    %308 = arith.mulf %306, %307 : vector<8x8xf32>
    %cst_157 = arith.constant -1.000000e+09 : f32
    %309 = vector.broadcast %cst_157 : f32 to vector<8x8xf32>
    %310 = arith.select %279, %309, %308 : vector<8x8xi1>, vector<8x8xf32>
    %cst_158 = arith.constant dense<0xFF800000> : vector<8xf32>
    %311 = vector.multi_reduction <maximumf>, %310, %cst_158 [1] : vector<8x8xf32> to vector<8xf32>
    %312 = vector.shape_cast %311 : vector<8xf32> to vector<8x1xf32>
    %313 = vector.broadcast %312 : vector<8x1xf32> to vector<8x8xf32>
    %314 = arith.subf %310, %313 : vector<8x8xf32>
    %315 = math.exp %314 : vector<8x8xf32>
    %cst_159 = arith.constant dense<0.000000e+00> : vector<8xf32>
    %316 = vector.multi_reduction <add>, %315, %cst_159 [1] : vector<8x8xf32> to vector<8xf32>
    %317 = vector.shape_cast %316 : vector<8xf32> to vector<8x1xf32>
    %318 = tpu.reciprocal %317 {approx = true} : vector<8x1xf32> -> vector<8x1xf32>
    %319 = vector.broadcast %318 : vector<8x1xf32> to vector<8x8xf32>
    %320 = arith.mulf %315, %319 : vector<8x8xf32>
    %cst_160 = arith.constant dense<0.000000e+00> : vector<8x8xf32>
    %321 = tpu.matmul %320, %305, %cst_160 {dimension_numbers = #tpu.dot_dimension_numbers<[1], [0], [0], [1], [0, 0, 1, 1], [], []>} : vector<8x8xf32>, vector<8x8xf32>, vector<8x8xf32> -> vector<8x8xf32>
    %c0_161 = arith.constant 0 : index
    %c8_162 = arith.constant 8 : index
    %322 = vector.load %arg32[%c0_161, %c8_162] : memref<16x32xf32, #tpu.memory_space<vmem>>, vector<8x8xf32>
    tpu.vector_store %arg32[%c0_161, %c8_162], %321 {strides = array<i32>} : memref<16x32xf32, #tpu.memory_space<vmem>>, vector<8x8xf32>,
    %323 = vector.extract_strided_slice %280 {offsets = [0, 16], sizes = [8, 8], strides = [1, 1]} : vector<8x32xf32> to vector<8x8xf32>
    %324 = vector.extract_strided_slice %281 {offsets = [0, 16], sizes = [8, 8], strides = [1, 1]} : vector<8x32xf32> to vector<8x8xf32>
    %325 = vector.extract_strided_slice %282 {offsets = [0, 16], sizes = [8, 8], strides = [1, 1]} : vector<8x32xf32> to vector<8x8xf32>
    %cst_163 = arith.constant dense<0.000000e+00> : vector<8x8xf32>
    %326 = tpu.matmul %323, %324, %cst_163 {dimension_numbers = #tpu.dot_dimension_numbers<[1], [1], [0], [0], [0, 0, 1, 0], [], []>} : vector<8x8xf32>, vector<8x8xf32>, vector<8x8xf32> -> vector<8x8xf32>
    %cst_164 = arith.constant 0.353553385 : f32
    %327 = vector.broadcast %cst_164 : f32 to vector<8x8xf32>
    %328 = arith.mulf %326, %327 : vector<8x8xf32>
    %cst_165 = arith.constant -1.000000e+09 : f32
    %329 = vector.broadcast %cst_165 : f32 to vector<8x8xf32>
    %330 = arith.select %279, %329, %328 : vector<8x8xi1>, vector<8x8xf32>
    %cst_166 = arith.constant dense<0xFF800000> : vector<8xf32>
    %331 = vector.multi_reduction <maximumf>, %330, %cst_166 [1] : vector<8x8xf32> to vector<8xf32>
    %332 = vector.shape_cast %331 : vector<8xf32> to vector<8x1xf32>
    %333 = vector.broadcast %332 : vector<8x1xf32> to vector<8x8xf32>
    %334 = arith.subf %330, %333 : vector<8x8xf32>
    %335 = math.exp %334 : vector<8x8xf32>
    %cst_167 = arith.constant dense<0.000000e+00> : vector<8xf32>
    %336 = vector.multi_reduction <add>, %335, %cst_167 [1] : vector<8x8xf32> to vector<8xf32>
    %337 = vector.shape_cast %336 : vector<8xf32> to vector<8x1xf32>
    %338 = tpu.reciprocal %337 {approx = true} : vector<8x1xf32> -> vector<8x1xf32>
    %339 = vector.broadcast %338 : vector<8x1xf32> to vector<8x8xf32>
    %340 = arith.mulf %335, %339 : vector<8x8xf32>
    %cst_168 = arith.constant dense<0.000000e+00> : vector<8x8xf32>
    %341 = tpu.matmul %340, %325, %cst_168 {dimension_numbers = #tpu.dot_dimension_numbers<[1], [0], [0], [1], [0, 0, 1, 1], [], []>} : vector<8x8xf32>, vector<8x8xf32>, vector<8x8xf32> -> vector<8x8xf32>
    %c0_169 = arith.constant 0 : index
    %c16_170 = arith.constant 16 : index
    %342 = vector.load %arg32[%c0_169, %c16_170] : memref<16x32xf32, #tpu.memory_space<vmem>>, vector<8x8xf32>
    tpu.vector_store %arg32[%c0_169, %c16_170], %341 {strides = array<i32>} : memref<16x32xf32, #tpu.memory_space<vmem>>, vector<8x8xf32>,
    %343 = vector.extract_strided_slice %280 {offsets = [0, 24], sizes = [8, 8], strides = [1, 1]} : vector<8x32xf32> to vector<8x8xf32>
    %344 = vector.extract_strided_slice %281 {offsets = [0, 24], sizes = [8, 8], strides = [1, 1]} : vector<8x32xf32> to vector<8x8xf32>
    %345 = vector.extract_strided_slice %282 {offsets = [0, 24], sizes = [8, 8], strides = [1, 1]} : vector<8x32xf32> to vector<8x8xf32>
    %cst_171 = arith.constant dense<0.000000e+00> : vector<8x8xf32>
    %346 = tpu.matmul %343, %344, %cst_171 {dimension_numbers = #tpu.dot_dimension_numbers<[1], [1], [0], [0], [0, 0, 1, 0], [], []>} : vector<8x8xf32>, vector<8x8xf32>, vector<8x8xf32> -> vector<8x8xf32>
    %cst_172 = arith.constant 0.353553385 : f32
    %347 = vector.broadcast %cst_172 : f32 to vector<8x8xf32>
    %348 = arith.mulf %346, %347 : vector<8x8xf32>
    %cst_173 = arith.constant -1.000000e+09 : f32
    %349 = vector.broadcast %cst_173 : f32 to vector<8x8xf32>
    %350 = arith.select %279, %349, %348 : vector<8x8xi1>, vector<8x8xf32>
    %cst_174 = arith.constant dense<0xFF800000> : vector<8xf32>
    %351 = vector.multi_reduction <maximumf>, %350, %cst_174 [1] : vector<8x8xf32> to vector<8xf32>
    %352 = vector.shape_cast %351 : vector<8xf32> to vector<8x1xf32>
    %353 = vector.broadcast %352 : vector<8x1xf32> to vector<8x8xf32>
    %354 = arith.subf %350, %353 : vector<8x8xf32>
    %355 = math.exp %354 : vector<8x8xf32>
    %cst_175 = arith.constant dense<0.000000e+00> : vector<8xf32>
    %356 = vector.multi_reduction <add>, %355, %cst_175 [1] : vector<8x8xf32> to vector<8xf32>
    %357 = vector.shape_cast %356 : vector<8xf32> to vector<8x1xf32>
    %358 = tpu.reciprocal %357 {approx = true} : vector<8x1xf32> -> vector<8x1xf32>
    %359 = vector.broadcast %358 : vector<8x1xf32> to vector<8x8xf32>
    %360 = arith.mulf %355, %359 : vector<8x8xf32>
    %cst_176 = arith.constant dense<0.000000e+00> : vector<8x8xf32>
    %361 = tpu.matmul %360, %345, %cst_176 {dimension_numbers = #tpu.dot_dimension_numbers<[1], [0], [0], [1], [0, 0, 1, 1], [], []>} : vector<8x8xf32>, vector<8x8xf32>, vector<8x8xf32> -> vector<8x8xf32>
    %c0_177 = arith.constant 0 : index
    %c24_178 = arith.constant 24 : index
    %362 = vector.load %arg32[%c0_177, %c24_178] : memref<16x32xf32, #tpu.memory_space<vmem>>, vector<8x8xf32>
    tpu.vector_store %arg32[%c0_177, %c24_178], %361 {strides = array<i32>} : memref<16x32xf32, #tpu.memory_space<vmem>>, vector<8x8xf32>,
    %363 = vector.extract_strided_slice %6 {offsets = [1, 0], sizes = [1, 8], strides = [1, 1]} : vector<2x8xf32> to vector<1x8xf32>
    %cst_179 = arith.constant 0.000000e+00 : f32
    %364 = vector.broadcast %cst_179 : f32 to vector<1x8xf32>
    %365 = arith.cmpf ogt, %363, %364 : vector<1x8xf32>
    %366 = vector.broadcast %365 : vector<1x8xi1> to vector<8x8xi1>
    %367 = arith.ori %274, %366 : vector<8x8xi1>
    %368 = vector.extract_strided_slice %265 {offsets = [8, 0], sizes = [8, 32], strides = [1, 1]} : vector<16x32xf32> to vector<8x32xf32>
    %369 = vector.extract_strided_slice %268 {offsets = [8, 0], sizes = [8, 32], strides = [1, 1]} : vector<16x32xf32> to vector<8x32xf32>
    %370 = vector.extract_strided_slice %271 {offsets = [8, 0], sizes = [8, 32], strides = [1, 1]} : vector<16x32xf32> to vector<8x32xf32>
    %371 = vector.extract_strided_slice %368 {offsets = [0, 0], sizes = [8, 8], strides = [1, 1]} : vector<8x32xf32> to vector<8x8xf32>
    %372 = vector.extract_strided_slice %369 {offsets = [0, 0], sizes = [8, 8], strides = [1, 1]} : vector<8x32xf32> to vector<8x8xf32>
    %373 = vector.extract_strided_slice %370 {offsets = [0, 0], sizes = [8, 8], strides = [1, 1]} : vector<8x32xf32> to vector<8x8xf32>
    %cst_180 = arith.constant dense<0.000000e+00> : vector<8x8xf32>
    %374 = tpu.matmul %371, %372, %cst_180 {dimension_numbers = #tpu.dot_dimension_numbers<[1], [1], [0], [0], [0, 0, 1, 0], [], []>} : vector<8x8xf32>, vector<8x8xf32>, vector<8x8xf32> -> vector<8x8xf32>
    %cst_181 = arith.constant 0.353553385 : f32
    %375 = vector.broadcast %cst_181 : f32 to vector<8x8xf32>
    %376 = arith.mulf %374, %375 : vector<8x8xf32>
    %cst_182 = arith.constant -1.000000e+09 : f32
    %377 = vector.broadcast %cst_182 : f32 to vector<8x8xf32>
    %378 = arith.select %367, %377, %376 : vector<8x8xi1>, vector<8x8xf32>
    %cst_183 = arith.constant dense<0xFF800000> : vector<8xf32>
    %379 = vector.multi_reduction <maximumf>, %378, %cst_183 [1] : vector<8x8xf32> to vector<8xf32>
    %380 = vector.shape_cast %379 : vector<8xf32> to vector<8x1xf32>
    %381 = vector.broadcast %380 : vector<8x1xf32> to vector<8x8xf32>
    %382 = arith.subf %378, %381 : vector<8x8xf32>
    %383 = math.exp %382 : vector<8x8xf32>
    %cst_184 = arith.constant dense<0.000000e+00> : vector<8xf32>
    %384 = vector.multi_reduction <add>, %383, %cst_184 [1] : vector<8x8xf32> to vector<8xf32>
    %385 = vector.shape_cast %384 : vector<8xf32> to vector<8x1xf32>
    %386 = tpu.reciprocal %385 {approx = true} : vector<8x1xf32> -> vector<8x1xf32>
    %387 = vector.broadcast %386 : vector<8x1xf32> to vector<8x8xf32>
    %388 = arith.mulf %383, %387 : vector<8x8xf32>
    %cst_185 = arith.constant dense<0.000000e+00> : vector<8x8xf32>
    %389 = tpu.matmul %388, %373, %cst_185 {dimension_numbers = #tpu.dot_dimension_numbers<[1], [0], [0], [1], [0, 0, 1, 1], [], []>} : vector<8x8xf32>, vector<8x8xf32>, vector<8x8xf32> -> vector<8x8xf32>
    %c8_186 = arith.constant 8 : index
    %c0_187 = arith.constant 0 : index
    %390 = vector.load %arg32[%c8_186, %c0_187] : memref<16x32xf32, #tpu.memory_space<vmem>>, vector<8x8xf32>
    tpu.vector_store %arg32[%c8_186, %c0_187], %389 {strides = array<i32>} : memref<16x32xf32, #tpu.memory_space<vmem>>, vector<8x8xf32>,
    %391 = vector.extract_strided_slice %368 {offsets = [0, 8], sizes = [8, 8], strides = [1, 1]} : vector<8x32xf32> to vector<8x8xf32>
    %392 = vector.extract_strided_slice %369 {offsets = [0, 8], sizes = [8, 8], strides = [1, 1]} : vector<8x32xf32> to vector<8x8xf32>
    %393 = vector.extract_strided_slice %370 {offsets = [0, 8], sizes = [8, 8], strides = [1, 1]} : vector<8x32xf32> to vector<8x8xf32>
    %cst_188 = arith.constant dense<0.000000e+00> : vector<8x8xf32>
    %394 = tpu.matmul %391, %392, %cst_188 {dimension_numbers = #tpu.dot_dimension_numbers<[1], [1], [0], [0], [0, 0, 1, 0], [], []>} : vector<8x8xf32>, vector<8x8xf32>, vector<8x8xf32> -> vector<8x8xf32>
    %cst_189 = arith.constant 0.353553385 : f32
    %395 = vector.broadcast %cst_189 : f32 to vector<8x8xf32>
    %396 = arith.mulf %394, %395 : vector<8x8xf32>
    %cst_190 = arith.constant -1.000000e+09 : f32
    %397 = vector.broadcast %cst_190 : f32 to vector<8x8xf32>
    %398 = arith.select %367, %397, %396 : vector<8x8xi1>, vector<8x8xf32>
    %cst_191 = arith.constant dense<0xFF800000> : vector<8xf32>
    %399 = vector.multi_reduction <maximumf>, %398, %cst_191 [1] : vector<8x8xf32> to vector<8xf32>
    %400 = vector.shape_cast %399 : vector<8xf32> to vector<8x1xf32>
    %401 = vector.broadcast %400 : vector<8x1xf32> to vector<8x8xf32>
    %402 = arith.subf %398, %401 : vector<8x8xf32>
    %403 = math.exp %402 : vector<8x8xf32>
    %cst_192 = arith.constant dense<0.000000e+00> : vector<8xf32>
    %404 = vector.multi_reduction <add>, %403, %cst_192 [1] : vector<8x8xf32> to vector<8xf32>
    %405 = vector.shape_cast %404 : vector<8xf32> to vector<8x1xf32>
    %406 = tpu.reciprocal %405 {approx = true} : vector<8x1xf32> -> vector<8x1xf32>
    %407 = vector.broadcast %406 : vector<8x1xf32> to vector<8x8xf32>
    %408 = arith.mulf %403, %407 : vector<8x8xf32>
    %cst_193 = arith.constant dense<0.000000e+00> : vector<8x8xf32>
    %409 = tpu.matmul %408, %393, %cst_193 {dimension_numbers = #tpu.dot_dimension_numbers<[1], [0], [0], [1], [0, 0, 1, 1], [], []>} : vector<8x8xf32>, vector<8x8xf32>, vector<8x8xf32> -> vector<8x8xf32>
    %c8_194 = arith.constant 8 : index
    %c8_195 = arith.constant 8 : index
    %410 = vector.load %arg32[%c8_194, %c8_195] : memref<16x32xf32, #tpu.memory_space<vmem>>, vector<8x8xf32>
    tpu.vector_store %arg32[%c8_194, %c8_195], %409 {strides = array<i32>} : memref<16x32xf32, #tpu.memory_space<vmem>>, vector<8x8xf32>,
    %411 = vector.extract_strided_slice %368 {offsets = [0, 16], sizes = [8, 8], strides = [1, 1]} : vector<8x32xf32> to vector<8x8xf32>
    %412 = vector.extract_strided_slice %369 {offsets = [0, 16], sizes = [8, 8], strides = [1, 1]} : vector<8x32xf32> to vector<8x8xf32>
    %413 = vector.extract_strided_slice %370 {offsets = [0, 16], sizes = [8, 8], strides = [1, 1]} : vector<8x32xf32> to vector<8x8xf32>
    %cst_196 = arith.constant dense<0.000000e+00> : vector<8x8xf32>
    %414 = tpu.matmul %411, %412, %cst_196 {dimension_numbers = #tpu.dot_dimension_numbers<[1], [1], [0], [0], [0, 0, 1, 0], [], []>} : vector<8x8xf32>, vector<8x8xf32>, vector<8x8xf32> -> vector<8x8xf32>
    %cst_197 = arith.constant 0.353553385 : f32
    %415 = vector.broadcast %cst_197 : f32 to vector<8x8xf32>
    %416 = arith.mulf %414, %415 : vector<8x8xf32>
    %cst_198 = arith.constant -1.000000e+09 : f32
    %417 = vector.broadcast %cst_198 : f32 to vector<8x8xf32>
    %418 = arith.select %367, %417, %416 : vector<8x8xi1>, vector<8x8xf32>
    %cst_199 = arith.constant dense<0xFF800000> : vector<8xf32>
    %419 = vector.multi_reduction <maximumf>, %418, %cst_199 [1] : vector<8x8xf32> to vector<8xf32>
    %420 = vector.shape_cast %419 : vector<8xf32> to vector<8x1xf32>
    %421 = vector.broadcast %420 : vector<8x1xf32> to vector<8x8xf32>
    %422 = arith.subf %418, %421 : vector<8x8xf32>
    %423 = math.exp %422 : vector<8x8xf32>
    %cst_200 = arith.constant dense<0.000000e+00> : vector<8xf32>
    %424 = vector.multi_reduction <add>, %423, %cst_200 [1] : vector<8x8xf32> to vector<8xf32>
    %425 = vector.shape_cast %424 : vector<8xf32> to vector<8x1xf32>
    %426 = tpu.reciprocal %425 {approx = true} : vector<8x1xf32> -> vector<8x1xf32>
    %427 = vector.broadcast %426 : vector<8x1xf32> to vector<8x8xf32>
    %428 = arith.mulf %423, %427 : vector<8x8xf32>
    %cst_201 = arith.constant dense<0.000000e+00> : vector<8x8xf32>
    %429 = tpu.matmul %428, %413, %cst_201 {dimension_numbers = #tpu.dot_dimension_numbers<[1], [0], [0], [1], [0, 0, 1, 1], [], []>} : vector<8x8xf32>, vector<8x8xf32>, vector<8x8xf32> -> vector<8x8xf32>
    %c8_202 = arith.constant 8 : index
    %c16_203 = arith.constant 16 : index
    %430 = vector.load %arg32[%c8_202, %c16_203] : memref<16x32xf32, #tpu.memory_space<vmem>>, vector<8x8xf32>
    tpu.vector_store %arg32[%c8_202, %c16_203], %429 {strides = array<i32>} : memref<16x32xf32, #tpu.memory_space<vmem>>, vector<8x8xf32>,
    %431 = vector.extract_strided_slice %368 {offsets = [0, 24], sizes = [8, 8], strides = [1, 1]} : vector<8x32xf32> to vector<8x8xf32>
    %432 = vector.extract_strided_slice %369 {offsets = [0, 24], sizes = [8, 8], strides = [1, 1]} : vector<8x32xf32> to vector<8x8xf32>
    %433 = vector.extract_strided_slice %370 {offsets = [0, 24], sizes = [8, 8], strides = [1, 1]} : vector<8x32xf32> to vector<8x8xf32>
    %cst_204 = arith.constant dense<0.000000e+00> : vector<8x8xf32>
    %434 = tpu.matmul %431, %432, %cst_204 {dimension_numbers = #tpu.dot_dimension_numbers<[1], [1], [0], [0], [0, 0, 1, 0], [], []>} : vector<8x8xf32>, vector<8x8xf32>, vector<8x8xf32> -> vector<8x8xf32>
    %cst_205 = arith.constant 0.353553385 : f32
    %435 = vector.broadcast %cst_205 : f32 to vector<8x8xf32>
    %436 = arith.mulf %434, %435 : vector<8x8xf32>
    %cst_206 = arith.constant -1.000000e+09 : f32
    %437 = vector.broadcast %cst_206 : f32 to vector<8x8xf32>
    %438 = arith.select %367, %437, %436 : vector<8x8xi1>, vector<8x8xf32>
    %cst_207 = arith.constant dense<0xFF800000> : vector<8xf32>
    %439 = vector.multi_reduction <maximumf>, %438, %cst_207 [1] : vector<8x8xf32> to vector<8xf32>
    %440 = vector.shape_cast %439 : vector<8xf32> to vector<8x1xf32>
    %441 = vector.broadcast %440 : vector<8x1xf32> to vector<8x8xf32>
    %442 = arith.subf %438, %441 : vector<8x8xf32>
    %443 = math.exp %442 : vector<8x8xf32>
    %cst_208 = arith.constant dense<0.000000e+00> : vector<8xf32>
    %444 = vector.multi_reduction <add>, %443, %cst_208 [1] : vector<8x8xf32> to vector<8xf32>
    %445 = vector.shape_cast %444 : vector<8xf32> to vector<8x1xf32>
    %446 = tpu.reciprocal %445 {approx = true} : vector<8x1xf32> -> vector<8x1xf32>
    %447 = vector.broadcast %446 : vector<8x1xf32> to vector<8x8xf32>
    %448 = arith.mulf %443, %447 : vector<8x8xf32>
    %cst_209 = arith.constant dense<0.000000e+00> : vector<8x8xf32>
    %449 = tpu.matmul %448, %433, %cst_209 {dimension_numbers = #tpu.dot_dimension_numbers<[1], [0], [0], [1], [0, 0, 1, 1], [], []>} : vector<8x8xf32>, vector<8x8xf32>, vector<8x8xf32> -> vector<8x8xf32>
    %c8_210 = arith.constant 8 : index
    %c24_211 = arith.constant 24 : index
    %450 = vector.load %arg32[%c8_210, %c24_211] : memref<16x32xf32, #tpu.memory_space<vmem>>, vector<8x8xf32>
    tpu.vector_store %arg32[%c8_210, %c24_211], %449 {strides = array<i32>} : memref<16x32xf32, #tpu.memory_space<vmem>>, vector<8x8xf32>,
    %c0_212 = arith.constant 0 : index
    %c0_213 = arith.constant 0 : index
    %451 = vector.load %arg32[%c0_212, %c0_213] : memref<16x32xf32, #tpu.memory_space<vmem>>, vector<16x32xf32>
    %cst_214 = arith.constant dense<0.000000e+00> : vector<16x32xf32>
    %452 = tpu.matmul %451, %256, %cst_214 {dimension_numbers = #tpu.dot_dimension_numbers<[1], [0], [0], [1], [0, 0, 1, 1], [], []>} : vector<16x32xf32>, vector<32x32xf32>, vector<16x32xf32> -> vector<16x32xf32>
    %453 = vector.broadcast %258 : vector<1x32xf32> to vector<16x32xf32>
    %454 = arith.addf %452, %453 : vector<16x32xf32>
    %455 = arith.addf %454, %242 : vector<16x32xf32>
    %cst_215 = arith.constant dense<0.000000e+00> : vector<16xf32>
    %456 = vector.multi_reduction <add>, %455, %cst_215 [1] : vector<16x32xf32> to vector<16xf32>
    %457 = vector.shape_cast %456 : vector<16xf32> to vector<16x1xf32>
    %cst_216 = arith.constant 3.200000e+01 : f32
    %458 = vector.broadcast %cst_216 : f32 to vector<16x1xf32>
    %459 = arith.divf %457, %458 : vector<16x1xf32>
    %460 = vector.broadcast %459 : vector<16x1xf32> to vector<16x32xf32>
    %461 = arith.subf %455, %460 : vector<16x32xf32>
    %462 = arith.mulf %461, %461 : vector<16x32xf32>
    %cst_217 = arith.constant dense<0.000000e+00> : vector<16xf32>
    %463 = vector.multi_reduction <add>, %462, %cst_217 [1] : vector<16x32xf32> to vector<16xf32>
    %464 = vector.shape_cast %463 : vector<16xf32> to vector<16x1xf32>
    %cst_218 = arith.constant 3.200000e+01 : f32
    %465 = vector.broadcast %cst_218 : f32 to vector<16x1xf32>
    %466 = arith.divf %464, %465 : vector<16x1xf32>
    %467 = vector.broadcast %459 : vector<16x1xf32> to vector<16x32xf32>
    %468 = arith.subf %455, %467 : vector<16x32xf32>
    %cst_219 = arith.constant 9.99999974E-6 : f32
    %469 = vector.broadcast %cst_219 : f32 to vector<16x1xf32>
    %470 = arith.addf %466, %469 : vector<16x1xf32>
    %471 = math.rsqrt %470 : vector<16x1xf32>
    %472 = vector.broadcast %471 : vector<16x1xf32> to vector<16x32xf32>
    %473 = arith.mulf %468, %472 : vector<16x32xf32>
    %474 = vector.broadcast %260 : vector<1x32xf32> to vector<16x32xf32>
    %475 = arith.mulf %473, %474 : vector<16x32xf32>
    %476 = vector.broadcast %262 : vector<1x32xf32> to vector<16x32xf32>
    %477 = arith.addf %475, %476 : vector<16x32xf32>
    %c0_220 = arith.constant 0 : index
    %c0_221 = arith.constant 0 : index
    %c0_222 = arith.constant 0 : index
    %478 = vector.load %arg25[%c0_220, %c0_221, %c0_222] : memref<2x32x64xf32, #tpu.memory_space<vmem>>, vector<1x32x64xf32>
    %479 = vector.shape_cast %478 : vector<1x32x64xf32> to vector<32x64xf32>
    %c0_223 = arith.constant 0 : index
    %c0_224 = arith.constant 0 : index
    %c0_225 = arith.constant 0 : index
    %480 = vector.load %arg26[%c0_223, %c0_224, %c0_225] : memref<2x1x64xf32, #tpu.memory_space<vmem>>, vector<1x1x64xf32>
    %481 = vector.shape_cast %480 : vector<1x1x64xf32> to vector<1x64xf32>
    %c0_226 = arith.constant 0 : index
    %c0_227 = arith.constant 0 : index
    %c0_228 = arith.constant 0 : index
    %482 = vector.load %arg27[%c0_226, %c0_227, %c0_228] : memref<2x64x32xf32, #tpu.memory_space<vmem>>, vector<1x64x32xf32>
    %483 = vector.shape_cast %482 : vector<1x64x32xf32> to vector<64x32xf32>
    %c0_229 = arith.constant 0 : index
    %c0_230 = arith.constant 0 : index
    %c0_231 = arith.constant 0 : index
    %484 = vector.load %arg28[%c0_229, %c0_230, %c0_231] : memref<2x1x32xf32, #tpu.memory_space<vmem>>, vector<1x1x32xf32>
    %485 = vector.shape_cast %484 : vector<1x1x32xf32> to vector<1x32xf32>
    %c0_232 = arith.constant 0 : index
    %c0_233 = arith.constant 0 : index
    %c0_234 = arith.constant 0 : index
    %486 = vector.load %arg29[%c0_232, %c0_233, %c0_234] : memref<2x1x32xf32, #tpu.memory_space<vmem>>, vector<1x1x32xf32>
    %487 = vector.shape_cast %486 : vector<1x1x32xf32> to vector<1x32xf32>
    %c0_235 = arith.constant 0 : index
    %c0_236 = arith.constant 0 : index
    %c0_237 = arith.constant 0 : index
    %488 = vector.load %arg30[%c0_235, %c0_236, %c0_237] : memref<2x1x32xf32, #tpu.memory_space<vmem>>, vector<1x1x32xf32>
    %489 = vector.shape_cast %488 : vector<1x1x32xf32> to vector<1x32xf32>
    %cst_238 = arith.constant dense<0.000000e+00> : vector<16x64xf32>
    %490 = tpu.matmul %477, %479, %cst_238 {dimension_numbers = #tpu.dot_dimension_numbers<[1], [0], [0], [1], [0, 0, 1, 1], [], []>} : vector<16x32xf32>, vector<32x64xf32>, vector<16x64xf32> -> vector<16x64xf32>
    %491 = vector.broadcast %481 : vector<1x64xf32> to vector<16x64xf32>
    %492 = arith.addf %490, %491 : vector<16x64xf32>
    %cst_239 = arith.constant 0.000000e+00 : f32
    %493 = vector.broadcast %cst_239 : f32 to vector<16x64xf32>
    %494 = arith.maximumf %492, %493 : vector<16x64xf32>
    %cst_240 = arith.constant dense<0.000000e+00> : vector<16x32xf32>
    %495 = tpu.matmul %494, %483, %cst_240 {dimension_numbers = #tpu.dot_dimension_numbers<[1], [0], [0], [1], [0, 0, 1, 1], [], []>} : vector<16x64xf32>, vector<64x32xf32>, vector<16x32xf32> -> vector<16x32xf32>
    %496 = vector.broadcast %485 : vector<1x32xf32> to vector<16x32xf32>
    %497 = arith.addf %495, %496 : vector<16x32xf32>
    %498 = arith.addf %497, %477 : vector<16x32xf32>
    %cst_241 = arith.constant dense<0.000000e+00> : vector<16xf32>
    %499 = vector.multi_reduction <add>, %498, %cst_241 [1] : vector<16x32xf32> to vector<16xf32>
    %500 = vector.shape_cast %499 : vector<16xf32> to vector<16x1xf32>
    %cst_242 = arith.constant 3.200000e+01 : f32
    %501 = vector.broadcast %cst_242 : f32 to vector<16x1xf32>
    %502 = arith.divf %500, %501 : vector<16x1xf32>
    %503 = vector.broadcast %502 : vector<16x1xf32> to vector<16x32xf32>
    %504 = arith.subf %498, %503 : vector<16x32xf32>
    %505 = arith.mulf %504, %504 : vector<16x32xf32>
    %cst_243 = arith.constant dense<0.000000e+00> : vector<16xf32>
    %506 = vector.multi_reduction <add>, %505, %cst_243 [1] : vector<16x32xf32> to vector<16xf32>
    %507 = vector.shape_cast %506 : vector<16xf32> to vector<16x1xf32>
    %cst_244 = arith.constant 3.200000e+01 : f32
    %508 = vector.broadcast %cst_244 : f32 to vector<16x1xf32>
    %509 = arith.divf %507, %508 : vector<16x1xf32>
    %510 = vector.broadcast %502 : vector<16x1xf32> to vector<16x32xf32>
    %511 = arith.subf %498, %510 : vector<16x32xf32>
    %cst_245 = arith.constant 9.99999974E-6 : f32
    %512 = vector.broadcast %cst_245 : f32 to vector<16x1xf32>
    %513 = arith.addf %509, %512 : vector<16x1xf32>
    %514 = math.rsqrt %513 : vector<16x1xf32>
    %515 = vector.broadcast %514 : vector<16x1xf32> to vector<16x32xf32>
    %516 = arith.mulf %511, %515 : vector<16x32xf32>
    %517 = vector.broadcast %487 : vector<1x32xf32> to vector<16x32xf32>
    %518 = arith.mulf %516, %517 : vector<16x32xf32>
    %519 = vector.broadcast %489 : vector<1x32xf32> to vector<16x32xf32>
    %520 = arith.addf %518, %519 : vector<16x32xf32>
    %c1 = arith.constant 1 : index
    %c0_246 = arith.constant 0 : index
    %c0_247 = arith.constant 0 : index
    %521 = vector.load %arg5[%c1, %c0_246, %c0_247] : memref<2x32x32xf32, #tpu.memory_space<vmem>>, vector<1x32x32xf32>
    %522 = vector.shape_cast %521 : vector<1x32x32xf32> to vector<32x32xf32>
    %c1_248 = arith.constant 1 : index
    %c0_249 = arith.constant 0 : index
    %c0_250 = arith.constant 0 : index
    %523 = vector.load %arg6[%c1_248, %c0_249, %c0_250] : memref<2x32x32xf32, #tpu.memory_space<vmem>>, vector<1x32x32xf32>
    %524 = vector.shape_cast %523 : vector<1x32x32xf32> to vector<32x32xf32>
    %c1_251 = arith.constant 1 : index
    %c0_252 = arith.constant 0 : index
    %c0_253 = arith.constant 0 : index
    %525 = vector.load %arg7[%c1_251, %c0_252, %c0_253] : memref<2x32x32xf32, #tpu.memory_space<vmem>>, vector<1x32x32xf32>
    %526 = vector.shape_cast %525 : vector<1x32x32xf32> to vector<32x32xf32>
    %c1_254 = arith.constant 1 : index
    %c0_255 = arith.constant 0 : index
    %c0_256 = arith.constant 0 : index
    %527 = vector.load %arg8[%c1_254, %c0_255, %c0_256] : memref<2x1x32xf32, #tpu.memory_space<vmem>>, vector<1x1x32xf32>
    %528 = vector.shape_cast %527 : vector<1x1x32xf32> to vector<1x32xf32>
    %c1_257 = arith.constant 1 : index
    %c0_258 = arith.constant 0 : index
    %c0_259 = arith.constant 0 : index
    %529 = vector.load %arg9[%c1_257, %c0_258, %c0_259] : memref<2x1x32xf32, #tpu.memory_space<vmem>>, vector<1x1x32xf32>
    %530 = vector.shape_cast %529 : vector<1x1x32xf32> to vector<1x32xf32>
    %c1_260 = arith.constant 1 : index
    %c0_261 = arith.constant 0 : index
    %c0_262 = arith.constant 0 : index
    %531 = vector.load %arg10[%c1_260, %c0_261, %c0_262] : memref<2x1x32xf32, #tpu.memory_space<vmem>>, vector<1x1x32xf32>
    %532 = vector.shape_cast %531 : vector<1x1x32xf32> to vector<1x32xf32>
    %c1_263 = arith.constant 1 : index
    %c0_264 = arith.constant 0 : index
    %c0_265 = arith.constant 0 : index
    %533 = vector.load %arg11[%c1_263, %c0_264, %c0_265] : memref<2x32x32xf32, #tpu.memory_space<vmem>>, vector<1x32x32xf32>
    %534 = vector.shape_cast %533 : vector<1x32x32xf32> to vector<32x32xf32>
    %c1_266 = arith.constant 1 : index
    %c0_267 = arith.constant 0 : index
    %c0_268 = arith.constant 0 : index
    %535 = vector.load %arg12[%c1_266, %c0_267, %c0_268] : memref<2x1x32xf32, #tpu.memory_space<vmem>>, vector<1x1x32xf32>
    %536 = vector.shape_cast %535 : vector<1x1x32xf32> to vector<1x32xf32>
    %c1_269 = arith.constant 1 : index
    %c0_270 = arith.constant 0 : index
    %c0_271 = arith.constant 0 : index
    %537 = vector.load %arg13[%c1_269, %c0_270, %c0_271] : memref<2x1x32xf32, #tpu.memory_space<vmem>>, vector<1x1x32xf32>
    %538 = vector.shape_cast %537 : vector<1x1x32xf32> to vector<1x32xf32>
    %c1_272 = arith.constant 1 : index
    %c0_273 = arith.constant 0 : index
    %c0_274 = arith.constant 0 : index
    %539 = vector.load %arg14[%c1_272, %c0_273, %c0_274] : memref<2x1x32xf32, #tpu.memory_space<vmem>>, vector<1x1x32xf32>
    %540 = vector.shape_cast %539 : vector<1x1x32xf32> to vector<1x32xf32>
    %cst_275 = arith.constant dense<0.000000e+00> : vector<16x32xf32>
    %541 = tpu.matmul %520, %522, %cst_275 {dimension_numbers = #tpu.dot_dimension_numbers<[1], [0], [0], [1], [0, 0, 1, 1], [], []>} : vector<16x32xf32>, vector<32x32xf32>, vector<16x32xf32> -> vector<16x32xf32>
    %542 = vector.broadcast %528 : vector<1x32xf32> to vector<16x32xf32>
    %543 = arith.addf %541, %542 : vector<16x32xf32>
    %cst_276 = arith.constant dense<0.000000e+00> : vector<16x32xf32>
    %544 = tpu.matmul %520, %524, %cst_276 {dimension_numbers = #tpu.dot_dimension_numbers<[1], [0], [0], [1], [0, 0, 1, 1], [], []>} : vector<16x32xf32>, vector<32x32xf32>, vector<16x32xf32> -> vector<16x32xf32>
    %545 = vector.broadcast %530 : vector<1x32xf32> to vector<16x32xf32>
    %546 = arith.addf %544, %545 : vector<16x32xf32>
    %cst_277 = arith.constant dense<0.000000e+00> : vector<16x32xf32>
    %547 = tpu.matmul %520, %526, %cst_277 {dimension_numbers = #tpu.dot_dimension_numbers<[1], [0], [0], [1], [0, 0, 1, 1], [], []>} : vector<16x32xf32>, vector<32x32xf32>, vector<16x32xf32> -> vector<16x32xf32>
    %548 = vector.broadcast %532 : vector<1x32xf32> to vector<16x32xf32>
    %549 = arith.addf %547, %548 : vector<16x32xf32>
    %550 = tpu.iota {dimensions = array<i32: 0>} : vector<8x8xi32>
    %551 = tpu.iota {dimensions = array<i32: 1>} : vector<8x8xi32>
    %552 = arith.cmpi sgt, %551, %550 : vector<8x8xi32>
    %553 = vector.extract_strided_slice %5 {offsets = [0, 0], sizes = [1, 8], strides = [1, 1]} : vector<2x8xf32> to vector<1x8xf32>
    %cst_278 = arith.constant 0.000000e+00 : f32
    %554 = vector.broadcast %cst_278 : f32 to vector<1x8xf32>
    %555 = arith.cmpf ogt, %553, %554 : vector<1x8xf32>
    %556 = vector.broadcast %555 : vector<1x8xi1> to vector<8x8xi1>
    %557 = arith.ori %552, %556 : vector<8x8xi1>
    %558 = vector.extract_strided_slice %543 {offsets = [0, 0], sizes = [8, 32], strides = [1, 1]} : vector<16x32xf32> to vector<8x32xf32>
    %559 = vector.extract_strided_slice %546 {offsets = [0, 0], sizes = [8, 32], strides = [1, 1]} : vector<16x32xf32> to vector<8x32xf32>
    %560 = vector.extract_strided_slice %549 {offsets = [0, 0], sizes = [8, 32], strides = [1, 1]} : vector<16x32xf32> to vector<8x32xf32>
    %561 = vector.extract_strided_slice %558 {offsets = [0, 0], sizes = [8, 8], strides = [1, 1]} : vector<8x32xf32> to vector<8x8xf32>
    %562 = vector.extract_strided_slice %559 {offsets = [0, 0], sizes = [8, 8], strides = [1, 1]} : vector<8x32xf32> to vector<8x8xf32>
    %563 = vector.extract_strided_slice %560 {offsets = [0, 0], sizes = [8, 8], strides = [1, 1]} : vector<8x32xf32> to vector<8x8xf32>
    %cst_279 = arith.constant dense<0.000000e+00> : vector<8x8xf32>
    %564 = tpu.matmul %561, %562, %cst_279 {dimension_numbers = #tpu.dot_dimension_numbers<[1], [1], [0], [0], [0, 0, 1, 0], [], []>} : vector<8x8xf32>, vector<8x8xf32>, vector<8x8xf32> -> vector<8x8xf32>
    %cst_280 = arith.constant 0.353553385 : f32
    %565 = vector.broadcast %cst_280 : f32 to vector<8x8xf32>
    %566 = arith.mulf %564, %565 : vector<8x8xf32>
    %cst_281 = arith.constant -1.000000e+09 : f32
    %567 = vector.broadcast %cst_281 : f32 to vector<8x8xf32>
    %568 = arith.select %557, %567, %566 : vector<8x8xi1>, vector<8x8xf32>
    %cst_282 = arith.constant dense<0xFF800000> : vector<8xf32>
    %569 = vector.multi_reduction <maximumf>, %568, %cst_282 [1] : vector<8x8xf32> to vector<8xf32>
    %570 = vector.shape_cast %569 : vector<8xf32> to vector<8x1xf32>
    %571 = vector.broadcast %570 : vector<8x1xf32> to vector<8x8xf32>
    %572 = arith.subf %568, %571 : vector<8x8xf32>
    %573 = math.exp %572 : vector<8x8xf32>
    %cst_283 = arith.constant dense<0.000000e+00> : vector<8xf32>
    %574 = vector.multi_reduction <add>, %573, %cst_283 [1] : vector<8x8xf32> to vector<8xf32>
    %575 = vector.shape_cast %574 : vector<8xf32> to vector<8x1xf32>
    %576 = tpu.reciprocal %575 {approx = true} : vector<8x1xf32> -> vector<8x1xf32>
    %577 = vector.broadcast %576 : vector<8x1xf32> to vector<8x8xf32>
    %578 = arith.mulf %573, %577 : vector<8x8xf32>
    %cst_284 = arith.constant dense<0.000000e+00> : vector<8x8xf32>
    %579 = tpu.matmul %578, %563, %cst_284 {dimension_numbers = #tpu.dot_dimension_numbers<[1], [0], [0], [1], [0, 0, 1, 1], [], []>} : vector<8x8xf32>, vector<8x8xf32>, vector<8x8xf32> -> vector<8x8xf32>
    %c0_285 = arith.constant 0 : index
    %c0_286 = arith.constant 0 : index
    %580 = vector.load %arg32[%c0_285, %c0_286] : memref<16x32xf32, #tpu.memory_space<vmem>>, vector<8x8xf32>
    tpu.vector_store %arg32[%c0_285, %c0_286], %579 {strides = array<i32>} : memref<16x32xf32, #tpu.memory_space<vmem>>, vector<8x8xf32>,
    %581 = vector.extract_strided_slice %558 {offsets = [0, 8], sizes = [8, 8], strides = [1, 1]} : vector<8x32xf32> to vector<8x8xf32>
    %582 = vector.extract_strided_slice %559 {offsets = [0, 8], sizes = [8, 8], strides = [1, 1]} : vector<8x32xf32> to vector<8x8xf32>
    %583 = vector.extract_strided_slice %560 {offsets = [0, 8], sizes = [8, 8], strides = [1, 1]} : vector<8x32xf32> to vector<8x8xf32>
    %cst_287 = arith.constant dense<0.000000e+00> : vector<8x8xf32>
    %584 = tpu.matmul %581, %582, %cst_287 {dimension_numbers = #tpu.dot_dimension_numbers<[1], [1], [0], [0], [0, 0, 1, 0], [], []>} : vector<8x8xf32>, vector<8x8xf32>, vector<8x8xf32> -> vector<8x8xf32>
    %cst_288 = arith.constant 0.353553385 : f32
    %585 = vector.broadcast %cst_288 : f32 to vector<8x8xf32>
    %586 = arith.mulf %584, %585 : vector<8x8xf32>
    %cst_289 = arith.constant -1.000000e+09 : f32
    %587 = vector.broadcast %cst_289 : f32 to vector<8x8xf32>
    %588 = arith.select %557, %587, %586 : vector<8x8xi1>, vector<8x8xf32>
    %cst_290 = arith.constant dense<0xFF800000> : vector<8xf32>
    %589 = vector.multi_reduction <maximumf>, %588, %cst_290 [1] : vector<8x8xf32> to vector<8xf32>
    %590 = vector.shape_cast %589 : vector<8xf32> to vector<8x1xf32>
    %591 = vector.broadcast %590 : vector<8x1xf32> to vector<8x8xf32>
    %592 = arith.subf %588, %591 : vector<8x8xf32>
    %593 = math.exp %592 : vector<8x8xf32>
    %cst_291 = arith.constant dense<0.000000e+00> : vector<8xf32>
    %594 = vector.multi_reduction <add>, %593, %cst_291 [1] : vector<8x8xf32> to vector<8xf32>
    %595 = vector.shape_cast %594 : vector<8xf32> to vector<8x1xf32>
    %596 = tpu.reciprocal %595 {approx = true} : vector<8x1xf32> -> vector<8x1xf32>
    %597 = vector.broadcast %596 : vector<8x1xf32> to vector<8x8xf32>
    %598 = arith.mulf %593, %597 : vector<8x8xf32>
    %cst_292 = arith.constant dense<0.000000e+00> : vector<8x8xf32>
    %599 = tpu.matmul %598, %583, %cst_292 {dimension_numbers = #tpu.dot_dimension_numbers<[1], [0], [0], [1], [0, 0, 1, 1], [], []>} : vector<8x8xf32>, vector<8x8xf32>, vector<8x8xf32> -> vector<8x8xf32>
    %c0_293 = arith.constant 0 : index
    %c8_294 = arith.constant 8 : index
    %600 = vector.load %arg32[%c0_293, %c8_294] : memref<16x32xf32, #tpu.memory_space<vmem>>, vector<8x8xf32>
    tpu.vector_store %arg32[%c0_293, %c8_294], %599 {strides = array<i32>} : memref<16x32xf32, #tpu.memory_space<vmem>>, vector<8x8xf32>,
    %601 = vector.extract_strided_slice %558 {offsets = [0, 16], sizes = [8, 8], strides = [1, 1]} : vector<8x32xf32> to vector<8x8xf32>
    %602 = vector.extract_strided_slice %559 {offsets = [0, 16], sizes = [8, 8], strides = [1, 1]} : vector<8x32xf32> to vector<8x8xf32>
    %603 = vector.extract_strided_slice %560 {offsets = [0, 16], sizes = [8, 8], strides = [1, 1]} : vector<8x32xf32> to vector<8x8xf32>
    %cst_295 = arith.constant dense<0.000000e+00> : vector<8x8xf32>
    %604 = tpu.matmul %601, %602, %cst_295 {dimension_numbers = #tpu.dot_dimension_numbers<[1], [1], [0], [0], [0, 0, 1, 0], [], []>} : vector<8x8xf32>, vector<8x8xf32>, vector<8x8xf32> -> vector<8x8xf32>
    %cst_296 = arith.constant 0.353553385 : f32
    %605 = vector.broadcast %cst_296 : f32 to vector<8x8xf32>
    %606 = arith.mulf %604, %605 : vector<8x8xf32>
    %cst_297 = arith.constant -1.000000e+09 : f32
    %607 = vector.broadcast %cst_297 : f32 to vector<8x8xf32>
    %608 = arith.select %557, %607, %606 : vector<8x8xi1>, vector<8x8xf32>
    %cst_298 = arith.constant dense<0xFF800000> : vector<8xf32>
    %609 = vector.multi_reduction <maximumf>, %608, %cst_298 [1] : vector<8x8xf32> to vector<8xf32>
    %610 = vector.shape_cast %609 : vector<8xf32> to vector<8x1xf32>
    %611 = vector.broadcast %610 : vector<8x1xf32> to vector<8x8xf32>
    %612 = arith.subf %608, %611 : vector<8x8xf32>
    %613 = math.exp %612 : vector<8x8xf32>
    %cst_299 = arith.constant dense<0.000000e+00> : vector<8xf32>
    %614 = vector.multi_reduction <add>, %613, %cst_299 [1] : vector<8x8xf32> to vector<8xf32>
    %615 = vector.shape_cast %614 : vector<8xf32> to vector<8x1xf32>
    %616 = tpu.reciprocal %615 {approx = true} : vector<8x1xf32> -> vector<8x1xf32>
    %617 = vector.broadcast %616 : vector<8x1xf32> to vector<8x8xf32>
    %618 = arith.mulf %613, %617 : vector<8x8xf32>
    %cst_300 = arith.constant dense<0.000000e+00> : vector<8x8xf32>
    %619 = tpu.matmul %618, %603, %cst_300 {dimension_numbers = #tpu.dot_dimension_numbers<[1], [0], [0], [1], [0, 0, 1, 1], [], []>} : vector<8x8xf32>, vector<8x8xf32>, vector<8x8xf32> -> vector<8x8xf32>
    %c0_301 = arith.constant 0 : index
    %c16_302 = arith.constant 16 : index
    %620 = vector.load %arg32[%c0_301, %c16_302] : memref<16x32xf32, #tpu.memory_space<vmem>>, vector<8x8xf32>
    tpu.vector_store %arg32[%c0_301, %c16_302], %619 {strides = array<i32>} : memref<16x32xf32, #tpu.memory_space<vmem>>, vector<8x8xf32>,
    %621 = vector.extract_strided_slice %558 {offsets = [0, 24], sizes = [8, 8], strides = [1, 1]} : vector<8x32xf32> to vector<8x8xf32>
    %622 = vector.extract_strided_slice %559 {offsets = [0, 24], sizes = [8, 8], strides = [1, 1]} : vector<8x32xf32> to vector<8x8xf32>
    %623 = vector.extract_strided_slice %560 {offsets = [0, 24], sizes = [8, 8], strides = [1, 1]} : vector<8x32xf32> to vector<8x8xf32>
    %cst_303 = arith.constant dense<0.000000e+00> : vector<8x8xf32>
    %624 = tpu.matmul %621, %622, %cst_303 {dimension_numbers = #tpu.dot_dimension_numbers<[1], [1], [0], [0], [0, 0, 1, 0], [], []>} : vector<8x8xf32>, vector<8x8xf32>, vector<8x8xf32> -> vector<8x8xf32>
    %cst_304 = arith.constant 0.353553385 : f32
    %625 = vector.broadcast %cst_304 : f32 to vector<8x8xf32>
    %626 = arith.mulf %624, %625 : vector<8x8xf32>
    %cst_305 = arith.constant -1.000000e+09 : f32
    %627 = vector.broadcast %cst_305 : f32 to vector<8x8xf32>
    %628 = arith.select %557, %627, %626 : vector<8x8xi1>, vector<8x8xf32>
    %cst_306 = arith.constant dense<0xFF800000> : vector<8xf32>
    %629 = vector.multi_reduction <maximumf>, %628, %cst_306 [1] : vector<8x8xf32> to vector<8xf32>
    %630 = vector.shape_cast %629 : vector<8xf32> to vector<8x1xf32>
    %631 = vector.broadcast %630 : vector<8x1xf32> to vector<8x8xf32>
    %632 = arith.subf %628, %631 : vector<8x8xf32>
    %633 = math.exp %632 : vector<8x8xf32>
    %cst_307 = arith.constant dense<0.000000e+00> : vector<8xf32>
    %634 = vector.multi_reduction <add>, %633, %cst_307 [1] : vector<8x8xf32> to vector<8xf32>
    %635 = vector.shape_cast %634 : vector<8xf32> to vector<8x1xf32>
    %636 = tpu.reciprocal %635 {approx = true} : vector<8x1xf32> -> vector<8x1xf32>
    %637 = vector.broadcast %636 : vector<8x1xf32> to vector<8x8xf32>
    %638 = arith.mulf %633, %637 : vector<8x8xf32>
    %cst_308 = arith.constant dense<0.000000e+00> : vector<8x8xf32>
    %639 = tpu.matmul %638, %623, %cst_308 {dimension_numbers = #tpu.dot_dimension_numbers<[1], [0], [0], [1], [0, 0, 1, 1], [], []>} : vector<8x8xf32>, vector<8x8xf32>, vector<8x8xf32> -> vector<8x8xf32>
    %c0_309 = arith.constant 0 : index
    %c24_310 = arith.constant 24 : index
    %640 = vector.load %arg32[%c0_309, %c24_310] : memref<16x32xf32, #tpu.memory_space<vmem>>, vector<8x8xf32>
    tpu.vector_store %arg32[%c0_309, %c24_310], %639 {strides = array<i32>} : memref<16x32xf32, #tpu.memory_space<vmem>>, vector<8x8xf32>,
    %641 = vector.extract_strided_slice %5 {offsets = [1, 0], sizes = [1, 8], strides = [1, 1]} : vector<2x8xf32> to vector<1x8xf32>
    %cst_311 = arith.constant 0.000000e+00 : f32
    %642 = vector.broadcast %cst_311 : f32 to vector<1x8xf32>
    %643 = arith.cmpf ogt, %641, %642 : vector<1x8xf32>
    %644 = vector.broadcast %643 : vector<1x8xi1> to vector<8x8xi1>
    %645 = arith.ori %552, %644 : vector<8x8xi1>
    %646 = vector.extract_strided_slice %543 {offsets = [8, 0], sizes = [8, 32], strides = [1, 1]} : vector<16x32xf32> to vector<8x32xf32>
    %647 = vector.extract_strided_slice %546 {offsets = [8, 0], sizes = [8, 32], strides = [1, 1]} : vector<16x32xf32> to vector<8x32xf32>
    %648 = vector.extract_strided_slice %549 {offsets = [8, 0], sizes = [8, 32], strides = [1, 1]} : vector<16x32xf32> to vector<8x32xf32>
    %649 = vector.extract_strided_slice %646 {offsets = [0, 0], sizes = [8, 8], strides = [1, 1]} : vector<8x32xf32> to vector<8x8xf32>
    %650 = vector.extract_strided_slice %647 {offsets = [0, 0], sizes = [8, 8], strides = [1, 1]} : vector<8x32xf32> to vector<8x8xf32>
    %651 = vector.extract_strided_slice %648 {offsets = [0, 0], sizes = [8, 8], strides = [1, 1]} : vector<8x32xf32> to vector<8x8xf32>
    %cst_312 = arith.constant dense<0.000000e+00> : vector<8x8xf32>
    %652 = tpu.matmul %649, %650, %cst_312 {dimension_numbers = #tpu.dot_dimension_numbers<[1], [1], [0], [0], [0, 0, 1, 0], [], []>} : vector<8x8xf32>, vector<8x8xf32>, vector<8x8xf32> -> vector<8x8xf32>
    %cst_313 = arith.constant 0.353553385 : f32
    %653 = vector.broadcast %cst_313 : f32 to vector<8x8xf32>
    %654 = arith.mulf %652, %653 : vector<8x8xf32>
    %cst_314 = arith.constant -1.000000e+09 : f32
    %655 = vector.broadcast %cst_314 : f32 to vector<8x8xf32>
    %656 = arith.select %645, %655, %654 : vector<8x8xi1>, vector<8x8xf32>
    %cst_315 = arith.constant dense<0xFF800000> : vector<8xf32>
    %657 = vector.multi_reduction <maximumf>, %656, %cst_315 [1] : vector<8x8xf32> to vector<8xf32>
    %658 = vector.shape_cast %657 : vector<8xf32> to vector<8x1xf32>
    %659 = vector.broadcast %658 : vector<8x1xf32> to vector<8x8xf32>
    %660 = arith.subf %656, %659 : vector<8x8xf32>
    %661 = math.exp %660 : vector<8x8xf32>
    %cst_316 = arith.constant dense<0.000000e+00> : vector<8xf32>
    %662 = vector.multi_reduction <add>, %661, %cst_316 [1] : vector<8x8xf32> to vector<8xf32>
    %663 = vector.shape_cast %662 : vector<8xf32> to vector<8x1xf32>
    %664 = tpu.reciprocal %663 {approx = true} : vector<8x1xf32> -> vector<8x1xf32>
    %665 = vector.broadcast %664 : vector<8x1xf32> to vector<8x8xf32>
    %666 = arith.mulf %661, %665 : vector<8x8xf32>
    %cst_317 = arith.constant dense<0.000000e+00> : vector<8x8xf32>
    %667 = tpu.matmul %666, %651, %cst_317 {dimension_numbers = #tpu.dot_dimension_numbers<[1], [0], [0], [1], [0, 0, 1, 1], [], []>} : vector<8x8xf32>, vector<8x8xf32>, vector<8x8xf32> -> vector<8x8xf32>
    %c8_318 = arith.constant 8 : index
    %c0_319 = arith.constant 0 : index
    %668 = vector.load %arg32[%c8_318, %c0_319] : memref<16x32xf32, #tpu.memory_space<vmem>>, vector<8x8xf32>
    tpu.vector_store %arg32[%c8_318, %c0_319], %667 {strides = array<i32>} : memref<16x32xf32, #tpu.memory_space<vmem>>, vector<8x8xf32>,
    %669 = vector.extract_strided_slice %646 {offsets = [0, 8], sizes = [8, 8], strides = [1, 1]} : vector<8x32xf32> to vector<8x8xf32>
    %670 = vector.extract_strided_slice %647 {offsets = [0, 8], sizes = [8, 8], strides = [1, 1]} : vector<8x32xf32> to vector<8x8xf32>
    %671 = vector.extract_strided_slice %648 {offsets = [0, 8], sizes = [8, 8], strides = [1, 1]} : vector<8x32xf32> to vector<8x8xf32>
    %cst_320 = arith.constant dense<0.000000e+00> : vector<8x8xf32>
    %672 = tpu.matmul %669, %670, %cst_320 {dimension_numbers = #tpu.dot_dimension_numbers<[1], [1], [0], [0], [0, 0, 1, 0], [], []>} : vector<8x8xf32>, vector<8x8xf32>, vector<8x8xf32> -> vector<8x8xf32>
    %cst_321 = arith.constant 0.353553385 : f32
    %673 = vector.broadcast %cst_321 : f32 to vector<8x8xf32>
    %674 = arith.mulf %672, %673 : vector<8x8xf32>
    %cst_322 = arith.constant -1.000000e+09 : f32
    %675 = vector.broadcast %cst_322 : f32 to vector<8x8xf32>
    %676 = arith.select %645, %675, %674 : vector<8x8xi1>, vector<8x8xf32>
    %cst_323 = arith.constant dense<0xFF800000> : vector<8xf32>
    %677 = vector.multi_reduction <maximumf>, %676, %cst_323 [1] : vector<8x8xf32> to vector<8xf32>
    %678 = vector.shape_cast %677 : vector<8xf32> to vector<8x1xf32>
    %679 = vector.broadcast %678 : vector<8x1xf32> to vector<8x8xf32>
    %680 = arith.subf %676, %679 : vector<8x8xf32>
    %681 = math.exp %680 : vector<8x8xf32>
    %cst_324 = arith.constant dense<0.000000e+00> : vector<8xf32>
    %682 = vector.multi_reduction <add>, %681, %cst_324 [1] : vector<8x8xf32> to vector<8xf32>
    %683 = vector.shape_cast %682 : vector<8xf32> to vector<8x1xf32>
    %684 = tpu.reciprocal %683 {approx = true} : vector<8x1xf32> -> vector<8x1xf32>
    %685 = vector.broadcast %684 : vector<8x1xf32> to vector<8x8xf32>
    %686 = arith.mulf %681, %685 : vector<8x8xf32>
    %cst_325 = arith.constant dense<0.000000e+00> : vector<8x8xf32>
    %687 = tpu.matmul %686, %671, %cst_325 {dimension_numbers = #tpu.dot_dimension_numbers<[1], [0], [0], [1], [0, 0, 1, 1], [], []>} : vector<8x8xf32>, vector<8x8xf32>, vector<8x8xf32> -> vector<8x8xf32>
    %c8_326 = arith.constant 8 : index
    %c8_327 = arith.constant 8 : index
    %688 = vector.load %arg32[%c8_326, %c8_327] : memref<16x32xf32, #tpu.memory_space<vmem>>, vector<8x8xf32>
    tpu.vector_store %arg32[%c8_326, %c8_327], %687 {strides = array<i32>} : memref<16x32xf32, #tpu.memory_space<vmem>>, vector<8x8xf32>,
    %689 = vector.extract_strided_slice %646 {offsets = [0, 16], sizes = [8, 8], strides = [1, 1]} : vector<8x32xf32> to vector<8x8xf32>
    %690 = vector.extract_strided_slice %647 {offsets = [0, 16], sizes = [8, 8], strides = [1, 1]} : vector<8x32xf32> to vector<8x8xf32>
    %691 = vector.extract_strided_slice %648 {offsets = [0, 16], sizes = [8, 8], strides = [1, 1]} : vector<8x32xf32> to vector<8x8xf32>
    %cst_328 = arith.constant dense<0.000000e+00> : vector<8x8xf32>
    %692 = tpu.matmul %689, %690, %cst_328 {dimension_numbers = #tpu.dot_dimension_numbers<[1], [1], [0], [0], [0, 0, 1, 0], [], []>} : vector<8x8xf32>, vector<8x8xf32>, vector<8x8xf32> -> vector<8x8xf32>
    %cst_329 = arith.constant 0.353553385 : f32
    %693 = vector.broadcast %cst_329 : f32 to vector<8x8xf32>
    %694 = arith.mulf %692, %693 : vector<8x8xf32>
    %cst_330 = arith.constant -1.000000e+09 : f32
    %695 = vector.broadcast %cst_330 : f32 to vector<8x8xf32>
    %696 = arith.select %645, %695, %694 : vector<8x8xi1>, vector<8x8xf32>
    %cst_331 = arith.constant dense<0xFF800000> : vector<8xf32>
    %697 = vector.multi_reduction <maximumf>, %696, %cst_331 [1] : vector<8x8xf32> to vector<8xf32>
    %698 = vector.shape_cast %697 : vector<8xf32> to vector<8x1xf32>
    %699 = vector.broadcast %698 : vector<8x1xf32> to vector<8x8xf32>
    %700 = arith.subf %696, %699 : vector<8x8xf32>
    %701 = math.exp %700 : vector<8x8xf32>
    %cst_332 = arith.constant dense<0.000000e+00> : vector<8xf32>
    %702 = vector.multi_reduction <add>, %701, %cst_332 [1] : vector<8x8xf32> to vector<8xf32>
    %703 = vector.shape_cast %702 : vector<8xf32> to vector<8x1xf32>
    %704 = tpu.reciprocal %703 {approx = true} : vector<8x1xf32> -> vector<8x1xf32>
    %705 = vector.broadcast %704 : vector<8x1xf32> to vector<8x8xf32>
    %706 = arith.mulf %701, %705 : vector<8x8xf32>
    %cst_333 = arith.constant dense<0.000000e+00> : vector<8x8xf32>
    %707 = tpu.matmul %706, %691, %cst_333 {dimension_numbers = #tpu.dot_dimension_numbers<[1], [0], [0], [1], [0, 0, 1, 1], [], []>} : vector<8x8xf32>, vector<8x8xf32>, vector<8x8xf32> -> vector<8x8xf32>
    %c8_334 = arith.constant 8 : index
    %c16_335 = arith.constant 16 : index
    %708 = vector.load %arg32[%c8_334, %c16_335] : memref<16x32xf32, #tpu.memory_space<vmem>>, vector<8x8xf32>
    tpu.vector_store %arg32[%c8_334, %c16_335], %707 {strides = array<i32>} : memref<16x32xf32, #tpu.memory_space<vmem>>, vector<8x8xf32>,
    %709 = vector.extract_strided_slice %646 {offsets = [0, 24], sizes = [8, 8], strides = [1, 1]} : vector<8x32xf32> to vector<8x8xf32>
    %710 = vector.extract_strided_slice %647 {offsets = [0, 24], sizes = [8, 8], strides = [1, 1]} : vector<8x32xf32> to vector<8x8xf32>
    %711 = vector.extract_strided_slice %648 {offsets = [0, 24], sizes = [8, 8], strides = [1, 1]} : vector<8x32xf32> to vector<8x8xf32>
    %cst_336 = arith.constant dense<0.000000e+00> : vector<8x8xf32>
    %712 = tpu.matmul %709, %710, %cst_336 {dimension_numbers = #tpu.dot_dimension_numbers<[1], [1], [0], [0], [0, 0, 1, 0], [], []>} : vector<8x8xf32>, vector<8x8xf32>, vector<8x8xf32> -> vector<8x8xf32>
    %cst_337 = arith.constant 0.353553385 : f32
    %713 = vector.broadcast %cst_337 : f32 to vector<8x8xf32>
    %714 = arith.mulf %712, %713 : vector<8x8xf32>
    %cst_338 = arith.constant -1.000000e+09 : f32
    %715 = vector.broadcast %cst_338 : f32 to vector<8x8xf32>
    %716 = arith.select %645, %715, %714 : vector<8x8xi1>, vector<8x8xf32>
    %cst_339 = arith.constant dense<0xFF800000> : vector<8xf32>
    %717 = vector.multi_reduction <maximumf>, %716, %cst_339 [1] : vector<8x8xf32> to vector<8xf32>
    %718 = vector.shape_cast %717 : vector<8xf32> to vector<8x1xf32>
    %719 = vector.broadcast %718 : vector<8x1xf32> to vector<8x8xf32>
    %720 = arith.subf %716, %719 : vector<8x8xf32>
    %721 = math.exp %720 : vector<8x8xf32>
    %cst_340 = arith.constant dense<0.000000e+00> : vector<8xf32>
    %722 = vector.multi_reduction <add>, %721, %cst_340 [1] : vector<8x8xf32> to vector<8xf32>
    %723 = vector.shape_cast %722 : vector<8xf32> to vector<8x1xf32>
    %724 = tpu.reciprocal %723 {approx = true} : vector<8x1xf32> -> vector<8x1xf32>
    %725 = vector.broadcast %724 : vector<8x1xf32> to vector<8x8xf32>
    %726 = arith.mulf %721, %725 : vector<8x8xf32>
    %cst_341 = arith.constant dense<0.000000e+00> : vector<8x8xf32>
    %727 = tpu.matmul %726, %711, %cst_341 {dimension_numbers = #tpu.dot_dimension_numbers<[1], [0], [0], [1], [0, 0, 1, 1], [], []>} : vector<8x8xf32>, vector<8x8xf32>, vector<8x8xf32> -> vector<8x8xf32>
    %c8_342 = arith.constant 8 : index
    %c24_343 = arith.constant 24 : index
    %728 = vector.load %arg32[%c8_342, %c24_343] : memref<16x32xf32, #tpu.memory_space<vmem>>, vector<8x8xf32>
    tpu.vector_store %arg32[%c8_342, %c24_343], %727 {strides = array<i32>} : memref<16x32xf32, #tpu.memory_space<vmem>>, vector<8x8xf32>,
    %c0_344 = arith.constant 0 : index
    %c0_345 = arith.constant 0 : index
    %729 = vector.load %arg32[%c0_344, %c0_345] : memref<16x32xf32, #tpu.memory_space<vmem>>, vector<16x32xf32>
    %cst_346 = arith.constant dense<0.000000e+00> : vector<16x32xf32>
    %730 = tpu.matmul %729, %534, %cst_346 {dimension_numbers = #tpu.dot_dimension_numbers<[1], [0], [0], [1], [0, 0, 1, 1], [], []>} : vector<16x32xf32>, vector<32x32xf32>, vector<16x32xf32> -> vector<16x32xf32>
    %731 = vector.broadcast %536 : vector<1x32xf32> to vector<16x32xf32>
    %732 = arith.addf %730, %731 : vector<16x32xf32>
    %733 = arith.addf %732, %520 : vector<16x32xf32>
    %cst_347 = arith.constant dense<0.000000e+00> : vector<16xf32>
    %734 = vector.multi_reduction <add>, %733, %cst_347 [1] : vector<16x32xf32> to vector<16xf32>
    %735 = vector.shape_cast %734 : vector<16xf32> to vector<16x1xf32>
    %cst_348 = arith.constant 3.200000e+01 : f32
    %736 = vector.broadcast %cst_348 : f32 to vector<16x1xf32>
    %737 = arith.divf %735, %736 : vector<16x1xf32>
    %738 = vector.broadcast %737 : vector<16x1xf32> to vector<16x32xf32>
    %739 = arith.subf %733, %738 : vector<16x32xf32>
    %740 = arith.mulf %739, %739 : vector<16x32xf32>
    %cst_349 = arith.constant dense<0.000000e+00> : vector<16xf32>
    %741 = vector.multi_reduction <add>, %740, %cst_349 [1] : vector<16x32xf32> to vector<16xf32>
    %742 = vector.shape_cast %741 : vector<16xf32> to vector<16x1xf32>
    %cst_350 = arith.constant 3.200000e+01 : f32
    %743 = vector.broadcast %cst_350 : f32 to vector<16x1xf32>
    %744 = arith.divf %742, %743 : vector<16x1xf32>
    %745 = vector.broadcast %737 : vector<16x1xf32> to vector<16x32xf32>
    %746 = arith.subf %733, %745 : vector<16x32xf32>
    %cst_351 = arith.constant 9.99999974E-6 : f32
    %747 = vector.broadcast %cst_351 : f32 to vector<16x1xf32>
    %748 = arith.addf %744, %747 : vector<16x1xf32>
    %749 = math.rsqrt %748 : vector<16x1xf32>
    %750 = vector.broadcast %749 : vector<16x1xf32> to vector<16x32xf32>
    %751 = arith.mulf %746, %750 : vector<16x32xf32>
    %752 = vector.broadcast %538 : vector<1x32xf32> to vector<16x32xf32>
    %753 = arith.mulf %751, %752 : vector<16x32xf32>
    %754 = vector.broadcast %540 : vector<1x32xf32> to vector<16x32xf32>
    %755 = arith.addf %753, %754 : vector<16x32xf32>
    %c1_352 = arith.constant 1 : index
    %c0_353 = arith.constant 0 : index
    %c0_354 = arith.constant 0 : index
    %756 = vector.load %arg15[%c1_352, %c0_353, %c0_354] : memref<2x32x32xf32, #tpu.memory_space<vmem>>, vector<1x32x32xf32>
    %757 = vector.shape_cast %756 : vector<1x32x32xf32> to vector<32x32xf32>
    %c1_355 = arith.constant 1 : index
    %c0_356 = arith.constant 0 : index
    %c0_357 = arith.constant 0 : index
    %758 = vector.load %arg16[%c1_355, %c0_356, %c0_357] : memref<2x32x32xf32, #tpu.memory_space<vmem>>, vector<1x32x32xf32>
    %759 = vector.shape_cast %758 : vector<1x32x32xf32> to vector<32x32xf32>
    %c1_358 = arith.constant 1 : index
    %c0_359 = arith.constant 0 : index
    %c0_360 = arith.constant 0 : index
    %760 = vector.load %arg17[%c1_358, %c0_359, %c0_360] : memref<2x32x32xf32, #tpu.memory_space<vmem>>, vector<1x32x32xf32>
    %761 = vector.shape_cast %760 : vector<1x32x32xf32> to vector<32x32xf32>
    %c1_361 = arith.constant 1 : index
    %c0_362 = arith.constant 0 : index
    %c0_363 = arith.constant 0 : index
    %762 = vector.load %arg18[%c1_361, %c0_362, %c0_363] : memref<2x1x32xf32, #tpu.memory_space<vmem>>, vector<1x1x32xf32>
    %763 = vector.shape_cast %762 : vector<1x1x32xf32> to vector<1x32xf32>
    %c1_364 = arith.constant 1 : index
    %c0_365 = arith.constant 0 : index
    %c0_366 = arith.constant 0 : index
    %764 = vector.load %arg19[%c1_364, %c0_365, %c0_366] : memref<2x1x32xf32, #tpu.memory_space<vmem>>, vector<1x1x32xf32>
    %765 = vector.shape_cast %764 : vector<1x1x32xf32> to vector<1x32xf32>
    %c1_367 = arith.constant 1 : index
    %c0_368 = arith.constant 0 : index
    %c0_369 = arith.constant 0 : index
    %766 = vector.load %arg20[%c1_367, %c0_368, %c0_369] : memref<2x1x32xf32, #tpu.memory_space<vmem>>, vector<1x1x32xf32>
    %767 = vector.shape_cast %766 : vector<1x1x32xf32> to vector<1x32xf32>
    %c1_370 = arith.constant 1 : index
    %c0_371 = arith.constant 0 : index
    %c0_372 = arith.constant 0 : index
    %768 = vector.load %arg21[%c1_370, %c0_371, %c0_372] : memref<2x32x32xf32, #tpu.memory_space<vmem>>, vector<1x32x32xf32>
    %769 = vector.shape_cast %768 : vector<1x32x32xf32> to vector<32x32xf32>
    %c1_373 = arith.constant 1 : index
    %c0_374 = arith.constant 0 : index
    %c0_375 = arith.constant 0 : index
    %770 = vector.load %arg22[%c1_373, %c0_374, %c0_375] : memref<2x1x32xf32, #tpu.memory_space<vmem>>, vector<1x1x32xf32>
    %771 = vector.shape_cast %770 : vector<1x1x32xf32> to vector<1x32xf32>
    %c1_376 = arith.constant 1 : index
    %c0_377 = arith.constant 0 : index
    %c0_378 = arith.constant 0 : index
    %772 = vector.load %arg23[%c1_376, %c0_377, %c0_378] : memref<2x1x32xf32, #tpu.memory_space<vmem>>, vector<1x1x32xf32>
    %773 = vector.shape_cast %772 : vector<1x1x32xf32> to vector<1x32xf32>
    %c1_379 = arith.constant 1 : index
    %c0_380 = arith.constant 0 : index
    %c0_381 = arith.constant 0 : index
    %774 = vector.load %arg24[%c1_379, %c0_380, %c0_381] : memref<2x1x32xf32, #tpu.memory_space<vmem>>, vector<1x1x32xf32>
    %775 = vector.shape_cast %774 : vector<1x1x32xf32> to vector<1x32xf32>
    %cst_382 = arith.constant dense<0.000000e+00> : vector<16x32xf32>
    %776 = tpu.matmul %755, %757, %cst_382 {dimension_numbers = #tpu.dot_dimension_numbers<[1], [0], [0], [1], [0, 0, 1, 1], [], []>} : vector<16x32xf32>, vector<32x32xf32>, vector<16x32xf32> -> vector<16x32xf32>
    %777 = vector.broadcast %763 : vector<1x32xf32> to vector<16x32xf32>
    %778 = arith.addf %776, %777 : vector<16x32xf32>
    %cst_383 = arith.constant dense<0.000000e+00> : vector<16x32xf32>
    %779 = tpu.matmul %7, %759, %cst_383 {dimension_numbers = #tpu.dot_dimension_numbers<[1], [0], [0], [1], [0, 0, 1, 1], [], []>} : vector<16x32xf32>, vector<32x32xf32>, vector<16x32xf32> -> vector<16x32xf32>
    %780 = vector.broadcast %765 : vector<1x32xf32> to vector<16x32xf32>
    %781 = arith.addf %779, %780 : vector<16x32xf32>
    %cst_384 = arith.constant dense<0.000000e+00> : vector<16x32xf32>
    %782 = tpu.matmul %7, %761, %cst_384 {dimension_numbers = #tpu.dot_dimension_numbers<[1], [0], [0], [1], [0, 0, 1, 1], [], []>} : vector<16x32xf32>, vector<32x32xf32>, vector<16x32xf32> -> vector<16x32xf32>
    %783 = vector.broadcast %767 : vector<1x32xf32> to vector<16x32xf32>
    %784 = arith.addf %782, %783 : vector<16x32xf32>
    %785 = tpu.iota {dimensions = array<i32: 0>} : vector<8x8xi32>
    %786 = tpu.iota {dimensions = array<i32: 1>} : vector<8x8xi32>
    %787 = arith.cmpi sgt, %786, %785 : vector<8x8xi32>
    %788 = vector.extract_strided_slice %6 {offsets = [0, 0], sizes = [1, 8], strides = [1, 1]} : vector<2x8xf32> to vector<1x8xf32>
    %cst_385 = arith.constant 0.000000e+00 : f32
    %789 = vector.broadcast %cst_385 : f32 to vector<1x8xf32>
    %790 = arith.cmpf ogt, %788, %789 : vector<1x8xf32>
    %791 = vector.broadcast %790 : vector<1x8xi1> to vector<8x8xi1>
    %792 = arith.ori %787, %791 : vector<8x8xi1>
    %793 = vector.extract_strided_slice %778 {offsets = [0, 0], sizes = [8, 32], strides = [1, 1]} : vector<16x32xf32> to vector<8x32xf32>
    %794 = vector.extract_strided_slice %781 {offsets = [0, 0], sizes = [8, 32], strides = [1, 1]} : vector<16x32xf32> to vector<8x32xf32>
    %795 = vector.extract_strided_slice %784 {offsets = [0, 0], sizes = [8, 32], strides = [1, 1]} : vector<16x32xf32> to vector<8x32xf32>
    %796 = vector.extract_strided_slice %793 {offsets = [0, 0], sizes = [8, 8], strides = [1, 1]} : vector<8x32xf32> to vector<8x8xf32>
    %797 = vector.extract_strided_slice %794 {offsets = [0, 0], sizes = [8, 8], strides = [1, 1]} : vector<8x32xf32> to vector<8x8xf32>
    %798 = vector.extract_strided_slice %795 {offsets = [0, 0], sizes = [8, 8], strides = [1, 1]} : vector<8x32xf32> to vector<8x8xf32>
    %cst_386 = arith.constant dense<0.000000e+00> : vector<8x8xf32>
    %799 = tpu.matmul %796, %797, %cst_386 {dimension_numbers = #tpu.dot_dimension_numbers<[1], [1], [0], [0], [0, 0, 1, 0], [], []>} : vector<8x8xf32>, vector<8x8xf32>, vector<8x8xf32> -> vector<8x8xf32>
    %cst_387 = arith.constant 0.353553385 : f32
    %800 = vector.broadcast %cst_387 : f32 to vector<8x8xf32>
    %801 = arith.mulf %799, %800 : vector<8x8xf32>
    %cst_388 = arith.constant -1.000000e+09 : f32
    %802 = vector.broadcast %cst_388 : f32 to vector<8x8xf32>
    %803 = arith.select %792, %802, %801 : vector<8x8xi1>, vector<8x8xf32>
    %cst_389 = arith.constant dense<0xFF800000> : vector<8xf32>
    %804 = vector.multi_reduction <maximumf>, %803, %cst_389 [1] : vector<8x8xf32> to vector<8xf32>
    %805 = vector.shape_cast %804 : vector<8xf32> to vector<8x1xf32>
    %806 = vector.broadcast %805 : vector<8x1xf32> to vector<8x8xf32>
    %807 = arith.subf %803, %806 : vector<8x8xf32>
    %808 = math.exp %807 : vector<8x8xf32>
    %cst_390 = arith.constant dense<0.000000e+00> : vector<8xf32>
    %809 = vector.multi_reduction <add>, %808, %cst_390 [1] : vector<8x8xf32> to vector<8xf32>
    %810 = vector.shape_cast %809 : vector<8xf32> to vector<8x1xf32>
    %811 = tpu.reciprocal %810 {approx = true} : vector<8x1xf32> -> vector<8x1xf32>
    %812 = vector.broadcast %811 : vector<8x1xf32> to vector<8x8xf32>
    %813 = arith.mulf %808, %812 : vector<8x8xf32>
    %cst_391 = arith.constant dense<0.000000e+00> : vector<8x8xf32>
    %814 = tpu.matmul %813, %798, %cst_391 {dimension_numbers = #tpu.dot_dimension_numbers<[1], [0], [0], [1], [0, 0, 1, 1], [], []>} : vector<8x8xf32>, vector<8x8xf32>, vector<8x8xf32> -> vector<8x8xf32>
    %c0_392 = arith.constant 0 : index
    %c0_393 = arith.constant 0 : index
    %815 = vector.load %arg32[%c0_392, %c0_393] : memref<16x32xf32, #tpu.memory_space<vmem>>, vector<8x8xf32>
    tpu.vector_store %arg32[%c0_392, %c0_393], %814 {strides = array<i32>} : memref<16x32xf32, #tpu.memory_space<vmem>>, vector<8x8xf32>,
    %816 = vector.extract_strided_slice %793 {offsets = [0, 8], sizes = [8, 8], strides = [1, 1]} : vector<8x32xf32> to vector<8x8xf32>
    %817 = vector.extract_strided_slice %794 {offsets = [0, 8], sizes = [8, 8], strides = [1, 1]} : vector<8x32xf32> to vector<8x8xf32>
    %818 = vector.extract_strided_slice %795 {offsets = [0, 8], sizes = [8, 8], strides = [1, 1]} : vector<8x32xf32> to vector<8x8xf32>
    %cst_394 = arith.constant dense<0.000000e+00> : vector<8x8xf32>
    %819 = tpu.matmul %816, %817, %cst_394 {dimension_numbers = #tpu.dot_dimension_numbers<[1], [1], [0], [0], [0, 0, 1, 0], [], []>} : vector<8x8xf32>, vector<8x8xf32>, vector<8x8xf32> -> vector<8x8xf32>
    %cst_395 = arith.constant 0.353553385 : f32
    %820 = vector.broadcast %cst_395 : f32 to vector<8x8xf32>
    %821 = arith.mulf %819, %820 : vector<8x8xf32>
    %cst_396 = arith.constant -1.000000e+09 : f32
    %822 = vector.broadcast %cst_396 : f32 to vector<8x8xf32>
    %823 = arith.select %792, %822, %821 : vector<8x8xi1>, vector<8x8xf32>
    %cst_397 = arith.constant dense<0xFF800000> : vector<8xf32>
    %824 = vector.multi_reduction <maximumf>, %823, %cst_397 [1] : vector<8x8xf32> to vector<8xf32>
    %825 = vector.shape_cast %824 : vector<8xf32> to vector<8x1xf32>
    %826 = vector.broadcast %825 : vector<8x1xf32> to vector<8x8xf32>
    %827 = arith.subf %823, %826 : vector<8x8xf32>
    %828 = math.exp %827 : vector<8x8xf32>
    %cst_398 = arith.constant dense<0.000000e+00> : vector<8xf32>
    %829 = vector.multi_reduction <add>, %828, %cst_398 [1] : vector<8x8xf32> to vector<8xf32>
    %830 = vector.shape_cast %829 : vector<8xf32> to vector<8x1xf32>
    %831 = tpu.reciprocal %830 {approx = true} : vector<8x1xf32> -> vector<8x1xf32>
    %832 = vector.broadcast %831 : vector<8x1xf32> to vector<8x8xf32>
    %833 = arith.mulf %828, %832 : vector<8x8xf32>
    %cst_399 = arith.constant dense<0.000000e+00> : vector<8x8xf32>
    %834 = tpu.matmul %833, %818, %cst_399 {dimension_numbers = #tpu.dot_dimension_numbers<[1], [0], [0], [1], [0, 0, 1, 1], [], []>} : vector<8x8xf32>, vector<8x8xf32>, vector<8x8xf32> -> vector<8x8xf32>
    %c0_400 = arith.constant 0 : index
    %c8_401 = arith.constant 8 : index
    %835 = vector.load %arg32[%c0_400, %c8_401] : memref<16x32xf32, #tpu.memory_space<vmem>>, vector<8x8xf32>
    tpu.vector_store %arg32[%c0_400, %c8_401], %834 {strides = array<i32>} : memref<16x32xf32, #tpu.memory_space<vmem>>, vector<8x8xf32>,
    %836 = vector.extract_strided_slice %793 {offsets = [0, 16], sizes = [8, 8], strides = [1, 1]} : vector<8x32xf32> to vector<8x8xf32>
    %837 = vector.extract_strided_slice %794 {offsets = [0, 16], sizes = [8, 8], strides = [1, 1]} : vector<8x32xf32> to vector<8x8xf32>
    %838 = vector.extract_strided_slice %795 {offsets = [0, 16], sizes = [8, 8], strides = [1, 1]} : vector<8x32xf32> to vector<8x8xf32>
    %cst_402 = arith.constant dense<0.000000e+00> : vector<8x8xf32>
    %839 = tpu.matmul %836, %837, %cst_402 {dimension_numbers = #tpu.dot_dimension_numbers<[1], [1], [0], [0], [0, 0, 1, 0], [], []>} : vector<8x8xf32>, vector<8x8xf32>, vector<8x8xf32> -> vector<8x8xf32>
    %cst_403 = arith.constant 0.353553385 : f32
    %840 = vector.broadcast %cst_403 : f32 to vector<8x8xf32>
    %841 = arith.mulf %839, %840 : vector<8x8xf32>
    %cst_404 = arith.constant -1.000000e+09 : f32
    %842 = vector.broadcast %cst_404 : f32 to vector<8x8xf32>
    %843 = arith.select %792, %842, %841 : vector<8x8xi1>, vector<8x8xf32>
    %cst_405 = arith.constant dense<0xFF800000> : vector<8xf32>
    %844 = vector.multi_reduction <maximumf>, %843, %cst_405 [1] : vector<8x8xf32> to vector<8xf32>
    %845 = vector.shape_cast %844 : vector<8xf32> to vector<8x1xf32>
    %846 = vector.broadcast %845 : vector<8x1xf32> to vector<8x8xf32>
    %847 = arith.subf %843, %846 : vector<8x8xf32>
    %848 = math.exp %847 : vector<8x8xf32>
    %cst_406 = arith.constant dense<0.000000e+00> : vector<8xf32>
    %849 = vector.multi_reduction <add>, %848, %cst_406 [1] : vector<8x8xf32> to vector<8xf32>
    %850 = vector.shape_cast %849 : vector<8xf32> to vector<8x1xf32>
    %851 = tpu.reciprocal %850 {approx = true} : vector<8x1xf32> -> vector<8x1xf32>
    %852 = vector.broadcast %851 : vector<8x1xf32> to vector<8x8xf32>
    %853 = arith.mulf %848, %852 : vector<8x8xf32>
    %cst_407 = arith.constant dense<0.000000e+00> : vector<8x8xf32>
    %854 = tpu.matmul %853, %838, %cst_407 {dimension_numbers = #tpu.dot_dimension_numbers<[1], [0], [0], [1], [0, 0, 1, 1], [], []>} : vector<8x8xf32>, vector<8x8xf32>, vector<8x8xf32> -> vector<8x8xf32>
    %c0_408 = arith.constant 0 : index
    %c16_409 = arith.constant 16 : index
    %855 = vector.load %arg32[%c0_408, %c16_409] : memref<16x32xf32, #tpu.memory_space<vmem>>, vector<8x8xf32>
    tpu.vector_store %arg32[%c0_408, %c16_409], %854 {strides = array<i32>} : memref<16x32xf32, #tpu.memory_space<vmem>>, vector<8x8xf32>,
    %856 = vector.extract_strided_slice %793 {offsets = [0, 24], sizes = [8, 8], strides = [1, 1]} : vector<8x32xf32> to vector<8x8xf32>
    %857 = vector.extract_strided_slice %794 {offsets = [0, 24], sizes = [8, 8], strides = [1, 1]} : vector<8x32xf32> to vector<8x8xf32>
    %858 = vector.extract_strided_slice %795 {offsets = [0, 24], sizes = [8, 8], strides = [1, 1]} : vector<8x32xf32> to vector<8x8xf32>
    %cst_410 = arith.constant dense<0.000000e+00> : vector<8x8xf32>
    %859 = tpu.matmul %856, %857, %cst_410 {dimension_numbers = #tpu.dot_dimension_numbers<[1], [1], [0], [0], [0, 0, 1, 0], [], []>} : vector<8x8xf32>, vector<8x8xf32>, vector<8x8xf32> -> vector<8x8xf32>
    %cst_411 = arith.constant 0.353553385 : f32
    %860 = vector.broadcast %cst_411 : f32 to vector<8x8xf32>
    %861 = arith.mulf %859, %860 : vector<8x8xf32>
    %cst_412 = arith.constant -1.000000e+09 : f32
    %862 = vector.broadcast %cst_412 : f32 to vector<8x8xf32>
    %863 = arith.select %792, %862, %861 : vector<8x8xi1>, vector<8x8xf32>
    %cst_413 = arith.constant dense<0xFF800000> : vector<8xf32>
    %864 = vector.multi_reduction <maximumf>, %863, %cst_413 [1] : vector<8x8xf32> to vector<8xf32>
    %865 = vector.shape_cast %864 : vector<8xf32> to vector<8x1xf32>
    %866 = vector.broadcast %865 : vector<8x1xf32> to vector<8x8xf32>
    %867 = arith.subf %863, %866 : vector<8x8xf32>
    %868 = math.exp %867 : vector<8x8xf32>
    %cst_414 = arith.constant dense<0.000000e+00> : vector<8xf32>
    %869 = vector.multi_reduction <add>, %868, %cst_414 [1] : vector<8x8xf32> to vector<8xf32>
    %870 = vector.shape_cast %869 : vector<8xf32> to vector<8x1xf32>
    %871 = tpu.reciprocal %870 {approx = true} : vector<8x1xf32> -> vector<8x1xf32>
    %872 = vector.broadcast %871 : vector<8x1xf32> to vector<8x8xf32>
    %873 = arith.mulf %868, %872 : vector<8x8xf32>
    %cst_415 = arith.constant dense<0.000000e+00> : vector<8x8xf32>
    %874 = tpu.matmul %873, %858, %cst_415 {dimension_numbers = #tpu.dot_dimension_numbers<[1], [0], [0], [1], [0, 0, 1, 1], [], []>} : vector<8x8xf32>, vector<8x8xf32>, vector<8x8xf32> -> vector<8x8xf32>
    %c0_416 = arith.constant 0 : index
    %c24_417 = arith.constant 24 : index
    %875 = vector.load %arg32[%c0_416, %c24_417] : memref<16x32xf32, #tpu.memory_space<vmem>>, vector<8x8xf32>
    tpu.vector_store %arg32[%c0_416, %c24_417], %874 {strides = array<i32>} : memref<16x32xf32, #tpu.memory_space<vmem>>, vector<8x8xf32>,
    %876 = vector.extract_strided_slice %6 {offsets = [1, 0], sizes = [1, 8], strides = [1, 1]} : vector<2x8xf32> to vector<1x8xf32>
    %cst_418 = arith.constant 0.000000e+00 : f32
    %877 = vector.broadcast %cst_418 : f32 to vector<1x8xf32>
    %878 = arith.cmpf ogt, %876, %877 : vector<1x8xf32>
    %879 = vector.broadcast %878 : vector<1x8xi1> to vector<8x8xi1>
    %880 = arith.ori %787, %879 : vector<8x8xi1>
    %881 = vector.extract_strided_slice %778 {offsets = [8, 0], sizes = [8, 32], strides = [1, 1]} : vector<16x32xf32> to vector<8x32xf32>
    %882 = vector.extract_strided_slice %781 {offsets = [8, 0], sizes = [8, 32], strides = [1, 1]} : vector<16x32xf32> to vector<8x32xf32>
    %883 = vector.extract_strided_slice %784 {offsets = [8, 0], sizes = [8, 32], strides = [1, 1]} : vector<16x32xf32> to vector<8x32xf32>
    %884 = vector.extract_strided_slice %881 {offsets = [0, 0], sizes = [8, 8], strides = [1, 1]} : vector<8x32xf32> to vector<8x8xf32>
    %885 = vector.extract_strided_slice %882 {offsets = [0, 0], sizes = [8, 8], strides = [1, 1]} : vector<8x32xf32> to vector<8x8xf32>
    %886 = vector.extract_strided_slice %883 {offsets = [0, 0], sizes = [8, 8], strides = [1, 1]} : vector<8x32xf32> to vector<8x8xf32>
    %cst_419 = arith.constant dense<0.000000e+00> : vector<8x8xf32>
    %887 = tpu.matmul %884, %885, %cst_419 {dimension_numbers = #tpu.dot_dimension_numbers<[1], [1], [0], [0], [0, 0, 1, 0], [], []>} : vector<8x8xf32>, vector<8x8xf32>, vector<8x8xf32> -> vector<8x8xf32>
    %cst_420 = arith.constant 0.353553385 : f32
    %888 = vector.broadcast %cst_420 : f32 to vector<8x8xf32>
    %889 = arith.mulf %887, %888 : vector<8x8xf32>
    %cst_421 = arith.constant -1.000000e+09 : f32
    %890 = vector.broadcast %cst_421 : f32 to vector<8x8xf32>
    %891 = arith.select %880, %890, %889 : vector<8x8xi1>, vector<8x8xf32>
    %cst_422 = arith.constant dense<0xFF800000> : vector<8xf32>
    %892 = vector.multi_reduction <maximumf>, %891, %cst_422 [1] : vector<8x8xf32> to vector<8xf32>
    %893 = vector.shape_cast %892 : vector<8xf32> to vector<8x1xf32>
    %894 = vector.broadcast %893 : vector<8x1xf32> to vector<8x8xf32>
    %895 = arith.subf %891, %894 : vector<8x8xf32>
    %896 = math.exp %895 : vector<8x8xf32>
    %cst_423 = arith.constant dense<0.000000e+00> : vector<8xf32>
    %897 = vector.multi_reduction <add>, %896, %cst_423 [1] : vector<8x8xf32> to vector<8xf32>
    %898 = vector.shape_cast %897 : vector<8xf32> to vector<8x1xf32>
    %899 = tpu.reciprocal %898 {approx = true} : vector<8x1xf32> -> vector<8x1xf32>
    %900 = vector.broadcast %899 : vector<8x1xf32> to vector<8x8xf32>
    %901 = arith.mulf %896, %900 : vector<8x8xf32>
    %cst_424 = arith.constant dense<0.000000e+00> : vector<8x8xf32>
    %902 = tpu.matmul %901, %886, %cst_424 {dimension_numbers = #tpu.dot_dimension_numbers<[1], [0], [0], [1], [0, 0, 1, 1], [], []>} : vector<8x8xf32>, vector<8x8xf32>, vector<8x8xf32> -> vector<8x8xf32>
    %c8_425 = arith.constant 8 : index
    %c0_426 = arith.constant 0 : index
    %903 = vector.load %arg32[%c8_425, %c0_426] : memref<16x32xf32, #tpu.memory_space<vmem>>, vector<8x8xf32>
    tpu.vector_store %arg32[%c8_425, %c0_426], %902 {strides = array<i32>} : memref<16x32xf32, #tpu.memory_space<vmem>>, vector<8x8xf32>,
    %904 = vector.extract_strided_slice %881 {offsets = [0, 8], sizes = [8, 8], strides = [1, 1]} : vector<8x32xf32> to vector<8x8xf32>
    %905 = vector.extract_strided_slice %882 {offsets = [0, 8], sizes = [8, 8], strides = [1, 1]} : vector<8x32xf32> to vector<8x8xf32>
    %906 = vector.extract_strided_slice %883 {offsets = [0, 8], sizes = [8, 8], strides = [1, 1]} : vector<8x32xf32> to vector<8x8xf32>
    %cst_427 = arith.constant dense<0.000000e+00> : vector<8x8xf32>
    %907 = tpu.matmul %904, %905, %cst_427 {dimension_numbers = #tpu.dot_dimension_numbers<[1], [1], [0], [0], [0, 0, 1, 0], [], []>} : vector<8x8xf32>, vector<8x8xf32>, vector<8x8xf32> -> vector<8x8xf32>
    %cst_428 = arith.constant 0.353553385 : f32
    %908 = vector.broadcast %cst_428 : f32 to vector<8x8xf32>
    %909 = arith.mulf %907, %908 : vector<8x8xf32>
    %cst_429 = arith.constant -1.000000e+09 : f32
    %910 = vector.broadcast %cst_429 : f32 to vector<8x8xf32>
    %911 = arith.select %880, %910, %909 : vector<8x8xi1>, vector<8x8xf32>
    %cst_430 = arith.constant dense<0xFF800000> : vector<8xf32>
    %912 = vector.multi_reduction <maximumf>, %911, %cst_430 [1] : vector<8x8xf32> to vector<8xf32>
    %913 = vector.shape_cast %912 : vector<8xf32> to vector<8x1xf32>
    %914 = vector.broadcast %913 : vector<8x1xf32> to vector<8x8xf32>
    %915 = arith.subf %911, %914 : vector<8x8xf32>
    %916 = math.exp %915 : vector<8x8xf32>
    %cst_431 = arith.constant dense<0.000000e+00> : vector<8xf32>
    %917 = vector.multi_reduction <add>, %916, %cst_431 [1] : vector<8x8xf32> to vector<8xf32>
    %918 = vector.shape_cast %917 : vector<8xf32> to vector<8x1xf32>
    %919 = tpu.reciprocal %918 {approx = true} : vector<8x1xf32> -> vector<8x1xf32>
    %920 = vector.broadcast %919 : vector<8x1xf32> to vector<8x8xf32>
    %921 = arith.mulf %916, %920 : vector<8x8xf32>
    %cst_432 = arith.constant dense<0.000000e+00> : vector<8x8xf32>
    %922 = tpu.matmul %921, %906, %cst_432 {dimension_numbers = #tpu.dot_dimension_numbers<[1], [0], [0], [1], [0, 0, 1, 1], [], []>} : vector<8x8xf32>, vector<8x8xf32>, vector<8x8xf32> -> vector<8x8xf32>
    %c8_433 = arith.constant 8 : index
    %c8_434 = arith.constant 8 : index
    %923 = vector.load %arg32[%c8_433, %c8_434] : memref<16x32xf32, #tpu.memory_space<vmem>>, vector<8x8xf32>
    tpu.vector_store %arg32[%c8_433, %c8_434], %922 {strides = array<i32>} : memref<16x32xf32, #tpu.memory_space<vmem>>, vector<8x8xf32>,
    %924 = vector.extract_strided_slice %881 {offsets = [0, 16], sizes = [8, 8], strides = [1, 1]} : vector<8x32xf32> to vector<8x8xf32>
    %925 = vector.extract_strided_slice %882 {offsets = [0, 16], sizes = [8, 8], strides = [1, 1]} : vector<8x32xf32> to vector<8x8xf32>
    %926 = vector.extract_strided_slice %883 {offsets = [0, 16], sizes = [8, 8], strides = [1, 1]} : vector<8x32xf32> to vector<8x8xf32>
    %cst_435 = arith.constant dense<0.000000e+00> : vector<8x8xf32>
    %927 = tpu.matmul %924, %925, %cst_435 {dimension_numbers = #tpu.dot_dimension_numbers<[1], [1], [0], [0], [0, 0, 1, 0], [], []>} : vector<8x8xf32>, vector<8x8xf32>, vector<8x8xf32> -> vector<8x8xf32>
    %cst_436 = arith.constant 0.353553385 : f32
    %928 = vector.broadcast %cst_436 : f32 to vector<8x8xf32>
    %929 = arith.mulf %927, %928 : vector<8x8xf32>
    %cst_437 = arith.constant -1.000000e+09 : f32
    %930 = vector.broadcast %cst_437 : f32 to vector<8x8xf32>
    %931 = arith.select %880, %930, %929 : vector<8x8xi1>, vector<8x8xf32>
    %cst_438 = arith.constant dense<0xFF800000> : vector<8xf32>
    %932 = vector.multi_reduction <maximumf>, %931, %cst_438 [1] : vector<8x8xf32> to vector<8xf32>
    %933 = vector.shape_cast %932 : vector<8xf32> to vector<8x1xf32>
    %934 = vector.broadcast %933 : vector<8x1xf32> to vector<8x8xf32>
    %935 = arith.subf %931, %934 : vector<8x8xf32>
    %936 = math.exp %935 : vector<8x8xf32>
    %cst_439 = arith.constant dense<0.000000e+00> : vector<8xf32>
    %937 = vector.multi_reduction <add>, %936, %cst_439 [1] : vector<8x8xf32> to vector<8xf32>
    %938 = vector.shape_cast %937 : vector<8xf32> to vector<8x1xf32>
    %939 = tpu.reciprocal %938 {approx = true} : vector<8x1xf32> -> vector<8x1xf32>
    %940 = vector.broadcast %939 : vector<8x1xf32> to vector<8x8xf32>
    %941 = arith.mulf %936, %940 : vector<8x8xf32>
    %cst_440 = arith.constant dense<0.000000e+00> : vector<8x8xf32>
    %942 = tpu.matmul %941, %926, %cst_440 {dimension_numbers = #tpu.dot_dimension_numbers<[1], [0], [0], [1], [0, 0, 1, 1], [], []>} : vector<8x8xf32>, vector<8x8xf32>, vector<8x8xf32> -> vector<8x8xf32>
    %c8_441 = arith.constant 8 : index
    %c16_442 = arith.constant 16 : index
    %943 = vector.load %arg32[%c8_441, %c16_442] : memref<16x32xf32, #tpu.memory_space<vmem>>, vector<8x8xf32>
    tpu.vector_store %arg32[%c8_441, %c16_442], %942 {strides = array<i32>} : memref<16x32xf32, #tpu.memory_space<vmem>>, vector<8x8xf32>,
    %944 = vector.extract_strided_slice %881 {offsets = [0, 24], sizes = [8, 8], strides = [1, 1]} : vector<8x32xf32> to vector<8x8xf32>
    %945 = vector.extract_strided_slice %882 {offsets = [0, 24], sizes = [8, 8], strides = [1, 1]} : vector<8x32xf32> to vector<8x8xf32>
    %946 = vector.extract_strided_slice %883 {offsets = [0, 24], sizes = [8, 8], strides = [1, 1]} : vector<8x32xf32> to vector<8x8xf32>
    %cst_443 = arith.constant dense<0.000000e+00> : vector<8x8xf32>
    %947 = tpu.matmul %944, %945, %cst_443 {dimension_numbers = #tpu.dot_dimension_numbers<[1], [1], [0], [0], [0, 0, 1, 0], [], []>} : vector<8x8xf32>, vector<8x8xf32>, vector<8x8xf32> -> vector<8x8xf32>
    %cst_444 = arith.constant 0.353553385 : f32
    %948 = vector.broadcast %cst_444 : f32 to vector<8x8xf32>
    %949 = arith.mulf %947, %948 : vector<8x8xf32>
    %cst_445 = arith.constant -1.000000e+09 : f32
    %950 = vector.broadcast %cst_445 : f32 to vector<8x8xf32>
    %951 = arith.select %880, %950, %949 : vector<8x8xi1>, vector<8x8xf32>
    %cst_446 = arith.constant dense<0xFF800000> : vector<8xf32>
    %952 = vector.multi_reduction <maximumf>, %951, %cst_446 [1] : vector<8x8xf32> to vector<8xf32>
    %953 = vector.shape_cast %952 : vector<8xf32> to vector<8x1xf32>
    %954 = vector.broadcast %953 : vector<8x1xf32> to vector<8x8xf32>
    %955 = arith.subf %951, %954 : vector<8x8xf32>
    %956 = math.exp %955 : vector<8x8xf32>
    %cst_447 = arith.constant dense<0.000000e+00> : vector<8xf32>
    %957 = vector.multi_reduction <add>, %956, %cst_447 [1] : vector<8x8xf32> to vector<8xf32>
    %958 = vector.shape_cast %957 : vector<8xf32> to vector<8x1xf32>
    %959 = tpu.reciprocal %958 {approx = true} : vector<8x1xf32> -> vector<8x1xf32>
    %960 = vector.broadcast %959 : vector<8x1xf32> to vector<8x8xf32>
    %961 = arith.mulf %956, %960 : vector<8x8xf32>
    %cst_448 = arith.constant dense<0.000000e+00> : vector<8x8xf32>
    %962 = tpu.matmul %961, %946, %cst_448 {dimension_numbers = #tpu.dot_dimension_numbers<[1], [0], [0], [1], [0, 0, 1, 1], [], []>} : vector<8x8xf32>, vector<8x8xf32>, vector<8x8xf32> -> vector<8x8xf32>
    %c8_449 = arith.constant 8 : index
    %c24_450 = arith.constant 24 : index
    %963 = vector.load %arg32[%c8_449, %c24_450] : memref<16x32xf32, #tpu.memory_space<vmem>>, vector<8x8xf32>
    tpu.vector_store %arg32[%c8_449, %c24_450], %962 {strides = array<i32>} : memref<16x32xf32, #tpu.memory_space<vmem>>, vector<8x8xf32>,
    %c0_451 = arith.constant 0 : index
    %c0_452 = arith.constant 0 : index
    %964 = vector.load %arg32[%c0_451, %c0_452] : memref<16x32xf32, #tpu.memory_space<vmem>>, vector<16x32xf32>
    %cst_453 = arith.constant dense<0.000000e+00> : vector<16x32xf32>
    %965 = tpu.matmul %964, %769, %cst_453 {dimension_numbers = #tpu.dot_dimension_numbers<[1], [0], [0], [1], [0, 0, 1, 1], [], []>} : vector<16x32xf32>, vector<32x32xf32>, vector<16x32xf32> -> vector<16x32xf32>
    %966 = vector.broadcast %771 : vector<1x32xf32> to vector<16x32xf32>
    %967 = arith.addf %965, %966 : vector<16x32xf32>
    %968 = arith.addf %967, %755 : vector<16x32xf32>
    %cst_454 = arith.constant dense<0.000000e+00> : vector<16xf32>
    %969 = vector.multi_reduction <add>, %968, %cst_454 [1] : vector<16x32xf32> to vector<16xf32>
    %970 = vector.shape_cast %969 : vector<16xf32> to vector<16x1xf32>
    %cst_455 = arith.constant 3.200000e+01 : f32
    %971 = vector.broadcast %cst_455 : f32 to vector<16x1xf32>
    %972 = arith.divf %970, %971 : vector<16x1xf32>
    %973 = vector.broadcast %972 : vector<16x1xf32> to vector<16x32xf32>
    %974 = arith.subf %968, %973 : vector<16x32xf32>
    %975 = arith.mulf %974, %974 : vector<16x32xf32>
    %cst_456 = arith.constant dense<0.000000e+00> : vector<16xf32>
    %976 = vector.multi_reduction <add>, %975, %cst_456 [1] : vector<16x32xf32> to vector<16xf32>
    %977 = vector.shape_cast %976 : vector<16xf32> to vector<16x1xf32>
    %cst_457 = arith.constant 3.200000e+01 : f32
    %978 = vector.broadcast %cst_457 : f32 to vector<16x1xf32>
    %979 = arith.divf %977, %978 : vector<16x1xf32>
    %980 = vector.broadcast %972 : vector<16x1xf32> to vector<16x32xf32>
    %981 = arith.subf %968, %980 : vector<16x32xf32>
    %cst_458 = arith.constant 9.99999974E-6 : f32
    %982 = vector.broadcast %cst_458 : f32 to vector<16x1xf32>
    %983 = arith.addf %979, %982 : vector<16x1xf32>
    %984 = math.rsqrt %983 : vector<16x1xf32>
    %985 = vector.broadcast %984 : vector<16x1xf32> to vector<16x32xf32>
    %986 = arith.mulf %981, %985 : vector<16x32xf32>
    %987 = vector.broadcast %773 : vector<1x32xf32> to vector<16x32xf32>
    %988 = arith.mulf %986, %987 : vector<16x32xf32>
    %989 = vector.broadcast %775 : vector<1x32xf32> to vector<16x32xf32>
    %990 = arith.addf %988, %989 : vector<16x32xf32>
    %c1_459 = arith.constant 1 : index
    %c0_460 = arith.constant 0 : index
    %c0_461 = arith.constant 0 : index
    %991 = vector.load %arg25[%c1_459, %c0_460, %c0_461] : memref<2x32x64xf32, #tpu.memory_space<vmem>>, vector<1x32x64xf32>
    %992 = vector.shape_cast %991 : vector<1x32x64xf32> to vector<32x64xf32>
    %c1_462 = arith.constant 1 : index
    %c0_463 = arith.constant 0 : index
    %c0_464 = arith.constant 0 : index
    %993 = vector.load %arg26[%c1_462, %c0_463, %c0_464] : memref<2x1x64xf32, #tpu.memory_space<vmem>>, vector<1x1x64xf32>
    %994 = vector.shape_cast %993 : vector<1x1x64xf32> to vector<1x64xf32>
    %c1_465 = arith.constant 1 : index
    %c0_466 = arith.constant 0 : index
    %c0_467 = arith.constant 0 : index
    %995 = vector.load %arg27[%c1_465, %c0_466, %c0_467] : memref<2x64x32xf32, #tpu.memory_space<vmem>>, vector<1x64x32xf32>
    %996 = vector.shape_cast %995 : vector<1x64x32xf32> to vector<64x32xf32>
    %c1_468 = arith.constant 1 : index
    %c0_469 = arith.constant 0 : index
    %c0_470 = arith.constant 0 : index
    %997 = vector.load %arg28[%c1_468, %c0_469, %c0_470] : memref<2x1x32xf32, #tpu.memory_space<vmem>>, vector<1x1x32xf32>
    %998 = vector.shape_cast %997 : vector<1x1x32xf32> to vector<1x32xf32>
    %c1_471 = arith.constant 1 : index
    %c0_472 = arith.constant 0 : index
    %c0_473 = arith.constant 0 : index
    %999 = vector.load %arg29[%c1_471, %c0_472, %c0_473] : memref<2x1x32xf32, #tpu.memory_space<vmem>>, vector<1x1x32xf32>
    %1000 = vector.shape_cast %999 : vector<1x1x32xf32> to vector<1x32xf32>
    %c1_474 = arith.constant 1 : index
    %c0_475 = arith.constant 0 : index
    %c0_476 = arith.constant 0 : index
    %1001 = vector.load %arg30[%c1_474, %c0_475, %c0_476] : memref<2x1x32xf32, #tpu.memory_space<vmem>>, vector<1x1x32xf32>
    %1002 = vector.shape_cast %1001 : vector<1x1x32xf32> to vector<1x32xf32>
    %cst_477 = arith.constant dense<0.000000e+00> : vector<16x64xf32>
    %1003 = tpu.matmul %990, %992, %cst_477 {dimension_numbers = #tpu.dot_dimension_numbers<[1], [0], [0], [1], [0, 0, 1, 1], [], []>} : vector<16x32xf32>, vector<32x64xf32>, vector<16x64xf32> -> vector<16x64xf32>
    %1004 = vector.broadcast %994 : vector<1x64xf32> to vector<16x64xf32>
    %1005 = arith.addf %1003, %1004 : vector<16x64xf32>
    %cst_478 = arith.constant 0.000000e+00 : f32
    %1006 = vector.broadcast %cst_478 : f32 to vector<16x64xf32>
    %1007 = arith.maximumf %1005, %1006 : vector<16x64xf32>
    %cst_479 = arith.constant dense<0.000000e+00> : vector<16x32xf32>
    %1008 = tpu.matmul %1007, %996, %cst_479 {dimension_numbers = #tpu.dot_dimension_numbers<[1], [0], [0], [1], [0, 0, 1, 1], [], []>} : vector<16x64xf32>, vector<64x32xf32>, vector<16x32xf32> -> vector<16x32xf32>
    %1009 = vector.broadcast %998 : vector<1x32xf32> to vector<16x32xf32>
    %1010 = arith.addf %1008, %1009 : vector<16x32xf32>
    %1011 = arith.addf %1010, %990 : vector<16x32xf32>
    %cst_480 = arith.constant dense<0.000000e+00> : vector<16xf32>
    %1012 = vector.multi_reduction <add>, %1011, %cst_480 [1] : vector<16x32xf32> to vector<16xf32>
    %1013 = vector.shape_cast %1012 : vector<16xf32> to vector<16x1xf32>
    %cst_481 = arith.constant 3.200000e+01 : f32
    %1014 = vector.broadcast %cst_481 : f32 to vector<16x1xf32>
    %1015 = arith.divf %1013, %1014 : vector<16x1xf32>
    %1016 = vector.broadcast %1015 : vector<16x1xf32> to vector<16x32xf32>
    %1017 = arith.subf %1011, %1016 : vector<16x32xf32>
    %1018 = arith.mulf %1017, %1017 : vector<16x32xf32>
    %cst_482 = arith.constant dense<0.000000e+00> : vector<16xf32>
    %1019 = vector.multi_reduction <add>, %1018, %cst_482 [1] : vector<16x32xf32> to vector<16xf32>
    %1020 = vector.shape_cast %1019 : vector<16xf32> to vector<16x1xf32>
    %cst_483 = arith.constant 3.200000e+01 : f32
    %1021 = vector.broadcast %cst_483 : f32 to vector<16x1xf32>
    %1022 = arith.divf %1020, %1021 : vector<16x1xf32>
    %1023 = vector.broadcast %1015 : vector<16x1xf32> to vector<16x32xf32>
    %1024 = arith.subf %1011, %1023 : vector<16x32xf32>
    %cst_484 = arith.constant 9.99999974E-6 : f32
    %1025 = vector.broadcast %cst_484 : f32 to vector<16x1xf32>
    %1026 = arith.addf %1022, %1025 : vector<16x1xf32>
    %1027 = math.rsqrt %1026 : vector<16x1xf32>
    %1028 = vector.broadcast %1027 : vector<16x1xf32> to vector<16x32xf32>
    %1029 = arith.mulf %1024, %1028 : vector<16x32xf32>
    %1030 = vector.broadcast %1000 : vector<1x32xf32> to vector<16x32xf32>
    %1031 = arith.mulf %1029, %1030 : vector<16x32xf32>
    %1032 = vector.broadcast %1002 : vector<1x32xf32> to vector<16x32xf32>
    %1033 = arith.addf %1031, %1032 : vector<16x32xf32>
    %c0_485 = arith.constant 0 : index
    %c0_486 = arith.constant 0 : index
    %1034 = vector.load %arg31[%c0_485, %c0_486] : memref<16x32xf32, #tpu.memory_space<vmem>>, vector<16x32xf32>
    tpu.vector_store %arg31[%c0_485, %c0_486], %1033 {strides = array<i32>} : memref<16x32xf32, #tpu.memory_space<vmem>>, vector<16x32xf32>,
    return
  }
}

</mosaic_0001>

<llo_original>
// kernel: decoder_forward.1
$region0: #{decoder_forward.1}
  #allocation0 [shape = 'u32[]', space=smem, size = 0x4, offset = 0x4, fixed_abs, tag = 'smem constant byte address 0x4 - core index']
  #allocation1 [shape = 'u32[144,128]{1,0:T(1,128)}', space=vmem, size = 0x12000, scoped, tag = 'internal scratch']
  #allocation2 [shape = 'f32[16,32]{1,0:T(8,128)}', space=vmem, size = 0x2000, scoped, tag = 'scratch operand']
  %s0 = inlined_call_operand.smem [shape: u32[32], index: -1, kind: input, shape index: {}]
  %s1 = sld [smem:[%s0]]
  %s2 = scalar_lea.smem %s0, 1
  %s3 = sld [smem:[%s2]]
  %s4 = scalar_lea.smem %s0, 2
  %s5 = sld [smem:[%s4]]
  %s6 = scalar_lea.smem %s0, 3
  %s7 = sld [smem:[%s6]]
  %s8 = scalar_lea.smem %s0, 4
  %s9 = sld [smem:[%s8]]
  %s10 = scalar_lea.smem %s0, 5
  %s11 = sld [smem:[%s10]]
  %s12 = scalar_lea.smem %s0, 6
  %s13 = sld [smem:[%s12]]
  %s14 = scalar_lea.smem %s0, 7
  %s15 = sld [smem:[%s14]]
  %s16 = scalar_lea.smem %s0, 8
  %s17 = sld [smem:[%s16]]
  %s18 = scalar_lea.smem %s0, 9
  %s19 = sld [smem:[%s18]]
  %s20 = scalar_lea.smem %s0, 10
  %s21 = sld [smem:[%s20]]
  %s22 = scalar_lea.smem %s0, 11
  %s23 = sld [smem:[%s22]]
  %s24 = scalar_lea.smem %s0, 12
  %s25 = sld [smem:[%s24]]
  %s26 = scalar_lea.smem %s0, 13
  %s27 = sld [smem:[%s26]]
  %s28 = scalar_lea.smem %s0, 14
  %s29 = sld [smem:[%s28]]
  %s30 = scalar_lea.smem %s0, 15
  %s31 = sld [smem:[%s30]]
  %s32 = scalar_lea.smem %s0, 16
  %s33 = sld [smem:[%s32]]
  %s34 = scalar_lea.smem %s0, 17
  %s35 = sld [smem:[%s34]]
  %s36 = scalar_lea.smem %s0, 18
  %s37 = sld [smem:[%s36]]
  %s38 = scalar_lea.smem %s0, 19
  %s39 = sld [smem:[%s38]]
  %s40 = scalar_lea.smem %s0, 20
  %s41 = sld [smem:[%s40]]
  %s42 = scalar_lea.smem %s0, 21
  %s43 = sld [smem:[%s42]]
  %s44 = scalar_lea.smem %s0, 22
  %s45 = sld [smem:[%s44]]
  %s46 = scalar_lea.smem %s0, 23
  %s47 = sld [smem:[%s46]]
  %s48 = scalar_lea.smem %s0, 24
  %s49 = sld [smem:[%s48]]
  %s50 = scalar_lea.smem %s0, 25
  %s51 = sld [smem:[%s50]]
  %s52 = scalar_lea.smem %s0, 26
  %s53 = sld [smem:[%s52]]
  %s54 = scalar_lea.smem %s0, 27
  %s55 = sld [smem:[%s54]]
  %s56 = scalar_lea.smem %s0, 28
  %s57 = sld [smem:[%s56]]
  %s58 = scalar_lea.smem %s0, 29
  %s59 = sld [smem:[%s58]]
  %s60 = scalar_lea.smem %s0, 30
  %s61 = sld [smem:[%s60]]
  %s62 = scalar_lea.smem %s0, 31
  %s63 = sld [smem:[%s62]]
  %s64 = sld [smem:[#allocation0]]
  $region166: #{decoder_forward.1} parent=0
    _
  %s66 = ssub.s32 1, %s64
  %s67 = scalar_select 0, %s66, %s64
  $region1: #{decoder_forward.1} parent=0
    #allocation3 [shape = 'u8[8192]{0}', space=vmem, size = 0x2000, scoped, tag = 'input window, operand 4, single buffered']
    #allocation4 [shape = 's32[1]{0}', space=sflag, size = 0x4, scoped, tag = 'scoped memory for decoder_forward.1']
    #allocation5 [shape = 's32[1]{0}', space=sflag, size = 0x4, scoped, tag = 'scoped memory for decoder_forward.1']
    #allocation6 [shape = 'u8[32768]{0}', space=vmem, size = 0x8000, scoped, tag = 'input window, operand 17, single buffered']
    #allocation7 [shape = 's32[1]{0}', space=sflag, size = 0x4, scoped, tag = 'scoped memory for decoder_forward.1']
    #allocation8 [shape = 'u8[1024]{0}', space=vmem, size = 0x400, scoped, tag = 'input window, operand 18, single buffered']
    #allocation9 [shape = 'u8[1024]{0}', space=vmem, size = 0x400, scoped, tag = 'input window, operand 19, single buffered']
    #allocation10 [shape = 's32[1]{0}', space=sflag, size = 0x4, scoped, tag = 'scoped memory for decoder_forward.1']
    #allocation11 [shape = 'u8[32768]{0}', space=vmem, size = 0x8000, scoped, tag = 'input window, operand 21, single buffered']
    #allocation12 [shape = 'u8[1024]{0}', space=vmem, size = 0x400, scoped, tag = 'input window, operand 22, single buffered']
    #allocation13 [shape = 's32[1]{0}', space=sflag, size = 0x4, scoped, tag = 'scoped memory for decoder_forward.1']
    #allocation14 [shape = 'u8[1024]{0}', space=vmem, size = 0x400, scoped, tag = 'input window, operand 24, single buffered']
    #allocation15 [shape = 'u8[32768]{0}', space=vmem, size = 0x8000, scoped, tag = 'input window, operand 25, single buffered']
    #allocation16 [shape = 's32[1]{0}', space=sflag, size = 0x4, scoped, tag = 'scoped memory for decoder_forward.1']
    #allocation17 [shape = 'u8[8192]{0}', space=vmem, size = 0x2000, scoped, tag = 'output window, operand 0, single buffered']
    %68 = vsyncpa [#allocation4], 0
    %69 = vsyncpa [#allocation7], 0
    %70 = vsyncpa [#allocation10], 0
    %71 = vsyncpa [#allocation13], 0
    %72 = vsyncpa [#allocation16], 0
    %73 = vsyncpa [#allocation5], 0
    // Predicated region
    $region2: #{decoder_forward.1} parent=1 // pred_check
      _
    $region3: #{decoder_forward.1} parent=1 // pred_check_branch
      %75 = sbr.rel (0) target = $region5
    $region4: #{decoder_forward.1} parent=1 // pred_region
      _
    $region5: #{decoder_forward.1} parent=1 // pred_fallthru
      _
    // Predicated region
    $region6: #{decoder_forward.1} parent=1 // pred_check
      _
    $region7: #{decoder_forward.1} parent=1 // pred_check_branch
      %77 = sbr.rel (0) target = $region9
    $region8: #{decoder_forward.1} parent=1 // pred_region
      _
    $region9: #{decoder_forward.1} parent=1 // pred_fallthru
      _
    // Predicated region
    $region10: #{decoder_forward.1} parent=1 // pred_check
      _
    $region11: #{decoder_forward.1} parent=1 // pred_check_branch
      %79 = sbr.rel (0) target = $region13
    $region12: #{decoder_forward.1} parent=1 // pred_region
      _
    $region13: #{decoder_forward.1} parent=1 // pred_fallthru
      _
    // Predicated region
    $region14: #{decoder_forward.1} parent=1 // pred_check
      _
    $region15: #{decoder_forward.1} parent=1 // pred_check_branch
      %81 = sbr.rel (0) target = $region17
    $region16: #{decoder_forward.1} parent=1 // pred_region
      _
    $region17: #{decoder_forward.1} parent=1 // pred_fallthru
      _
    // Predicated region
    $region18: #{decoder_forward.1} parent=1 // pred_check
      _
    $region19: #{decoder_forward.1} parent=1 // pred_check_branch
      %83 = sbr.rel (0) target = $region21
    $region20: #{decoder_forward.1} parent=1 // pred_region
      %s85 = ssub.s32 256, 256
      %86 = vsyncadd [#allocation4], %s85
      %s87 = sshll.u32 [#allocation3], 4
      %s88 = int_to_ptr.vmem [resolvable:$true] %s87
      %93 = dma.hbm_to_vmem [thread:$0]  %s9, 256, %s88, [#allocation4], 128, 128, 8
    $region21: #{decoder_forward.1} parent=1 // pred_fallthru
      _
    // Predicated region
    $region22: #{decoder_forward.1} parent=1 // pred_check
      _
    $region23: #{decoder_forward.1} parent=1 // pred_check_branch
      %95 = sbr.rel (0) target = $region25
    $region24: #{decoder_forward.1} parent=1 // pred_region
      _
    $region25: #{decoder_forward.1} parent=1 // pred_fallthru
      _
    // Predicated region
    $region26: #{decoder_forward.1} parent=1 // pred_check
      _
    $region27: #{decoder_forward.1} parent=1 // pred_check_branch
      %97 = sbr.rel (0) target = $region29
    $region28: #{decoder_forward.1} parent=1 // pred_region
      _
    $region29: #{decoder_forward.1} parent=1 // pred_fallthru
      _
    // Predicated region
    $region30: #{decoder_forward.1} parent=1 // pred_check
      _
    $region31: #{decoder_forward.1} parent=1 // pred_check_branch
      %99 = sbr.rel (0) target = $region33
    $region32: #{decoder_forward.1} parent=1 // pred_region
      _
    $region33: #{decoder_forward.1} parent=1 // pred_fallthru
      _
    // Predicated region
    $region34: #{decoder_forward.1} parent=1 // pred_check
      _
    $region35: #{decoder_forward.1} parent=1 // pred_check_branch
      %101 = sbr.rel (0) target = $region37
    $region36: #{decoder_forward.1} parent=1 // pred_region
      _
    $region37: #{decoder_forward.1} parent=1 // pred_fallthru
      _
    // Predicated region
    $region38: #{decoder_forward.1} parent=1 // pred_check
      _
    $region39: #{decoder_forward.1} parent=1 // pred_check_branch
      %103 = sbr.rel (0) target = $region41
    $region40: #{decoder_forward.1} parent=1 // pred_region
      _
    $region41: #{decoder_forward.1} parent=1 // pred_fallthru
      _
    // Predicated region
    $region42: #{decoder_forward.1} parent=1 // pred_check
      _
    $region43: #{decoder_forward.1} parent=1 // pred_check_branch
      %105 = sbr.rel (0) target = $region45
    $region44: #{decoder_forward.1} parent=1 // pred_region
      _
    $region45: #{decoder_forward.1} parent=1 // pred_fallthru
      _
    // Predicated region
    $region46: #{decoder_forward.1} parent=1 // pred_check
      _
    $region47: #{decoder_forward.1} parent=1 // pred_check_branch
      %107 = sbr.rel (0) target = $region49
    $region48: #{decoder_forward.1} parent=1 // pred_region
      _
    $region49: #{decoder_forward.1} parent=1 // pred_fallthru
      _
    // Predicated region
    $region50: #{decoder_forward.1} parent=1 // pred_check
      _
    $region51: #{decoder_forward.1} parent=1 // pred_check_branch
      %109 = sbr.rel (0) target = $region53
    $region52: #{decoder_forward.1} parent=1 // pred_region
      _
    $region53: #{decoder_forward.1} parent=1 // pred_fallthru
      _
    // Predicated region
    $region54: #{decoder_forward.1} parent=1 // pred_check
      _
    $region55: #{decoder_forward.1} parent=1 // pred_check_branch
      %111 = sbr.rel (0) target = $region57
    $region56: #{decoder_forward.1} parent=1 // pred_region
      _
    $region57: #{decoder_forward.1} parent=1 // pred_fallthru
      _
    // Predicated region
    $region58: #{decoder_forward.1} parent=1 // pred_check
      _
    $region59: #{decoder_forward.1} parent=1 // pred_check_branch
      %113 = sbr.rel (0) target = $region61
    $region60: #{decoder_forward.1} parent=1 // pred_region
      _
    $region61: #{decoder_forward.1} parent=1 // pred_fallthru
      _
    // Predicated region
    $region62: #{decoder_forward.1} parent=1 // pred_check
      _
    $region63: #{decoder_forward.1} parent=1 // pred_check_branch
      %115 = sbr.rel (0) target = $region65
    $region64: #{decoder_forward.1} parent=1 // pred_region
      _
    $region65: #{decoder_forward.1} parent=1 // pred_fallthru
      _
    // Predicated region
    $region66: #{decoder_forward.1} parent=1 // pred_check
      _
    $region67: #{decoder_forward.1} parent=1 // pred_check_branch
      %117 = sbr.rel (0) target = $region69
    $region68: #{decoder_forward.1} parent=1 // pred_region
      _
    $region69: #{decoder_forward.1} parent=1 // pred_fallthru
      _
    // Predicated region
    $region70: #{decoder_forward.1} parent=1 // pred_check
      _
    $region71: #{decoder_forward.1} parent=1 // pred_check_branch
      %119 = sbr.rel (0) target = $region73
    $region72: #{decoder_forward.1} parent=1 // pred_region
      %s121 = ssub.s32 1024, 1024
      %122 = vsyncadd [#allocation7], %s121
      %s123 = sshll.u32 [#allocation6], 4
      %s124 = int_to_ptr.vmem [resolvable:$true] %s123
      %129 = dma.hbm_to_vmem [thread:$0]  %s35, 1024, %s124, [#allocation7], 128, 128, 8
    $region73: #{decoder_forward.1} parent=1 // pred_fallthru
      _
    // Predicated region
    $region74: #{decoder_forward.1} parent=1 // pred_check
      _
    $region75: #{decoder_forward.1} parent=1 // pred_check_branch
      %131 = sbr.rel (0) target = $region77
    $region76: #{decoder_forward.1} parent=1 // pred_region
      %s133 = ssub.s32 32, 32
      %134 = vsyncadd [#allocation7], %s133
      %s135 = sshll.u32 [#allocation8], 4
      %s136 = int_to_ptr.vmem [resolvable:$true] %s135
      %141 = dma.hbm_to_vmem [thread:$0]  %s37, 32, %s136, [#allocation7], 16, 16, 1
    $region77: #{decoder_forward.1} parent=1 // pred_fallthru
      _
    // Predicated region
    $region78: #{decoder_forward.1} parent=1 // pred_check
      _
    $region79: #{decoder_forward.1} parent=1 // pred_check_branch
      %143 = sbr.rel (0) target = $region81
    $region80: #{decoder_forward.1} parent=1 // pred_region
      %s145 = ssub.s32 32, 32
      %146 = vsyncadd [#allocation10], %s145
      %s147 = sshll.u32 [#allocation9], 4
      %s148 = int_to_ptr.vmem [resolvable:$true] %s147
      %153 = dma.hbm_to_vmem [thread:$0]  %s39, 32, %s148, [#allocation10], 16, 16, 1
    $region81: #{decoder_forward.1} parent=1 // pred_fallthru
      _
    // Predicated region
    $region82: #{decoder_forward.1} parent=1 // pred_check
      _
    $region83: #{decoder_forward.1} parent=1 // pred_check_branch
      %155 = sbr.rel (0) target = $region85
    $region84: #{decoder_forward.1} parent=1 // pred_region
      _
    $region85: #{decoder_forward.1} parent=1 // pred_fallthru
      _
    // Predicated region
    $region86: #{decoder_forward.1} parent=1 // pred_check
      _
    $region87: #{decoder_forward.1} parent=1 // pred_check_branch
      %157 = sbr.rel (0) target = $region89
    $region88: #{decoder_forward.1} parent=1 // pred_region
      %s159 = ssub.s32 1024, 1024
      %160 = vsyncadd [#allocation10], %s159
      %s161 = sshll.u32 [#allocation11], 4
      %s162 = int_to_ptr.vmem [resolvable:$true] %s161
      %167 = dma.hbm_to_vmem [thread:$0]  %s43, 1024, %s162, [#allocation10], 128, 128, 8
    $region89: #{decoder_forward.1} parent=1 // pred_fallthru
      _
    // Predicated region
    $region90: #{decoder_forward.1} parent=1 // pred_check
      _
    $region91: #{decoder_forward.1} parent=1 // pred_check_branch
      %169 = sbr.rel (0) target = $region93
    $region92: #{decoder_forward.1} parent=1 // pred_region
      %s171 = ssub.s32 32, 32
      %172 = vsyncadd [#allocation13], %s171
      %s173 = sshll.u32 [#allocation12], 4
      %s174 = int_to_ptr.vmem [resolvable:$true] %s173
      %179 = dma.hbm_to_vmem [thread:$0]  %s45, 32, %s174, [#allocation13], 16, 16, 1
    $region93: #{decoder_forward.1} parent=1 // pred_fallthru
      _
    // Predicated region
    $region94: #{decoder_forward.1} parent=1 // pred_check
      _
    $region95: #{decoder_forward.1} parent=1 // pred_check_branch
      %181 = sbr.rel (0) target = $region97
    $region96: #{decoder_forward.1} parent=1 // pred_region
      _
    $region97: #{decoder_forward.1} parent=1 // pred_fallthru
      _
    // Predicated region
    $region98: #{decoder_forward.1} parent=1 // pred_check
      _
    $region99: #{decoder_forward.1} parent=1 // pred_check_branch
      %183 = sbr.rel (0) target = $region101
    $region100: #{decoder_forward.1} parent=1 // pred_region
      %s185 = ssub.s32 32, 32
      %186 = vsyncadd [#allocation13], %s185
      %s187 = sshll.u32 [#allocation14], 4
      %s188 = int_to_ptr.vmem [resolvable:$true] %s187
      %193 = dma.hbm_to_vmem [thread:$0]  %s49, 32, %s188, [#allocation13], 16, 16, 1
    $region101: #{decoder_forward.1} parent=1 // pred_fallthru
      _
    // Predicated region
    $region102: #{decoder_forward.1} parent=1 // pred_check
      _
    $region103: #{decoder_forward.1} parent=1 // pred_check_branch
      %195 = sbr.rel (0) target = $region105
    $region104: #{decoder_forward.1} parent=1 // pred_region
      %s197 = ssub.s32 1024, 1024
      %198 = vsyncadd [#allocation16], %s197
      %s199 = sshll.u32 [#allocation15], 4
      %s200 = int_to_ptr.vmem [resolvable:$true] %s199
      %205 = dma.hbm_to_vmem [thread:$0]  %s51, 1024, %s200, [#allocation16], 128, 128, 8
    $region105: #{decoder_forward.1} parent=1 // pred_fallthru
      _
    // Predicated region
    $region106: #{decoder_forward.1} parent=1 // pred_check
      _
    $region107: #{decoder_forward.1} parent=1 // pred_check_branch
      %207 = sbr.rel (0) target = $region109
    $region108: #{decoder_forward.1} parent=1 // pred_region
      _
    $region109: #{decoder_forward.1} parent=1 // pred_fallthru
      _
    // Predicated region
    $region110: #{decoder_forward.1} parent=1 // pred_check
      _
    $region111: #{decoder_forward.1} parent=1 // pred_check_branch
      %209 = sbr.rel (0) target = $region113
    $region112: #{decoder_forward.1} parent=1 // pred_region
      _
    $region113: #{decoder_forward.1} parent=1 // pred_fallthru
      _
    // Predicated region
    $region114: #{decoder_forward.1} parent=1 // pred_check
      _
    $region115: #{decoder_forward.1} parent=1 // pred_check_branch
      %211 = sbr.rel (0) target = $region117
    $region116: #{decoder_forward.1} parent=1 // pred_region
      _
    $region117: #{decoder_forward.1} parent=1 // pred_fallthru
      _
    // Predicated region
    $region118: #{decoder_forward.1} parent=1 // pred_check
      _
    $region119: #{decoder_forward.1} parent=1 // pred_check_branch
      %213 = sbr.rel (0) target = $region121
    $region120: #{decoder_forward.1} parent=1 // pred_region
      _
    $region121: #{decoder_forward.1} parent=1 // pred_fallthru
      _
    // Predicated region
    $region122: #{decoder_forward.1} parent=1 // pred_check
      _
    $region123: #{decoder_forward.1} parent=1 // pred_check_branch
      %215 = sbr.rel (0) target = $region125
    $region124: #{decoder_forward.1} parent=1 // pred_region
      _
    $region125: #{decoder_forward.1} parent=1 // pred_fallthru
      _
    // Predicated region
    $region126: #{decoder_forward.1} parent=1 // pred_check
      _
    $region127: #{decoder_forward.1} parent=1 // pred_check_branch
      %217 = sbr.rel (0) target = $region129
    $region128: #{decoder_forward.1} parent=1 // pred_region
      %218 = dma.done [#allocation4], 256
    $region129: #{decoder_forward.1} parent=1 // pred_fallthru
      _
    // Predicated region
    $region130: #{decoder_forward.1} parent=1 // pred_check
      _
    $region131: #{decoder_forward.1} parent=1 // pred_check_branch
      %220 = sbr.rel (0) target = $region133
    $region132: #{decoder_forward.1} parent=1 // pred_region
      %221 = dma.done [#allocation7], 1024
    $region133: #{decoder_forward.1} parent=1 // pred_fallthru
      _
    // Predicated region
    $region134: #{decoder_forward.1} parent=1 // pred_check
      _
    $region135: #{decoder_forward.1} parent=1 // pred_check_branch
      %223 = sbr.rel (0) target = $region137
    $region136: #{decoder_forward.1} parent=1 // pred_region
      %224 = dma.done [#allocation7], 32
    $region137: #{decoder_forward.1} parent=1 // pred_fallthru
      _
    // Predicated region
    $region138: #{decoder_forward.1} parent=1 // pred_check
      _
    $region139: #{decoder_forward.1} parent=1 // pred_check_branch
      %226 = sbr.rel (0) target = $region141
    $region140: #{decoder_forward.1} parent=1 // pred_region
      %227 = dma.done [#allocation10], 32
    $region141: #{decoder_forward.1} parent=1 // pred_fallthru
      _
    // Predicated region
    $region142: #{decoder_forward.1} parent=1 // pred_check
      _
    $region143: #{decoder_forward.1} parent=1 // pred_check_branch
      %229 = sbr.rel (0) target = $region145
    $region144: #{decoder_forward.1} parent=1 // pred_region
      %230 = dma.done [#allocation10], 1024
    $region145: #{decoder_forward.1} parent=1 // pred_fallthru
      _
    // Predicated region
    $region146: #{decoder_forward.1} parent=1 // pred_check
      _
    $region147: #{decoder_forward.1} parent=1 // pred_check_branch
      %232 = sbr.rel (0) target = $region149
    $region148: #{decoder_forward.1} parent=1 // pred_region
      %233 = dma.done [#allocation13], 32
    $region149: #{decoder_forward.1} parent=1 // pred_fallthru
      _
    // Predicated region
    $region150: #{decoder_forward.1} parent=1 // pred_check
      _
    $region151: #{decoder_forward.1} parent=1 // pred_check_branch
      %235 = sbr.rel (0) target = $region153
    $region152: #{decoder_forward.1} parent=1 // pred_region
      %236 = dma.done [#allocation13], 32
    $region153: #{decoder_forward.1} parent=1 // pred_fallthru
      _
    // Predicated region
    $region154: #{decoder_forward.1} parent=1 // pred_check
      _
    $region155: #{decoder_forward.1} parent=1 // pred_check_branch
      %238 = sbr.rel (0) target = $region157
    $region156: #{decoder_forward.1} parent=1 // pred_region
      %239 = dma.done [#allocation16], 1024
    $region157: #{decoder_forward.1} parent=1 // pred_fallthru
      _
    %v240 = vld [vmem:[%s1] sm:$0xff]
    %v241 = vld [vmem:[%s1 + $0x8] sm:$0xff]
    %v242 = vmul.f32 %v240, 5.656854
    %v243 = vmul.f32 %v241, 5.656854
    %v244 = vld [vmem:[%s3] sm:$0xff]
    %v245 = vld [vmem:[%s3 + $0x8] sm:$0xff]
    %v246 = vadd.f32 %v242, %v244
    %v247 = vadd.f32 %v243, %v245
    %v248 = vld [vmem:[%s5] sm:$0x3]
    %v249 = vld [vmem:[%s7] sm:$0x3]
    %v250 = vld [vmem:[#allocation3] sm:$0xff]
    %v251 = vld [vmem:[#allocation3 + $0x8] sm:$0xff]
    %v252 = vld [vmem:[%s11] sm:$0xff]
    %v253 = vld [vmem:[%s11 + $0x8] sm:$0xff]
    %v254 = vld [vmem:[%s11 + $0x10] sm:$0xff]
    %v255 = vld [vmem:[%s11 + $0x18] sm:$0xff]
    %v256 = vld [vmem:[%s13] sm:$0xff]
    %v257 = vld [vmem:[%s13 + $0x8] sm:$0xff]
    %v258 = vld [vmem:[%s13 + $0x10] sm:$0xff]
    %v259 = vld [vmem:[%s13 + $0x18] sm:$0xff]
    %v260 = vld [vmem:[%s15] sm:$0xff]
    %v261 = vld [vmem:[%s15 + $0x8] sm:$0xff]
    %v262 = vld [vmem:[%s15 + $0x10] sm:$0xff]
    %v263 = vld [vmem:[%s15 + $0x18] sm:$0xff]
    %v264 = vld [vmem:[%s17] sm:$0x1]
    %v265 = vld [vmem:[%s19] sm:$0x1]
    %v266 = vld [vmem:[%s21] sm:$0x1]
    %v267 = vld [vmem:[%s23] sm:$0xff]
    %v268 = vld [vmem:[%s23 + $0x8] sm:$0xff]
    %v269 = vld [vmem:[%s23 + $0x10] sm:$0xff]
    %v270 = vld [vmem:[%s23 + $0x18] sm:$0xff]
    %v271 = vld [vmem:[%s25] sm:$0x1]
    %v272 = vld [vmem:[%s27] sm:$0x1]
    %v273 = vld [vmem:[%s29] sm:$0x1]
    %v275 = vlaneseq
    %v276 = vshrl.u32 %v275, 7
    %v277 = vsub.s32 0, %v276
    %v278 = vrot.slane %v264, %v277
    %vm280 = vcmask 261120
    %v282 = vsel %vm280, %v246, 0
    %v285 = vsel %vm280, %v247, 0
    %287 = vmatprep.subr.mxu0 0.0
    %288 = vmatpush1.msra.mxu0 %v252
    %289 = vmatprep.subr.mxu0 0.0
    %290 = vmatpush1.msra.mxu0 %v253
    %291 = vmatprep.subr.mxu0 0.0
    %292 = vmatpush1.msra.mxu0 %v254
    %293 = vmatprep.subr.mxu0 0.0
    %294 = vmatpush1.msra.mxu0 %v255
    %295 = vmatprep.subr.mxu0 0.0
    %296 = vmatpush1.msra.mxu0 0.0
    %297 = vmatprep.subr.mxu0 0.0
    %298 = vmatpush1.msra.mxu0 0.0
    %299 = vmatprep.subr.mxu0 0.0
    %300 = vmatpush1.msra.mxu0 0.0
    %301 = vmatprep.subr.mxu0 0.0
    %302 = vmatpush1.msra.mxu0 0.0
    %303 = vmatprep.subr.mxu0 0.0
    %304 = vmatpush1.msra.mxu0 0.0
    %305 = vmatprep.subr.mxu0 0.0
    %306 = vmatpush1.msra.mxu0 0.0
    %307 = vmatprep.subr.mxu0 0.0
    %308 = vmatpush1.msra.mxu0 0.0
    %309 = vmatprep.subr.mxu0 0.0
    %310 = vmatpush1.msra.mxu0 0.0
    %311 = vmatprep.subr.mxu0 0.0
    %312 = vmatpush1.msra.mxu0 0.0
    %313 = vmatprep.subr.mxu0 0.0
    %314 = vmatpush1.msra.mxu0 0.0
    %315 = vmatprep.subr.mxu0 0.0
    %316 = vmatpush1.msra.mxu0 0.0
    %317 = vmatprep.subr.mxu0 0.0
    %318 = vmatpush1.msra.mxu0 0.0
    %319 = vmatprep.subr.mxu0 0.0
    %320 = vmatpush1.msra.mxu0 0.0
    %321 = vmatprep.subr.mxu0 0.0
    %322 = vmatpush1.msra.mxu0 0.0
    %323 = vmatprep.subr.mxu0 0.0
    %324 = vmatpush1.msra.mxu0 0.0
    %325 = vmatprep.subr.mxu0 0.0
    %326 = vmatpush1.msra.mxu0 0.0
    %327 = vmatprep.subr.mxu0 0.0
    %328 = vmatpush1.msra.mxu0 0.0
    %329 = vmatprep.subr.mxu0 0.0
    %330 = vmatpush1.msra.mxu0 0.0
    %331 = vmatprep.subr.mxu0 0.0
    %332 = vmatpush1.msra.mxu0 0.0
    %333 = vmatprep.subr.mxu0 0.0
    %334 = vmatpush1.msra.mxu0 0.0
    %335 = vmatprep.subr.mxu0 0.0
    %336 = vmatpush1.msra.mxu0 0.0
    %337 = vmatprep.subr.mxu0 0.0
    %338 = vmatpush1.msra.mxu0 0.0
    %339 = vmatprep.subr.mxu0 0.0
    %340 = vmatpush1.msra.mxu0 0.0
    %341 = vmatprep.subr.mxu0 0.0
    %342 = vmatpush1.msra.mxu0 0.0
    %343 = vmatprep.subr.mxu0 0.0
    %344 = vmatpush1.msra.mxu0 0.0
    %345 = vmatprep.subr.mxu0 0.0
    %346 = vmatpush1.msra.mxu0 0.0
    %347 = vmatprep.subr.mxu0 0.0
    %348 = vmatpush1.msra.mxu0 0.0
    %349 = vmatprep.subr.mxu0 0.0
    %350 = vmatpush1.msra.mxu0 0.0
    %351 = vmatprep.mubr.f32.mxu0 0.0
    %352 = vmatmul.mubr.f32.gmra.mrb[0].mxu0 %v282
    %v353 = vpop.f32.mrb[0].mxu0
    %v354 = vadd.f32 %v278, %v353
    %v355 = vpop.f32.mrb[0].mxu0
    %356 = vmatprep.mubr.f32.mxu0 0.0
    %357 = vmatmul.mubr.f32.gmra.mrb[0].mxu0 %v285
    %v358 = vpop.f32.mrb[0].mxu0
    %v359 = vadd.f32 %v278, %v358
    %v360 = vpop.f32.mrb[0].mxu0
    %361 = vdwg.mxu0
    %v363 = vlaneseq
    %v364 = vshrl.u32 %v363, 7
    %v365 = vsub.s32 0, %v364
    %v366 = vrot.slane %v265, %v365
    %368 = vmatprep.subr.mxu0 0.0
    %369 = vmatpush1.msra.mxu0 %v256
    %370 = vmatprep.subr.mxu0 0.0
    %371 = vmatpush1.msra.mxu0 %v257
    %372 = vmatprep.subr.mxu0 0.0
    %373 = vmatpush1.msra.mxu0 %v258
    %374 = vmatprep.subr.mxu0 0.0
    %375 = vmatpush1.msra.mxu0 %v259
    %376 = vmatprep.subr.mxu0 0.0
    %377 = vmatpush1.msra.mxu0 0.0
    %378 = vmatprep.subr.mxu0 0.0
    %379 = vmatpush1.msra.mxu0 0.0
    %380 = vmatprep.subr.mxu0 0.0
    %381 = vmatpush1.msra.mxu0 0.0
    %382 = vmatprep.subr.mxu0 0.0
    %383 = vmatpush1.msra.mxu0 0.0
    %384 = vmatprep.subr.mxu0 0.0
    %385 = vmatpush1.msra.mxu0 0.0
    %386 = vmatprep.subr.mxu0 0.0
    %387 = vmatpush1.msra.mxu0 0.0
    %388 = vmatprep.subr.mxu0 0.0
    %389 = vmatpush1.msra.mxu0 0.0
    %390 = vmatprep.subr.mxu0 0.0
    %391 = vmatpush1.msra.mxu0 0.0
    %392 = vmatprep.subr.mxu0 0.0
    %393 = vmatpush1.msra.mxu0 0.0
    %394 = vmatprep.subr.mxu0 0.0
    %395 = vmatpush1.msra.mxu0 0.0
    %396 = vmatprep.subr.mxu0 0.0
    %397 = vmatpush1.msra.mxu0 0.0
    %398 = vmatprep.subr.mxu0 0.0
    %399 = vmatpush1.msra.mxu0 0.0
    %400 = vmatprep.subr.mxu0 0.0
    %401 = vmatpush1.msra.mxu0 0.0
    %402 = vmatprep.subr.mxu0 0.0
    %403 = vmatpush1.msra.mxu0 0.0
    %404 = vmatprep.subr.mxu0 0.0
    %405 = vmatpush1.msra.mxu0 0.0
    %406 = vmatprep.subr.mxu0 0.0
    %407 = vmatpush1.msra.mxu0 0.0
    %408 = vmatprep.subr.mxu0 0.0
    %409 = vmatpush1.msra.mxu0 0.0
    %410 = vmatprep.subr.mxu0 0.0
    %411 = vmatpush1.msra.mxu0 0.0
    %412 = vmatprep.subr.mxu0 0.0
    %413 = vmatpush1.msra.mxu0 0.0
    %414 = vmatprep.subr.mxu0 0.0
    %415 = vmatpush1.msra.mxu0 0.0
    %416 = vmatprep.subr.mxu0 0.0
    %417 = vmatpush1.msra.mxu0 0.0
    %418 = vmatprep.subr.mxu0 0.0
    %419 = vmatpush1.msra.mxu0 0.0
    %420 = vmatprep.subr.mxu0 0.0
    %421 = vmatpush1.msra.mxu0 0.0
    %422 = vmatprep.subr.mxu0 0.0
    %423 = vmatpush1.msra.mxu0 0.0
    %424 = vmatprep.subr.mxu0 0.0
    %425 = vmatpush1.msra.mxu0 0.0
    %426 = vmatprep.subr.mxu0 0.0
    %427 = vmatpush1.msra.mxu0 0.0
    %428 = vmatprep.subr.mxu0 0.0
    %429 = vmatpush1.msra.mxu0 0.0
    %430 = vmatprep.subr.mxu0 0.0
    %431 = vmatpush1.msra.mxu0 0.0
    %432 = vmatprep.mubr.f32.mxu0 0.0
    %433 = vmatmul.mubr.f32.gmra.mrb[0].mxu0 %v282
    %v434 = vpop.f32.mrb[0].mxu0
    %v435 = vadd.f32 %v366, %v434
    %v436 = vpop.f32.mrb[0].mxu0
    %437 = vmatprep.mubr.f32.mxu0 0.0
    %438 = vmatmul.mubr.f32.gmra.mrb[0].mxu0 %v285
    %v439 = vpop.f32.mrb[0].mxu0
    %v440 = vadd.f32 %v366, %v439
    %v441 = vpop.f32.mrb[0].mxu0
    %442 = vdwg.mxu0
    %v444 = vlaneseq
    %v445 = vshrl.u32 %v444, 7
    %v446 = vsub.s32 0, %v445
    %v447 = vrot.slane %v266, %v446
    %449 = vmatprep.subr.mxu0 0.0
    %450 = vmatpush1.msra.mxu0 %v260
    %451 = vmatprep.subr.mxu0 0.0
    %452 = vmatpush1.msra.mxu0 %v261
    %453 = vmatprep.subr.mxu0 0.0
    %454 = vmatpush1.msra.mxu0 %v262
    %455 = vmatprep.subr.mxu0 0.0
    %456 = vmatpush1.msra.mxu0 %v263
    %457 = vmatprep.subr.mxu0 0.0
    %458 = vmatpush1.msra.mxu0 0.0
    %459 = vmatprep.subr.mxu0 0.0
    %460 = vmatpush1.msra.mxu0 0.0
    %461 = vmatprep.subr.mxu0 0.0
    %462 = vmatpush1.msra.mxu0 0.0
    %463 = vmatprep.subr.mxu0 0.0
    %464 = vmatpush1.msra.mxu0 0.0
    %465 = vmatprep.subr.mxu0 0.0
    %466 = vmatpush1.msra.mxu0 0.0
    %467 = vmatprep.subr.mxu0 0.0
    %468 = vmatpush1.msra.mxu0 0.0
    %469 = vmatprep.subr.mxu0 0.0
    %470 = vmatpush1.msra.mxu0 0.0
    %471 = vmatprep.subr.mxu0 0.0
    %472 = vmatpush1.msra.mxu0 0.0
    %473 = vmatprep.subr.mxu0 0.0
    %474 = vmatpush1.msra.mxu0 0.0
    %475 = vmatprep.subr.mxu0 0.0
    %476 = vmatpush1.msra.mxu0 0.0
    %477 = vmatprep.subr.mxu0 0.0
    %478 = vmatpush1.msra.mxu0 0.0
    %479 = vmatprep.subr.mxu0 0.0
    %480 = vmatpush1.msra.mxu0 0.0
    %481 = vmatprep.subr.mxu0 0.0
    %482 = vmatpush1.msra.mxu0 0.0
    %483 = vmatprep.subr.mxu0 0.0
    %484 = vmatpush1.msra.mxu0 0.0
    %485 = vmatprep.subr.mxu0 0.0
    %486 = vmatpush1.msra.mxu0 0.0
    %487 = vmatprep.subr.mxu0 0.0
    %488 = vmatpush1.msra.mxu0 0.0
    %489 = vmatprep.subr.mxu0 0.0
    %490 = vmatpush1.msra.mxu0 0.0
    %491 = vmatprep.subr.mxu0 0.0
    %492 = vmatpush1.msra.mxu0 0.0
    %493 = vmatprep.subr.mxu0 0.0
    %494 = vmatpush1.msra.mxu0 0.0
    %495 = vmatprep.subr.mxu0 0.0
    %496 = vmatpush1.msra.mxu0 0.0
    %497 = vmatprep.subr.mxu0 0.0
    %498 = vmatpush1.msra.mxu0 0.0
    %499 = vmatprep.subr.mxu0 0.0
    %500 = vmatpush1.msra.mxu0 0.0
    %501 = vmatprep.subr.mxu0 0.0
    %502 = vmatpush1.msra.mxu0 0.0
    %503 = vmatprep.subr.mxu0 0.0
    %504 = vmatpush1.msra.mxu0 0.0
    %505 = vmatprep.subr.mxu0 0.0
    %506 = vmatpush1.msra.mxu0 0.0
    %507 = vmatprep.subr.mxu0 0.0
    %508 = vmatpush1.msra.mxu0 0.0
    %509 = vmatprep.subr.mxu0 0.0
    %510 = vmatpush1.msra.mxu0 0.0
    %511 = vmatprep.subr.mxu0 0.0
    %512 = vmatpush1.msra.mxu0 0.0
    %513 = vmatprep.mubr.f32.mxu0 0.0
    %514 = vmatmul.mubr.f32.gmra.mrb[0].mxu0 %v282
    %v515 = vpop.f32.mrb[0].mxu0
    %v516 = vadd.f32 %v447, %v515
    %v517 = vpop.f32.mrb[0].mxu0
    %518 = vmatprep.mubr.f32.mxu0 0.0
    %519 = vmatmul.mubr.f32.gmra.mrb[0].mxu0 %v285
    %v520 = vpop.f32.mrb[0].mxu0
    %v521 = vadd.f32 %v447, %v520
    %v522 = vpop.f32.mrb[0].mxu0
    %523 = vdwg.mxu0
    %v524 = vlaneseq
    %v525 = vshrl.u32 %v524, 7
    %v526 = vlaneseq
    %v527 = vand.u32 %v526, 127
    %vm528 = vcmp.gt.s32.totalorder %v527, %v525
    %vm529 = vcmp.gt.f32.partialorder %v248, 0.0
    %v530 = vsel %vm529, 1, 0
    %v531 = vlaneseq
    %v532 = vshrl.u32 %v531, 7
    %v533 = vsub.s32 0, %v532
    %v534 = vrot.slane %v530, %v533
    %vm535 = vcmp.eq.s32.totalorder %v534, 1
    %vm536 = vmor %vm528, %vm535
    %vm537 = vcmask 64512
    %v539 = vsel %vm537, %v354, 0
    %v542 = vsel %vm537, %v435, 0
    %544 = vmatprep.subr.mxu0 0.0
    %545 = vmatpush1.xpose.msra.mxu0 %v542
    %546 = vmatprep.subr.mxu0 0.0
    %547 = vmatpush1.xpose.msra.mxu0 0.0
    %548 = vmatprep.subr.mxu0 0.0
    %549 = vmatpush1.xpose.msra.mxu0 0.0
    %550 = vmatprep.subr.mxu0 0.0
    %551 = vmatpush1.xpose.msra.mxu0 0.0
    %552 = vmatprep.subr.mxu0 0.0
    %553 = vmatpush1.xpose.msra.mxu0 0.0
    %554 = vmatprep.subr.mxu0 0.0
    %555 = vmatpush1.xpose.msra.mxu0 0.0
    %556 = vmatprep.subr.mxu0 0.0
    %557 = vmatpush1.xpose.msra.mxu0 0.0
    %558 = vmatprep.subr.mxu0 0.0
    %559 = vmatpush1.xpose.msra.mxu0 0.0
    %560 = vmatprep.subr.mxu0 0.0
    %561 = vmatpush1.xpose.msra.mxu0 0.0
    %562 = vmatprep.subr.mxu0 0.0
    %563 = vmatpush1.xpose.msra.mxu0 0.0
    %564 = vmatprep.subr.mxu0 0.0
    %565 = vmatpush1.xpose.msra.mxu0 0.0
    %566 = vmatprep.subr.mxu0 0.0
    %567 = vmatpush1.xpose.msra.mxu0 0.0
    %568 = vmatprep.subr.mxu0 0.0
    %569 = vmatpush1.xpose.msra.mxu0 0.0
    %570 = vmatprep.subr.mxu0 0.0
    %571 = vmatpush1.xpose.msra.mxu0 0.0
    %572 = vmatprep.subr.mxu0 0.0
    %573 = vmatpush1.xpose.msra.mxu0 0.0
    %574 = vmatprep.subr.mxu0 0.0
    %575 = vmatpush1.xpose.msra.mxu0 0.0
    %576 = vmatprep.subr.mxu0 0.0
    %577 = vmatpush1.xpose.msra.mxu0 0.0
    %578 = vmatprep.subr.mxu0 0.0
    %579 = vmatpush1.xpose.msra.mxu0 0.0
    %580 = vmatprep.subr.mxu0 0.0
    %581 = vmatpush1.xpose.msra.mxu0 0.0
    %582 = vmatprep.subr.mxu0 0.0
    %583 = vmatpush1.xpose.msra.mxu0 0.0
    %584 = vmatprep.subr.mxu0 0.0
    %585 = vmatpush1.xpose.msra.mxu0 0.0
    %586 = vmatprep.subr.mxu0 0.0
    %587 = vmatpush1.xpose.msra.mxu0 0.0
    %588 = vmatprep.subr.mxu0 0.0
    %589 = vmatpush1.xpose.msra.mxu0 0.0
    %590 = vmatprep.subr.mxu0 0.0
    %591 = vmatpush1.xpose.msra.mxu0 0.0
    %592 = vmatprep.subr.mxu0 0.0
    %593 = vmatpush1.xpose.msra.mxu0 0.0
    %594 = vmatprep.subr.mxu0 0.0
    %595 = vmatpush1.xpose.msra.mxu0 0.0
    %596 = vmatprep.subr.mxu0 0.0
    %597 = vmatpush1.xpose.msra.mxu0 0.0
    %598 = vmatprep.subr.mxu0 0.0
    %599 = vmatpush1.xpose.msra.mxu0 0.0
    %600 = vmatprep.subr.mxu0 0.0
    %601 = vmatpush1.xpose.msra.mxu0 0.0
    %602 = vmatprep.subr.mxu0 0.0
    %603 = vmatpush1.xpose.msra.mxu0 0.0
    %604 = vmatprep.subr.mxu0 0.0
    %605 = vmatpush1.xpose.msra.mxu0 0.0
    %606 = vmatprep.subr.mxu0 0.0
    %607 = vmatpush1.xpose.msra.mxu0 0.0
    %608 = vmatprep.mubr.f32.mxu0 0.0
    %609 = vmatmul.mubr.f32.gmra.mrb[0].mxu0 %v539
    %v610 = vpop.f32.mrb[0].mxu0
    %v611 = vadd.f32 0.0, %v610
    %v612 = vpop.f32.mrb[0].mxu0
    %613 = vdwg.mxu0
    %v614 = vmul.f32 %v611, 0.35355338
    %v615 = vsel %vm536, -1e+09, %v614
    %v616 = vsel %vm537, %v615, -inf
    %617 = vmax.xlane.f32.xlu0 %v616
    %v618 = vpop.xlane.xlu0 %617
    %v619 = vsub.f32 %v615, %v618
    %v620 = vmul.f32 %v619, 1.442695
    %v621 = vpow.pop %v620
    %v622 = vsel %vm537, %v621, 0.0
    %623 = vadd.xlane.f32.xlu0 %v622
    %v624 = vpop.xlane.xlu0 %623
    %v625 = vrcp.pop %v624
    %v626 = vmul.f32 %v621, %v625
    %v628 = vsel %vm537, %v626, 0
    %630 = vmatprep.subr.mxu0 0.0
    %631 = vmatpush1.msra.mxu0 %v516
    %632 = vmatprep.subr.mxu0 0.0
    %633 = vmatpush1.msra.mxu0 0.0
    %634 = vmatprep.subr.mxu0 0.0
    %635 = vmatpush1.msra.mxu0 0.0
    %636 = vmatprep.subr.mxu0 0.0
    %637 = vmatpush1.msra.mxu0 0.0
    %638 = vmatprep.subr.mxu0 0.0
    %639 = vmatpush1.msra.mxu0 0.0
    %640 = vmatprep.subr.mxu0 0.0
    %641 = vmatpush1.msra.mxu0 0.0
    %642 = vmatprep.subr.mxu0 0.0
    %643 = vmatpush1.msra.mxu0 0.0
    %644 = vmatprep.subr.mxu0 0.0
    %645 = vmatpush1.msra.mxu0 0.0
    %646 = vmatprep.subr.mxu0 0.0
    %647 = vmatpush1.msra.mxu0 0.0
    %648 = vmatprep.subr.mxu0 0.0
    %649 = vmatpush1.msra.mxu0 0.0
    %650 = vmatprep.subr.mxu0 0.0
    %651 = vmatpush1.msra.mxu0 0.0
    %652 = vmatprep.subr.mxu0 0.0
    %653 = vmatpush1.msra.mxu0 0.0
    %654 = vmatprep.subr.mxu0 0.0
    %655 = vmatpush1.msra.mxu0 0.0
    %656 = vmatprep.subr.mxu0 0.0
    %657 = vmatpush1.msra.mxu0 0.0
    %658 = vmatprep.subr.mxu0 0.0
    %659 = vmatpush1.msra.mxu0 0.0
    %660 = vmatprep.subr.mxu0 0.0
    %661 = vmatpush1.msra.mxu0 0.0
    %662 = vmatprep.subr.mxu0 0.0
    %663 = vmatpush1.msra.mxu0 0.0
    %664 = vmatprep.subr.mxu0 0.0
    %665 = vmatpush1.msra.mxu0 0.0
    %666 = vmatprep.subr.mxu0 0.0
    %667 = vmatpush1.msra.mxu0 0.0
    %668 = vmatprep.subr.mxu0 0.0
    %669 = vmatpush1.msra.mxu0 0.0
    %670 = vmatprep.subr.mxu0 0.0
    %671 = vmatpush1.msra.mxu0 0.0
    %672 = vmatprep.subr.mxu0 0.0
    %673 = vmatpush1.msra.mxu0 0.0
    %674 = vmatprep.subr.mxu0 0.0
    %675 = vmatpush1.msra.mxu0 0.0
    %676 = vmatprep.subr.mxu0 0.0
    %677 = vmatpush1.msra.mxu0 0.0
    %678 = vmatprep.subr.mxu0 0.0
    %679 = vmatpush1.msra.mxu0 0.0
    %680 = vmatprep.subr.mxu0 0.0
    %681 = vmatpush1.msra.mxu0 0.0
    %682 = vmatprep.subr.mxu0 0.0
    %683 = vmatpush1.msra.mxu0 0.0
    %684 = vmatprep.subr.mxu0 0.0
    %685 = vmatpush1.msra.mxu0 0.0
    %686 = vmatprep.subr.mxu0 0.0
    %687 = vmatpush1.msra.mxu0 0.0
    %688 = vmatprep.subr.mxu0 0.0
    %689 = vmatpush1.msra.mxu0 0.0
    %690 = vmatprep.subr.mxu0 0.0
    %691 = vmatpush1.msra.mxu0 0.0
    %692 = vmatprep.subr.mxu0 0.0
    %693 = vmatpush1.msra.mxu0 0.0
    %694 = vmatprep.mubr.f32.mxu0 0.0
    %695 = vmatmul.mubr.f32.gmra.mrb[0].mxu0 %v628
    %v696 = vpop.f32.mrb[0].mxu0
    %v697 = vadd.f32 0.0, %v696
    %v698 = vpop.f32.mrb[0].mxu0
    %699 = vdwg.mxu0
    %700 = vst.msk [vmem:[#allocation2] sm:$0xff] %vm537, %v697
    %701 = vrot.lane.b32.xlu0 %v354, 120
    %v702 = vpop.permute.xlu0 %701
    %703 = vrot.lane.b32.xlu0 %v435, 120
    %v704 = vpop.permute.xlu0 %703
    %v705 = vsel %vm537, %v702, 0
    %v707 = vsel %vm537, %v704, 0
    %709 = vmatprep.subr.mxu0 0.0
    %710 = vmatpush1.xpose.msra.mxu0 %v707
    %711 = vmatprep.subr.mxu0 0.0
    %712 = vmatpush1.xpose.msra.mxu0 0.0
    %713 = vmatprep.subr.mxu0 0.0
    %714 = vmatpush1.xpose.msra.mxu0 0.0
    %715 = vmatprep.subr.mxu0 0.0
    %716 = vmatpush1.xpose.msra.mxu0 0.0
    %717 = vmatprep.subr.mxu0 0.0
    %718 = vmatpush1.xpose.msra.mxu0 0.0
    %719 = vmatprep.subr.mxu0 0.0
    %720 = vmatpush1.xpose.msra.mxu0 0.0
    %721 = vmatprep.subr.mxu0 0.0
    %722 = vmatpush1.xpose.msra.mxu0 0.0
    %723 = vmatprep.subr.mxu0 0.0
    %724 = vmatpush1.xpose.msra.mxu0 0.0
    %725 = vmatprep.subr.mxu0 0.0
    %726 = vmatpush1.xpose.msra.mxu0 0.0
    %727 = vmatprep.subr.mxu0 0.0
    %728 = vmatpush1.xpose.msra.mxu0 0.0
    %729 = vmatprep.subr.mxu0 0.0
    %730 = vmatpush1.xpose.msra.mxu0 0.0
    %731 = vmatprep.subr.mxu0 0.0
    %732 = vmatpush1.xpose.msra.mxu0 0.0
    %733 = vmatprep.subr.mxu0 0.0
    %734 = vmatpush1.xpose.msra.mxu0 0.0
    %735 = vmatprep.subr.mxu0 0.0
    %736 = vmatpush1.xpose.msra.mxu0 0.0
    %737 = vmatprep.subr.mxu0 0.0
    %738 = vmatpush1.xpose.msra.mxu0 0.0
    %739 = vmatprep.subr.mxu0 0.0
    %740 = vmatpush1.xpose.msra.mxu0 0.0
    %741 = vmatprep.subr.mxu0 0.0
    %742 = vmatpush1.xpose.msra.mxu0 0.0
    %743 = vmatprep.subr.mxu0 0.0
    %744 = vmatpush1.xpose.msra.mxu0 0.0
    %745 = vmatprep.subr.mxu0 0.0
    %746 = vmatpush1.xpose.msra.mxu0 0.0
    %747 = vmatprep.subr.mxu0 0.0
    %748 = vmatpush1.xpose.msra.mxu0 0.0
    %749 = vmatprep.subr.mxu0 0.0
    %750 = vmatpush1.xpose.msra.mxu0 0.0
    %751 = vmatprep.subr.mxu0 0.0
    %752 = vmatpush1.xpose.msra.mxu0 0.0
    %753 = vmatprep.subr.mxu0 0.0
    %754 = vmatpush1.xpose.msra.mxu0 0.0
    %755 = vmatprep.subr.mxu0 0.0
    %756 = vmatpush1.xpose.msra.mxu0 0.0
    %757 = vmatprep.subr.mxu0 0.0
    %758 = vmatpush1.xpose.msra.mxu0 0.0
    %759 = vmatprep.subr.mxu0 0.0
    %760 = vmatpush1.xpose.msra.mxu0 0.0
    %761 = vmatprep.subr.mxu0 0.0
    %762 = vmatpush1.xpose.msra.mxu0 0.0
    %763 = vmatprep.subr.mxu0 0.0
    %764 = vmatpush1.xpose.msra.mxu0 0.0
    %765 = vmatprep.subr.mxu0 0.0
    %766 = vmatpush1.xpose.msra.mxu0 0.0
    %767 = vmatprep.subr.mxu0 0.0
    %768 = vmatpush1.xpose.msra.mxu0 0.0
    %769 = vmatprep.subr.mxu0 0.0
    %770 = vmatpush1.xpose.msra.mxu0 0.0
    %771 = vmatprep.subr.mxu0 0.0
    %772 = vmatpush1.xpose.msra.mxu0 0.0
    %773 = vmatprep.mubr.f32.mxu0 0.0
    %774 = vmatmul.mubr.f32.gmra.mrb[0].mxu0 %v705
    %v775 = vpop.f32.mrb[0].mxu0
    %v776 = vadd.f32 0.0, %v775
    %v777 = vpop.f32.mrb[0].mxu0
    %778 = vdwg.mxu0
    %v779 = vmul.f32 %v776, 0.35355338
    %v780 = vsel %vm536, -1e+09, %v779
    %v781 = vsel %vm537, %v780, -inf
    %782 = vmax.xlane.f32.xlu0 %v781
    %v783 = vpop.xlane.xlu0 %782
    %v784 = vsub.f32 %v780, %v783
    %v785 = vmul.f32 %v784, 1.442695
    %v786 = vpow.pop %v785
    %v787 = vsel %vm537, %v786, 0.0
    %788 = vadd.xlane.f32.xlu0 %v787
    %v789 = vpop.xlane.xlu0 %788
    %v790 = vrcp.pop %v789
    %v791 = vmul.f32 %v786, %v790
    %793 = vrot.lane.b32.xlu0 %v516, 120
    %v794 = vpop.permute.xlu0 %793
    %v797 = vsel %vm537, %v791, 0
    %799 = vmatprep.subr.mxu0 0.0
    %800 = vmatpush1.msra.mxu0 %v794
    %801 = vmatprep.subr.mxu0 0.0
    %802 = vmatpush1.msra.mxu0 0.0
    %803 = vmatprep.subr.mxu0 0.0
    %804 = vmatpush1.msra.mxu0 0.0
    %805 = vmatprep.subr.mxu0 0.0
    %806 = vmatpush1.msra.mxu0 0.0
    %807 = vmatprep.subr.mxu0 0.0
    %808 = vmatpush1.msra.mxu0 0.0
    %809 = vmatprep.subr.mxu0 0.0
    %810 = vmatpush1.msra.mxu0 0.0
    %811 = vmatprep.subr.mxu0 0.0
    %812 = vmatpush1.msra.mxu0 0.0
    %813 = vmatprep.subr.mxu0 0.0
    %814 = vmatpush1.msra.mxu0 0.0
    %815 = vmatprep.subr.mxu0 0.0
    %816 = vmatpush1.msra.mxu0 0.0
    %817 = vmatprep.subr.mxu0 0.0
    %818 = vmatpush1.msra.mxu0 0.0
    %819 = vmatprep.subr.mxu0 0.0
    %820 = vmatpush1.msra.mxu0 0.0
    %821 = vmatprep.subr.mxu0 0.0
    %822 = vmatpush1.msra.mxu0 0.0
    %823 = vmatprep.subr.mxu0 0.0
    %824 = vmatpush1.msra.mxu0 0.0
    %825 = vmatprep.subr.mxu0 0.0
    %826 = vmatpush1.msra.mxu0 0.0
    %827 = vmatprep.subr.mxu0 0.0
    %828 = vmatpush1.msra.mxu0 0.0
    %829 = vmatprep.subr.mxu0 0.0
    %830 = vmatpush1.msra.mxu0 0.0
    %831 = vmatprep.subr.mxu0 0.0
    %832 = vmatpush1.msra.mxu0 0.0
    %833 = vmatprep.subr.mxu0 0.0
    %834 = vmatpush1.msra.mxu0 0.0
    %835 = vmatprep.subr.mxu0 0.0
    %836 = vmatpush1.msra.mxu0 0.0
    %837 = vmatprep.subr.mxu0 0.0
    %838 = vmatpush1.msra.mxu0 0.0
    %839 = vmatprep.subr.mxu0 0.0
    %840 = vmatpush1.msra.mxu0 0.0
    %841 = vmatprep.subr.mxu0 0.0
    %842 = vmatpush1.msra.mxu0 0.0
    %843 = vmatprep.subr.mxu0 0.0
    %844 = vmatpush1.msra.mxu0 0.0
    %845 = vmatprep.subr.mxu0 0.0
    %846 = vmatpush1.msra.mxu0 0.0
    %847 = vmatprep.subr.mxu0 0.0
    %848 = vmatpush1.msra.mxu0 0.0
    %849 = vmatprep.subr.mxu0 0.0
    %850 = vmatpush1.msra.mxu0 0.0
    %851 = vmatprep.subr.mxu0 0.0
    %852 = vmatpush1.msra.mxu0 0.0
    %853 = vmatprep.subr.mxu0 0.0
    %854 = vmatpush1.msra.mxu0 0.0
    %855 = vmatprep.subr.mxu0 0.0
    %856 = vmatpush1.msra.mxu0 0.0
    %857 = vmatprep.subr.mxu0 0.0
    %858 = vmatpush1.msra.mxu0 0.0
    %859 = vmatprep.subr.mxu0 0.0
    %860 = vmatpush1.msra.mxu0 0.0
    %861 = vmatprep.subr.mxu0 0.0
    %862 = vmatpush1.msra.mxu0 0.0
    %863 = vmatprep.mubr.f32.mxu0 0.0
    %864 = vmatmul.mubr.f32.gmra.mrb[0].mxu0 %v797
    %v865 = vpop.f32.mrb[0].mxu0
    %v866 = vadd.f32 0.0, %v865
    %v867 = vpop.f32.mrb[0].mxu0
    %868 = vdwg.mxu0
    %870 = vrot.lane.b32.xlu0 %v866, 8
    %v871 = vpop.permute.xlu0 %870
    %vm873 = vcmask 130112
    %874 = vst.msk [vmem:[#allocation2] sm:$0xff] %vm873, %v871
    %875 = vrot.lane.b32.xlu0 %v354, 112
    %v876 = vpop.permute.xlu0 %875
    %877 = vrot.lane.b32.xlu0 %v435, 112
    %v878 = vpop.permute.xlu0 %877
    %v879 = vsel %vm537, %v876, 0
    %v881 = vsel %vm537, %v878, 0
    %883 = vmatprep.subr.mxu0 0.0
    %884 = vmatpush1.xpose.msra.mxu0 %v881
    %885 = vmatprep.subr.mxu0 0.0
    %886 = vmatpush1.xpose.msra.mxu0 0.0
    %887 = vmatprep.subr.mxu0 0.0
    %888 = vmatpush1.xpose.msra.mxu0 0.0
    %889 = vmatprep.subr.mxu0 0.0
    %890 = vmatpush1.xpose.msra.mxu0 0.0
    %891 = vmatprep.subr.mxu0 0.0
    %892 = vmatpush1.xpose.msra.mxu0 0.0
    %893 = vmatprep.subr.mxu0 0.0
    %894 = vmatpush1.xpose.msra.mxu0 0.0
    %895 = vmatprep.subr.mxu0 0.0
    %896 = vmatpush1.xpose.msra.mxu0 0.0
    %897 = vmatprep.subr.mxu0 0.0
    %898 = vmatpush1.xpose.msra.mxu0 0.0
    %899 = vmatprep.subr.mxu0 0.0
    %900 = vmatpush1.xpose.msra.mxu0 0.0
    %901 = vmatprep.subr.mxu0 0.0
    %902 = vmatpush1.xpose.msra.mxu0 0.0
    %903 = vmatprep.subr.mxu0 0.0
    %904 = vmatpush1.xpose.msra.mxu0 0.0
    %905 = vmatprep.subr.mxu0 0.0
    %906 = vmatpush1.xpose.msra.mxu0 0.0
    %907 = vmatprep.subr.mxu0 0.0
    %908 = vmatpush1.xpose.msra.mxu0 0.0
    %909 = vmatprep.subr.mxu0 0.0
    %910 = vmatpush1.xpose.msra.mxu0 0.0
    %911 = vmatprep.subr.mxu0 0.0
    %912 = vmatpush1.xpose.msra.mxu0 0.0
    %913 = vmatprep.subr.mxu0 0.0
    %914 = vmatpush1.xpose.msra.mxu0 0.0
    %915 = vmatprep.subr.mxu0 0.0
    %916 = vmatpush1.xpose.msra.mxu0 0.0
    %917 = vmatprep.subr.mxu0 0.0
    %918 = vmatpush1.xpose.msra.mxu0 0.0
    %919 = vmatprep.subr.mxu0 0.0
    %920 = vmatpush1.xpose.msra.mxu0 0.0
    %921 = vmatprep.subr.mxu0 0.0
    %922 = vmatpush1.xpose.msra.mxu0 0.0
    %923 = vmatprep.subr.mxu0 0.0
    %924 = vmatpush1.xpose.msra.mxu0 0.0
    %925 = vmatprep.subr.mxu0 0.0
    %926 = vmatpush1.xpose.msra.mxu0 0.0
    %927 = vmatprep.subr.mxu0 0.0
    %928 = vmatpush1.xpose.msra.mxu0 0.0
    %929 = vmatprep.subr.mxu0 0.0
    %930 = vmatpush1.xpose.msra.mxu0 0.0
    %931 = vmatprep.subr.mxu0 0.0
    %932 = vmatpush1.xpose.msra.mxu0 0.0
    %933 = vmatprep.subr.mxu0 0.0
    %934 = vmatpush1.xpose.msra.mxu0 0.0
    %935 = vmatprep.subr.mxu0 0.0
    %936 = vmatpush1.xpose.msra.mxu0 0.0
    %937 = vmatprep.subr.mxu0 0.0
    %938 = vmatpush1.xpose.msra.mxu0 0.0
    %939 = vmatprep.subr.mxu0 0.0
    %940 = vmatpush1.xpose.msra.mxu0 0.0
    %941 = vmatprep.subr.mxu0 0.0
    %942 = vmatpush1.xpose.msra.mxu0 0.0
    %943 = vmatprep.subr.mxu0 0.0
    %944 = vmatpush1.xpose.msra.mxu0 0.0
    %945 = vmatprep.subr.mxu0 0.0
    %946 = vmatpush1.xpose.msra.mxu0 0.0
    %947 = vmatprep.mubr.f32.mxu0 0.0
    %948 = vmatmul.mubr.f32.gmra.mrb[0].mxu0 %v879
    %v949 = vpop.f32.mrb[0].mxu0
    %v950 = vadd.f32 0.0, %v949
    %v951 = vpop.f32.mrb[0].mxu0
    %952 = vdwg.mxu0
    %v953 = vmul.f32 %v950, 0.35355338
    %v954 = vsel %vm536, -1e+09, %v953
    %v955 = vsel %vm537, %v954, -inf
    %956 = vmax.xlane.f32.xlu0 %v955
    %v957 = vpop.xlane.xlu0 %956
    %v958 = vsub.f32 %v954, %v957
    %v959 = vmul.f32 %v958, 1.442695
    %v960 = vpow.pop %v959
    %v961 = vsel %vm537, %v960, 0.0
    %962 = vadd.xlane.f32.xlu0 %v961
    %v963 = vpop.xlane.xlu0 %962
    %v964 = vrcp.pop %v963
    %v965 = vmul.f32 %v960, %v964
    %966 = vrot.lane.b32.xlu0 %v516, 112
    %v967 = vpop.permute.xlu0 %966
    %v970 = vsel %vm537, %v965, 0
    %972 = vmatprep.subr.mxu0 0.0
    %973 = vmatpush1.msra.mxu0 %v967
    %974 = vmatprep.subr.mxu0 0.0
    %975 = vmatpush1.msra.mxu0 0.0
    %976 = vmatprep.subr.mxu0 0.0
    %977 = vmatpush1.msra.mxu0 0.0
    %978 = vmatprep.subr.mxu0 0.0
    %979 = vmatpush1.msra.mxu0 0.0
    %980 = vmatprep.subr.mxu0 0.0
    %981 = vmatpush1.msra.mxu0 0.0
    %982 = vmatprep.subr.mxu0 0.0
    %983 = vmatpush1.msra.mxu0 0.0
    %984 = vmatprep.subr.mxu0 0.0
    %985 = vmatpush1.msra.mxu0 0.0
    %986 = vmatprep.subr.mxu0 0.0
    %987 = vmatpush1.msra.mxu0 0.0
    %988 = vmatprep.subr.mxu0 0.0
    %989 = vmatpush1.msra.mxu0 0.0
    %990 = vmatprep.subr.mxu0 0.0
    %991 = vmatpush1.msra.mxu0 0.0
    %992 = vmatprep.subr.mxu0 0.0
    %993 = vmatpush1.msra.mxu0 0.0
    %994 = vmatprep.subr.mxu0 0.0
    %995 = vmatpush1.msra.mxu0 0.0
    %996 = vmatprep.subr.mxu0 0.0
    %997 = vmatpush1.msra.mxu0 0.0
    %998 = vmatprep.subr.mxu0 0.0
    %999 = vmatpush1.msra.mxu0 0.0
    %1000 = vmatprep.subr.mxu0 0.0
    %1001 = vmatpush1.msra.mxu0 0.0
    %1002 = vmatprep.subr.mxu0 0.0
    %1003 = vmatpush1.msra.mxu0 0.0
    %1004 = vmatprep.subr.mxu0 0.0
    %1005 = vmatpush1.msra.mxu0 0.0
    %1006 = vmatprep.subr.mxu0 0.0
    %1007 = vmatpush1.msra.mxu0 0.0
    %1008 = vmatprep.subr.mxu0 0.0
    %1009 = vmatpush1.msra.mxu0 0.0
    %1010 = vmatprep.subr.mxu0 0.0
    %1011 = vmatpush1.msra.mxu0 0.0
    %1012 = vmatprep.subr.mxu0 0.0
    %1013 = vmatpush1.msra.mxu0 0.0
    %1014 = vmatprep.subr.mxu0 0.0
    %1015 = vmatpush1.msra.mxu0 0.0
    %1016 = vmatprep.subr.mxu0 0.0
    %1017 = vmatpush1.msra.mxu0 0.0
    %1018 = vmatprep.subr.mxu0 0.0
    %1019 = vmatpush1.msra.mxu0 0.0
    %1020 = vmatprep.subr.mxu0 0.0
    %1021 = vmatpush1.msra.mxu0 0.0
    %1022 = vmatprep.subr.mxu0 0.0
    %1023 = vmatpush1.msra.mxu0 0.0
    %1024 = vmatprep.subr.mxu0 0.0
    %1025 = vmatpush1.msra.mxu0 0.0
    %1026 = vmatprep.subr.mxu0 0.0
    %1027 = vmatpush1.msra.mxu0 0.0
    %1028 = vmatprep.subr.mxu0 0.0
    %1029 = vmatpush1.msra.mxu0 0.0
    %1030 = vmatprep.subr.mxu0 0.0
    %1031 = vmatpush1.msra.mxu0 0.0
    %1032 = vmatprep.subr.mxu0 0.0
    %1033 = vmatpush1.msra.mxu0 0.0
    %1034 = vmatprep.subr.mxu0 0.0
    %1035 = vmatpush1.msra.mxu0 0.0
    %1036 = vmatprep.mubr.f32.mxu0 0.0
    %1037 = vmatmul.mubr.f32.gmra.mrb[0].mxu0 %v970
    %v1038 = vpop.f32.mrb[0].mxu0
    %v1039 = vadd.f32 0.0, %v1038
    %v1040 = vpop.f32.mrb[0].mxu0
    %1041 = vdwg.mxu0
    %1043 = vrot.lane.b32.xlu0 %v1039, 16
    %v1044 = vpop.permute.xlu0 %1043
    %vm1046 = vcmask 195712
    %1047 = vst.msk [vmem:[#allocation2] sm:$0xff] %vm1046, %v1044
    %1048 = vrot.lane.b32.xlu0 %v354, 104
    %v1049 = vpop.permute.xlu0 %1048
    %1050 = vrot.lane.b32.xlu0 %v435, 104
    %v1051 = vpop.permute.xlu0 %1050
    %v1052 = vsel %vm537, %v1049, 0
    %v1054 = vsel %vm537, %v1051, 0
    %1056 = vmatprep.subr.mxu0 0.0
    %1057 = vmatpush1.xpose.msra.mxu0 %v1054
    %1058 = vmatprep.subr.mxu0 0.0
    %1059 = vmatpush1.xpose.msra.mxu0 0.0
    %1060 = vmatprep.subr.mxu0 0.0
    %1061 = vmatpush1.xpose.msra.mxu0 0.0
    %1062 = vmatprep.subr.mxu0 0.0
    %1063 = vmatpush1.xpose.msra.mxu0 0.0
    %1064 = vmatprep.subr.mxu0 0.0
    %1065 = vmatpush1.xpose.msra.mxu0 0.0
    %1066 = vmatprep.subr.mxu0 0.0
    %1067 = vmatpush1.xpose.msra.mxu0 0.0
    %1068 = vmatprep.subr.mxu0 0.0
    %1069 = vmatpush1.xpose.msra.mxu0 0.0
    %1070 = vmatprep.subr.mxu0 0.0
    %1071 = vmatpush1.xpose.msra.mxu0 0.0
    %1072 = vmatprep.subr.mxu0 0.0
    %1073 = vmatpush1.xpose.msra.mxu0 0.0
    %1074 = vmatprep.subr.mxu0 0.0
    %1075 = vmatpush1.xpose.msra.mxu0 0.0
    %1076 = vmatprep.subr.mxu0 0.0
    %1077 = vmatpush1.xpose.msra.mxu0 0.0
    %1078 = vmatprep.subr.mxu0 0.0
    %1079 = vmatpush1.xpose.msra.mxu0 0.0
    %1080 = vmatprep.subr.mxu0 0.0
    %1081 = vmatpush1.xpose.msra.mxu0 0.0
    %1082 = vmatprep.subr.mxu0 0.0
    %1083 = vmatpush1.xpose.msra.mxu0 0.0
    %1084 = vmatprep.subr.mxu0 0.0
    %1085 = vmatpush1.xpose.msra.mxu0 0.0
    %1086 = vmatprep.subr.mxu0 0.0
    %1087 = vmatpush1.xpose.msra.mxu0 0.0
    %1088 = vmatprep.subr.mxu0 0.0
    %1089 = vmatpush1.xpose.msra.mxu0 0.0
    %1090 = vmatprep.subr.mxu0 0.0
    %1091 = vmatpush1.xpose.msra.mxu0 0.0
    %1092 = vmatprep.subr.mxu0 0.0
    %1093 = vmatpush1.xpose.msra.mxu0 0.0
    %1094 = vmatprep.subr.mxu0 0.0
    %1095 = vmatpush1.xpose.msra.mxu0 0.0
    %1096 = vmatprep.subr.mxu0 0.0
    %1097 = vmatpush1.xpose.msra.mxu0 0.0
    %1098 = vmatprep.subr.mxu0 0.0
    %1099 = vmatpush1.xpose.msra.mxu0 0.0
    %1100 = vmatprep.subr.mxu0 0.0
    %1101 = vmatpush1.xpose.msra.mxu0 0.0
    %1102 = vmatprep.subr.mxu0 0.0
    %1103 = vmatpush1.xpose.msra.mxu0 0.0
    %1104 = vmatprep.subr.mxu0 0.0
    %1105 = vmatpush1.xpose.msra.mxu0 0.0
    %1106 = vmatprep.subr.mxu0 0.0
    %1107 = vmatpush1.xpose.msra.mxu0 0.0
    %1108 = vmatprep.subr.mxu0 0.0
    %1109 = vmatpush1.xpose.msra.mxu0 0.0
    %1110 = vmatprep.subr.mxu0 0.0
    %1111 = vmatpush1.xpose.msra.mxu0 0.0
    %1112 = vmatprep.subr.mxu0 0.0
    %1113 = vmatpush1.xpose.msra.mxu0 0.0
    %1114 = vmatprep.subr.mxu0 0.0
    %1115 = vmatpush1.xpose.msra.mxu0 0.0
    %1116 = vmatprep.subr.mxu0 0.0
    %1117 = vmatpush1.xpose.msra.mxu0 0.0
    %1118 = vmatprep.subr.mxu0 0.0
    %1119 = vmatpush1.xpose.msra.mxu0 0.0
    %1120 = vmatprep.mubr.f32.mxu0 0.0
    %1121 = vmatmul.mubr.f32.gmra.mrb[0].mxu0 %v1052
    %v1122 = vpop.f32.mrb[0].mxu0
    %v1123 = vadd.f32 0.0, %v1122
    %v1124 = vpop.f32.mrb[0].mxu0
    %1125 = vdwg.mxu0
    %v1126 = vmul.f32 %v1123, 0.35355338
    %v1127 = vsel %vm536, -1e+09, %v1126
    %v1128 = vsel %vm537, %v1127, -inf
    %1129 = vmax.xlane.f32.xlu0 %v1128
    %v1130 = vpop.xlane.xlu0 %1129
    %v1131 = vsub.f32 %v1127, %v1130
    %v1132 = vmul.f32 %v1131, 1.442695
    %v1133 = vpow.pop %v1132
    %v1134 = vsel %vm537, %v1133, 0.0
    %1135 = vadd.xlane.f32.xlu0 %v1134
    %v1136 = vpop.xlane.xlu0 %1135
    %v1137 = vrcp.pop %v1136
    %v1138 = vmul.f32 %v1133, %v1137
    %1139 = vrot.lane.b32.xlu0 %v516, 104
    %v1140 = vpop.permute.xlu0 %1139
    %v1143 = vsel %vm537, %v1138, 0
    %1145 = vmatprep.subr.mxu0 0.0
    %1146 = vmatpush1.msra.mxu0 %v1140
    %1147 = vmatprep.subr.mxu0 0.0
    %1148 = vmatpush1.msra.mxu0 0.0
    %1149 = vmatprep.subr.mxu0 0.0
    %1150 = vmatpush1.msra.mxu0 0.0
    %1151 = vmatprep.subr.mxu0 0.0
    %1152 = vmatpush1.msra.mxu0 0.0
    %1153 = vmatprep.subr.mxu0 0.0
    %1154 = vmatpush1.msra.mxu0 0.0
    %1155 = vmatprep.subr.mxu0 0.0
    %1156 = vmatpush1.msra.mxu0 0.0
    %1157 = vmatprep.subr.mxu0 0.0
    %1158 = vmatpush1.msra.mxu0 0.0
    %1159 = vmatprep.subr.mxu0 0.0
    %1160 = vmatpush1.msra.mxu0 0.0
    %1161 = vmatprep.subr.mxu0 0.0
    %1162 = vmatpush1.msra.mxu0 0.0
    %1163 = vmatprep.subr.mxu0 0.0
    %1164 = vmatpush1.msra.mxu0 0.0
    %1165 = vmatprep.subr.mxu0 0.0
    %1166 = vmatpush1.msra.mxu0 0.0
    %1167 = vmatprep.subr.mxu0 0.0
    %1168 = vmatpush1.msra.mxu0 0.0
    %1169 = vmatprep.subr.mxu0 0.0
    %1170 = vmatpush1.msra.mxu0 0.0
    %1171 = vmatprep.subr.mxu0 0.0
    %1172 = vmatpush1.msra.mxu0 0.0
    %1173 = vmatprep.subr.mxu0 0.0
    %1174 = vmatpush1.msra.mxu0 0.0
    %1175 = vmatprep.subr.mxu0 0.0
    %1176 = vmatpush1.msra.mxu0 0.0
    %1177 = vmatprep.subr.mxu0 0.0
    %1178 = vmatpush1.msra.mxu0 0.0
    %1179 = vmatprep.subr.mxu0 0.0
    %1180 = vmatpush1.msra.mxu0 0.0
    %1181 = vmatprep.subr.mxu0 0.0
    %1182 = vmatpush1.msra.mxu0 0.0
    %1183 = vmatprep.subr.mxu0 0.0
    %1184 = vmatpush1.msra.mxu0 0.0
    %1185 = vmatprep.subr.mxu0 0.0
    %1186 = vmatpush1.msra.mxu0 0.0
    %1187 = vmatprep.subr.mxu0 0.0
    %1188 = vmatpush1.msra.mxu0 0.0
    %1189 = vmatprep.subr.mxu0 0.0
    %1190 = vmatpush1.msra.mxu0 0.0
    %1191 = vmatprep.subr.mxu0 0.0
    %1192 = vmatpush1.msra.mxu0 0.0
    %1193 = vmatprep.subr.mxu0 0.0
    %1194 = vmatpush1.msra.mxu0 0.0
    %1195 = vmatprep.subr.mxu0 0.0
    %1196 = vmatpush1.msra.mxu0 0.0
    %1197 = vmatprep.subr.mxu0 0.0
    %1198 = vmatpush1.msra.mxu0 0.0
    %1199 = vmatprep.subr.mxu0 0.0
    %1200 = vmatpush1.msra.mxu0 0.0
    %1201 = vmatprep.subr.mxu0 0.0
    %1202 = vmatpush1.msra.mxu0 0.0
    %1203 = vmatprep.subr.mxu0 0.0
    %1204 = vmatpush1.msra.mxu0 0.0
    %1205 = vmatprep.subr.mxu0 0.0
    %1206 = vmatpush1.msra.mxu0 0.0
    %1207 = vmatprep.subr.mxu0 0.0
    %1208 = vmatpush1.msra.mxu0 0.0
    %1209 = vmatprep.mubr.f32.mxu0 0.0
    %1210 = vmatmul.mubr.f32.gmra.mrb[0].mxu0 %v1143
    %v1211 = vpop.f32.mrb[0].mxu0
    %v1212 = vadd.f32 0.0, %v1211
    %v1213 = vpop.f32.mrb[0].mxu0
    %1214 = vdwg.mxu0
    %1216 = vrot.lane.b32.xlu0 %v1212, 24
    %v1217 = vpop.permute.xlu0 %1216
    %vm1219 = vcmask 261312
    %1220 = vst.msk [vmem:[#allocation2] sm:$0xff] %vm1219, %v1217
    %v1221 = vlaneseq
    %v1222 = vshrl.u32 %v1221, 7
    %v1223 = vsub.s32 1, %v1222
    %v1224 = vrot.slane %v530, %v1223
    %vm1225 = vcmp.eq.s32.totalorder %v1224, 1
    %vm1226 = vmor %vm528, %vm1225
    %v1228 = vsel %vm537, %v359, 0
    %v1231 = vsel %vm537, %v440, 0
    %1233 = vmatprep.subr.mxu0 0.0
    %1234 = vmatpush1.xpose.msra.mxu0 %v1231
    %1235 = vmatprep.subr.mxu0 0.0
    %1236 = vmatpush1.xpose.msra.mxu0 0.0
    %1237 = vmatprep.subr.mxu0 0.0
    %1238 = vmatpush1.xpose.msra.mxu0 0.0
    %1239 = vmatprep.subr.mxu0 0.0
    %1240 = vmatpush1.xpose.msra.mxu0 0.0
    %1241 = vmatprep.subr.mxu0 0.0
    %1242 = vmatpush1.xpose.msra.mxu0 0.0
    %1243 = vmatprep.subr.mxu0 0.0
    %1244 = vmatpush1.xpose.msra.mxu0 0.0
    %1245 = vmatprep.subr.mxu0 0.0
    %1246 = vmatpush1.xpose.msra.mxu0 0.0
    %1247 = vmatprep.subr.mxu0 0.0
    %1248 = vmatpush1.xpose.msra.mxu0 0.0
    %1249 = vmatprep.subr.mxu0 0.0
    %1250 = vmatpush1.xpose.msra.mxu0 0.0
    %1251 = vmatprep.subr.mxu0 0.0
    %1252 = vmatpush1.xpose.msra.mxu0 0.0
    %1253 = vmatprep.subr.mxu0 0.0
    %1254 = vmatpush1.xpose.msra.mxu0 0.0
    %1255 = vmatprep.subr.mxu0 0.0
    %1256 = vmatpush1.xpose.msra.mxu0 0.0
    %1257 = vmatprep.subr.mxu0 0.0
    %1258 = vmatpush1.xpose.msra.mxu0 0.0
    %1259 = vmatprep.subr.mxu0 0.0
    %1260 = vmatpush1.xpose.msra.mxu0 0.0
    %1261 = vmatprep.subr.mxu0 0.0
    %1262 = vmatpush1.xpose.msra.mxu0 0.0
    %1263 = vmatprep.subr.mxu0 0.0
    %1264 = vmatpush1.xpose.msra.mxu0 0.0
    %1265 = vmatprep.subr.mxu0 0.0
    %1266 = vmatpush1.xpose.msra.mxu0 0.0
    %1267 = vmatprep.subr.mxu0 0.0
    %1268 = vmatpush1.xpose.msra.mxu0 0.0
    %1269 = vmatprep.subr.mxu0 0.0
    %1270 = vmatpush1.xpose.msra.mxu0 0.0
    %1271 = vmatprep.subr.mxu0 0.0
    %1272 = vmatpush1.xpose.msra.mxu0 0.0
    %1273 = vmatprep.subr.mxu0 0.0
    %1274 = vmatpush1.xpose.msra.mxu0 0.0
    %1275 = vmatprep.subr.mxu0 0.0
    %1276 = vmatpush1.xpose.msra.mxu0 0.0
    %1277 = vmatprep.subr.mxu0 0.0
    %1278 = vmatpush1.xpose.msra.mxu0 0.0
    %1279 = vmatprep.subr.mxu0 0.0
    %1280 = vmatpush1.xpose.msra.mxu0 0.0
    %1281 = vmatprep.subr.mxu0 0.0
    %1282 = vmatpush1.xpose.msra.mxu0 0.0
    %1283 = vmatprep.subr.mxu0 0.0
    %1284 = vmatpush1.xpose.msra.mxu0 0.0
    %1285 = vmatprep.subr.mxu0 0.0
    %1286 = vmatpush1.xpose.msra.mxu0 0.0
    %1287 = vmatprep.subr.mxu0 0.0
    %1288 = vmatpush1.xpose.msra.mxu0 0.0
    %1289 = vmatprep.subr.mxu0 0.0
    %1290 = vmatpush1.xpose.msra.mxu0 0.0
    %1291 = vmatprep.subr.mxu0 0.0
    %1292 = vmatpush1.xpose.msra.mxu0 0.0
    %1293 = vmatprep.subr.mxu0 0.0
    %1294 = vmatpush1.xpose.msra.mxu0 0.0
    %1295 = vmatprep.subr.mxu0 0.0
    %1296 = vmatpush1.xpose.msra.mxu0 0.0
    %1297 = vmatprep.mubr.f32.mxu0 0.0
    %1298 = vmatmul.mubr.f32.gmra.mrb[0].mxu0 %v1228
    %v1299 = vpop.f32.mrb[0].mxu0
    %v1300 = vadd.f32 0.0, %v1299
    %v1301 = vpop.f32.mrb[0].mxu0
    %1302 = vdwg.mxu0
    %v1303 = vmul.f32 %v1300, 0.35355338
    %v1304 = vsel %vm1226, -1e+09, %v1303
    %v1305 = vsel %vm537, %v1304, -inf
    %1306 = vmax.xlane.f32.xlu0 %v1305
    %v1307 = vpop.xlane.xlu0 %1306
    %v1308 = vsub.f32 %v1304, %v1307
    %v1309 = vmul.f32 %v1308, 1.442695
    %v1310 = vpow.pop %v1309
    %v1311 = vsel %vm537, %v1310, 0.0
    %1312 = vadd.xlane.f32.xlu0 %v1311
    %v1313 = vpop.xlane.xlu0 %1312
    %v1314 = vrcp.pop %v1313
    %v1315 = vmul.f32 %v1310, %v1314
    %v1317 = vsel %vm537, %v1315, 0
    %1319 = vmatprep.subr.mxu0 0.0
    %1320 = vmatpush1.msra.mxu0 %v521
    %1321 = vmatprep.subr.mxu0 0.0
    %1322 = vmatpush1.msra.mxu0 0.0
    %1323 = vmatprep.subr.mxu0 0.0
    %1324 = vmatpush1.msra.mxu0 0.0
    %1325 = vmatprep.subr.mxu0 0.0
    %1326 = vmatpush1.msra.mxu0 0.0
    %1327 = vmatprep.subr.mxu0 0.0
    %1328 = vmatpush1.msra.mxu0 0.0
    %1329 = vmatprep.subr.mxu0 0.0
    %1330 = vmatpush1.msra.mxu0 0.0
    %1331 = vmatprep.subr.mxu0 0.0
    %1332 = vmatpush1.msra.mxu0 0.0
    %1333 = vmatprep.subr.mxu0 0.0
    %1334 = vmatpush1.msra.mxu0 0.0
    %1335 = vmatprep.subr.mxu0 0.0
    %1336 = vmatpush1.msra.mxu0 0.0
    %1337 = vmatprep.subr.mxu0 0.0
    %1338 = vmatpush1.msra.mxu0 0.0
    %1339 = vmatprep.subr.mxu0 0.0
    %1340 = vmatpush1.msra.mxu0 0.0
    %1341 = vmatprep.subr.mxu0 0.0
    %1342 = vmatpush1.msra.mxu0 0.0
    %1343 = vmatprep.subr.mxu0 0.0
    %1344 = vmatpush1.msra.mxu0 0.0
    %1345 = vmatprep.subr.mxu0 0.0
    %1346 = vmatpush1.msra.mxu0 0.0
    %1347 = vmatprep.subr.mxu0 0.0
    %1348 = vmatpush1.msra.mxu0 0.0
    %1349 = vmatprep.subr.mxu0 0.0
    %1350 = vmatpush1.msra.mxu0 0.0
    %1351 = vmatprep.subr.mxu0 0.0
    %1352 = vmatpush1.msra.mxu0 0.0
    %1353 = vmatprep.subr.mxu0 0.0
    %1354 = vmatpush1.msra.mxu0 0.0
    %1355 = vmatprep.subr.mxu0 0.0
    %1356 = vmatpush1.msra.mxu0 0.0
    %1357 = vmatprep.subr.mxu0 0.0
    %1358 = vmatpush1.msra.mxu0 0.0
    %1359 = vmatprep.subr.mxu0 0.0
    %1360 = vmatpush1.msra.mxu0 0.0
    %1361 = vmatprep.subr.mxu0 0.0
    %1362 = vmatpush1.msra.mxu0 0.0
    %1363 = vmatprep.subr.mxu0 0.0
    %1364 = vmatpush1.msra.mxu0 0.0
    %1365 = vmatprep.subr.mxu0 0.0
    %1366 = vmatpush1.msra.mxu0 0.0
    %1367 = vmatprep.subr.mxu0 0.0
    %1368 = vmatpush1.msra.mxu0 0.0
    %1369 = vmatprep.subr.mxu0 0.0
    %1370 = vmatpush1.msra.mxu0 0.0
    %1371 = vmatprep.subr.mxu0 0.0
    %1372 = vmatpush1.msra.mxu0 0.0
    %1373 = vmatprep.subr.mxu0 0.0
    %1374 = vmatpush1.msra.mxu0 0.0
    %1375 = vmatprep.subr.mxu0 0.0
    %1376 = vmatpush1.msra.mxu0 0.0
    %1377 = vmatprep.subr.mxu0 0.0
    %1378 = vmatpush1.msra.mxu0 0.0
    %1379 = vmatprep.subr.mxu0 0.0
    %1380 = vmatpush1.msra.mxu0 0.0
    %1381 = vmatprep.subr.mxu0 0.0
    %1382 = vmatpush1.msra.mxu0 0.0
    %1383 = vmatprep.mubr.f32.mxu0 0.0
    %1384 = vmatmul.mubr.f32.gmra.mrb[0].mxu0 %v1317
    %v1385 = vpop.f32.mrb[0].mxu0
    %v1386 = vadd.f32 0.0, %v1385
    %v1387 = vpop.f32.mrb[0].mxu0
    %1388 = vdwg.mxu0
    %1389 = vst.msk [vmem:[#allocation2 + $0x8] sm:$0xff] %vm537, %v1386
    %1390 = vrot.lane.b32.xlu0 %v359, 120
    %v1391 = vpop.permute.xlu0 %1390
    %1392 = vrot.lane.b32.xlu0 %v440, 120
    %v1393 = vpop.permute.xlu0 %1392
    %v1394 = vsel %vm537, %v1391, 0
    %v1396 = vsel %vm537, %v1393, 0
    %1398 = vmatprep.subr.mxu0 0.0
    %1399 = vmatpush1.xpose.msra.mxu0 %v1396
    %1400 = vmatprep.subr.mxu0 0.0
    %1401 = vmatpush1.xpose.msra.mxu0 0.0
    %1402 = vmatprep.subr.mxu0 0.0
    %1403 = vmatpush1.xpose.msra.mxu0 0.0
    %1404 = vmatprep.subr.mxu0 0.0
    %1405 = vmatpush1.xpose.msra.mxu0 0.0
    %1406 = vmatprep.subr.mxu0 0.0
    %1407 = vmatpush1.xpose.msra.mxu0 0.0
    %1408 = vmatprep.subr.mxu0 0.0
    %1409 = vmatpush1.xpose.msra.mxu0 0.0
    %1410 = vmatprep.subr.mxu0 0.0
    %1411 = vmatpush1.xpose.msra.mxu0 0.0
    %1412 = vmatprep.subr.mxu0 0.0
    %1413 = vmatpush1.xpose.msra.mxu0 0.0
    %1414 = vmatprep.subr.mxu0 0.0
    %1415 = vmatpush1.xpose.msra.mxu0 0.0
    %1416 = vmatprep.subr.mxu0 0.0
    %1417 = vmatpush1.xpose.msra.mxu0 0.0
    %1418 = vmatprep.subr.mxu0 0.0
    %1419 = vmatpush1.xpose.msra.mxu0 0.0
    %1420 = vmatprep.subr.mxu0 0.0
    %1421 = vmatpush1.xpose.msra.mxu0 0.0
    %1422 = vmatprep.subr.mxu0 0.0
    %1423 = vmatpush1.xpose.msra.mxu0 0.0
    %1424 = vmatprep.subr.mxu0 0.0
    %1425 = vmatpush1.xpose.msra.mxu0 0.0
    %1426 = vmatprep.subr.mxu0 0.0
    %1427 = vmatpush1.xpose.msra.mxu0 0.0
    %1428 = vmatprep.subr.mxu0 0.0
    %1429 = vmatpush1.xpose.msra.mxu0 0.0
    %1430 = vmatprep.subr.mxu0 0.0
    %1431 = vmatpush1.xpose.msra.mxu0 0.0
    %1432 = vmatprep.subr.mxu0 0.0
    %1433 = vmatpush1.xpose.msra.mxu0 0.0
    %1434 = vmatprep.subr.mxu0 0.0
    %1435 = vmatpush1.xpose.msra.mxu0 0.0
    %1436 = vmatprep.subr.mxu0 0.0
    %1437 = vmatpush1.xpose.msra.mxu0 0.0
    %1438 = vmatprep.subr.mxu0 0.0
    %1439 = vmatpush1.xpose.msra.mxu0 0.0
    %1440 = vmatprep.subr.mxu0 0.0
    %1441 = vmatpush1.xpose.msra.mxu0 0.0
    %1442 = vmatprep.subr.mxu0 0.0
    %1443 = vmatpush1.xpose.msra.mxu0 0.0
    %1444 = vmatprep.subr.mxu0 0.0
    %1445 = vmatpush1.xpose.msra.mxu0 0.0
    %1446 = vmatprep.subr.mxu0 0.0
    %1447 = vmatpush1.xpose.msra.mxu0 0.0
    %1448 = vmatprep.subr.mxu0 0.0
    %1449 = vmatpush1.xpose.msra.mxu0 0.0
    %1450 = vmatprep.subr.mxu0 0.0
    %1451 = vmatpush1.xpose.msra.mxu0 0.0
    %1452 = vmatprep.subr.mxu0 0.0
    %1453 = vmatpush1.xpose.msra.mxu0 0.0
    %1454 = vmatprep.subr.mxu0 0.0
    %1455 = vmatpush1.xpose.msra.mxu0 0.0
    %1456 = vmatprep.subr.mxu0 0.0
    %1457 = vmatpush1.xpose.msra.mxu0 0.0
    %1458 = vmatprep.subr.mxu0 0.0
    %1459 = vmatpush1.xpose.msra.mxu0 0.0
    %1460 = vmatprep.subr.mxu0 0.0
    %1461 = vmatpush1.xpose.msra.mxu0 0.0
    %1462 = vmatprep.mubr.f32.mxu0 0.0
    %1463 = vmatmul.mubr.f32.gmra.mrb[0].mxu0 %v1394
    %v1464 = vpop.f32.mrb[0].mxu0
    %v1465 = vadd.f32 0.0, %v1464
    %v1466 = vpop.f32.mrb[0].mxu0
    %1467 = vdwg.mxu0
    %v1468 = vmul.f32 %v1465, 0.35355338
    %v1469 = vsel %vm1226, -1e+09, %v1468
    %v1470 = vsel %vm537, %v1469, -inf
    %1471 = vmax.xlane.f32.xlu0 %v1470
    %v1472 = vpop.xlane.xlu0 %1471
    %v1473 = vsub.f32 %v1469, %v1472
    %v1474 = vmul.f32 %v1473, 1.442695
    %v1475 = vpow.pop %v1474
    %v1476 = vsel %vm537, %v1475, 0.0
    %1477 = vadd.xlane.f32.xlu0 %v1476
    %v1478 = vpop.xlane.xlu0 %1477
    %v1479 = vrcp.pop %v1478
    %v1480 = vmul.f32 %v1475, %v1479
    %1482 = vrot.lane.b32.xlu0 %v521, 120
    %v1483 = vpop.permute.xlu0 %1482
    %v1486 = vsel %vm537, %v1480, 0
    %1488 = vmatprep.subr.mxu0 0.0
    %1489 = vmatpush1.msra.mxu0 %v1483
    %1490 = vmatprep.subr.mxu0 0.0
    %1491 = vmatpush1.msra.mxu0 0.0
    %1492 = vmatprep.subr.mxu0 0.0
    %1493 = vmatpush1.msra.mxu0 0.0
    %1494 = vmatprep.subr.mxu0 0.0
    %1495 = vmatpush1.msra.mxu0 0.0
    %1496 = vmatprep.subr.mxu0 0.0
    %1497 = vmatpush1.msra.mxu0 0.0
    %1498 = vmatprep.subr.mxu0 0.0
    %1499 = vmatpush1.msra.mxu0 0.0
    %1500 = vmatprep.subr.mxu0 0.0
    %1501 = vmatpush1.msra.mxu0 0.0
    %1502 = vmatprep.subr.mxu0 0.0
    %1503 = vmatpush1.msra.mxu0 0.0
    %1504 = vmatprep.subr.mxu0 0.0
    %1505 = vmatpush1.msra.mxu0 0.0
    %1506 = vmatprep.subr.mxu0 0.0
    %1507 = vmatpush1.msra.mxu0 0.0
    %1508 = vmatprep.subr.mxu0 0.0
    %1509 = vmatpush1.msra.mxu0 0.0
    %1510 = vmatprep.subr.mxu0 0.0
    %1511 = vmatpush1.msra.mxu0 0.0
    %1512 = vmatprep.subr.mxu0 0.0
    %1513 = vmatpush1.msra.mxu0 0.0
    %1514 = vmatprep.subr.mxu0 0.0
    %1515 = vmatpush1.msra.mxu0 0.0
    %1516 = vmatprep.subr.mxu0 0.0
    %1517 = vmatpush1.msra.mxu0 0.0
    %1518 = vmatprep.subr.mxu0 0.0
    %1519 = vmatpush1.msra.mxu0 0.0
    %1520 = vmatprep.subr.mxu0 0.0
    %1521 = vmatpush1.msra.mxu0 0.0
    %1522 = vmatprep.subr.mxu0 0.0
    %1523 = vmatpush1.msra.mxu0 0.0
    %1524 = vmatprep.subr.mxu0 0.0
    %1525 = vmatpush1.msra.mxu0 0.0
    %1526 = vmatprep.subr.mxu0 0.0
    %1527 = vmatpush1.msra.mxu0 0.0
    %1528 = vmatprep.subr.mxu0 0.0
    %1529 = vmatpush1.msra.mxu0 0.0
    %1530 = vmatprep.subr.mxu0 0.0
    %1531 = vmatpush1.msra.mxu0 0.0
    %1532 = vmatprep.subr.mxu0 0.0
    %1533 = vmatpush1.msra.mxu0 0.0
    %1534 = vmatprep.subr.mxu0 0.0
    %1535 = vmatpush1.msra.mxu0 0.0
    %1536 = vmatprep.subr.mxu0 0.0
    %1537 = vmatpush1.msra.mxu0 0.0
    %1538 = vmatprep.subr.mxu0 0.0
    %1539 = vmatpush1.msra.mxu0 0.0
    %1540 = vmatprep.subr.mxu0 0.0
    %1541 = vmatpush1.msra.mxu0 0.0
    %1542 = vmatprep.subr.mxu0 0.0
    %1543 = vmatpush1.msra.mxu0 0.0
    %1544 = vmatprep.subr.mxu0 0.0
    %1545 = vmatpush1.msra.mxu0 0.0
    %1546 = vmatprep.subr.mxu0 0.0
    %1547 = vmatpush1.msra.mxu0 0.0
    %1548 = vmatprep.subr.mxu0 0.0
    %1549 = vmatpush1.msra.mxu0 0.0
    %1550 = vmatprep.subr.mxu0 0.0
    %1551 = vmatpush1.msra.mxu0 0.0
    %1552 = vmatprep.mubr.f32.mxu0 0.0
    %1553 = vmatmul.mubr.f32.gmra.mrb[0].mxu0 %v1486
    %v1554 = vpop.f32.mrb[0].mxu0
    %v1555 = vadd.f32 0.0, %v1554
    %v1556 = vpop.f32.mrb[0].mxu0
    %1557 = vdwg.mxu0
    %1559 = vrot.lane.b32.xlu0 %v1555, 8
    %v1560 = vpop.permute.xlu0 %1559
    %1562 = vst.msk [vmem:[#allocation2 + $0x8] sm:$0xff] %vm873, %v1560
    %1563 = vrot.lane.b32.xlu0 %v359, 112
    %v1564 = vpop.permute.xlu0 %1563
    %1565 = vrot.lane.b32.xlu0 %v440, 112
    %v1566 = vpop.permute.xlu0 %1565
    %v1567 = vsel %vm537, %v1564, 0
    %v1569 = vsel %vm537, %v1566, 0
    %1571 = vmatprep.subr.mxu0 0.0
    %1572 = vmatpush1.xpose.msra.mxu0 %v1569
    %1573 = vmatprep.subr.mxu0 0.0
    %1574 = vmatpush1.xpose.msra.mxu0 0.0
    %1575 = vmatprep.subr.mxu0 0.0
    %1576 = vmatpush1.xpose.msra.mxu0 0.0
    %1577 = vmatprep.subr.mxu0 0.0
    %1578 = vmatpush1.xpose.msra.mxu0 0.0
    %1579 = vmatprep.subr.mxu0 0.0
    %1580 = vmatpush1.xpose.msra.mxu0 0.0
    %1581 = vmatprep.subr.mxu0 0.0
    %1582 = vmatpush1.xpose.msra.mxu0 0.0
    %1583 = vmatprep.subr.mxu0 0.0
    %1584 = vmatpush1.xpose.msra.mxu0 0.0
    %1585 = vmatprep.subr.mxu0 0.0
    %1586 = vmatpush1.xpose.msra.mxu0 0.0
    %1587 = vmatprep.subr.mxu0 0.0
    %1588 = vmatpush1.xpose.msra.mxu0 0.0
    %1589 = vmatprep.subr.mxu0 0.0
    %1590 = vmatpush1.xpose.msra.mxu0 0.0
    %1591 = vmatprep.subr.mxu0 0.0
    %1592 = vmatpush1.xpose.msra.mxu0 0.0
    %1593 = vmatprep.subr.mxu0 0.0
    %1594 = vmatpush1.xpose.msra.mxu0 0.0
    %1595 = vmatprep.subr.mxu0 0.0
    %1596 = vmatpush1.xpose.msra.mxu0 0.0
    %1597 = vmatprep.subr.mxu0 0.0
    %1598 = vmatpush1.xpose.msra.mxu0 0.0
    %1599 = vmatprep.subr.mxu0 0.0
    %1600 = vmatpush1.xpose.msra.mxu0 0.0
    %1601 = vmatprep.subr.mxu0 0.0
    %1602 = vmatpush1.xpose.msra.mxu0 0.0
    %1603 = vmatprep.subr.mxu0 0.0
    %1604 = vmatpush1.xpose.msra.mxu0 0.0
    %1605 = vmatprep.subr.mxu0 0.0
    %1606 = vmatpush1.xpose.msra.mxu0 0.0
    %1607 = vmatprep.subr.mxu0 0.0
    %1608 = vmatpush1.xpose.msra.mxu0 0.0
    %1609 = vmatprep.subr.mxu0 0.0
    %1610 = vmatpush1.xpose.msra.mxu0 0.0
    %1611 = vmatprep.subr.mxu0 0.0
    %1612 = vmatpush1.xpose.msra.mxu0 0.0
    %1613 = vmatprep.subr.mxu0 0.0
    %1614 = vmatpush1.xpose.msra.mxu0 0.0
    %1615 = vmatprep.subr.mxu0 0.0
    %1616 = vmatpush1.xpose.msra.mxu0 0.0
    %1617 = vmatprep.subr.mxu0 0.0
    %1618 = vmatpush1.xpose.msra.mxu0 0.0
    %1619 = vmatprep.subr.mxu0 0.0
    %1620 = vmatpush1.xpose.msra.mxu0 0.0
    %1621 = vmatprep.subr.mxu0 0.0
    %1622 = vmatpush1.xpose.msra.mxu0 0.0
    %1623 = vmatprep.subr.mxu0 0.0
    %1624 = vmatpush1.xpose.msra.mxu0 0.0
    %1625 = vmatprep.subr.mxu0 0.0
    %1626 = vmatpush1.xpose.msra.mxu0 0.0
    %1627 = vmatprep.subr.mxu0 0.0
    %1628 = vmatpush1.xpose.msra.mxu0 0.0
    %1629 = vmatprep.subr.mxu0 0.0
    %1630 = vmatpush1.xpose.msra.mxu0 0.0
    %1631 = vmatprep.subr.mxu0 0.0
    %1632 = vmatpush1.xpose.msra.mxu0 0.0
    %1633 = vmatprep.subr.mxu0 0.0
    %1634 = vmatpush1.xpose.msra.mxu0 0.0
    %1635 = vmatprep.mubr.f32.mxu0 0.0
    %1636 = vmatmul.mubr.f32.gmra.mrb[0].mxu0 %v1567
    %v1637 = vpop.f32.mrb[0].mxu0
    %v1638 = vadd.f32 0.0, %v1637
    %v1639 = vpop.f32.mrb[0].mxu0
    %1640 = vdwg.mxu0
    %v1641 = vmul.f32 %v1638, 0.35355338
    %v1642 = vsel %vm1226, -1e+09, %v1641
    %v1643 = vsel %vm537, %v1642, -inf
    %1644 = vmax.xlane.f32.xlu0 %v1643
    %v1645 = vpop.xlane.xlu0 %1644
    %v1646 = vsub.f32 %v1642, %v1645
    %v1647 = vmul.f32 %v1646, 1.442695
    %v1648 = vpow.pop %v1647
    %v1649 = vsel %vm537, %v1648, 0.0
    %1650 = vadd.xlane.f32.xlu0 %v1649
    %v1651 = vpop.xlane.xlu0 %1650
    %v1652 = vrcp.pop %v1651
    %v1653 = vmul.f32 %v1648, %v1652
    %1654 = vrot.lane.b32.xlu0 %v521, 112
    %v1655 = vpop.permute.xlu0 %1654
    %v1658 = vsel %vm537, %v1653, 0
    %1660 = vmatprep.subr.mxu0 0.0
    %1661 = vmatpush1.msra.mxu0 %v1655
    %1662 = vmatprep.subr.mxu0 0.0
    %1663 = vmatpush1.msra.mxu0 0.0
    %1664 = vmatprep.subr.mxu0 0.0
    %1665 = vmatpush1.msra.mxu0 0.0
    %1666 = vmatprep.subr.mxu0 0.0
    %1667 = vmatpush1.msra.mxu0 0.0
    %1668 = vmatprep.subr.mxu0 0.0
    %1669 = vmatpush1.msra.mxu0 0.0
    %1670 = vmatprep.subr.mxu0 0.0
    %1671 = vmatpush1.msra.mxu0 0.0
    %1672 = vmatprep.subr.mxu0 0.0
    %1673 = vmatpush1.msra.mxu0 0.0
    %1674 = vmatprep.subr.mxu0 0.0
    %1675 = vmatpush1.msra.mxu0 0.0
    %1676 = vmatprep.subr.mxu0 0.0
    %1677 = vmatpush1.msra.mxu0 0.0
    %1678 = vmatprep.subr.mxu0 0.0
    %1679 = vmatpush1.msra.mxu0 0.0
    %1680 = vmatprep.subr.mxu0 0.0
    %1681 = vmatpush1.msra.mxu0 0.0
    %1682 = vmatprep.subr.mxu0 0.0
    %1683 = vmatpush1.msra.mxu0 0.0
    %1684 = vmatprep.subr.mxu0 0.0
    %1685 = vmatpush1.msra.mxu0 0.0
    %1686 = vmatprep.subr.mxu0 0.0
    %1687 = vmatpush1.msra.mxu0 0.0
    %1688 = vmatprep.subr.mxu0 0.0
    %1689 = vmatpush1.msra.mxu0 0.0
    %1690 = vmatprep.subr.mxu0 0.0
    %1691 = vmatpush1.msra.mxu0 0.0
    %1692 = vmatprep.subr.mxu0 0.0
    %1693 = vmatpush1.msra.mxu0 0.0
    %1694 = vmatprep.subr.mxu0 0.0
    %1695 = vmatpush1.msra.mxu0 0.0
    %1696 = vmatprep.subr.mxu0 0.0
    %1697 = vmatpush1.msra.mxu0 0.0
    %1698 = vmatprep.subr.mxu0 0.0
    %1699 = vmatpush1.msra.mxu0 0.0
    %1700 = vmatprep.subr.mxu0 0.0
    %1701 = vmatpush1.msra.mxu0 0.0
    %1702 = vmatprep.subr.mxu0 0.0
    %1703 = vmatpush1.msra.mxu0 0.0
    %1704 = vmatprep.subr.mxu0 0.0
    %1705 = vmatpush1.msra.mxu0 0.0
    %1706 = vmatprep.subr.mxu0 0.0
    %1707 = vmatpush1.msra.mxu0 0.0
    %1708 = vmatprep.subr.mxu0 0.0
    %1709 = vmatpush1.msra.mxu0 0.0
    %1710 = vmatprep.subr.mxu0 0.0
    %1711 = vmatpush1.msra.mxu0 0.0
    %1712 = vmatprep.subr.mxu0 0.0
    %1713 = vmatpush1.msra.mxu0 0.0
    %1714 = vmatprep.subr.mxu0 0.0
    %1715 = vmatpush1.msra.mxu0 0.0
    %1716 = vmatprep.subr.mxu0 0.0
    %1717 = vmatpush1.msra.mxu0 0.0
    %1718 = vmatprep.subr.mxu0 0.0
    %1719 = vmatpush1.msra.mxu0 0.0
    %1720 = vmatprep.subr.mxu0 0.0
    %1721 = vmatpush1.msra.mxu0 0.0
    %1722 = vmatprep.subr.mxu0 0.0
    %1723 = vmatpush1.msra.mxu0 0.0
    %1724 = vmatprep.mubr.f32.mxu0 0.0
    %1725 = vmatmul.mubr.f32.gmra.mrb[0].mxu0 %v1658
    %v1726 = vpop.f32.mrb[0].mxu0
    %v1727 = vadd.f32 0.0, %v1726
    %v1728 = vpop.f32.mrb[0].mxu0
    %1729 = vdwg.mxu0
    %1731 = vrot.lane.b32.xlu0 %v1727, 16
    %v1732 = vpop.permute.xlu0 %1731
    %1734 = vst.msk [vmem:[#allocation2 + $0x8] sm:$0xff] %vm1046, %v1732
    %1735 = vrot.lane.b32.xlu0 %v359, 104
    %v1736 = vpop.permute.xlu0 %1735
    %1737 = vrot.lane.b32.xlu0 %v440, 104
    %v1738 = vpop.permute.xlu0 %1737
    %v1739 = vsel %vm537, %v1736, 0
    %v1741 = vsel %vm537, %v1738, 0
    %1743 = vmatprep.subr.mxu0 0.0
    %1744 = vmatpush1.xpose.msra.mxu0 %v1741
    %1745 = vmatprep.subr.mxu0 0.0
    %1746 = vmatpush1.xpose.msra.mxu0 0.0
    %1747 = vmatprep.subr.mxu0 0.0
    %1748 = vmatpush1.xpose.msra.mxu0 0.0
    %1749 = vmatprep.subr.mxu0 0.0
    %1750 = vmatpush1.xpose.msra.mxu0 0.0
    %1751 = vmatprep.subr.mxu0 0.0
    %1752 = vmatpush1.xpose.msra.mxu0 0.0
    %1753 = vmatprep.subr.mxu0 0.0
    %1754 = vmatpush1.xpose.msra.mxu0 0.0
    %1755 = vmatprep.subr.mxu0 0.0
    %1756 = vmatpush1.xpose.msra.mxu0 0.0
    %1757 = vmatprep.subr.mxu0 0.0
    %1758 = vmatpush1.xpose.msra.mxu0 0.0
    %1759 = vmatprep.subr.mxu0 0.0
    %1760 = vmatpush1.xpose.msra.mxu0 0.0
    %1761 = vmatprep.subr.mxu0 0.0
    %1762 = vmatpush1.xpose.msra.mxu0 0.0
    %1763 = vmatprep.subr.mxu0 0.0
    %1764 = vmatpush1.xpose.msra.mxu0 0.0
    %1765 = vmatprep.subr.mxu0 0.0
    %1766 = vmatpush1.xpose.msra.mxu0 0.0
    %1767 = vmatprep.subr.mxu0 0.0
    %1768 = vmatpush1.xpose.msra.mxu0 0.0
    %1769 = vmatprep.subr.mxu0 0.0
    %1770 = vmatpush1.xpose.msra.mxu0 0.0
    %1771 = vmatprep.subr.mxu0 0.0
    %1772 = vmatpush1.xpose.msra.mxu0 0.0
    %1773 = vmatprep.subr.mxu0 0.0
    %1774 = vmatpush1.xpose.msra.mxu0 0.0
    %1775 = vmatprep.subr.mxu0 0.0
    %1776 = vmatpush1.xpose.msra.mxu0 0.0
    %1777 = vmatprep.subr.mxu0 0.0
    %1778 = vmatpush1.xpose.msra.mxu0 0.0
    %1779 = vmatprep.subr.mxu0 0.0
    %1780 = vmatpush1.xpose.msra.mxu0 0.0
    %1781 = vmatprep.subr.mxu0 0.0
    %1782 = vmatpush1.xpose.msra.mxu0 0.0
    %1783 = vmatprep.subr.mxu0 0.0
    %1784 = vmatpush1.xpose.msra.mxu0 0.0
    %1785 = vmatprep.subr.mxu0 0.0
    %1786 = vmatpush1.xpose.msra.mxu0 0.0
    %1787 = vmatprep.subr.mxu0 0.0
    %1788 = vmatpush1.xpose.msra.mxu0 0.0
    %1789 = vmatprep.subr.mxu0 0.0
    %1790 = vmatpush1.xpose.msra.mxu0 0.0
    %1791 = vmatprep.subr.mxu0 0.0
    %1792 = vmatpush1.xpose.msra.mxu0 0.0
    %1793 = vmatprep.subr.mxu0 0.0
    %1794 = vmatpush1.xpose.msra.mxu0 0.0
    %1795 = vmatprep.subr.mxu0 0.0
    %1796 = vmatpush1.xpose.msra.mxu0 0.0
    %1797 = vmatprep.subr.mxu0 0.0
    %1798 = vmatpush1.xpose.msra.mxu0 0.0
    %1799 = vmatprep.subr.mxu0 0.0
    %1800 = vmatpush1.xpose.msra.mxu0 0.0
    %1801 = vmatprep.subr.mxu0 0.0
    %1802 = vmatpush1.xpose.msra.mxu0 0.0
    %1803 = vmatprep.subr.mxu0 0.0
    %1804 = vmatpush1.xpose.msra.mxu0 0.0
    %1805 = vmatprep.subr.mxu0 0.0
    %1806 = vmatpush1.xpose.msra.mxu0 0.0
    %1807 = vmatprep.mubr.f32.mxu0 0.0
    %1808 = vmatmul.mubr.f32.gmra.mrb[0].mxu0 %v1739
    %v1809 = vpop.f32.mrb[0].mxu0
    %v1810 = vadd.f32 0.0, %v1809
    %v1811 = vpop.f32.mrb[0].mxu0
    %1812 = vdwg.mxu0
    %v1813 = vmul.f32 %v1810, 0.35355338
    %v1814 = vsel %vm1226, -1e+09, %v1813
    %v1815 = vsel %vm537, %v1814, -inf
    %1816 = vmax.xlane.f32.xlu0 %v1815
    %v1817 = vpop.xlane.xlu0 %1816
    %v1818 = vsub.f32 %v1814, %v1817
    %v1819 = vmul.f32 %v1818, 1.442695
    %v1820 = vpow.pop %v1819
    %v1821 = vsel %vm537, %v1820, 0.0
    %1822 = vadd.xlane.f32.xlu0 %v1821
    %v1823 = vpop.xlane.xlu0 %1822
    %v1824 = vrcp.pop %v1823
    %v1825 = vmul.f32 %v1820, %v1824
    %1826 = vrot.lane.b32.xlu0 %v521, 104
    %v1827 = vpop.permute.xlu0 %1826
    %v1830 = vsel %vm537, %v1825, 0
    %1832 = vmatprep.subr.mxu0 0.0
    %1833 = vmatpush1.msra.mxu0 %v1827
    %1834 = vmatprep.subr.mxu0 0.0
    %1835 = vmatpush1.msra.mxu0 0.0
    %1836 = vmatprep.subr.mxu0 0.0
    %1837 = vmatpush1.msra.mxu0 0.0
    %1838 = vmatprep.subr.mxu0 0.0
    %1839 = vmatpush1.msra.mxu0 0.0
    %1840 = vmatprep.subr.mxu0 0.0
    %1841 = vmatpush1.msra.mxu0 0.0
    %1842 = vmatprep.subr.mxu0 0.0
    %1843 = vmatpush1.msra.mxu0 0.0
    %1844 = vmatprep.subr.mxu0 0.0
    %1845 = vmatpush1.msra.mxu0 0.0
    %1846 = vmatprep.subr.mxu0 0.0
    %1847 = vmatpush1.msra.mxu0 0.0
    %1848 = vmatprep.subr.mxu0 0.0
    %1849 = vmatpush1.msra.mxu0 0.0
    %1850 = vmatprep.subr.mxu0 0.0
    %1851 = vmatpush1.msra.mxu0 0.0
    %1852 = vmatprep.subr.mxu0 0.0
    %1853 = vmatpush1.msra.mxu0 0.0
    %1854 = vmatprep.subr.mxu0 0.0
    %1855 = vmatpush1.msra.mxu0 0.0
    %1856 = vmatprep.subr.mxu0 0.0
    %1857 = vmatpush1.msra.mxu0 0.0
    %1858 = vmatprep.subr.mxu0 0.0
    %1859 = vmatpush1.msra.mxu0 0.0
    %1860 = vmatprep.subr.mxu0 0.0
    %1861 = vmatpush1.msra.mxu0 0.0
    %1862 = vmatprep.subr.mxu0 0.0
    %1863 = vmatpush1.msra.mxu0 0.0
    %1864 = vmatprep.subr.mxu0 0.0
    %1865 = vmatpush1.msra.mxu0 0.0
    %1866 = vmatprep.subr.mxu0 0.0
    %1867 = vmatpush1.msra.mxu0 0.0
    %1868 = vmatprep.subr.mxu0 0.0
    %1869 = vmatpush1.msra.mxu0 0.0
    %1870 = vmatprep.subr.mxu0 0.0
    %1871 = vmatpush1.msra.mxu0 0.0
    %1872 = vmatprep.subr.mxu0 0.0
    %1873 = vmatpush1.msra.mxu0 0.0
    %1874 = vmatprep.subr.mxu0 0.0
    %1875 = vmatpush1.msra.mxu0 0.0
    %1876 = vmatprep.subr.mxu0 0.0
    %1877 = vmatpush1.msra.mxu0 0.0
    %1878 = vmatprep.subr.mxu0 0.0
    %1879 = vmatpush1.msra.mxu0 0.0
    %1880 = vmatprep.subr.mxu0 0.0
    %1881 = vmatpush1.msra.mxu0 0.0
    %1882 = vmatprep.subr.mxu0 0.0
    %1883 = vmatpush1.msra.mxu0 0.0
    %1884 = vmatprep.subr.mxu0 0.0
    %1885 = vmatpush1.msra.mxu0 0.0
    %1886 = vmatprep.subr.mxu0 0.0
    %1887 = vmatpush1.msra.mxu0 0.0
    %1888 = vmatprep.subr.mxu0 0.0
    %1889 = vmatpush1.msra.mxu0 0.0
    %1890 = vmatprep.subr.mxu0 0.0
    %1891 = vmatpush1.msra.mxu0 0.0
    %1892 = vmatprep.subr.mxu0 0.0
    %1893 = vmatpush1.msra.mxu0 0.0
    %1894 = vmatprep.subr.mxu0 0.0
    %1895 = vmatpush1.msra.mxu0 0.0
    %1896 = vmatprep.mubr.f32.mxu0 0.0
    %1897 = vmatmul.mubr.f32.gmra.mrb[0].mxu0 %v1830
    %v1898 = vpop.f32.mrb[0].mxu0
    %v1899 = vadd.f32 0.0, %v1898
    %v1900 = vpop.f32.mrb[0].mxu0
    %1901 = vdwg.mxu0
    %1903 = vrot.lane.b32.xlu0 %v1899, 24
    %v1904 = vpop.permute.xlu0 %1903
    %1906 = vst.msk [vmem:[#allocation2 + $0x8] sm:$0xff] %vm1219, %v1904
    %v1907 = vld [vmem:[#allocation2] sm:$0xff]
    %v1908 = vld [vmem:[#allocation2 + $0x8] sm:$0xff]
    %v1910 = vlaneseq
    %v1911 = vshrl.u32 %v1910, 7
    %v1912 = vsub.s32 0, %v1911
    %v1913 = vrot.slane %v271, %v1912
    %v1916 = vsel %vm280, %v1907, 0
    %v1919 = vsel %vm280, %v1908, 0
    %1921 = vmatprep.subr.mxu0 0.0
    %1922 = vmatpush1.msra.mxu0 %v267
    %1923 = vmatprep.subr.mxu0 0.0
    %1924 = vmatpush1.msra.mxu0 %v268
    %1925 = vmatprep.subr.mxu0 0.0
    %1926 = vmatpush1.msra.mxu0 %v269
    %1927 = vmatprep.subr.mxu0 0.0
    %1928 = vmatpush1.msra.mxu0 %v270
    %1929 = vmatprep.subr.mxu0 0.0
    %1930 = vmatpush1.msra.mxu0 0.0
    %1931 = vmatprep.subr.mxu0 0.0
    %1932 = vmatpush1.msra.mxu0 0.0
    %1933 = vmatprep.subr.mxu0 0.0
    %1934 = vmatpush1.msra.mxu0 0.0
    %1935 = vmatprep.subr.mxu0 0.0
    %1936 = vmatpush1.msra.mxu0 0.0
    %1937 = vmatprep.subr.mxu0 0.0
    %1938 = vmatpush1.msra.mxu0 0.0
    %1939 = vmatprep.subr.mxu0 0.0
    %1940 = vmatpush1.msra.mxu0 0.0
    %1941 = vmatprep.subr.mxu0 0.0
    %1942 = vmatpush1.msra.mxu0 0.0
    %1943 = vmatprep.subr.mxu0 0.0
    %1944 = vmatpush1.msra.mxu0 0.0
    %1945 = vmatprep.subr.mxu0 0.0
    %1946 = vmatpush1.msra.mxu0 0.0
    %1947 = vmatprep.subr.mxu0 0.0
    %1948 = vmatpush1.msra.mxu0 0.0
    %1949 = vmatprep.subr.mxu0 0.0
    %1950 = vmatpush1.msra.mxu0 0.0
    %1951 = vmatprep.subr.mxu0 0.0
    %1952 = vmatpush1.msra.mxu0 0.0
    %1953 = vmatprep.subr.mxu0 0.0
    %1954 = vmatpush1.msra.mxu0 0.0
    %1955 = vmatprep.subr.mxu0 0.0
    %1956 = vmatpush1.msra.mxu0 0.0
    %1957 = vmatprep.subr.mxu0 0.0
    %1958 = vmatpush1.msra.mxu0 0.0
    %1959 = vmatprep.subr.mxu0 0.0
    %1960 = vmatpush1.msra.mxu0 0.0
    %1961 = vmatprep.subr.mxu0 0.0
    %1962 = vmatpush1.msra.mxu0 0.0
    %1963 = vmatprep.subr.mxu0 0.0
    %1964 = vmatpush1.msra.mxu0 0.0
    %1965 = vmatprep.subr.mxu0 0.0
    %1966 = vmatpush1.msra.mxu0 0.0
    %1967 = vmatprep.subr.mxu0 0.0
    %1968 = vmatpush1.msra.mxu0 0.0
    %1969 = vmatprep.subr.mxu0 0.0
    %1970 = vmatpush1.msra.mxu0 0.0
    %1971 = vmatprep.subr.mxu0 0.0
    %1972 = vmatpush1.msra.mxu0 0.0
    %1973 = vmatprep.subr.mxu0 0.0
    %1974 = vmatpush1.msra.mxu0 0.0
    %1975 = vmatprep.subr.mxu0 0.0
    %1976 = vmatpush1.msra.mxu0 0.0
    %1977 = vmatprep.subr.mxu0 0.0
    %1978 = vmatpush1.msra.mxu0 0.0
    %1979 = vmatprep.subr.mxu0 0.0
    %1980 = vmatpush1.msra.mxu0 0.0
    %1981 = vmatprep.subr.mxu0 0.0
    %1982 = vmatpush1.msra.mxu0 0.0
    %1983 = vmatprep.subr.mxu0 0.0
    %1984 = vmatpush1.msra.mxu0 0.0
    %1985 = vmatprep.mubr.f32.mxu0 0.0
    %1986 = vmatmul.mubr.f32.gmra.mrb[0].mxu0 %v1916
    %v1987 = vpop.f32.mrb[0].mxu0
    %v1988 = vadd.f32 %v1913, %v1987
    %v1989 = vpop.f32.mrb[0].mxu0
    %1990 = vmatprep.mubr.f32.mxu0 0.0
    %1991 = vmatmul.mubr.f32.gmra.mrb[0].mxu0 %v1919
    %v1992 = vpop.f32.mrb[0].mxu0
    %v1993 = vadd.f32 %v1913, %v1992
    %v1994 = vpop.f32.mrb[0].mxu0
    %1995 = vdwg.mxu0
    %v1996 = vadd.f32 %v1988, %v246
    %v1997 = vadd.f32 %v1993, %v247
    %v1998 = vsel %vm280, %v1996, 0.0
    %1999 = vadd.xlane.f32.xlu0 %v1998
    %v2000 = vpop.xlane.xlu0 %1999
    %v2001 = vsel %vm280, %v1997, 0.0
    %2002 = vadd.xlane.f32.xlu0 %v2001
    %v2003 = vpop.xlane.xlu0 %2002
    %v2004 = vrcp.pop 32.0
    %v2005 = vmul.f32 %v2000, %v2004
    %v2006 = vmul.f32 %v2003, %v2004
    %v2007 = vsub.f32 %v1996, %v2005
    %v2008 = vsub.f32 %v1997, %v2006
    %v2009 = vmul.f32 %v2007, %v2007
    %v2010 = vmul.f32 %v2008, %v2008
    %v2011 = vsel %vm280, %v2009, 0.0
    %2012 = vadd.xlane.f32.xlu0 %v2011
    %v2013 = vpop.xlane.xlu0 %2012
    %v2014 = vsel %vm280, %v2010, 0.0
    %2015 = vadd.xlane.f32.xlu0 %v2014
    %v2016 = vpop.xlane.xlu0 %2015
    %v2017 = vmul.f32 %v2013, %v2004
    %v2018 = vmul.f32 %v2016, %v2004
    %v2019 = vadd.f32 %v2017, 1e-05
    %v2020 = vadd.f32 %v2018, 1e-05
    %v2021 = vrsqrt.pop %v2019
    %v2022 = vrsqrt.pop %v2020
    %v2023 = vmul.f32 %v2007, %v2021
    %v2024 = vmul.f32 %v2008, %v2022
    %v2026 = vlaneseq
    %v2027 = vshrl.u32 %v2026, 7
    %v2028 = vsub.s32 0, %v2027
    %v2029 = vrot.slane %v272, %v2028
    %v2031 = vmul.f32 %v2023, %v2029
    %v2032 = vmul.f32 %v2024, %v2029
    %v2034 = vlaneseq
    %v2035 = vshrl.u32 %v2034, 7
    %v2036 = vsub.s32 0, %v2035
    %v2037 = vrot.slane %v273, %v2036
    %v2039 = vadd.f32 %v2031, %v2037
    %v2040 = vadd.f32 %v2032, %v2037
    %v2041 = vld [vmem:[%s31] sm:$0xff]
    %v2042 = vld [vmem:[%s31 + $0x8] sm:$0xff]
    %v2043 = vld [vmem:[%s31 + $0x10] sm:$0xff]
    %v2044 = vld [vmem:[%s31 + $0x18] sm:$0xff]
    %v2045 = vld [vmem:[%s33] sm:$0xff]
    %v2046 = vld [vmem:[%s33 + $0x8] sm:$0xff]
    %v2047 = vld [vmem:[%s33 + $0x10] sm:$0xff]
    %v2048 = vld [vmem:[%s33 + $0x18] sm:$0xff]
    %v2049 = vld [vmem:[#allocation6] sm:$0xff]
    %v2050 = vld [vmem:[#allocation6 + $0x8] sm:$0xff]
    %v2051 = vld [vmem:[#allocation6 + $0x10] sm:$0xff]
    %v2052 = vld [vmem:[#allocation6 + $0x18] sm:$0xff]
    %v2053 = vld [vmem:[#allocation8] sm:$0x1]
    %v2054 = vld [vmem:[#allocation9] sm:$0x1]
    %v2055 = vld [vmem:[%s41] sm:$0x1]
    %v2056 = vld [vmem:[#allocation11] sm:$0xff]
    %v2057 = vld [vmem:[#allocation11 + $0x8] sm:$0xff]
    %v2058 = vld [vmem:[#allocation11 + $0x10] sm:$0xff]
    %v2059 = vld [vmem:[#allocation11 + $0x18] sm:$0xff]
    %v2060 = vld [vmem:[#allocation12] sm:$0x1]
    %v2061 = vld [vmem:[%s47] sm:$0x1]
    %v2062 = vld [vmem:[#allocation14] sm:$0x1]
    %v2064 = vlaneseq
    %v2065 = vshrl.u32 %v2064, 7
    %v2066 = vsub.s32 0, %v2065
    %v2067 = vrot.slane %v2053, %v2066
    %v2070 = vsel %vm280, %v2039, 0
    %v2073 = vsel %vm280, %v2040, 0
    %2075 = vmatprep.subr.mxu0 0.0
    %2076 = vmatpush1.msra.mxu0 %v2041
    %2077 = vmatprep.subr.mxu0 0.0
    %2078 = vmatpush1.msra.mxu0 %v2042
    %2079 = vmatprep.subr.mxu0 0.0
    %2080 = vmatpush1.msra.mxu0 %v2043
    %2081 = vmatprep.subr.mxu0 0.0
    %2082 = vmatpush1.msra.mxu0 %v2044
    %2083 = vmatprep.subr.mxu0 0.0
    %2084 = vmatpush1.msra.mxu0 0.0
    %2085 = vmatprep.subr.mxu0 0.0
    %2086 = vmatpush1.msra.mxu0 0.0
    %2087 = vmatprep.subr.mxu0 0.0
    %2088 = vmatpush1.msra.mxu0 0.0
    %2089 = vmatprep.subr.mxu0 0.0
    %2090 = vmatpush1.msra.mxu0 0.0
    %2091 = vmatprep.subr.mxu0 0.0
    %2092 = vmatpush1.msra.mxu0 0.0
    %2093 = vmatprep.subr.mxu0 0.0
    %2094 = vmatpush1.msra.mxu0 0.0
    %2095 = vmatprep.subr.mxu0 0.0
    %2096 = vmatpush1.msra.mxu0 0.0
    %2097 = vmatprep.subr.mxu0 0.0
    %2098 = vmatpush1.msra.mxu0 0.0
    %2099 = vmatprep.subr.mxu0 0.0
    %2100 = vmatpush1.msra.mxu0 0.0
    %2101 = vmatprep.subr.mxu0 0.0
    %2102 = vmatpush1.msra.mxu0 0.0
    %2103 = vmatprep.subr.mxu0 0.0
    %2104 = vmatpush1.msra.mxu0 0.0
    %2105 = vmatprep.subr.mxu0 0.0
    %2106 = vmatpush1.msra.mxu0 0.0
    %2107 = vmatprep.subr.mxu0 0.0
    %2108 = vmatpush1.msra.mxu0 0.0
    %2109 = vmatprep.subr.mxu0 0.0
    %2110 = vmatpush1.msra.mxu0 0.0
    %2111 = vmatprep.subr.mxu0 0.0
    %2112 = vmatpush1.msra.mxu0 0.0
    %2113 = vmatprep.subr.mxu0 0.0
    %2114 = vmatpush1.msra.mxu0 0.0
    %2115 = vmatprep.subr.mxu0 0.0
    %2116 = vmatpush1.msra.mxu0 0.0
    %2117 = vmatprep.subr.mxu0 0.0
    %2118 = vmatpush1.msra.mxu0 0.0
    %2119 = vmatprep.subr.mxu0 0.0
    %2120 = vmatpush1.msra.mxu0 0.0
    %2121 = vmatprep.subr.mxu0 0.0
    %2122 = vmatpush1.msra.mxu0 0.0
    %2123 = vmatprep.subr.mxu0 0.0
    %2124 = vmatpush1.msra.mxu0 0.0
    %2125 = vmatprep.subr.mxu0 0.0
    %2126 = vmatpush1.msra.mxu0 0.0
    %2127 = vmatprep.subr.mxu0 0.0
    %2128 = vmatpush1.msra.mxu0 0.0
    %2129 = vmatprep.subr.mxu0 0.0
    %2130 = vmatpush1.msra.mxu0 0.0
    %2131 = vmatprep.subr.mxu0 0.0
    %2132 = vmatpush1.msra.mxu0 0.0
    %2133 = vmatprep.subr.mxu0 0.0
    %2134 = vmatpush1.msra.mxu0 0.0
    %2135 = vmatprep.subr.mxu0 0.0
    %2136 = vmatpush1.msra.mxu0 0.0
    %2137 = vmatprep.subr.mxu0 0.0
    %2138 = vmatpush1.msra.mxu0 0.0
    %2139 = vmatprep.mubr.f32.mxu0 0.0
    %2140 = vmatmul.mubr.f32.gmra.mrb[0].mxu0 %v2070
    %v2141 = vpop.f32.mrb[0].mxu0
    %v2142 = vadd.f32 %v2067, %v2141
    %v2143 = vpop.f32.mrb[0].mxu0
    %2144 = vmatprep.mubr.f32.mxu0 0.0
    %2145 = vmatmul.mubr.f32.gmra.mrb[0].mxu0 %v2073
    %v2146 = vpop.f32.mrb[0].mxu0
    %v2147 = vadd.f32 %v2067, %v2146
    %v2148 = vpop.f32.mrb[0].mxu0
    %2149 = vdwg.mxu0
    %v2151 = vlaneseq
    %v2152 = vshrl.u32 %v2151, 7
    %v2153 = vsub.s32 0, %v2152
    %v2154 = vrot.slane %v2054, %v2153
    %v2157 = vsel %vm280, %v250, 0
    %v2160 = vsel %vm280, %v251, 0
    %2162 = vmatprep.subr.mxu0 0.0
    %2163 = vmatpush1.msra.mxu0 %v2045
    %2164 = vmatprep.subr.mxu0 0.0
    %2165 = vmatpush1.msra.mxu0 %v2046
    %2166 = vmatprep.subr.mxu0 0.0
    %2167 = vmatpush1.msra.mxu0 %v2047
    %2168 = vmatprep.subr.mxu0 0.0
    %2169 = vmatpush1.msra.mxu0 %v2048
    %2170 = vmatprep.subr.mxu0 0.0
    %2171 = vmatpush1.msra.mxu0 0.0
    %2172 = vmatprep.subr.mxu0 0.0
    %2173 = vmatpush1.msra.mxu0 0.0
    %2174 = vmatprep.subr.mxu0 0.0
    %2175 = vmatpush1.msra.mxu0 0.0
    %2176 = vmatprep.subr.mxu0 0.0
    %2177 = vmatpush1.msra.mxu0 0.0
    %2178 = vmatprep.subr.mxu0 0.0
    %2179 = vmatpush1.msra.mxu0 0.0
    %2180 = vmatprep.subr.mxu0 0.0
    %2181 = vmatpush1.msra.mxu0 0.0
    %2182 = vmatprep.subr.mxu0 0.0
    %2183 = vmatpush1.msra.mxu0 0.0
    %2184 = vmatprep.subr.mxu0 0.0
    %2185 = vmatpush1.msra.mxu0 0.0
    %2186 = vmatprep.subr.mxu0 0.0
    %2187 = vmatpush1.msra.mxu0 0.0
    %2188 = vmatprep.subr.mxu0 0.0
    %2189 = vmatpush1.msra.mxu0 0.0
    %2190 = vmatprep.subr.mxu0 0.0
    %2191 = vmatpush1.msra.mxu0 0.0
    %2192 = vmatprep.subr.mxu0 0.0
    %2193 = vmatpush1.msra.mxu0 0.0
    %2194 = vmatprep.subr.mxu0 0.0
    %2195 = vmatpush1.msra.mxu0 0.0
    %2196 = vmatprep.subr.mxu0 0.0
    %2197 = vmatpush1.msra.mxu0 0.0
    %2198 = vmatprep.subr.mxu0 0.0
    %2199 = vmatpush1.msra.mxu0 0.0
    %2200 = vmatprep.subr.mxu0 0.0
    %2201 = vmatpush1.msra.mxu0 0.0
    %2202 = vmatprep.subr.mxu0 0.0
    %2203 = vmatpush1.msra.mxu0 0.0
    %2204 = vmatprep.subr.mxu0 0.0
    %2205 = vmatpush1.msra.mxu0 0.0
    %2206 = vmatprep.subr.mxu0 0.0
    %2207 = vmatpush1.msra.mxu0 0.0
    %2208 = vmatprep.subr.mxu0 0.0
    %2209 = vmatpush1.msra.mxu0 0.0
    %2210 = vmatprep.subr.mxu0 0.0
    %2211 = vmatpush1.msra.mxu0 0.0
    %2212 = vmatprep.subr.mxu0 0.0
    %2213 = vmatpush1.msra.mxu0 0.0
    %2214 = vmatprep.subr.mxu0 0.0
    %2215 = vmatpush1.msra.mxu0 0.0
    %2216 = vmatprep.subr.mxu0 0.0
    %2217 = vmatpush1.msra.mxu0 0.0
    %2218 = vmatprep.subr.mxu0 0.0
    %2219 = vmatpush1.msra.mxu0 0.0
    %2220 = vmatprep.subr.mxu0 0.0
    %2221 = vmatpush1.msra.mxu0 0.0
    %2222 = vmatprep.subr.mxu0 0.0
    %2223 = vmatpush1.msra.mxu0 0.0
    %2224 = vmatprep.subr.mxu0 0.0
    %2225 = vmatpush1.msra.mxu0 0.0
    %2226 = vmatprep.mubr.f32.mxu0 0.0
    %2227 = vmatmul.mubr.f32.gmra.mrb[0].mxu0 %v2157
    %v2228 = vpop.f32.mrb[0].mxu0
    %v2229 = vadd.f32 %v2154, %v2228
    %v2230 = vpop.f32.mrb[0].mxu0
    %2231 = vmatprep.mubr.f32.mxu0 0.0
    %2232 = vmatmul.mubr.f32.gmra.mrb[0].mxu0 %v2160
    %v2233 = vpop.f32.mrb[0].mxu0
    %v2234 = vadd.f32 %v2154, %v2233
    %v2235 = vpop.f32.mrb[0].mxu0
    %2236 = vdwg.mxu0
    %v2238 = vlaneseq
    %v2239 = vshrl.u32 %v2238, 7
    %v2240 = vsub.s32 0, %v2239
    %v2241 = vrot.slane %v2055, %v2240
    %2243 = vmatprep.subr.mxu0 0.0
    %2244 = vmatpush1.msra.mxu0 %v2049
    %2245 = vmatprep.subr.mxu0 0.0
    %2246 = vmatpush1.msra.mxu0 %v2050
    %2247 = vmatprep.subr.mxu0 0.0
    %2248 = vmatpush1.msra.mxu0 %v2051
    %2249 = vmatprep.subr.mxu0 0.0
    %2250 = vmatpush1.msra.mxu0 %v2052
    %2251 = vmatprep.subr.mxu0 0.0
    %2252 = vmatpush1.msra.mxu0 0.0
    %2253 = vmatprep.subr.mxu0 0.0
    %2254 = vmatpush1.msra.mxu0 0.0
    %2255 = vmatprep.subr.mxu0 0.0
    %2256 = vmatpush1.msra.mxu0 0.0
    %2257 = vmatprep.subr.mxu0 0.0
    %2258 = vmatpush1.msra.mxu0 0.0
    %2259 = vmatprep.subr.mxu0 0.0
    %2260 = vmatpush1.msra.mxu0 0.0
    %2261 = vmatprep.subr.mxu0 0.0
    %2262 = vmatpush1.msra.mxu0 0.0
    %2263 = vmatprep.subr.mxu0 0.0
    %2264 = vmatpush1.msra.mxu0 0.0
    %2265 = vmatprep.subr.mxu0 0.0
    %2266 = vmatpush1.msra.mxu0 0.0
    %2267 = vmatprep.subr.mxu0 0.0
    %2268 = vmatpush1.msra.mxu0 0.0
    %2269 = vmatprep.subr.mxu0 0.0
    %2270 = vmatpush1.msra.mxu0 0.0
    %2271 = vmatprep.subr.mxu0 0.0
    %2272 = vmatpush1.msra.mxu0 0.0
    %2273 = vmatprep.subr.mxu0 0.0
    %2274 = vmatpush1.msra.mxu0 0.0
    %2275 = vmatprep.subr.mxu0 0.0
    %2276 = vmatpush1.msra.mxu0 0.0
    %2277 = vmatprep.subr.mxu0 0.0
    %2278 = vmatpush1.msra.mxu0 0.0
    %2279 = vmatprep.subr.mxu0 0.0
    %2280 = vmatpush1.msra.mxu0 0.0
    %2281 = vmatprep.subr.mxu0 0.0
    %2282 = vmatpush1.msra.mxu0 0.0
    %2283 = vmatprep.subr.mxu0 0.0
    %2284 = vmatpush1.msra.mxu0 0.0
    %2285 = vmatprep.subr.mxu0 0.0
    %2286 = vmatpush1.msra.mxu0 0.0
    %2287 = vmatprep.subr.mxu0 0.0
    %2288 = vmatpush1.msra.mxu0 0.0
    %2289 = vmatprep.subr.mxu0 0.0
    %2290 = vmatpush1.msra.mxu0 0.0
    %2291 = vmatprep.subr.mxu0 0.0
    %2292 = vmatpush1.msra.mxu0 0.0
    %2293 = vmatprep.subr.mxu0 0.0
    %2294 = vmatpush1.msra.mxu0 0.0
    %2295 = vmatprep.subr.mxu0 0.0
    %2296 = vmatpush1.msra.mxu0 0.0
    %2297 = vmatprep.subr.mxu0 0.0
    %2298 = vmatpush1.msra.mxu0 0.0
    %2299 = vmatprep.subr.mxu0 0.0
    %2300 = vmatpush1.msra.mxu0 0.0
    %2301 = vmatprep.subr.mxu0 0.0
    %2302 = vmatpush1.msra.mxu0 0.0
    %2303 = vmatprep.subr.mxu0 0.0
    %2304 = vmatpush1.msra.mxu0 0.0
    %2305 = vmatprep.subr.mxu0 0.0
    %2306 = vmatpush1.msra.mxu0 0.0
    %2307 = vmatprep.mubr.f32.mxu0 0.0
    %2308 = vmatmul.mubr.f32.gmra.mrb[0].mxu0 %v2157
    %v2309 = vpop.f32.mrb[0].mxu0
    %v2310 = vadd.f32 %v2241, %v2309
    %v2311 = vpop.f32.mrb[0].mxu0
    %2312 = vmatprep.mubr.f32.mxu0 0.0
    %2313 = vmatmul.mubr.f32.gmra.mrb[0].mxu0 %v2160
    %v2314 = vpop.f32.mrb[0].mxu0
    %v2315 = vadd.f32 %v2241, %v2314
    %v2316 = vpop.f32.mrb[0].mxu0
    %2317 = vdwg.mxu0
    %vm2318 = vcmp.gt.f32.partialorder %v249, 0.0
    %v2319 = vsel %vm2318, 1, 0
    %v2320 = vlaneseq
    %v2321 = vshrl.u32 %v2320, 7
    %v2322 = vsub.s32 0, %v2321
    %v2323 = vrot.slane %v2319, %v2322
    %vm2324 = vcmp.eq.s32.totalorder %v2323, 1
    %vm2325 = vmor %vm528, %vm2324
    %v2327 = vsel %vm537, %v2142, 0
    %v2330 = vsel %vm537, %v2229, 0
    %2332 = vmatprep.subr.mxu0 0.0
    %2333 = vmatpush1.xpose.msra.mxu0 %v2330
    %2334 = vmatprep.subr.mxu0 0.0
    %2335 = vmatpush1.xpose.msra.mxu0 0.0
    %2336 = vmatprep.subr.mxu0 0.0
    %2337 = vmatpush1.xpose.msra.mxu0 0.0
    %2338 = vmatprep.subr.mxu0 0.0
    %2339 = vmatpush1.xpose.msra.mxu0 0.0
    %2340 = vmatprep.subr.mxu0 0.0
    %2341 = vmatpush1.xpose.msra.mxu0 0.0
    %2342 = vmatprep.subr.mxu0 0.0
    %2343 = vmatpush1.xpose.msra.mxu0 0.0
    %2344 = vmatprep.subr.mxu0 0.0
    %2345 = vmatpush1.xpose.msra.mxu0 0.0
    %2346 = vmatprep.subr.mxu0 0.0
    %2347 = vmatpush1.xpose.msra.mxu0 0.0
    %2348 = vmatprep.subr.mxu0 0.0
    %2349 = vmatpush1.xpose.msra.mxu0 0.0
    %2350 = vmatprep.subr.mxu0 0.0
    %2351 = vmatpush1.xpose.msra.mxu0 0.0
    %2352 = vmatprep.subr.mxu0 0.0
    %2353 = vmatpush1.xpose.msra.mxu0 0.0
    %2354 = vmatprep.subr.mxu0 0.0
    %2355 = vmatpush1.xpose.msra.mxu0 0.0
    %2356 = vmatprep.subr.mxu0 0.0
    %2357 = vmatpush1.xpose.msra.mxu0 0.0
    %2358 = vmatprep.subr.mxu0 0.0
    %2359 = vmatpush1.xpose.msra.mxu0 0.0
    %2360 = vmatprep.subr.mxu0 0.0
    %2361 = vmatpush1.xpose.msra.mxu0 0.0
    %2362 = vmatprep.subr.mxu0 0.0
    %2363 = vmatpush1.xpose.msra.mxu0 0.0
    %2364 = vmatprep.subr.mxu0 0.0
    %2365 = vmatpush1.xpose.msra.mxu0 0.0
    %2366 = vmatprep.subr.mxu0 0.0
    %2367 = vmatpush1.xpose.msra.mxu0 0.0
    %2368 = vmatprep.subr.mxu0 0.0
    %2369 = vmatpush1.xpose.msra.mxu0 0.0
    %2370 = vmatprep.subr.mxu0 0.0
    %2371 = vmatpush1.xpose.msra.mxu0 0.0
    %2372 = vmatprep.subr.mxu0 0.0
    %2373 = vmatpush1.xpose.msra.mxu0 0.0
    %2374 = vmatprep.subr.mxu0 0.0
    %2375 = vmatpush1.xpose.msra.mxu0 0.0
    %2376 = vmatprep.subr.mxu0 0.0
    %2377 = vmatpush1.xpose.msra.mxu0 0.0
    %2378 = vmatprep.subr.mxu0 0.0
    %2379 = vmatpush1.xpose.msra.mxu0 0.0
    %2380 = vmatprep.subr.mxu0 0.0
    %2381 = vmatpush1.xpose.msra.mxu0 0.0
    %2382 = vmatprep.subr.mxu0 0.0
    %2383 = vmatpush1.xpose.msra.mxu0 0.0
    %2384 = vmatprep.subr.mxu0 0.0
    %2385 = vmatpush1.xpose.msra.mxu0 0.0
    %2386 = vmatprep.subr.mxu0 0.0
    %2387 = vmatpush1.xpose.msra.mxu0 0.0
    %2388 = vmatprep.subr.mxu0 0.0
    %2389 = vmatpush1.xpose.msra.mxu0 0.0
    %2390 = vmatprep.subr.mxu0 0.0
    %2391 = vmatpush1.xpose.msra.mxu0 0.0
    %2392 = vmatprep.subr.mxu0 0.0
    %2393 = vmatpush1.xpose.msra.mxu0 0.0
    %2394 = vmatprep.subr.mxu0 0.0
    %2395 = vmatpush1.xpose.msra.mxu0 0.0
    %2396 = vmatprep.mubr.f32.mxu0 0.0
    %2397 = vmatmul.mubr.f32.gmra.mrb[0].mxu0 %v2327
    %v2398 = vpop.f32.mrb[0].mxu0
    %v2399 = vadd.f32 0.0, %v2398
    %v2400 = vpop.f32.mrb[0].mxu0
    %2401 = vdwg.mxu0
    %v2402 = vmul.f32 %v2399, 0.35355338
    %v2403 = vsel %vm2325, -1e+09, %v2402
    %v2404 = vsel %vm537, %v2403, -inf
    %2405 = vmax.xlane.f32.xlu0 %v2404
    %v2406 = vpop.xlane.xlu0 %2405
    %v2407 = vsub.f32 %v2403, %v2406
    %v2408 = vmul.f32 %v2407, 1.442695
    %v2409 = vpow.pop %v2408
    %v2410 = vsel %vm537, %v2409, 0.0
    %2411 = vadd.xlane.f32.xlu0 %v2410
    %v2412 = vpop.xlane.xlu0 %2411
    %v2413 = vrcp.pop %v2412
    %v2414 = vmul.f32 %v2409, %v2413
    %v2416 = vsel %vm537, %v2414, 0
    %2418 = vmatprep.subr.mxu0 0.0
    %2419 = vmatpush1.msra.mxu0 %v2310
    %2420 = vmatprep.subr.mxu0 0.0
    %2421 = vmatpush1.msra.mxu0 0.0
    %2422 = vmatprep.subr.mxu0 0.0
    %2423 = vmatpush1.msra.mxu0 0.0
    %2424 = vmatprep.subr.mxu0 0.0
    %2425 = vmatpush1.msra.mxu0 0.0
    %2426 = vmatprep.subr.mxu0 0.0
    %2427 = vmatpush1.msra.mxu0 0.0
    %2428 = vmatprep.subr.mxu0 0.0
    %2429 = vmatpush1.msra.mxu0 0.0
    %2430 = vmatprep.subr.mxu0 0.0
    %2431 = vmatpush1.msra.mxu0 0.0
    %2432 = vmatprep.subr.mxu0 0.0
    %2433 = vmatpush1.msra.mxu0 0.0
    %2434 = vmatprep.subr.mxu0 0.0
    %2435 = vmatpush1.msra.mxu0 0.0
    %2436 = vmatprep.subr.mxu0 0.0
    %2437 = vmatpush1.msra.mxu0 0.0
    %2438 = vmatprep.subr.mxu0 0.0
    %2439 = vmatpush1.msra.mxu0 0.0
    %2440 = vmatprep.subr.mxu0 0.0
    %2441 = vmatpush1.msra.mxu0 0.0
    %2442 = vmatprep.subr.mxu0 0.0
    %2443 = vmatpush1.msra.mxu0 0.0
    %2444 = vmatprep.subr.mxu0 0.0
    %2445 = vmatpush1.msra.mxu0 0.0
    %2446 = vmatprep.subr.mxu0 0.0
    %2447 = vmatpush1.msra.mxu0 0.0
    %2448 = vmatprep.subr.mxu0 0.0
    %2449 = vmatpush1.msra.mxu0 0.0
    %2450 = vmatprep.subr.mxu0 0.0
    %2451 = vmatpush1.msra.mxu0 0.0
    %2452 = vmatprep.subr.mxu0 0.0
    %2453 = vmatpush1.msra.mxu0 0.0
    %2454 = vmatprep.subr.mxu0 0.0
    %2455 = vmatpush1.msra.mxu0 0.0
    %2456 = vmatprep.subr.mxu0 0.0
    %2457 = vmatpush1.msra.mxu0 0.0
    %2458 = vmatprep.subr.mxu0 0.0
    %2459 = vmatpush1.msra.mxu0 0.0
    %2460 = vmatprep.subr.mxu0 0.0
    %2461 = vmatpush1.msra.mxu0 0.0
    %2462 = vmatprep.subr.mxu0 0.0
    %2463 = vmatpush1.msra.mxu0 0.0
    %2464 = vmatprep.subr.mxu0 0.0
    %2465 = vmatpush1.msra.mxu0 0.0
    %2466 = vmatprep.subr.mxu0 0.0
    %2467 = vmatpush1.msra.mxu0 0.0
    %2468 = vmatprep.subr.mxu0 0.0
    %2469 = vmatpush1.msra.mxu0 0.0
    %2470 = vmatprep.subr.mxu0 0.0
    %2471 = vmatpush1.msra.mxu0 0.0
    %2472 = vmatprep.subr.mxu0 0.0
    %2473 = vmatpush1.msra.mxu0 0.0
    %2474 = vmatprep.subr.mxu0 0.0
    %2475 = vmatpush1.msra.mxu0 0.0
    %2476 = vmatprep.subr.mxu0 0.0
    %2477 = vmatpush1.msra.mxu0 0.0
    %2478 = vmatprep.subr.mxu0 0.0
    %2479 = vmatpush1.msra.mxu0 0.0
    %2480 = vmatprep.subr.mxu0 0.0
    %2481 = vmatpush1.msra.mxu0 0.0
    %2482 = vmatprep.mubr.f32.mxu0 0.0
    %2483 = vmatmul.mubr.f32.gmra.mrb[0].mxu0 %v2416
    %v2484 = vpop.f32.mrb[0].mxu0
    %v2485 = vadd.f32 0.0, %v2484
    %v2486 = vpop.f32.mrb[0].mxu0
    %2487 = vdwg.mxu0
    %2488 = vst.msk [vmem:[#allocation2] sm:$0xff] %vm537, %v2485
    %2489 = vrot.lane.b32.xlu0 %v2142, 120
    %v2490 = vpop.permute.xlu0 %2489
    %2491 = vrot.lane.b32.xlu0 %v2229, 120
    %v2492 = vpop.permute.xlu0 %2491
    %v2493 = vsel %vm537, %v2490, 0
    %v2495 = vsel %vm537, %v2492, 0
    %2497 = vmatprep.subr.mxu0 0.0
    %2498 = vmatpush1.xpose.msra.mxu0 %v2495
    %2499 = vmatprep.subr.mxu0 0.0
    %2500 = vmatpush1.xpose.msra.mxu0 0.0
    %2501 = vmatprep.subr.mxu0 0.0
    %2502 = vmatpush1.xpose.msra.mxu0 0.0
    %2503 = vmatprep.subr.mxu0 0.0
    %2504 = vmatpush1.xpose.msra.mxu0 0.0
    %2505 = vmatprep.subr.mxu0 0.0
    %2506 = vmatpush1.xpose.msra.mxu0 0.0
    %2507 = vmatprep.subr.mxu0 0.0
    %2508 = vmatpush1.xpose.msra.mxu0 0.0
    %2509 = vmatprep.subr.mxu0 0.0
    %2510 = vmatpush1.xpose.msra.mxu0 0.0
    %2511 = vmatprep.subr.mxu0 0.0
    %2512 = vmatpush1.xpose.msra.mxu0 0.0
    %2513 = vmatprep.subr.mxu0 0.0
    %2514 = vmatpush1.xpose.msra.mxu0 0.0
    %2515 = vmatprep.subr.mxu0 0.0
    %2516 = vmatpush1.xpose.msra.mxu0 0.0
    %2517 = vmatprep.subr.mxu0 0.0
    %2518 = vmatpush1.xpose.msra.mxu0 0.0
    %2519 = vmatprep.subr.mxu0 0.0
    %2520 = vmatpush1.xpose.msra.mxu0 0.0
    %2521 = vmatprep.subr.mxu0 0.0
    %2522 = vmatpush1.xpose.msra.mxu0 0.0
    %2523 = vmatprep.subr.mxu0 0.0
    %2524 = vmatpush1.xpose.msra.mxu0 0.0
    %2525 = vmatprep.subr.mxu0 0.0
    %2526 = vmatpush1.xpose.msra.mxu0 0.0
    %2527 = vmatprep.subr.mxu0 0.0
    %2528 = vmatpush1.xpose.msra.mxu0 0.0
    %2529 = vmatprep.subr.mxu0 0.0
    %2530 = vmatpush1.xpose.msra.mxu0 0.0
    %2531 = vmatprep.subr.mxu0 0.0
    %2532 = vmatpush1.xpose.msra.mxu0 0.0
    %2533 = vmatprep.subr.mxu0 0.0
    %2534 = vmatpush1.xpose.msra.mxu0 0.0
    %2535 = vmatprep.subr.mxu0 0.0
    %2536 = vmatpush1.xpose.msra.mxu0 0.0
    %2537 = vmatprep.subr.mxu0 0.0
    %2538 = vmatpush1.xpose.msra.mxu0 0.0
    %2539 = vmatprep.subr.mxu0 0.0
    %2540 = vmatpush1.xpose.msra.mxu0 0.0
    %2541 = vmatprep.subr.mxu0 0.0
    %2542 = vmatpush1.xpose.msra.mxu0 0.0
    %2543 = vmatprep.subr.mxu0 0.0
    %2544 = vmatpush1.xpose.msra.mxu0 0.0
    %2545 = vmatprep.subr.mxu0 0.0
    %2546 = vmatpush1.xpose.msra.mxu0 0.0
    %2547 = vmatprep.subr.mxu0 0.0
    %2548 = vmatpush1.xpose.msra.mxu0 0.0
    %2549 = vmatprep.subr.mxu0 0.0
    %2550 = vmatpush1.xpose.msra.mxu0 0.0
    %2551 = vmatprep.subr.mxu0 0.0
    %2552 = vmatpush1.xpose.msra.mxu0 0.0
    %2553 = vmatprep.subr.mxu0 0.0
    %2554 = vmatpush1.xpose.msra.mxu0 0.0
    %2555 = vmatprep.subr.mxu0 0.0
    %2556 = vmatpush1.xpose.msra.mxu0 0.0
    %2557 = vmatprep.subr.mxu0 0.0
    %2558 = vmatpush1.xpose.msra.mxu0 0.0
    %2559 = vmatprep.subr.mxu0 0.0
    %2560 = vmatpush1.xpose.msra.mxu0 0.0
    %2561 = vmatprep.mubr.f32.mxu0 0.0
    %2562 = vmatmul.mubr.f32.gmra.mrb[0].mxu0 %v2493
    %v2563 = vpop.f32.mrb[0].mxu0
    %v2564 = vadd.f32 0.0, %v2563
    %v2565 = vpop.f32.mrb[0].mxu0
    %2566 = vdwg.mxu0
    %v2567 = vmul.f32 %v2564, 0.35355338
    %v2568 = vsel %vm2325, -1e+09, %v2567
    %v2569 = vsel %vm537, %v2568, -inf
    %2570 = vmax.xlane.f32.xlu0 %v2569
    %v2571 = vpop.xlane.xlu0 %2570
    %v2572 = vsub.f32 %v2568, %v2571
    %v2573 = vmul.f32 %v2572, 1.442695
    %v2574 = vpow.pop %v2573
    %v2575 = vsel %vm537, %v2574, 0.0
    %2576 = vadd.xlane.f32.xlu0 %v2575
    %v2577 = vpop.xlane.xlu0 %2576
    %v2578 = vrcp.pop %v2577
    %v2579 = vmul.f32 %v2574, %v2578
    %2581 = vrot.lane.b32.xlu0 %v2310, 120
    %v2582 = vpop.permute.xlu0 %2581
    %v2585 = vsel %vm537, %v2579, 0
    %2587 = vmatprep.subr.mxu0 0.0
    %2588 = vmatpush1.msra.mxu0 %v2582
    %2589 = vmatprep.subr.mxu0 0.0
    %2590 = vmatpush1.msra.mxu0 0.0
    %2591 = vmatprep.subr.mxu0 0.0
    %2592 = vmatpush1.msra.mxu0 0.0
    %2593 = vmatprep.subr.mxu0 0.0
    %2594 = vmatpush1.msra.mxu0 0.0
    %2595 = vmatprep.subr.mxu0 0.0
    %2596 = vmatpush1.msra.mxu0 0.0
    %2597 = vmatprep.subr.mxu0 0.0
    %2598 = vmatpush1.msra.mxu0 0.0
    %2599 = vmatprep.subr.mxu0 0.0
    %2600 = vmatpush1.msra.mxu0 0.0
    %2601 = vmatprep.subr.mxu0 0.0
    %2602 = vmatpush1.msra.mxu0 0.0
    %2603 = vmatprep.subr.mxu0 0.0
    %2604 = vmatpush1.msra.mxu0 0.0
    %2605 = vmatprep.subr.mxu0 0.0
    %2606 = vmatpush1.msra.mxu0 0.0
    %2607 = vmatprep.subr.mxu0 0.0
    %2608 = vmatpush1.msra.mxu0 0.0
    %2609 = vmatprep.subr.mxu0 0.0
    %2610 = vmatpush1.msra.mxu0 0.0
    %2611 = vmatprep.subr.mxu0 0.0
    %2612 = vmatpush1.msra.mxu0 0.0
    %2613 = vmatprep.subr.mxu0 0.0
    %2614 = vmatpush1.msra.mxu0 0.0
    %2615 = vmatprep.subr.mxu0 0.0
    %2616 = vmatpush1.msra.mxu0 0.0
    %2617 = vmatprep.subr.mxu0 0.0
    %2618 = vmatpush1.msra.mxu0 0.0
    %2619 = vmatprep.subr.mxu0 0.0
    %2620 = vmatpush1.msra.mxu0 0.0
    %2621 = vmatprep.subr.mxu0 0.0
    %2622 = vmatpush1.msra.mxu0 0.0
    %2623 = vmatprep.subr.mxu0 0.0
    %2624 = vmatpush1.msra.mxu0 0.0
    %2625 = vmatprep.subr.mxu0 0.0
    %2626 = vmatpush1.msra.mxu0 0.0
    %2627 = vmatprep.subr.mxu0 0.0
    %2628 = vmatpush1.msra.mxu0 0.0
    %2629 = vmatprep.subr.mxu0 0.0
    %2630 = vmatpush1.msra.mxu0 0.0
    %2631 = vmatprep.subr.mxu0 0.0
    %2632 = vmatpush1.msra.mxu0 0.0
    %2633 = vmatprep.subr.mxu0 0.0
    %2634 = vmatpush1.msra.mxu0 0.0
    %2635 = vmatprep.subr.mxu0 0.0
    %2636 = vmatpush1.msra.mxu0 0.0
    %2637 = vmatprep.subr.mxu0 0.0
    %2638 = vmatpush1.msra.mxu0 0.0
    %2639 = vmatprep.subr.mxu0 0.0
    %2640 = vmatpush1.msra.mxu0 0.0
    %2641 = vmatprep.subr.mxu0 0.0
    %2642 = vmatpush1.msra.mxu0 0.0
    %2643 = vmatprep.subr.mxu0 0.0
    %2644 = vmatpush1.msra.mxu0 0.0
    %2645 = vmatprep.subr.mxu0 0.0
    %2646 = vmatpush1.msra.mxu0 0.0
    %2647 = vmatprep.subr.mxu0 0.0
    %2648 = vmatpush1.msra.mxu0 0.0
    %2649 = vmatprep.subr.mxu0 0.0
    %2650 = vmatpush1.msra.mxu0 0.0
    %2651 = vmatprep.mubr.f32.mxu0 0.0
    %2652 = vmatmul.mubr.f32.gmra.mrb[0].mxu0 %v2585
    %v2653 = vpop.f32.mrb[0].mxu0
    %v2654 = vadd.f32 0.0, %v2653
    %v2655 = vpop.f32.mrb[0].mxu0
    %2656 = vdwg.mxu0
    %2658 = vrot.lane.b32.xlu0 %v2654, 8
    %v2659 = vpop.permute.xlu0 %2658
    %2661 = vst.msk [vmem:[#allocation2] sm:$0xff] %vm873, %v2659
    %2662 = vrot.lane.b32.xlu0 %v2142, 112
    %v2663 = vpop.permute.xlu0 %2662
    %2664 = vrot.lane.b32.xlu0 %v2229, 112
    %v2665 = vpop.permute.xlu0 %2664
    %v2666 = vsel %vm537, %v2663, 0
    %v2668 = vsel %vm537, %v2665, 0
    %2670 = vmatprep.subr.mxu0 0.0
    %2671 = vmatpush1.xpose.msra.mxu0 %v2668
    %2672 = vmatprep.subr.mxu0 0.0
    %2673 = vmatpush1.xpose.msra.mxu0 0.0
    %2674 = vmatprep.subr.mxu0 0.0
    %2675 = vmatpush1.xpose.msra.mxu0 0.0
    %2676 = vmatprep.subr.mxu0 0.0
    %2677 = vmatpush1.xpose.msra.mxu0 0.0
    %2678 = vmatprep.subr.mxu0 0.0
    %2679 = vmatpush1.xpose.msra.mxu0 0.0
    %2680 = vmatprep.subr.mxu0 0.0
    %2681 = vmatpush1.xpose.msra.mxu0 0.0
    %2682 = vmatprep.subr.mxu0 0.0
    %2683 = vmatpush1.xpose.msra.mxu0 0.0
    %2684 = vmatprep.subr.mxu0 0.0
    %2685 = vmatpush1.xpose.msra.mxu0 0.0
    %2686 = vmatprep.subr.mxu0 0.0
    %2687 = vmatpush1.xpose.msra.mxu0 0.0
    %2688 = vmatprep.subr.mxu0 0.0
    %2689 = vmatpush1.xpose.msra.mxu0 0.0
    %2690 = vmatprep.subr.mxu0 0.0
    %2691 = vmatpush1.xpose.msra.mxu0 0.0
    %2692 = vmatprep.subr.mxu0 0.0
    %2693 = vmatpush1.xpose.msra.mxu0 0.0
    %2694 = vmatprep.subr.mxu0 0.0
    %2695 = vmatpush1.xpose.msra.mxu0 0.0
    %2696 = vmatprep.subr.mxu0 0.0
    %2697 = vmatpush1.xpose.msra.mxu0 0.0
    %2698 = vmatprep.subr.mxu0 0.0
    %2699 = vmatpush1.xpose.msra.mxu0 0.0
    %2700 = vmatprep.subr.mxu0 0.0
    %2701 = vmatpush1.xpose.msra.mxu0 0.0
    %2702 = vmatprep.subr.mxu0 0.0
    %2703 = vmatpush1.xpose.msra.mxu0 0.0
    %2704 = vmatprep.subr.mxu0 0.0
    %2705 = vmatpush1.xpose.msra.mxu0 0.0
    %2706 = vmatprep.subr.mxu0 0.0
    %2707 = vmatpush1.xpose.msra.mxu0 0.0
    %2708 = vmatprep.subr.mxu0 0.0
    %2709 = vmatpush1.xpose.msra.mxu0 0.0
    %2710 = vmatprep.subr.mxu0 0.0
    %2711 = vmatpush1.xpose.msra.mxu0 0.0
    %2712 = vmatprep.subr.mxu0 0.0
    %2713 = vmatpush1.xpose.msra.mxu0 0.0
    %2714 = vmatprep.subr.mxu0 0.0
    %2715 = vmatpush1.xpose.msra.mxu0 0.0
    %2716 = vmatprep.subr.mxu0 0.0
    %2717 = vmatpush1.xpose.msra.mxu0 0.0
    %2718 = vmatprep.subr.mxu0 0.0
    %2719 = vmatpush1.xpose.msra.mxu0 0.0
    %2720 = vmatprep.subr.mxu0 0.0
    %2721 = vmatpush1.xpose.msra.mxu0 0.0
    %2722 = vmatprep.subr.mxu0 0.0
    %2723 = vmatpush1.xpose.msra.mxu0 0.0
    %2724 = vmatprep.subr.mxu0 0.0
    %2725 = vmatpush1.xpose.msra.mxu0 0.0
    %2726 = vmatprep.subr.mxu0 0.0
    %2727 = vmatpush1.xpose.msra.mxu0 0.0
    %2728 = vmatprep.subr.mxu0 0.0
    %2729 = vmatpush1.xpose.msra.mxu0 0.0
    %2730 = vmatprep.subr.mxu0 0.0
    %2731 = vmatpush1.xpose.msra.mxu0 0.0
    %2732 = vmatprep.subr.mxu0 0.0
    %2733 = vmatpush1.xpose.msra.mxu0 0.0
    %2734 = vmatprep.mubr.f32.mxu0 0.0
    %2735 = vmatmul.mubr.f32.gmra.mrb[0].mxu0 %v2666
    %v2736 = vpop.f32.mrb[0].mxu0
    %v2737 = vadd.f32 0.0, %v2736
    %v2738 = vpop.f32.mrb[0].mxu0
    %2739 = vdwg.mxu0
    %v2740 = vmul.f32 %v2737, 0.35355338
    %v2741 = vsel %vm2325, -1e+09, %v2740
    %v2742 = vsel %vm537, %v2741, -inf
    %2743 = vmax.xlane.f32.xlu0 %v2742
    %v2744 = vpop.xlane.xlu0 %2743
    %v2745 = vsub.f32 %v2741, %v2744
    %v2746 = vmul.f32 %v2745, 1.442695
    %v2747 = vpow.pop %v2746
    %v2748 = vsel %vm537, %v2747, 0.0
    %2749 = vadd.xlane.f32.xlu0 %v2748
    %v2750 = vpop.xlane.xlu0 %2749
    %v2751 = vrcp.pop %v2750
    %v2752 = vmul.f32 %v2747, %v2751
    %2753 = vrot.lane.b32.xlu0 %v2310, 112
    %v2754 = vpop.permute.xlu0 %2753
    %v2757 = vsel %vm537, %v2752, 0
    %2759 = vmatprep.subr.mxu0 0.0
    %2760 = vmatpush1.msra.mxu0 %v2754
    %2761 = vmatprep.subr.mxu0 0.0
    %2762 = vmatpush1.msra.mxu0 0.0
    %2763 = vmatprep.subr.mxu0 0.0
    %2764 = vmatpush1.msra.mxu0 0.0
    %2765 = vmatprep.subr.mxu0 0.0
    %2766 = vmatpush1.msra.mxu0 0.0
    %2767 = vmatprep.subr.mxu0 0.0
    %2768 = vmatpush1.msra.mxu0 0.0
    %2769 = vmatprep.subr.mxu0 0.0
    %2770 = vmatpush1.msra.mxu0 0.0
    %2771 = vmatprep.subr.mxu0 0.0
    %2772 = vmatpush1.msra.mxu0 0.0
    %2773 = vmatprep.subr.mxu0 0.0
    %2774 = vmatpush1.msra.mxu0 0.0
    %2775 = vmatprep.subr.mxu0 0.0
    %2776 = vmatpush1.msra.mxu0 0.0
    %2777 = vmatprep.subr.mxu0 0.0
    %2778 = vmatpush1.msra.mxu0 0.0
    %2779 = vmatprep.subr.mxu0 0.0
    %2780 = vmatpush1.msra.mxu0 0.0
    %2781 = vmatprep.subr.mxu0 0.0
    %2782 = vmatpush1.msra.mxu0 0.0
    %2783 = vmatprep.subr.mxu0 0.0
    %2784 = vmatpush1.msra.mxu0 0.0
    %2785 = vmatprep.subr.mxu0 0.0
    %2786 = vmatpush1.msra.mxu0 0.0
    %2787 = vmatprep.subr.mxu0 0.0
    %2788 = vmatpush1.msra.mxu0 0.0
    %2789 = vmatprep.subr.mxu0 0.0
    %2790 = vmatpush1.msra.mxu0 0.0
    %2791 = vmatprep.subr.mxu0 0.0
    %2792 = vmatpush1.msra.mxu0 0.0
    %2793 = vmatprep.subr.mxu0 0.0
    %2794 = vmatpush1.msra.mxu0 0.0
    %2795 = vmatprep.subr.mxu0 0.0
    %2796 = vmatpush1.msra.mxu0 0.0
    %2797 = vmatprep.subr.mxu0 0.0
    %2798 = vmatpush1.msra.mxu0 0.0
    %2799 = vmatprep.subr.mxu0 0.0
    %2800 = vmatpush1.msra.mxu0 0.0
    %2801 = vmatprep.subr.mxu0 0.0
    %2802 = vmatpush1.msra.mxu0 0.0
    %2803 = vmatprep.subr.mxu0 0.0
    %2804 = vmatpush1.msra.mxu0 0.0
    %2805 = vmatprep.subr.mxu0 0.0
    %2806 = vmatpush1.msra.mxu0 0.0
    %2807 = vmatprep.subr.mxu0 0.0
    %2808 = vmatpush1.msra.mxu0 0.0
    %2809 = vmatprep.subr.mxu0 0.0
    %2810 = vmatpush1.msra.mxu0 0.0
    %2811 = vmatprep.subr.mxu0 0.0
    %2812 = vmatpush1.msra.mxu0 0.0
    %2813 = vmatprep.subr.mxu0 0.0
    %2814 = vmatpush1.msra.mxu0 0.0
    %2815 = vmatprep.subr.mxu0 0.0
    %2816 = vmatpush1.msra.mxu0 0.0
    %2817 = vmatprep.subr.mxu0 0.0
    %2818 = vmatpush1.msra.mxu0 0.0
    %2819 = vmatprep.subr.mxu0 0.0
    %2820 = vmatpush1.msra.mxu0 0.0
    %2821 = vmatprep.subr.mxu0 0.0
    %2822 = vmatpush1.msra.mxu0 0.0
    %2823 = vmatprep.mubr.f32.mxu0 0.0
    %2824 = vmatmul.mubr.f32.gmra.mrb[0].mxu0 %v2757
    %v2825 = vpop.f32.mrb[0].mxu0
    %v2826 = vadd.f32 0.0, %v2825
    %v2827 = vpop.f32.mrb[0].mxu0
    %2828 = vdwg.mxu0
    %2830 = vrot.lane.b32.xlu0 %v2826, 16
    %v2831 = vpop.permute.xlu0 %2830
    %2833 = vst.msk [vmem:[#allocation2] sm:$0xff] %vm1046, %v2831
    %2834 = vrot.lane.b32.xlu0 %v2142, 104
    %v2835 = vpop.permute.xlu0 %2834
    %2836 = vrot.lane.b32.xlu0 %v2229, 104
    %v2837 = vpop.permute.xlu0 %2836
    %v2838 = vsel %vm537, %v2835, 0
    %v2840 = vsel %vm537, %v2837, 0
    %2842 = vmatprep.subr.mxu0 0.0
    %2843 = vmatpush1.xpose.msra.mxu0 %v2840
    %2844 = vmatprep.subr.mxu0 0.0
    %2845 = vmatpush1.xpose.msra.mxu0 0.0
    %2846 = vmatprep.subr.mxu0 0.0
    %2847 = vmatpush1.xpose.msra.mxu0 0.0
    %2848 = vmatprep.subr.mxu0 0.0
    %2849 = vmatpush1.xpose.msra.mxu0 0.0
    %2850 = vmatprep.subr.mxu0 0.0
    %2851 = vmatpush1.xpose.msra.mxu0 0.0
    %2852 = vmatprep.subr.mxu0 0.0
    %2853 = vmatpush1.xpose.msra.mxu0 0.0
    %2854 = vmatprep.subr.mxu0 0.0
    %2855 = vmatpush1.xpose.msra.mxu0 0.0
    %2856 = vmatprep.subr.mxu0 0.0
    %2857 = vmatpush1.xpose.msra.mxu0 0.0
    %2858 = vmatprep.subr.mxu0 0.0
    %2859 = vmatpush1.xpose.msra.mxu0 0.0
    %2860 = vmatprep.subr.mxu0 0.0
    %2861 = vmatpush1.xpose.msra.mxu0 0.0
    %2862 = vmatprep.subr.mxu0 0.0
    %2863 = vmatpush1.xpose.msra.mxu0 0.0
    %2864 = vmatprep.subr.mxu0 0.0
    %2865 = vmatpush1.xpose.msra.mxu0 0.0
    %2866 = vmatprep.subr.mxu0 0.0
    %2867 = vmatpush1.xpose.msra.mxu0 0.0
    %2868 = vmatprep.subr.mxu0 0.0
    %2869 = vmatpush1.xpose.msra.mxu0 0.0
    %2870 = vmatprep.subr.mxu0 0.0
    %2871 = vmatpush1.xpose.msra.mxu0 0.0
    %2872 = vmatprep.subr.mxu0 0.0
    %2873 = vmatpush1.xpose.msra.mxu0 0.0
    %2874 = vmatprep.subr.mxu0 0.0
    %2875 = vmatpush1.xpose.msra.mxu0 0.0
    %2876 = vmatprep.subr.mxu0 0.0
    %2877 = vmatpush1.xpose.msra.mxu0 0.0
    %2878 = vmatprep.subr.mxu0 0.0
    %2879 = vmatpush1.xpose.msra.mxu0 0.0
    %2880 = vmatprep.subr.mxu0 0.0
    %2881 = vmatpush1.xpose.msra.mxu0 0.0
    %2882 = vmatprep.subr.mxu0 0.0
    %2883 = vmatpush1.xpose.msra.mxu0 0.0
    %2884 = vmatprep.subr.mxu0 0.0
    %2885 = vmatpush1.xpose.msra.mxu0 0.0
    %2886 = vmatprep.subr.mxu0 0.0
    %2887 = vmatpush1.xpose.msra.mxu0 0.0
    %2888 = vmatprep.subr.mxu0 0.0
    %2889 = vmatpush1.xpose.msra.mxu0 0.0
    %2890 = vmatprep.subr.mxu0 0.0
    %2891 = vmatpush1.xpose.msra.mxu0 0.0
    %2892 = vmatprep.subr.mxu0 0.0
    %2893 = vmatpush1.xpose.msra.mxu0 0.0
    %2894 = vmatprep.subr.mxu0 0.0
    %2895 = vmatpush1.xpose.msra.mxu0 0.0
    %2896 = vmatprep.subr.mxu0 0.0
    %2897 = vmatpush1.xpose.msra.mxu0 0.0
    %2898 = vmatprep.subr.mxu0 0.0
    %2899 = vmatpush1.xpose.msra.mxu0 0.0
    %2900 = vmatprep.subr.mxu0 0.0
    %2901 = vmatpush1.xpose.msra.mxu0 0.0
    %2902 = vmatprep.subr.mxu0 0.0
    %2903 = vmatpush1.xpose.msra.mxu0 0.0
    %2904 = vmatprep.subr.mxu0 0.0
    %2905 = vmatpush1.xpose.msra.mxu0 0.0
    %2906 = vmatprep.mubr.f32.mxu0 0.0
    %2907 = vmatmul.mubr.f32.gmra.mrb[0].mxu0 %v2838
    %v2908 = vpop.f32.mrb[0].mxu0
    %v2909 = vadd.f32 0.0, %v2908
    %v2910 = vpop.f32.mrb[0].mxu0
    %2911 = vdwg.mxu0
    %v2912 = vmul.f32 %v2909, 0.35355338
    %v2913 = vsel %vm2325, -1e+09, %v2912
    %v2914 = vsel %vm537, %v2913, -inf
    %2915 = vmax.xlane.f32.xlu0 %v2914
    %v2916 = vpop.xlane.xlu0 %2915
    %v2917 = vsub.f32 %v2913, %v2916
    %v2918 = vmul.f32 %v2917, 1.442695
    %v2919 = vpow.pop %v2918
    %v2920 = vsel %vm537, %v2919, 0.0
    %2921 = vadd.xlane.f32.xlu0 %v2920
    %v2922 = vpop.xlane.xlu0 %2921
    %v2923 = vrcp.pop %v2922
    %v2924 = vmul.f32 %v2919, %v2923
    %2925 = vrot.lane.b32.xlu0 %v2310, 104
    %v2926 = vpop.permute.xlu0 %2925
    %v2929 = vsel %vm537, %v2924, 0
    %2931 = vmatprep.subr.mxu0 0.0
    %2932 = vmatpush1.msra.mxu0 %v2926
    %2933 = vmatprep.subr.mxu0 0.0
    %2934 = vmatpush1.msra.mxu0 0.0
    %2935 = vmatprep.subr.mxu0 0.0
    %2936 = vmatpush1.msra.mxu0 0.0
    %2937 = vmatprep.subr.mxu0 0.0
    %2938 = vmatpush1.msra.mxu0 0.0
    %2939 = vmatprep.subr.mxu0 0.0
    %2940 = vmatpush1.msra.mxu0 0.0
    %2941 = vmatprep.subr.mxu0 0.0
    %2942 = vmatpush1.msra.mxu0 0.0
    %2943 = vmatprep.subr.mxu0 0.0
    %2944 = vmatpush1.msra.mxu0 0.0
    %2945 = vmatprep.subr.mxu0 0.0
    %2946 = vmatpush1.msra.mxu0 0.0
    %2947 = vmatprep.subr.mxu0 0.0
    %2948 = vmatpush1.msra.mxu0 0.0
    %2949 = vmatprep.subr.mxu0 0.0
    %2950 = vmatpush1.msra.mxu0 0.0
    %2951 = vmatprep.subr.mxu0 0.0
    %2952 = vmatpush1.msra.mxu0 0.0
    %2953 = vmatprep.subr.mxu0 0.0
    %2954 = vmatpush1.msra.mxu0 0.0
    %2955 = vmatprep.subr.mxu0 0.0
    %2956 = vmatpush1.msra.mxu0 0.0
    %2957 = vmatprep.subr.mxu0 0.0
    %2958 = vmatpush1.msra.mxu0 0.0
    %2959 = vmatprep.subr.mxu0 0.0
    %2960 = vmatpush1.msra.mxu0 0.0
    %2961 = vmatprep.subr.mxu0 0.0
    %2962 = vmatpush1.msra.mxu0 0.0
    %2963 = vmatprep.subr.mxu0 0.0
    %2964 = vmatpush1.msra.mxu0 0.0
    %2965 = vmatprep.subr.mxu0 0.0
    %2966 = vmatpush1.msra.mxu0 0.0
    %2967 = vmatprep.subr.mxu0 0.0
    %2968 = vmatpush1.msra.mxu0 0.0
    %2969 = vmatprep.subr.mxu0 0.0
    %2970 = vmatpush1.msra.mxu0 0.0
    %2971 = vmatprep.subr.mxu0 0.0
    %2972 = vmatpush1.msra.mxu0 0.0
    %2973 = vmatprep.subr.mxu0 0.0
    %2974 = vmatpush1.msra.mxu0 0.0
    %2975 = vmatprep.subr.mxu0 0.0
    %2976 = vmatpush1.msra.mxu0 0.0
    %2977 = vmatprep.subr.mxu0 0.0
    %2978 = vmatpush1.msra.mxu0 0.0
    %2979 = vmatprep.subr.mxu0 0.0
    %2980 = vmatpush1.msra.mxu0 0.0
    %2981 = vmatprep.subr.mxu0 0.0
    %2982 = vmatpush1.msra.mxu0 0.0
    %2983 = vmatprep.subr.mxu0 0.0
    %2984 = vmatpush1.msra.mxu0 0.0
    %2985 = vmatprep.subr.mxu0 0.0
    %2986 = vmatpush1.msra.mxu0 0.0
    %2987 = vmatprep.subr.mxu0 0.0
    %2988 = vmatpush1.msra.mxu0 0.0
    %2989 = vmatprep.subr.mxu0 0.0
    %2990 = vmatpush1.msra.mxu0 0.0
    %2991 = vmatprep.subr.mxu0 0.0
    %2992 = vmatpush1.msra.mxu0 0.0
    %2993 = vmatprep.subr.mxu0 0.0
    %2994 = vmatpush1.msra.mxu0 0.0
    %2995 = vmatprep.mubr.f32.mxu0 0.0
    %2996 = vmatmul.mubr.f32.gmra.mrb[0].mxu0 %v2929
    %v2997 = vpop.f32.mrb[0].mxu0
    %v2998 = vadd.f32 0.0, %v2997
    %v2999 = vpop.f32.mrb[0].mxu0
    %3000 = vdwg.mxu0
    %3002 = vrot.lane.b32.xlu0 %v2998, 24
    %v3003 = vpop.permute.xlu0 %3002
    %3005 = vst.msk [vmem:[#allocation2] sm:$0xff] %vm1219, %v3003
    %v3006 = vlaneseq
    %v3007 = vshrl.u32 %v3006, 7
    %v3008 = vsub.s32 1, %v3007
    %v3009 = vrot.slane %v2319, %v3008
    %vm3010 = vcmp.eq.s32.totalorder %v3009, 1
    %vm3011 = vmor %vm528, %vm3010
    %v3013 = vsel %vm537, %v2147, 0
    %v3016 = vsel %vm537, %v2234, 0
    %3018 = vmatprep.subr.mxu0 0.0
    %3019 = vmatpush1.xpose.msra.mxu0 %v3016
    %3020 = vmatprep.subr.mxu0 0.0
    %3021 = vmatpush1.xpose.msra.mxu0 0.0
    %3022 = vmatprep.subr.mxu0 0.0
    %3023 = vmatpush1.xpose.msra.mxu0 0.0
    %3024 = vmatprep.subr.mxu0 0.0
    %3025 = vmatpush1.xpose.msra.mxu0 0.0
    %3026 = vmatprep.subr.mxu0 0.0
    %3027 = vmatpush1.xpose.msra.mxu0 0.0
    %3028 = vmatprep.subr.mxu0 0.0
    %3029 = vmatpush1.xpose.msra.mxu0 0.0
    %3030 = vmatprep.subr.mxu0 0.0
    %3031 = vmatpush1.xpose.msra.mxu0 0.0
    %3032 = vmatprep.subr.mxu0 0.0
    %3033 = vmatpush1.xpose.msra.mxu0 0.0
    %3034 = vmatprep.subr.mxu0 0.0
    %3035 = vmatpush1.xpose.msra.mxu0 0.0
    %3036 = vmatprep.subr.mxu0 0.0
    %3037 = vmatpush1.xpose.msra.mxu0 0.0
    %3038 = vmatprep.subr.mxu0 0.0
    %3039 = vmatpush1.xpose.msra.mxu0 0.0
    %3040 = vmatprep.subr.mxu0 0.0
    %3041 = vmatpush1.xpose.msra.mxu0 0.0
    %3042 = vmatprep.subr.mxu0 0.0
    %3043 = vmatpush1.xpose.msra.mxu0 0.0
    %3044 = vmatprep.subr.mxu0 0.0
    %3045 = vmatpush1.xpose.msra.mxu0 0.0
    %3046 = vmatprep.subr.mxu0 0.0
    %3047 = vmatpush1.xpose.msra.mxu0 0.0
    %3048 = vmatprep.subr.mxu0 0.0
    %3049 = vmatpush1.xpose.msra.mxu0 0.0
    %3050 = vmatprep.subr.mxu0 0.0
    %3051 = vmatpush1.xpose.msra.mxu0 0.0
    %3052 = vmatprep.subr.mxu0 0.0
    %3053 = vmatpush1.xpose.msra.mxu0 0.0
    %3054 = vmatprep.subr.mxu0 0.0
    %3055 = vmatpush1.xpose.msra.mxu0 0.0
    %3056 = vmatprep.subr.mxu0 0.0
    %3057 = vmatpush1.xpose.msra.mxu0 0.0
    %3058 = vmatprep.subr.mxu0 0.0
    %3059 = vmatpush1.xpose.msra.mxu0 0.0
    %3060 = vmatprep.subr.mxu0 0.0
    %3061 = vmatpush1.xpose.msra.mxu0 0.0
    %3062 = vmatprep.subr.mxu0 0.0
    %3063 = vmatpush1.xpose.msra.mxu0 0.0
    %3064 = vmatprep.subr.mxu0 0.0
    %3065 = vmatpush1.xpose.msra.mxu0 0.0
    %3066 = vmatprep.subr.mxu0 0.0
    %3067 = vmatpush1.xpose.msra.mxu0 0.0
    %3068 = vmatprep.subr.mxu0 0.0
    %3069 = vmatpush1.xpose.msra.mxu0 0.0
    %3070 = vmatprep.subr.mxu0 0.0
    %3071 = vmatpush1.xpose.msra.mxu0 0.0
    %3072 = vmatprep.subr.mxu0 0.0
    %3073 = vmatpush1.xpose.msra.mxu0 0.0
    %3074 = vmatprep.subr.mxu0 0.0
    %3075 = vmatpush1.xpose.msra.mxu0 0.0
    %3076 = vmatprep.subr.mxu0 0.0
    %3077 = vmatpush1.xpose.msra.mxu0 0.0
    %3078 = vmatprep.subr.mxu0 0.0
    %3079 = vmatpush1.xpose.msra.mxu0 0.0
    %3080 = vmatprep.subr.mxu0 0.0
    %3081 = vmatpush1.xpose.msra.mxu0 0.0
    %3082 = vmatprep.mubr.f32.mxu0 0.0
    %3083 = vmatmul.mubr.f32.gmra.mrb[0].mxu0 %v3013
    %v3084 = vpop.f32.mrb[0].mxu0
    %v3085 = vadd.f32 0.0, %v3084
    %v3086 = vpop.f32.mrb[0].mxu0
    %3087 = vdwg.mxu0
    %v3088 = vmul.f32 %v3085, 0.35355338
    %v3089 = vsel %vm3011, -1e+09, %v3088
    %v3090 = vsel %vm537, %v3089, -inf
    %3091 = vmax.xlane.f32.xlu0 %v3090
    %v3092 = vpop.xlane.xlu0 %3091
    %v3093 = vsub.f32 %v3089, %v3092
    %v3094 = vmul.f32 %v3093, 1.442695
    %v3095 = vpow.pop %v3094
    %v3096 = vsel %vm537, %v3095, 0.0
    %3097 = vadd.xlane.f32.xlu0 %v3096
    %v3098 = vpop.xlane.xlu0 %3097
    %v3099 = vrcp.pop %v3098
    %v3100 = vmul.f32 %v3095, %v3099
    %v3102 = vsel %vm537, %v3100, 0
    %3104 = vmatprep.subr.mxu0 0.0
    %3105 = vmatpush1.msra.mxu0 %v2315
    %3106 = vmatprep.subr.mxu0 0.0
    %3107 = vmatpush1.msra.mxu0 0.0
    %3108 = vmatprep.subr.mxu0 0.0
    %3109 = vmatpush1.msra.mxu0 0.0
    %3110 = vmatprep.subr.mxu0 0.0
    %3111 = vmatpush1.msra.mxu0 0.0
    %3112 = vmatprep.subr.mxu0 0.0
    %3113 = vmatpush1.msra.mxu0 0.0
    %3114 = vmatprep.subr.mxu0 0.0
    %3115 = vmatpush1.msra.mxu0 0.0
    %3116 = vmatprep.subr.mxu0 0.0
    %3117 = vmatpush1.msra.mxu0 0.0
    %3118 = vmatprep.subr.mxu0 0.0
    %3119 = vmatpush1.msra.mxu0 0.0
    %3120 = vmatprep.subr.mxu0 0.0
    %3121 = vmatpush1.msra.mxu0 0.0
    %3122 = vmatprep.subr.mxu0 0.0
    %3123 = vmatpush1.msra.mxu0 0.0
    %3124 = vmatprep.subr.mxu0 0.0
    %3125 = vmatpush1.msra.mxu0 0.0
    %3126 = vmatprep.subr.mxu0 0.0
    %3127 = vmatpush1.msra.mxu0 0.0
    %3128 = vmatprep.subr.mxu0 0.0
    %3129 = vmatpush1.msra.mxu0 0.0
    %3130 = vmatprep.subr.mxu0 0.0
    %3131 = vmatpush1.msra.mxu0 0.0
    %3132 = vmatprep.subr.mxu0 0.0
    %3133 = vmatpush1.msra.mxu0 0.0
    %3134 = vmatprep.subr.mxu0 0.0
    %3135 = vmatpush1.msra.mxu0 0.0
    %3136 = vmatprep.subr.mxu0 0.0
    %3137 = vmatpush1.msra.mxu0 0.0
    %3138 = vmatprep.subr.mxu0 0.0
    %3139 = vmatpush1.msra.mxu0 0.0
    %3140 = vmatprep.subr.mxu0 0.0
    %3141 = vmatpush1.msra.mxu0 0.0
    %3142 = vmatprep.subr.mxu0 0.0
    %3143 = vmatpush1.msra.mxu0 0.0
    %3144 = vmatprep.subr.mxu0 0.0
    %3145 = vmatpush1.msra.mxu0 0.0
    %3146 = vmatprep.subr.mxu0 0.0
    %3147 = vmatpush1.msra.mxu0 0.0
    %3148 = vmatprep.subr.mxu0 0.0
    %3149 = vmatpush1.msra.mxu0 0.0
    %3150 = vmatprep.subr.mxu0 0.0
    %3151 = vmatpush1.msra.mxu0 0.0
    %3152 = vmatprep.subr.mxu0 0.0
    %3153 = vmatpush1.msra.mxu0 0.0
    %3154 = vmatprep.subr.mxu0 0.0
    %3155 = vmatpush1.msra.mxu0 0.0
    %3156 = vmatprep.subr.mxu0 0.0
    %3157 = vmatpush1.msra.mxu0 0.0
    %3158 = vmatprep.subr.mxu0 0.0
    %3159 = vmatpush1.msra.mxu0 0.0
    %3160 = vmatprep.subr.mxu0 0.0
    %3161 = vmatpush1.msra.mxu0 0.0
    %3162 = vmatprep.subr.mxu0 0.0
    %3163 = vmatpush1.msra.mxu0 0.0
    %3164 = vmatprep.subr.mxu0 0.0
    %3165 = vmatpush1.msra.mxu0 0.0
    %3166 = vmatprep.subr.mxu0 0.0
    %3167 = vmatpush1.msra.mxu0 0.0
    %3168 = vmatprep.mubr.f32.mxu0 0.0
    %3169 = vmatmul.mubr.f32.gmra.mrb[0].mxu0 %v3102
    %v3170 = vpop.f32.mrb[0].mxu0
    %v3171 = vadd.f32 0.0, %v3170
    %v3172 = vpop.f32.mrb[0].mxu0
    %3173 = vdwg.mxu0
    %3174 = vst.msk [vmem:[#allocation2 + $0x8] sm:$0xff] %vm537, %v3171
    %3175 = vrot.lane.b32.xlu0 %v2147, 120
    %v3176 = vpop.permute.xlu0 %3175
    %3177 = vrot.lane.b32.xlu0 %v2234, 120
    %v3178 = vpop.permute.xlu0 %3177
    %v3179 = vsel %vm537, %v3176, 0
    %v3181 = vsel %vm537, %v3178, 0
    %3183 = vmatprep.subr.mxu0 0.0
    %3184 = vmatpush1.xpose.msra.mxu0 %v3181
    %3185 = vmatprep.subr.mxu0 0.0
    %3186 = vmatpush1.xpose.msra.mxu0 0.0
    %3187 = vmatprep.subr.mxu0 0.0
    %3188 = vmatpush1.xpose.msra.mxu0 0.0
    %3189 = vmatprep.subr.mxu0 0.0
    %3190 = vmatpush1.xpose.msra.mxu0 0.0
    %3191 = vmatprep.subr.mxu0 0.0
    %3192 = vmatpush1.xpose.msra.mxu0 0.0
    %3193 = vmatprep.subr.mxu0 0.0
    %3194 = vmatpush1.xpose.msra.mxu0 0.0
    %3195 = vmatprep.subr.mxu0 0.0
    %3196 = vmatpush1.xpose.msra.mxu0 0.0
    %3197 = vmatprep.subr.mxu0 0.0
    %3198 = vmatpush1.xpose.msra.mxu0 0.0
    %3199 = vmatprep.subr.mxu0 0.0
    %3200 = vmatpush1.xpose.msra.mxu0 0.0
    %3201 = vmatprep.subr.mxu0 0.0
    %3202 = vmatpush1.xpose.msra.mxu0 0.0
    %3203 = vmatprep.subr.mxu0 0.0
    %3204 = vmatpush1.xpose.msra.mxu0 0.0
    %3205 = vmatprep.subr.mxu0 0.0
    %3206 = vmatpush1.xpose.msra.mxu0 0.0
    %3207 = vmatprep.subr.mxu0 0.0
    %3208 = vmatpush1.xpose.msra.mxu0 0.0
    %3209 = vmatprep.subr.mxu0 0.0
    %3210 = vmatpush1.xpose.msra.mxu0 0.0
    %3211 = vmatprep.subr.mxu0 0.0
    %3212 = vmatpush1.xpose.msra.mxu0 0.0
    %3213 = vmatprep.subr.mxu0 0.0
    %3214 = vmatpush1.xpose.msra.mxu0 0.0
    %3215 = vmatprep.subr.mxu0 0.0
    %3216 = vmatpush1.xpose.msra.mxu0 0.0
    %3217 = vmatprep.subr.mxu0 0.0
    %3218 = vmatpush1.xpose.msra.mxu0 0.0
    %3219 = vmatprep.subr.mxu0 0.0
    %3220 = vmatpush1.xpose.msra.mxu0 0.0
    %3221 = vmatprep.subr.mxu0 0.0
    %3222 = vmatpush1.xpose.msra.mxu0 0.0
    %3223 = vmatprep.subr.mxu0 0.0
    %3224 = vmatpush1.xpose.msra.mxu0 0.0
    %3225 = vmatprep.subr.mxu0 0.0
    %3226 = vmatpush1.xpose.msra.mxu0 0.0
    %3227 = vmatprep.subr.mxu0 0.0
    %3228 = vmatpush1.xpose.msra.mxu0 0.0
    %3229 = vmatprep.subr.mxu0 0.0
    %3230 = vmatpush1.xpose.msra.mxu0 0.0
    %3231 = vmatprep.subr.mxu0 0.0
    %3232 = vmatpush1.xpose.msra.mxu0 0.0
    %3233 = vmatprep.subr.mxu0 0.0
    %3234 = vmatpush1.xpose.msra.mxu0 0.0
    %3235 = vmatprep.subr.mxu0 0.0
    %3236 = vmatpush1.xpose.msra.mxu0 0.0
    %3237 = vmatprep.subr.mxu0 0.0
    %3238 = vmatpush1.xpose.msra.mxu0 0.0
    %3239 = vmatprep.subr.mxu0 0.0
    %3240 = vmatpush1.xpose.msra.mxu0 0.0
    %3241 = vmatprep.subr.mxu0 0.0
    %3242 = vmatpush1.xpose.msra.mxu0 0.0
    %3243 = vmatprep.subr.mxu0 0.0
    %3244 = vmatpush1.xpose.msra.mxu0 0.0
    %3245 = vmatprep.subr.mxu0 0.0
    %3246 = vmatpush1.xpose.msra.mxu0 0.0
    %3247 = vmatprep.mubr.f32.mxu0 0.0
    %3248 = vmatmul.mubr.f32.gmra.mrb[0].mxu0 %v3179
    %v3249 = vpop.f32.mrb[0].mxu0
    %v3250 = vadd.f32 0.0, %v3249
    %v3251 = vpop.f32.mrb[0].mxu0
    %3252 = vdwg.mxu0
    %v3253 = vmul.f32 %v3250, 0.35355338
    %v3254 = vsel %vm3011, -1e+09, %v3253
    %v3255 = vsel %vm537, %v3254, -inf
    %3256 = vmax.xlane.f32.xlu0 %v3255
    %v3257 = vpop.xlane.xlu0 %3256
    %v3258 = vsub.f32 %v3254, %v3257
    %v3259 = vmul.f32 %v3258, 1.442695
    %v3260 = vpow.pop %v3259
    %v3261 = vsel %vm537, %v3260, 0.0
    %3262 = vadd.xlane.f32.xlu0 %v3261
    %v3263 = vpop.xlane.xlu0 %3262
    %v3264 = vrcp.pop %v3263
    %v3265 = vmul.f32 %v3260, %v3264
    %3267 = vrot.lane.b32.xlu0 %v2315, 120
    %v3268 = vpop.permute.xlu0 %3267
    %v3271 = vsel %vm537, %v3265, 0
    %3273 = vmatprep.subr.mxu0 0.0
    %3274 = vmatpush1.msra.mxu0 %v3268
    %3275 = vmatprep.subr.mxu0 0.0
    %3276 = vmatpush1.msra.mxu0 0.0
    %3277 = vmatprep.subr.mxu0 0.0
    %3278 = vmatpush1.msra.mxu0 0.0
    %3279 = vmatprep.subr.mxu0 0.0
    %3280 = vmatpush1.msra.mxu0 0.0
    %3281 = vmatprep.subr.mxu0 0.0
    %3282 = vmatpush1.msra.mxu0 0.0
    %3283 = vmatprep.subr.mxu0 0.0
    %3284 = vmatpush1.msra.mxu0 0.0
    %3285 = vmatprep.subr.mxu0 0.0
    %3286 = vmatpush1.msra.mxu0 0.0
    %3287 = vmatprep.subr.mxu0 0.0
    %3288 = vmatpush1.msra.mxu0 0.0
    %3289 = vmatprep.subr.mxu0 0.0
    %3290 = vmatpush1.msra.mxu0 0.0
    %3291 = vmatprep.subr.mxu0 0.0
    %3292 = vmatpush1.msra.mxu0 0.0
    %3293 = vmatprep.subr.mxu0 0.0
    %3294 = vmatpush1.msra.mxu0 0.0
    %3295 = vmatprep.subr.mxu0 0.0
    %3296 = vmatpush1.msra.mxu0 0.0
    %3297 = vmatprep.subr.mxu0 0.0
    %3298 = vmatpush1.msra.mxu0 0.0
    %3299 = vmatprep.subr.mxu0 0.0
    %3300 = vmatpush1.msra.mxu0 0.0
    %3301 = vmatprep.subr.mxu0 0.0
    %3302 = vmatpush1.msra.mxu0 0.0
    %3303 = vmatprep.subr.mxu0 0.0
    %3304 = vmatpush1.msra.mxu0 0.0
    %3305 = vmatprep.subr.mxu0 0.0
    %3306 = vmatpush1.msra.mxu0 0.0
    %3307 = vmatprep.subr.mxu0 0.0
    %3308 = vmatpush1.msra.mxu0 0.0
    %3309 = vmatprep.subr.mxu0 0.0
    %3310 = vmatpush1.msra.mxu0 0.0
    %3311 = vmatprep.subr.mxu0 0.0
    %3312 = vmatpush1.msra.mxu0 0.0
    %3313 = vmatprep.subr.mxu0 0.0
    %3314 = vmatpush1.msra.mxu0 0.0
    %3315 = vmatprep.subr.mxu0 0.0
    %3316 = vmatpush1.msra.mxu0 0.0
    %3317 = vmatprep.subr.mxu0 0.0
    %3318 = vmatpush1.msra.mxu0 0.0
    %3319 = vmatprep.subr.mxu0 0.0
    %3320 = vmatpush1.msra.mxu0 0.0
    %3321 = vmatprep.subr.mxu0 0.0
    %3322 = vmatpush1.msra.mxu0 0.0
    %3323 = vmatprep.subr.mxu0 0.0
    %3324 = vmatpush1.msra.mxu0 0.0
    %3325 = vmatprep.subr.mxu0 0.0
    %3326 = vmatpush1.msra.mxu0 0.0
    %3327 = vmatprep.subr.mxu0 0.0
    %3328 = vmatpush1.msra.mxu0 0.0
    %3329 = vmatprep.subr.mxu0 0.0
    %3330 = vmatpush1.msra.mxu0 0.0
    %3331 = vmatprep.subr.mxu0 0.0
    %3332 = vmatpush1.msra.mxu0 0.0
    %3333 = vmatprep.subr.mxu0 0.0
    %3334 = vmatpush1.msra.mxu0 0.0
    %3335 = vmatprep.subr.mxu0 0.0
    %3336 = vmatpush1.msra.mxu0 0.0
    %3337 = vmatprep.mubr.f32.mxu0 0.0
    %3338 = vmatmul.mubr.f32.gmra.mrb[0].mxu0 %v3271
    %v3339 = vpop.f32.mrb[0].mxu0
    %v3340 = vadd.f32 0.0, %v3339
    %v3341 = vpop.f32.mrb[0].mxu0
    %3342 = vdwg.mxu0
    %3344 = vrot.lane.b32.xlu0 %v3340, 8
    %v3345 = vpop.permute.xlu0 %3344
    %3347 = vst.msk [vmem:[#allocation2 + $0x8] sm:$0xff] %vm873, %v3345
    %3348 = vrot.lane.b32.xlu0 %v2147, 112
    %v3349 = vpop.permute.xlu0 %3348
    %3350 = vrot.lane.b32.xlu0 %v2234, 112
    %v3351 = vpop.permute.xlu0 %3350
    %v3352 = vsel %vm537, %v3349, 0
    %v3354 = vsel %vm537, %v3351, 0
    %3356 = vmatprep.subr.mxu0 0.0
    %3357 = vmatpush1.xpose.msra.mxu0 %v3354
    %3358 = vmatprep.subr.mxu0 0.0
    %3359 = vmatpush1.xpose.msra.mxu0 0.0
    %3360 = vmatprep.subr.mxu0 0.0
    %3361 = vmatpush1.xpose.msra.mxu0 0.0
    %3362 = vmatprep.subr.mxu0 0.0
    %3363 = vmatpush1.xpose.msra.mxu0 0.0
    %3364 = vmatprep.subr.mxu0 0.0
    %3365 = vmatpush1.xpose.msra.mxu0 0.0
    %3366 = vmatprep.subr.mxu0 0.0
    %3367 = vmatpush1.xpose.msra.mxu0 0.0
    %3368 = vmatprep.subr.mxu0 0.0
    %3369 = vmatpush1.xpose.msra.mxu0 0.0
    %3370 = vmatprep.subr.mxu0 0.0
    %3371 = vmatpush1.xpose.msra.mxu0 0.0
    %3372 = vmatprep.subr.mxu0 0.0
    %3373 = vmatpush1.xpose.msra.mxu0 0.0
    %3374 = vmatprep.subr.mxu0 0.0
    %3375 = vmatpush1.xpose.msra.mxu0 0.0
    %3376 = vmatprep.subr.mxu0 0.0
    %3377 = vmatpush1.xpose.msra.mxu0 0.0
    %3378 = vmatprep.subr.mxu0 0.0
    %3379 = vmatpush1.xpose.msra.mxu0 0.0
    %3380 = vmatprep.subr.mxu0 0.0
    %3381 = vmatpush1.xpose.msra.mxu0 0.0
    %3382 = vmatprep.subr.mxu0 0.0
    %3383 = vmatpush1.xpose.msra.mxu0 0.0
    %3384 = vmatprep.subr.mxu0 0.0
    %3385 = vmatpush1.xpose.msra.mxu0 0.0
    %3386 = vmatprep.subr.mxu0 0.0
    %3387 = vmatpush1.xpose.msra.mxu0 0.0
    %3388 = vmatprep.subr.mxu0 0.0
    %3389 = vmatpush1.xpose.msra.mxu0 0.0
    %3390 = vmatprep.subr.mxu0 0.0
    %3391 = vmatpush1.xpose.msra.mxu0 0.0
    %3392 = vmatprep.subr.mxu0 0.0
    %3393 = vmatpush1.xpose.msra.mxu0 0.0
    %3394 = vmatprep.subr.mxu0 0.0
    %3395 = vmatpush1.xpose.msra.mxu0 0.0
    %3396 = vmatprep.subr.mxu0 0.0
    %3397 = vmatpush1.xpose.msra.mxu0 0.0
    %3398 = vmatprep.subr.mxu0 0.0
    %3399 = vmatpush1.xpose.msra.mxu0 0.0
    %3400 = vmatprep.subr.mxu0 0.0
    %3401 = vmatpush1.xpose.msra.mxu0 0.0
    %3402 = vmatprep.subr.mxu0 0.0
    %3403 = vmatpush1.xpose.msra.mxu0 0.0
    %3404 = vmatprep.subr.mxu0 0.0
    %3405 = vmatpush1.xpose.msra.mxu0 0.0
    %3406 = vmatprep.subr.mxu0 0.0
    %3407 = vmatpush1.xpose.msra.mxu0 0.0
    %3408 = vmatprep.subr.mxu0 0.0
    %3409 = vmatpush1.xpose.msra.mxu0 0.0
    %3410 = vmatprep.subr.mxu0 0.0
    %3411 = vmatpush1.xpose.msra.mxu0 0.0
    %3412 = vmatprep.subr.mxu0 0.0
    %3413 = vmatpush1.xpose.msra.mxu0 0.0
    %3414 = vmatprep.subr.mxu0 0.0
    %3415 = vmatpush1.xpose.msra.mxu0 0.0
    %3416 = vmatprep.subr.mxu0 0.0
    %3417 = vmatpush1.xpose.msra.mxu0 0.0
    %3418 = vmatprep.subr.mxu0 0.0
    %3419 = vmatpush1.xpose.msra.mxu0 0.0
    %3420 = vmatprep.mubr.f32.mxu0 0.0
    %3421 = vmatmul.mubr.f32.gmra.mrb[0].mxu0 %v3352
    %v3422 = vpop.f32.mrb[0].mxu0
    %v3423 = vadd.f32 0.0, %v3422
    %v3424 = vpop.f32.mrb[0].mxu0
    %3425 = vdwg.mxu0
    %v3426 = vmul.f32 %v3423, 0.35355338
    %v3427 = vsel %vm3011, -1e+09, %v3426
    %v3428 = vsel %vm537, %v3427, -inf
    %3429 = vmax.xlane.f32.xlu0 %v3428
    %v3430 = vpop.xlane.xlu0 %3429
    %v3431 = vsub.f32 %v3427, %v3430
    %v3432 = vmul.f32 %v3431, 1.442695
    %v3433 = vpow.pop %v3432
    %v3434 = vsel %vm537, %v3433, 0.0
    %3435 = vadd.xlane.f32.xlu0 %v3434
    %v3436 = vpop.xlane.xlu0 %3435
    %v3437 = vrcp.pop %v3436
    %v3438 = vmul.f32 %v3433, %v3437
    %3439 = vrot.lane.b32.xlu0 %v2315, 112
    %v3440 = vpop.permute.xlu0 %3439
    %v3443 = vsel %vm537, %v3438, 0
    %3445 = vmatprep.subr.mxu0 0.0
    %3446 = vmatpush1.msra.mxu0 %v3440
    %3447 = vmatprep.subr.mxu0 0.0
    %3448 = vmatpush1.msra.mxu0 0.0
    %3449 = vmatprep.subr.mxu0 0.0
    %3450 = vmatpush1.msra.mxu0 0.0
    %3451 = vmatprep.subr.mxu0 0.0
    %3452 = vmatpush1.msra.mxu0 0.0
    %3453 = vmatprep.subr.mxu0 0.0
    %3454 = vmatpush1.msra.mxu0 0.0
    %3455 = vmatprep.subr.mxu0 0.0
    %3456 = vmatpush1.msra.mxu0 0.0
    %3457 = vmatprep.subr.mxu0 0.0
    %3458 = vmatpush1.msra.mxu0 0.0
    %3459 = vmatprep.subr.mxu0 0.0
    %3460 = vmatpush1.msra.mxu0 0.0
    %3461 = vmatprep.subr.mxu0 0.0
    %3462 = vmatpush1.msra.mxu0 0.0
    %3463 = vmatprep.subr.mxu0 0.0
    %3464 = vmatpush1.msra.mxu0 0.0
    %3465 = vmatprep.subr.mxu0 0.0
    %3466 = vmatpush1.msra.mxu0 0.0
    %3467 = vmatprep.subr.mxu0 0.0
    %3468 = vmatpush1.msra.mxu0 0.0
    %3469 = vmatprep.subr.mxu0 0.0
    %3470 = vmatpush1.msra.mxu0 0.0
    %3471 = vmatprep.subr.mxu0 0.0
    %3472 = vmatpush1.msra.mxu0 0.0
    %3473 = vmatprep.subr.mxu0 0.0
    %3474 = vmatpush1.msra.mxu0 0.0
    %3475 = vmatprep.subr.mxu0 0.0
    %3476 = vmatpush1.msra.mxu0 0.0
    %3477 = vmatprep.subr.mxu0 0.0
    %3478 = vmatpush1.msra.mxu0 0.0
    %3479 = vmatprep.subr.mxu0 0.0
    %3480 = vmatpush1.msra.mxu0 0.0
    %3481 = vmatprep.subr.mxu0 0.0
    %3482 = vmatpush1.msra.mxu0 0.0
    %3483 = vmatprep.subr.mxu0 0.0
    %3484 = vmatpush1.msra.mxu0 0.0
    %3485 = vmatprep.subr.mxu0 0.0
    %3486 = vmatpush1.msra.mxu0 0.0
    %3487 = vmatprep.subr.mxu0 0.0
    %3488 = vmatpush1.msra.mxu0 0.0
    %3489 = vmatprep.subr.mxu0 0.0
    %3490 = vmatpush1.msra.mxu0 0.0
    %3491 = vmatprep.subr.mxu0 0.0
    %3492 = vmatpush1.msra.mxu0 0.0
    %3493 = vmatprep.subr.mxu0 0.0
    %3494 = vmatpush1.msra.mxu0 0.0
    %3495 = vmatprep.subr.mxu0 0.0
    %3496 = vmatpush1.msra.mxu0 0.0
    %3497 = vmatprep.subr.mxu0 0.0
    %3498 = vmatpush1.msra.mxu0 0.0
    %3499 = vmatprep.subr.mxu0 0.0
    %3500 = vmatpush1.msra.mxu0 0.0
    %3501 = vmatprep.subr.mxu0 0.0
    %3502 = vmatpush1.msra.mxu0 0.0
    %3503 = vmatprep.subr.mxu0 0.0
    %3504 = vmatpush1.msra.mxu0 0.0
    %3505 = vmatprep.subr.mxu0 0.0
    %3506 = vmatpush1.msra.mxu0 0.0
    %3507 = vmatprep.subr.mxu0 0.0
    %3508 = vmatpush1.msra.mxu0 0.0
    %3509 = vmatprep.mubr.f32.mxu0 0.0
    %3510 = vmatmul.mubr.f32.gmra.mrb[0].mxu0 %v3443
    %v3511 = vpop.f32.mrb[0].mxu0
    %v3512 = vadd.f32 0.0, %v3511
    %v3513 = vpop.f32.mrb[0].mxu0
    %3514 = vdwg.mxu0
    %3516 = vrot.lane.b32.xlu0 %v3512, 16
    %v3517 = vpop.permute.xlu0 %3516
    %3519 = vst.msk [vmem:[#allocation2 + $0x8] sm:$0xff] %vm1046, %v3517
    %3520 = vrot.lane.b32.xlu0 %v2147, 104
    %v3521 = vpop.permute.xlu0 %3520
    %3522 = vrot.lane.b32.xlu0 %v2234, 104
    %v3523 = vpop.permute.xlu0 %3522
    %v3524 = vsel %vm537, %v3521, 0
    %v3526 = vsel %vm537, %v3523, 0
    %3528 = vmatprep.subr.mxu0 0.0
    %3529 = vmatpush1.xpose.msra.mxu0 %v3526
    %3530 = vmatprep.subr.mxu0 0.0
    %3531 = vmatpush1.xpose.msra.mxu0 0.0
    %3532 = vmatprep.subr.mxu0 0.0
    %3533 = vmatpush1.xpose.msra.mxu0 0.0
    %3534 = vmatprep.subr.mxu0 0.0
    %3535 = vmatpush1.xpose.msra.mxu0 0.0
    %3536 = vmatprep.subr.mxu0 0.0
    %3537 = vmatpush1.xpose.msra.mxu0 0.0
    %3538 = vmatprep.subr.mxu0 0.0
    %3539 = vmatpush1.xpose.msra.mxu0 0.0
    %3540 = vmatprep.subr.mxu0 0.0
    %3541 = vmatpush1.xpose.msra.mxu0 0.0
    %3542 = vmatprep.subr.mxu0 0.0
    %3543 = vmatpush1.xpose.msra.mxu0 0.0
    %3544 = vmatprep.subr.mxu0 0.0
    %3545 = vmatpush1.xpose.msra.mxu0 0.0
    %3546 = vmatprep.subr.mxu0 0.0
    %3547 = vmatpush1.xpose.msra.mxu0 0.0
    %3548 = vmatprep.subr.mxu0 0.0
    %3549 = vmatpush1.xpose.msra.mxu0 0.0
    %3550 = vmatprep.subr.mxu0 0.0
    %3551 = vmatpush1.xpose.msra.mxu0 0.0
    %3552 = vmatprep.subr.mxu0 0.0
    %3553 = vmatpush1.xpose.msra.mxu0 0.0
    %3554 = vmatprep.subr.mxu0 0.0
    %3555 = vmatpush1.xpose.msra.mxu0 0.0
    %3556 = vmatprep.subr.mxu0 0.0
    %3557 = vmatpush1.xpose.msra.mxu0 0.0
    %3558 = vmatprep.subr.mxu0 0.0
    %3559 = vmatpush1.xpose.msra.mxu0 0.0
    %3560 = vmatprep.subr.mxu0 0.0
    %3561 = vmatpush1.xpose.msra.mxu0 0.0
    %3562 = vmatprep.subr.mxu0 0.0
    %3563 = vmatpush1.xpose.msra.mxu0 0.0
    %3564 = vmatprep.subr.mxu0 0.0
    %3565 = vmatpush1.xpose.msra.mxu0 0.0
    %3566 = vmatprep.subr.mxu0 0.0
    %3567 = vmatpush1.xpose.msra.mxu0 0.0
    %3568 = vmatprep.subr.mxu0 0.0
    %3569 = vmatpush1.xpose.msra.mxu0 0.0
    %3570 = vmatprep.subr.mxu0 0.0
    %3571 = vmatpush1.xpose.msra.mxu0 0.0
    %3572 = vmatprep.subr.mxu0 0.0
    %3573 = vmatpush1.xpose.msra.mxu0 0.0
    %3574 = vmatprep.subr.mxu0 0.0
    %3575 = vmatpush1.xpose.msra.mxu0 0.0
    %3576 = vmatprep.subr.mxu0 0.0
    %3577 = vmatpush1.xpose.msra.mxu0 0.0
    %3578 = vmatprep.subr.mxu0 0.0
    %3579 = vmatpush1.xpose.msra.mxu0 0.0
    %3580 = vmatprep.subr.mxu0 0.0
    %3581 = vmatpush1.xpose.msra.mxu0 0.0
    %3582 = vmatprep.subr.mxu0 0.0
    %3583 = vmatpush1.xpose.msra.mxu0 0.0
    %3584 = vmatprep.subr.mxu0 0.0
    %3585 = vmatpush1.xpose.msra.mxu0 0.0
    %3586 = vmatprep.subr.mxu0 0.0
    %3587 = vmatpush1.xpose.msra.mxu0 0.0
    %3588 = vmatprep.subr.mxu0 0.0
    %3589 = vmatpush1.xpose.msra.mxu0 0.0
    %3590 = vmatprep.subr.mxu0 0.0
    %3591 = vmatpush1.xpose.msra.mxu0 0.0
    %3592 = vmatprep.mubr.f32.mxu0 0.0
    %3593 = vmatmul.mubr.f32.gmra.mrb[0].mxu0 %v3524
    %v3594 = vpop.f32.mrb[0].mxu0
    %v3595 = vadd.f32 0.0, %v3594
    %v3596 = vpop.f32.mrb[0].mxu0
    %3597 = vdwg.mxu0
    %v3598 = vmul.f32 %v3595, 0.35355338
    %v3599 = vsel %vm3011, -1e+09, %v3598
    %v3600 = vsel %vm537, %v3599, -inf
    %3601 = vmax.xlane.f32.xlu0 %v3600
    %v3602 = vpop.xlane.xlu0 %3601
    %v3603 = vsub.f32 %v3599, %v3602
    %v3604 = vmul.f32 %v3603, 1.442695
    %v3605 = vpow.pop %v3604
    %v3606 = vsel %vm537, %v3605, 0.0
    %3607 = vadd.xlane.f32.xlu0 %v3606
    %v3608 = vpop.xlane.xlu0 %3607
    %v3609 = vrcp.pop %v3608
    %v3610 = vmul.f32 %v3605, %v3609
    %3611 = vrot.lane.b32.xlu0 %v2315, 104
    %v3612 = vpop.permute.xlu0 %3611
    %v3615 = vsel %vm537, %v3610, 0
    %3617 = vmatprep.subr.mxu0 0.0
    %3618 = vmatpush1.msra.mxu0 %v3612
    %3619 = vmatprep.subr.mxu0 0.0
    %3620 = vmatpush1.msra.mxu0 0.0
    %3621 = vmatprep.subr.mxu0 0.0
    %3622 = vmatpush1.msra.mxu0 0.0
    %3623 = vmatprep.subr.mxu0 0.0
    %3624 = vmatpush1.msra.mxu0 0.0
    %3625 = vmatprep.subr.mxu0 0.0
    %3626 = vmatpush1.msra.mxu0 0.0
    %3627 = vmatprep.subr.mxu0 0.0
    %3628 = vmatpush1.msra.mxu0 0.0
    %3629 = vmatprep.subr.mxu0 0.0
    %3630 = vmatpush1.msra.mxu0 0.0
    %3631 = vmatprep.subr.mxu0 0.0
    %3632 = vmatpush1.msra.mxu0 0.0
    %3633 = vmatprep.subr.mxu0 0.0
    %3634 = vmatpush1.msra.mxu0 0.0
    %3635 = vmatprep.subr.mxu0 0.0
    %3636 = vmatpush1.msra.mxu0 0.0
    %3637 = vmatprep.subr.mxu0 0.0
    %3638 = vmatpush1.msra.mxu0 0.0
    %3639 = vmatprep.subr.mxu0 0.0
    %3640 = vmatpush1.msra.mxu0 0.0
    %3641 = vmatprep.subr.mxu0 0.0
    %3642 = vmatpush1.msra.mxu0 0.0
    %3643 = vmatprep.subr.mxu0 0.0
    %3644 = vmatpush1.msra.mxu0 0.0
    %3645 = vmatprep.subr.mxu0 0.0
    %3646 = vmatpush1.msra.mxu0 0.0
    %3647 = vmatprep.subr.mxu0 0.0
    %3648 = vmatpush1.msra.mxu0 0.0
    %3649 = vmatprep.subr.mxu0 0.0
    %3650 = vmatpush1.msra.mxu0 0.0
    %3651 = vmatprep.subr.mxu0 0.0
    %3652 = vmatpush1.msra.mxu0 0.0
    %3653 = vmatprep.subr.mxu0 0.0
    %3654 = vmatpush1.msra.mxu0 0.0
    %3655 = vmatprep.subr.mxu0 0.0
    %3656 = vmatpush1.msra.mxu0 0.0
    %3657 = vmatprep.subr.mxu0 0.0
    %3658 = vmatpush1.msra.mxu0 0.0
    %3659 = vmatprep.subr.mxu0 0.0
    %3660 = vmatpush1.msra.mxu0 0.0
    %3661 = vmatprep.subr.mxu0 0.0
    %3662 = vmatpush1.msra.mxu0 0.0
    %3663 = vmatprep.subr.mxu0 0.0
    %3664 = vmatpush1.msra.mxu0 0.0
    %3665 = vmatprep.subr.mxu0 0.0
    %3666 = vmatpush1.msra.mxu0 0.0
    %3667 = vmatprep.subr.mxu0 0.0
    %3668 = vmatpush1.msra.mxu0 0.0
    %3669 = vmatprep.subr.mxu0 0.0
    %3670 = vmatpush1.msra.mxu0 0.0
    %3671 = vmatprep.subr.mxu0 0.0
    %3672 = vmatpush1.msra.mxu0 0.0
    %3673 = vmatprep.subr.mxu0 0.0
    %3674 = vmatpush1.msra.mxu0 0.0
    %3675 = vmatprep.subr.mxu0 0.0
    %3676 = vmatpush1.msra.mxu0 0.0
    %3677 = vmatprep.subr.mxu0 0.0
    %3678 = vmatpush1.msra.mxu0 0.0
    %3679 = vmatprep.subr.mxu0 0.0
    %3680 = vmatpush1.msra.mxu0 0.0
    %3681 = vmatprep.mubr.f32.mxu0 0.0
    %3682 = vmatmul.mubr.f32.gmra.mrb[0].mxu0 %v3615
    %v3683 = vpop.f32.mrb[0].mxu0
    %v3684 = vadd.f32 0.0, %v3683
    %v3685 = vpop.f32.mrb[0].mxu0
    %3686 = vdwg.mxu0
    %3688 = vrot.lane.b32.xlu0 %v3684, 24
    %v3689 = vpop.permute.xlu0 %3688
    %3691 = vst.msk [vmem:[#allocation2 + $0x8] sm:$0xff] %vm1219, %v3689
    %v3692 = vld [vmem:[#allocation2] sm:$0xff]
    %v3693 = vld [vmem:[#allocation2 + $0x8] sm:$0xff]
    %v3695 = vlaneseq
    %v3696 = vshrl.u32 %v3695, 7
    %v3697 = vsub.s32 0, %v3696
    %v3698 = vrot.slane %v2060, %v3697
    %v3701 = vsel %vm280, %v3692, 0
    %v3704 = vsel %vm280, %v3693, 0
    %3706 = vmatprep.subr.mxu0 0.0
    %3707 = vmatpush1.msra.mxu0 %v2056
    %3708 = vmatprep.subr.mxu0 0.0
    %3709 = vmatpush1.msra.mxu0 %v2057
    %3710 = vmatprep.subr.mxu0 0.0
    %3711 = vmatpush1.msra.mxu0 %v2058
    %3712 = vmatprep.subr.mxu0 0.0
    %3713 = vmatpush1.msra.mxu0 %v2059
    %3714 = vmatprep.subr.mxu0 0.0
    %3715 = vmatpush1.msra.mxu0 0.0
    %3716 = vmatprep.subr.mxu0 0.0
    %3717 = vmatpush1.msra.mxu0 0.0
    %3718 = vmatprep.subr.mxu0 0.0
    %3719 = vmatpush1.msra.mxu0 0.0
    %3720 = vmatprep.subr.mxu0 0.0
    %3721 = vmatpush1.msra.mxu0 0.0
    %3722 = vmatprep.subr.mxu0 0.0
    %3723 = vmatpush1.msra.mxu0 0.0
    %3724 = vmatprep.subr.mxu0 0.0
    %3725 = vmatpush1.msra.mxu0 0.0
    %3726 = vmatprep.subr.mxu0 0.0
    %3727 = vmatpush1.msra.mxu0 0.0
    %3728 = vmatprep.subr.mxu0 0.0
    %3729 = vmatpush1.msra.mxu0 0.0
    %3730 = vmatprep.subr.mxu0 0.0
    %3731 = vmatpush1.msra.mxu0 0.0
    %3732 = vmatprep.subr.mxu0 0.0
    %3733 = vmatpush1.msra.mxu0 0.0
    %3734 = vmatprep.subr.mxu0 0.0
    %3735 = vmatpush1.msra.mxu0 0.0
    %3736 = vmatprep.subr.mxu0 0.0
    %3737 = vmatpush1.msra.mxu0 0.0
    %3738 = vmatprep.subr.mxu0 0.0
    %3739 = vmatpush1.msra.mxu0 0.0
    %3740 = vmatprep.subr.mxu0 0.0
    %3741 = vmatpush1.msra.mxu0 0.0
    %3742 = vmatprep.subr.mxu0 0.0
    %3743 = vmatpush1.msra.mxu0 0.0
    %3744 = vmatprep.subr.mxu0 0.0
    %3745 = vmatpush1.msra.mxu0 0.0
    %3746 = vmatprep.subr.mxu0 0.0
    %3747 = vmatpush1.msra.mxu0 0.0
    %3748 = vmatprep.subr.mxu0 0.0
    %3749 = vmatpush1.msra.mxu0 0.0
    %3750 = vmatprep.subr.mxu0 0.0
    %3751 = vmatpush1.msra.mxu0 0.0
    %3752 = vmatprep.subr.mxu0 0.0
    %3753 = vmatpush1.msra.mxu0 0.0
    %3754 = vmatprep.subr.mxu0 0.0
    %3755 = vmatpush1.msra.mxu0 0.0
    %3756 = vmatprep.subr.mxu0 0.0
    %3757 = vmatpush1.msra.mxu0 0.0
    %3758 = vmatprep.subr.mxu0 0.0
    %3759 = vmatpush1.msra.mxu0 0.0
    %3760 = vmatprep.subr.mxu0 0.0
    %3761 = vmatpush1.msra.mxu0 0.0
    %3762 = vmatprep.subr.mxu0 0.0
    %3763 = vmatpush1.msra.mxu0 0.0
    %3764 = vmatprep.subr.mxu0 0.0
    %3765 = vmatpush1.msra.mxu0 0.0
    %3766 = vmatprep.subr.mxu0 0.0
    %3767 = vmatpush1.msra.mxu0 0.0
    %3768 = vmatprep.subr.mxu0 0.0
    %3769 = vmatpush1.msra.mxu0 0.0
    %3770 = vmatprep.mubr.f32.mxu0 0.0
    %3771 = vmatmul.mubr.f32.gmra.mrb[0].mxu0 %v3701
    %v3772 = vpop.f32.mrb[0].mxu0
    %v3773 = vadd.f32 %v3698, %v3772
    %v3774 = vpop.f32.mrb[0].mxu0
    %3775 = vmatprep.mubr.f32.mxu0 0.0
    %3776 = vmatmul.mubr.f32.gmra.mrb[0].mxu0 %v3704
    %v3777 = vpop.f32.mrb[0].mxu0
    %v3778 = vadd.f32 %v3698, %v3777
    %v3779 = vpop.f32.mrb[0].mxu0
    %3780 = vdwg.mxu0
    %v3781 = vadd.f32 %v3773, %v2039
    %v3782 = vadd.f32 %v3778, %v2040
    %v3783 = vsel %vm280, %v3781, 0.0
    %3784 = vadd.xlane.f32.xlu0 %v3783
    %v3785 = vpop.xlane.xlu0 %3784
    %v3786 = vsel %vm280, %v3782, 0.0
    %3787 = vadd.xlane.f32.xlu0 %v3786
    %v3788 = vpop.xlane.xlu0 %3787
    %v3789 = vmul.f32 %v3785, %v2004
    %v3790 = vmul.f32 %v3788, %v2004
    %v3791 = vsub.f32 %v3781, %v3789
    %v3792 = vsub.f32 %v3782, %v3790
    %v3793 = vmul.f32 %v3791, %v3791
    %v3794 = vmul.f32 %v3792, %v3792
    %v3795 = vsel %vm280, %v3793, 0.0
    %3796 = vadd.xlane.f32.xlu0 %v3795
    %v3797 = vpop.xlane.xlu0 %3796
    %v3798 = vsel %vm280, %v3794, 0.0
    %3799 = vadd.xlane.f32.xlu0 %v3798
    %v3800 = vpop.xlane.xlu0 %3799
    %v3801 = vmul.f32 %v3797, %v2004
    %v3802 = vmul.f32 %v3800, %v2004
    %v3803 = vadd.f32 %v3801, 1e-05
    %v3804 = vadd.f32 %v3802, 1e-05
    %v3805 = vrsqrt.pop %v3803
    %v3806 = vrsqrt.pop %v3804
    %v3807 = vmul.f32 %v3791, %v3805
    %v3808 = vmul.f32 %v3792, %v3806
    %v3810 = vlaneseq
    %v3811 = vshrl.u32 %v3810, 7
    %v3812 = vsub.s32 0, %v3811
    %v3813 = vrot.slane %v2061, %v3812
    %v3815 = vmul.f32 %v3807, %v3813
    %v3816 = vmul.f32 %v3808, %v3813
    %v3818 = vlaneseq
    %v3819 = vshrl.u32 %v3818, 7
    %v3820 = vsub.s32 0, %v3819
    %v3821 = vrot.slane %v2062, %v3820
    %v3823 = vadd.f32 %v3815, %v3821
    %v3824 = vadd.f32 %v3816, %v3821
    %v3825 = vld [vmem:[#allocation15] sm:$0xff]
    %v3826 = vld [vmem:[#allocation15 + $0x8] sm:$0xff]
    %v3827 = vld [vmem:[#allocation15 + $0x10] sm:$0xff]
    %v3828 = vld [vmem:[#allocation15 + $0x18] sm:$0xff]
    %v3829 = vld [vmem:[%s53] sm:$0x1]
    %v3830 = vld [vmem:[%s55] sm:$0xff]
    %v3831 = vld [vmem:[%s55 + $0x8] sm:$0xff]
    %v3832 = vld [vmem:[%s55 + $0x10] sm:$0xff]
    %v3833 = vld [vmem:[%s55 + $0x18] sm:$0xff]
    %v3834 = vld [vmem:[%s55 + $0x20] sm:$0xff]
    %v3835 = vld [vmem:[%s55 + $0x28] sm:$0xff]
    %v3836 = vld [vmem:[%s55 + $0x30] sm:$0xff]
    %v3837 = vld [vmem:[%s55 + $0x38] sm:$0xff]
    %v3838 = vld [vmem:[%s57] sm:$0x1]
    %v3839 = vld [vmem:[%s59] sm:$0x1]
    %v3840 = vld [vmem:[%s61] sm:$0x1]
    %v3842 = vlaneseq
    %v3843 = vshrl.u32 %v3842, 7
    %v3844 = vsub.s32 0, %v3843
    %v3845 = vrot.slane %v3829, %v3844
    %v3848 = vsel %vm280, %v3823, 0
    %v3851 = vsel %vm280, %v3824, 0
    %3853 = vmatprep.subr.mxu0 0.0
    %3854 = vmatpush1.msra.mxu0 %v3825
    %3855 = vmatprep.subr.mxu0 0.0
    %3856 = vmatpush1.msra.mxu0 %v3826
    %3857 = vmatprep.subr.mxu0 0.0
    %3858 = vmatpush1.msra.mxu0 %v3827
    %3859 = vmatprep.subr.mxu0 0.0
    %3860 = vmatpush1.msra.mxu0 %v3828
    %3861 = vmatprep.subr.mxu0 0.0
    %3862 = vmatpush1.msra.mxu0 0.0
    %3863 = vmatprep.subr.mxu0 0.0
    %3864 = vmatpush1.msra.mxu0 0.0
    %3865 = vmatprep.subr.mxu0 0.0
    %3866 = vmatpush1.msra.mxu0 0.0
    %3867 = vmatprep.subr.mxu0 0.0
    %3868 = vmatpush1.msra.mxu0 0.0
    %3869 = vmatprep.subr.mxu0 0.0
    %3870 = vmatpush1.msra.mxu0 0.0
    %3871 = vmatprep.subr.mxu0 0.0
    %3872 = vmatpush1.msra.mxu0 0.0
    %3873 = vmatprep.subr.mxu0 0.0
    %3874 = vmatpush1.msra.mxu0 0.0
    %3875 = vmatprep.subr.mxu0 0.0
    %3876 = vmatpush1.msra.mxu0 0.0
    %3877 = vmatprep.subr.mxu0 0.0
    %3878 = vmatpush1.msra.mxu0 0.0
    %3879 = vmatprep.subr.mxu0 0.0
    %3880 = vmatpush1.msra.mxu0 0.0
    %3881 = vmatprep.subr.mxu0 0.0
    %3882 = vmatpush1.msra.mxu0 0.0
    %3883 = vmatprep.subr.mxu0 0.0
    %3884 = vmatpush1.msra.mxu0 0.0
    %3885 = vmatprep.subr.mxu0 0.0
    %3886 = vmatpush1.msra.mxu0 0.0
    %3887 = vmatprep.subr.mxu0 0.0
    %3888 = vmatpush1.msra.mxu0 0.0
    %3889 = vmatprep.subr.mxu0 0.0
    %3890 = vmatpush1.msra.mxu0 0.0
    %3891 = vmatprep.subr.mxu0 0.0
    %3892 = vmatpush1.msra.mxu0 0.0
    %3893 = vmatprep.subr.mxu0 0.0
    %3894 = vmatpush1.msra.mxu0 0.0
    %3895 = vmatprep.subr.mxu0 0.0
    %3896 = vmatpush1.msra.mxu0 0.0
    %3897 = vmatprep.subr.mxu0 0.0
    %3898 = vmatpush1.msra.mxu0 0.0
    %3899 = vmatprep.subr.mxu0 0.0
    %3900 = vmatpush1.msra.mxu0 0.0
    %3901 = vmatprep.subr.mxu0 0.0
    %3902 = vmatpush1.msra.mxu0 0.0
    %3903 = vmatprep.subr.mxu0 0.0
    %3904 = vmatpush1.msra.mxu0 0.0
    %3905 = vmatprep.subr.mxu0 0.0
    %3906 = vmatpush1.msra.mxu0 0.0
    %3907 = vmatprep.subr.mxu0 0.0
    %3908 = vmatpush1.msra.mxu0 0.0
    %3909 = vmatprep.subr.mxu0 0.0
    %3910 = vmatpush1.msra.mxu0 0.0
    %3911 = vmatprep.subr.mxu0 0.0
    %3912 = vmatpush1.msra.mxu0 0.0
    %3913 = vmatprep.subr.mxu0 0.0
    %3914 = vmatpush1.msra.mxu0 0.0
    %3915 = vmatprep.subr.mxu0 0.0
    %3916 = vmatpush1.msra.mxu0 0.0
    %3917 = vmatprep.mubr.f32.mxu0 0.0
    %3918 = vmatmul.mubr.f32.gmra.mrb[0].mxu0 %v3848
    %v3919 = vpop.f32.mrb[0].mxu0
    %v3920 = vadd.f32 %v3845, %v3919
    %v3921 = vpop.f32.mrb[0].mxu0
    %3922 = vmatprep.mubr.f32.mxu0 0.0
    %3923 = vmatmul.mubr.f32.gmra.mrb[0].mxu0 %v3851
    %v3924 = vpop.f32.mrb[0].mxu0
    %v3925 = vadd.f32 %v3845, %v3924
    %v3926 = vpop.f32.mrb[0].mxu0
    %3927 = vdwg.mxu0
    %v3928 = vmax.f32 %v3920, 0.0
    %v3929 = vmax.f32 %v3925, 0.0
    %v3931 = vlaneseq
    %v3932 = vshrl.u32 %v3931, 7
    %v3933 = vsub.s32 0, %v3932
    %v3934 = vrot.slane %v3838, %v3933
    %vm3936 = vcmask 523264
    %v3938 = vsel %vm3936, %v3928, 0
    %v3941 = vsel %vm3936, %v3929, 0
    %3943 = vmatprep.subr.mxu0 0.0
    %3944 = vmatpush1.msra.mxu0 %v3830
    %3945 = vmatprep.subr.mxu0 0.0
    %3946 = vmatpush1.msra.mxu0 %v3831
    %3947 = vmatprep.subr.mxu0 0.0
    %3948 = vmatpush1.msra.mxu0 %v3832
    %3949 = vmatprep.subr.mxu0 0.0
    %3950 = vmatpush1.msra.mxu0 %v3833
    %3951 = vmatprep.subr.mxu0 0.0
    %3952 = vmatpush1.msra.mxu0 %v3834
    %3953 = vmatprep.subr.mxu0 0.0
    %3954 = vmatpush1.msra.mxu0 %v3835
    %3955 = vmatprep.subr.mxu0 0.0
    %3956 = vmatpush1.msra.mxu0 %v3836
    %3957 = vmatprep.subr.mxu0 0.0
    %3958 = vmatpush1.msra.mxu0 %v3837
    %3959 = vmatprep.subr.mxu0 0.0
    %3960 = vmatpush1.msra.mxu0 0.0
    %3961 = vmatprep.subr.mxu0 0.0
    %3962 = vmatpush1.msra.mxu0 0.0
    %3963 = vmatprep.subr.mxu0 0.0
    %3964 = vmatpush1.msra.mxu0 0.0
    %3965 = vmatprep.subr.mxu0 0.0
    %3966 = vmatpush1.msra.mxu0 0.0
    %3967 = vmatprep.subr.mxu0 0.0
    %3968 = vmatpush1.msra.mxu0 0.0
    %3969 = vmatprep.subr.mxu0 0.0
    %3970 = vmatpush1.msra.mxu0 0.0
    %3971 = vmatprep.subr.mxu0 0.0
    %3972 = vmatpush1.msra.mxu0 0.0
    %3973 = vmatprep.subr.mxu0 0.0
    %3974 = vmatpush1.msra.mxu0 0.0
    %3975 = vmatprep.subr.mxu0 0.0
    %3976 = vmatpush1.msra.mxu0 0.0
    %3977 = vmatprep.subr.mxu0 0.0
    %3978 = vmatpush1.msra.mxu0 0.0
    %3979 = vmatprep.subr.mxu0 0.0
    %3980 = vmatpush1.msra.mxu0 0.0
    %3981 = vmatprep.subr.mxu0 0.0
    %3982 = vmatpush1.msra.mxu0 0.0
    %3983 = vmatprep.subr.mxu0 0.0
    %3984 = vmatpush1.msra.mxu0 0.0
    %3985 = vmatprep.subr.mxu0 0.0
    %3986 = vmatpush1.msra.mxu0 0.0
    %3987 = vmatprep.subr.mxu0 0.0
    %3988 = vmatpush1.msra.mxu0 0.0
    %3989 = vmatprep.subr.mxu0 0.0
    %3990 = vmatpush1.msra.mxu0 0.0
    %3991 = vmatprep.subr.mxu0 0.0
    %3992 = vmatpush1.msra.mxu0 0.0
    %3993 = vmatprep.subr.mxu0 0.0
    %3994 = vmatpush1.msra.mxu0 0.0
    %3995 = vmatprep.subr.mxu0 0.0
    %3996 = vmatpush1.msra.mxu0 0.0
    %3997 = vmatprep.subr.mxu0 0.0
    %3998 = vmatpush1.msra.mxu0 0.0
    %3999 = vmatprep.subr.mxu0 0.0
    %4000 = vmatpush1.msra.mxu0 0.0
    %4001 = vmatprep.subr.mxu0 0.0
    %4002 = vmatpush1.msra.mxu0 0.0
    %4003 = vmatprep.subr.mxu0 0.0
    %4004 = vmatpush1.msra.mxu0 0.0
    %4005 = vmatprep.subr.mxu0 0.0
    %4006 = vmatpush1.msra.mxu0 0.0
    %4007 = vmatprep.mubr.f32.mxu0 0.0
    %4008 = vmatmul.mubr.f32.gmra.mrb[0].mxu0 %v3938
    %v4009 = vpop.f32.mrb[0].mxu0
    %v4010 = vadd.f32 %v3934, %v4009
    %v4011 = vpop.f32.mrb[0].mxu0
    %4012 = vmatprep.mubr.f32.mxu0 0.0
    %4013 = vmatmul.mubr.f32.gmra.mrb[0].mxu0 %v3941
    %v4014 = vpop.f32.mrb[0].mxu0
    %v4015 = vadd.f32 %v3934, %v4014
    %v4016 = vpop.f32.mrb[0].mxu0
    %4017 = vdwg.mxu0
    %v4018 = vadd.f32 %v4010, %v3823
    %v4019 = vadd.f32 %v4015, %v3824
    %v4020 = vsel %vm280, %v4018, 0.0
    %4021 = vadd.xlane.f32.xlu0 %v4020
    %v4022 = vpop.xlane.xlu0 %4021
    %v4023 = vsel %vm280, %v4019, 0.0
    %4024 = vadd.xlane.f32.xlu0 %v4023
    %v4025 = vpop.xlane.xlu0 %4024
    %v4026 = vmul.f32 %v4022, %v2004
    %v4027 = vmul.f32 %v4025, %v2004
    %v4028 = vsub.f32 %v4018, %v4026
    %v4029 = vsub.f32 %v4019, %v4027
    %v4030 = vmul.f32 %v4028, %v4028
    %v4031 = vmul.f32 %v4029, %v4029
    %v4032 = vsel %vm280, %v4030, 0.0
    %4033 = vadd.xlane.f32.xlu0 %v4032
    %v4034 = vpop.xlane.xlu0 %4033
    %v4035 = vsel %vm280, %v4031, 0.0
    %4036 = vadd.xlane.f32.xlu0 %v4035
    %v4037 = vpop.xlane.xlu0 %4036
    %v4038 = vmul.f32 %v4034, %v2004
    %v4039 = vmul.f32 %v4037, %v2004
    %v4040 = vadd.f32 %v4038, 1e-05
    %v4041 = vadd.f32 %v4039, 1e-05
    %v4042 = vrsqrt.pop %v4040
    %v4043 = vrsqrt.pop %v4041
    %v4044 = vmul.f32 %v4028, %v4042
    %v4045 = vmul.f32 %v4029, %v4043
    %v4047 = vlaneseq
    %v4048 = vshrl.u32 %v4047, 7
    %v4049 = vsub.s32 0, %v4048
    %v4050 = vrot.slane %v3839, %v4049
    %v4052 = vmul.f32 %v4044, %v4050
    %v4053 = vmul.f32 %v4045, %v4050
    %v4055 = vlaneseq
    %v4056 = vshrl.u32 %v4055, 7
    %v4057 = vsub.s32 0, %v4056
    %v4058 = vrot.slane %v3840, %v4057
    %v4060 = vadd.f32 %v4052, %v4058
    %v4061 = vadd.f32 %v4053, %v4058
    %s4062 = scalar_lea.vmem %s11, 32
    %v4063 = vld [vmem:[%s4062] sm:$0xff]
    %v4064 = vld [vmem:[%s4062 + $0x8] sm:$0xff]
    %v4065 = vld [vmem:[%s4062 + $0x10] sm:$0xff]
    %v4066 = vld [vmem:[%s4062 + $0x18] sm:$0xff]
    %s4067 = scalar_lea.vmem %s13, 32
    %v4068 = vld [vmem:[%s4067] sm:$0xff]
    %v4069 = vld [vmem:[%s4067 + $0x8] sm:$0xff]
    %v4070 = vld [vmem:[%s4067 + $0x10] sm:$0xff]
    %v4071 = vld [vmem:[%s4067 + $0x18] sm:$0xff]
    %s4072 = scalar_lea.vmem %s15, 32
    %v4073 = vld [vmem:[%s4072] sm:$0xff]
    %v4074 = vld [vmem:[%s4072 + $0x8] sm:$0xff]
    %v4075 = vld [vmem:[%s4072 + $0x10] sm:$0xff]
    %v4076 = vld [vmem:[%s4072 + $0x18] sm:$0xff]
    %s4077 = scalar_lea.vmem %s17, 1
    %v4078 = vld [vmem:[%s4077] sm:$0x1]
    %s4079 = scalar_lea.vmem %s19, 1
    %v4080 = vld [vmem:[%s4079] sm:$0x1]
    %s4081 = scalar_lea.vmem %s21, 1
    %v4082 = vld [vmem:[%s4081] sm:$0x1]
    %s4083 = scalar_lea.vmem %s23, 32
    %v4084 = vld [vmem:[%s4083] sm:$0xff]
    %v4085 = vld [vmem:[%s4083 + $0x8] sm:$0xff]
    %v4086 = vld [vmem:[%s4083 + $0x10] sm:$0xff]
    %v4087 = vld [vmem:[%s4083 + $0x18] sm:$0xff]
    %s4088 = scalar_lea.vmem %s25, 1
    %v4089 = vld [vmem:[%s4088] sm:$0x1]
    %s4090 = scalar_lea.vmem %s27, 1
    %v4091 = vld [vmem:[%s4090] sm:$0x1]
    %s4092 = scalar_lea.vmem %s29, 1
    %v4093 = vld [vmem:[%s4092] sm:$0x1]
    %v4095 = vlaneseq
    %v4096 = vshrl.u32 %v4095, 7
    %v4097 = vsub.s32 0, %v4096
    %v4098 = vrot.slane %v4078, %v4097
    %v4101 = vsel %vm280, %v4060, 0
    %v4104 = vsel %vm280, %v4061, 0
    %4106 = vmatprep.subr.mxu0 0.0
    %4107 = vmatpush1.msra.mxu0 %v4063
    %4108 = vmatprep.subr.mxu0 0.0
    %4109 = vmatpush1.msra.mxu0 %v4064
    %4110 = vmatprep.subr.mxu0 0.0
    %4111 = vmatpush1.msra.mxu0 %v4065
    %4112 = vmatprep.subr.mxu0 0.0
    %4113 = vmatpush1.msra.mxu0 %v4066
    %4114 = vmatprep.subr.mxu0 0.0
    %4115 = vmatpush1.msra.mxu0 0.0
    %4116 = vmatprep.subr.mxu0 0.0
    %4117 = vmatpush1.msra.mxu0 0.0
    %4118 = vmatprep.subr.mxu0 0.0
    %4119 = vmatpush1.msra.mxu0 0.0
    %4120 = vmatprep.subr.mxu0 0.0
    %4121 = vmatpush1.msra.mxu0 0.0
    %4122 = vmatprep.subr.mxu0 0.0
    %4123 = vmatpush1.msra.mxu0 0.0
    %4124 = vmatprep.subr.mxu0 0.0
    %4125 = vmatpush1.msra.mxu0 0.0
    %4126 = vmatprep.subr.mxu0 0.0
    %4127 = vmatpush1.msra.mxu0 0.0
    %4128 = vmatprep.subr.mxu0 0.0
    %4129 = vmatpush1.msra.mxu0 0.0
    %4130 = vmatprep.subr.mxu0 0.0
    %4131 = vmatpush1.msra.mxu0 0.0
    %4132 = vmatprep.subr.mxu0 0.0
    %4133 = vmatpush1.msra.mxu0 0.0
    %4134 = vmatprep.subr.mxu0 0.0
    %4135 = vmatpush1.msra.mxu0 0.0
    %4136 = vmatprep.subr.mxu0 0.0
    %4137 = vmatpush1.msra.mxu0 0.0
    %4138 = vmatprep.subr.mxu0 0.0
    %4139 = vmatpush1.msra.mxu0 0.0
    %4140 = vmatprep.subr.mxu0 0.0
    %4141 = vmatpush1.msra.mxu0 0.0
    %4142 = vmatprep.subr.mxu0 0.0
    %4143 = vmatpush1.msra.mxu0 0.0
    %4144 = vmatprep.subr.mxu0 0.0
    %4145 = vmatpush1.msra.mxu0 0.0
    %4146 = vmatprep.subr.mxu0 0.0
    %4147 = vmatpush1.msra.mxu0 0.0
    %4148 = vmatprep.subr.mxu0 0.0
    %4149 = vmatpush1.msra.mxu0 0.0
    %4150 = vmatprep.subr.mxu0 0.0
    %4151 = vmatpush1.msra.mxu0 0.0
    %4152 = vmatprep.subr.mxu0 0.0
    %4153 = vmatpush1.msra.mxu0 0.0
    %4154 = vmatprep.subr.mxu0 0.0
    %4155 = vmatpush1.msra.mxu0 0.0
    %4156 = vmatprep.subr.mxu0 0.0
    %4157 = vmatpush1.msra.mxu0 0.0
    %4158 = vmatprep.subr.mxu0 0.0
    %4159 = vmatpush1.msra.mxu0 0.0
    %4160 = vmatprep.subr.mxu0 0.0
    %4161 = vmatpush1.msra.mxu0 0.0
    %4162 = vmatprep.subr.mxu0 0.0
    %4163 = vmatpush1.msra.mxu0 0.0
    %4164 = vmatprep.subr.mxu0 0.0
    %4165 = vmatpush1.msra.mxu0 0.0
    %4166 = vmatprep.subr.mxu0 0.0
    %4167 = vmatpush1.msra.mxu0 0.0
    %4168 = vmatprep.subr.mxu0 0.0
    %4169 = vmatpush1.msra.mxu0 0.0
    %4170 = vmatprep.mubr.f32.mxu0 0.0
    %4171 = vmatmul.mubr.f32.gmra.mrb[0].mxu0 %v4101
    %v4172 = vpop.f32.mrb[0].mxu0
    %v4173 = vadd.f32 %v4098, %v4172
    %v4174 = vpop.f32.mrb[0].mxu0
    %4175 = vmatprep.mubr.f32.mxu0 0.0
    %4176 = vmatmul.mubr.f32.gmra.mrb[0].mxu0 %v4104
    %v4177 = vpop.f32.mrb[0].mxu0
    %v4178 = vadd.f32 %v4098, %v4177
    %v4179 = vpop.f32.mrb[0].mxu0
    %4180 = vdwg.mxu0
    %v4182 = vlaneseq
    %v4183 = vshrl.u32 %v4182, 7
    %v4184 = vsub.s32 0, %v4183
    %v4185 = vrot.slane %v4080, %v4184
    %4187 = vmatprep.subr.mxu0 0.0
    %4188 = vmatpush1.msra.mxu0 %v4068
    %4189 = vmatprep.subr.mxu0 0.0
    %4190 = vmatpush1.msra.mxu0 %v4069
    %4191 = vmatprep.subr.mxu0 0.0
    %4192 = vmatpush1.msra.mxu0 %v4070
    %4193 = vmatprep.subr.mxu0 0.0
    %4194 = vmatpush1.msra.mxu0 %v4071
    %4195 = vmatprep.subr.mxu0 0.0
    %4196 = vmatpush1.msra.mxu0 0.0
    %4197 = vmatprep.subr.mxu0 0.0
    %4198 = vmatpush1.msra.mxu0 0.0
    %4199 = vmatprep.subr.mxu0 0.0
    %4200 = vmatpush1.msra.mxu0 0.0
    %4201 = vmatprep.subr.mxu0 0.0
    %4202 = vmatpush1.msra.mxu0 0.0
    %4203 = vmatprep.subr.mxu0 0.0
    %4204 = vmatpush1.msra.mxu0 0.0
    %4205 = vmatprep.subr.mxu0 0.0
    %4206 = vmatpush1.msra.mxu0 0.0
    %4207 = vmatprep.subr.mxu0 0.0
    %4208 = vmatpush1.msra.mxu0 0.0
    %4209 = vmatprep.subr.mxu0 0.0
    %4210 = vmatpush1.msra.mxu0 0.0
    %4211 = vmatprep.subr.mxu0 0.0
    %4212 = vmatpush1.msra.mxu0 0.0
    %4213 = vmatprep.subr.mxu0 0.0
    %4214 = vmatpush1.msra.mxu0 0.0
    %4215 = vmatprep.subr.mxu0 0.0
    %4216 = vmatpush1.msra.mxu0 0.0
    %4217 = vmatprep.subr.mxu0 0.0
    %4218 = vmatpush1.msra.mxu0 0.0
    %4219 = vmatprep.subr.mxu0 0.0
    %4220 = vmatpush1.msra.mxu0 0.0
    %4221 = vmatprep.subr.mxu0 0.0
    %4222 = vmatpush1.msra.mxu0 0.0
    %4223 = vmatprep.subr.mxu0 0.0
    %4224 = vmatpush1.msra.mxu0 0.0
    %4225 = vmatprep.subr.mxu0 0.0
    %4226 = vmatpush1.msra.mxu0 0.0
    %4227 = vmatprep.subr.mxu0 0.0
    %4228 = vmatpush1.msra.mxu0 0.0
    %4229 = vmatprep.subr.mxu0 0.0
    %4230 = vmatpush1.msra.mxu0 0.0
    %4231 = vmatprep.subr.mxu0 0.0
    %4232 = vmatpush1.msra.mxu0 0.0
    %4233 = vmatprep.subr.mxu0 0.0
    %4234 = vmatpush1.msra.mxu0 0.0
    %4235 = vmatprep.subr.mxu0 0.0
    %4236 = vmatpush1.msra.mxu0 0.0
    %4237 = vmatprep.subr.mxu0 0.0
    %4238 = vmatpush1.msra.mxu0 0.0
    %4239 = vmatprep.subr.mxu0 0.0
    %4240 = vmatpush1.msra.mxu0 0.0
    %4241 = vmatprep.subr.mxu0 0.0
    %4242 = vmatpush1.msra.mxu0 0.0
    %4243 = vmatprep.subr.mxu0 0.0
    %4244 = vmatpush1.msra.mxu0 0.0
    %4245 = vmatprep.subr.mxu0 0.0
    %4246 = vmatpush1.msra.mxu0 0.0
    %4247 = vmatprep.subr.mxu0 0.0
    %4248 = vmatpush1.msra.mxu0 0.0
    %4249 = vmatprep.subr.mxu0 0.0
    %4250 = vmatpush1.msra.mxu0 0.0
    %4251 = vmatprep.mubr.f32.mxu0 0.0
    %4252 = vmatmul.mubr.f32.gmra.mrb[0].mxu0 %v4101
    %v4253 = vpop.f32.mrb[0].mxu0
    %v4254 = vadd.f32 %v4185, %v4253
    %v4255 = vpop.f32.mrb[0].mxu0
    %4256 = vmatprep.mubr.f32.mxu0 0.0
    %4257 = vmatmul.mubr.f32.gmra.mrb[0].mxu0 %v4104
    %v4258 = vpop.f32.mrb[0].mxu0
    %v4259 = vadd.f32 %v4185, %v4258
    %v4260 = vpop.f32.mrb[0].mxu0
    %4261 = vdwg.mxu0
    %v4263 = vlaneseq
    %v4264 = vshrl.u32 %v4263, 7
    %v4265 = vsub.s32 0, %v4264
    %v4266 = vrot.slane %v4082, %v4265
    %4268 = vmatprep.subr.mxu0 0.0
    %4269 = vmatpush1.msra.mxu0 %v4073
    %4270 = vmatprep.subr.mxu0 0.0
    %4271 = vmatpush1.msra.mxu0 %v4074
    %4272 = vmatprep.subr.mxu0 0.0
    %4273 = vmatpush1.msra.mxu0 %v4075
    %4274 = vmatprep.subr.mxu0 0.0
    %4275 = vmatpush1.msra.mxu0 %v4076
    %4276 = vmatprep.subr.mxu0 0.0
    %4277 = vmatpush1.msra.mxu0 0.0
    %4278 = vmatprep.subr.mxu0 0.0
    %4279 = vmatpush1.msra.mxu0 0.0
    %4280 = vmatprep.subr.mxu0 0.0
    %4281 = vmatpush1.msra.mxu0 0.0
    %4282 = vmatprep.subr.mxu0 0.0
    %4283 = vmatpush1.msra.mxu0 0.0
    %4284 = vmatprep.subr.mxu0 0.0
    %4285 = vmatpush1.msra.mxu0 0.0
    %4286 = vmatprep.subr.mxu0 0.0
    %4287 = vmatpush1.msra.mxu0 0.0
    %4288 = vmatprep.subr.mxu0 0.0
    %4289 = vmatpush1.msra.mxu0 0.0
    %4290 = vmatprep.subr.mxu0 0.0
    %4291 = vmatpush1.msra.mxu0 0.0
    %4292 = vmatprep.subr.mxu0 0.0
    %4293 = vmatpush1.msra.mxu0 0.0
    %4294 = vmatprep.subr.mxu0 0.0
    %4295 = vmatpush1.msra.mxu0 0.0
    %4296 = vmatprep.subr.mxu0 0.0
    %4297 = vmatpush1.msra.mxu0 0.0
    %4298 = vmatprep.subr.mxu0 0.0
    %4299 = vmatpush1.msra.mxu0 0.0
    %4300 = vmatprep.subr.mxu0 0.0
    %4301 = vmatpush1.msra.mxu0 0.0
    %4302 = vmatprep.subr.mxu0 0.0
    %4303 = vmatpush1.msra.mxu0 0.0
    %4304 = vmatprep.subr.mxu0 0.0
    %4305 = vmatpush1.msra.mxu0 0.0
    %4306 = vmatprep.subr.mxu0 0.0
    %4307 = vmatpush1.msra.mxu0 0.0
    %4308 = vmatprep.subr.mxu0 0.0
    %4309 = vmatpush1.msra.mxu0 0.0
    %4310 = vmatprep.subr.mxu0 0.0
    %4311 = vmatpush1.msra.mxu0 0.0
    %4312 = vmatprep.subr.mxu0 0.0
    %4313 = vmatpush1.msra.mxu0 0.0
    %4314 = vmatprep.subr.mxu0 0.0
    %4315 = vmatpush1.msra.mxu0 0.0
    %4316 = vmatprep.subr.mxu0 0.0
    %4317 = vmatpush1.msra.mxu0 0.0
    %4318 = vmatprep.subr.mxu0 0.0
    %4319 = vmatpush1.msra.mxu0 0.0
    %4320 = vmatprep.subr.mxu0 0.0
    %4321 = vmatpush1.msra.mxu0 0.0
    %4322 = vmatprep.subr.mxu0 0.0
    %4323 = vmatpush1.msra.mxu0 0.0
    %4324 = vmatprep.subr.mxu0 0.0
    %4325 = vmatpush1.msra.mxu0 0.0
    %4326 = vmatprep.subr.mxu0 0.0
    %4327 = vmatpush1.msra.mxu0 0.0
    %4328 = vmatprep.subr.mxu0 0.0
    %4329 = vmatpush1.msra.mxu0 0.0
    %4330 = vmatprep.subr.mxu0 0.0
    %4331 = vmatpush1.msra.mxu0 0.0
    %4332 = vmatprep.mubr.f32.mxu0 0.0
    %4333 = vmatmul.mubr.f32.gmra.mrb[0].mxu0 %v4101
    %v4334 = vpop.f32.mrb[0].mxu0
    %v4335 = vadd.f32 %v4266, %v4334
    %v4336 = vpop.f32.mrb[0].mxu0
    %4337 = vmatprep.mubr.f32.mxu0 0.0
    %4338 = vmatmul.mubr.f32.gmra.mrb[0].mxu0 %v4104
    %v4339 = vpop.f32.mrb[0].mxu0
    %v4340 = vadd.f32 %v4266, %v4339
    %v4341 = vpop.f32.mrb[0].mxu0
    %4342 = vdwg.mxu0
    %v4344 = vsel %vm537, %v4173, 0
    %v4347 = vsel %vm537, %v4254, 0
    %4349 = vmatprep.subr.mxu0 0.0
    %4350 = vmatpush1.xpose.msra.mxu0 %v4347
    %4351 = vmatprep.subr.mxu0 0.0
    %4352 = vmatpush1.xpose.msra.mxu0 0.0
    %4353 = vmatprep.subr.mxu0 0.0
    %4354 = vmatpush1.xpose.msra.mxu0 0.0
    %4355 = vmatprep.subr.mxu0 0.0
    %4356 = vmatpush1.xpose.msra.mxu0 0.0
    %4357 = vmatprep.subr.mxu0 0.0
    %4358 = vmatpush1.xpose.msra.mxu0 0.0
    %4359 = vmatprep.subr.mxu0 0.0
    %4360 = vmatpush1.xpose.msra.mxu0 0.0
    %4361 = vmatprep.subr.mxu0 0.0
    %4362 = vmatpush1.xpose.msra.mxu0 0.0
    %4363 = vmatprep.subr.mxu0 0.0
    %4364 = vmatpush1.xpose.msra.mxu0 0.0
    %4365 = vmatprep.subr.mxu0 0.0
    %4366 = vmatpush1.xpose.msra.mxu0 0.0
    %4367 = vmatprep.subr.mxu0 0.0
    %4368 = vmatpush1.xpose.msra.mxu0 0.0
    %4369 = vmatprep.subr.mxu0 0.0
    %4370 = vmatpush1.xpose.msra.mxu0 0.0
    %4371 = vmatprep.subr.mxu0 0.0
    %4372 = vmatpush1.xpose.msra.mxu0 0.0
    %4373 = vmatprep.subr.mxu0 0.0
    %4374 = vmatpush1.xpose.msra.mxu0 0.0
    %4375 = vmatprep.subr.mxu0 0.0
    %4376 = vmatpush1.xpose.msra.mxu0 0.0
    %4377 = vmatprep.subr.mxu0 0.0
    %4378 = vmatpush1.xpose.msra.mxu0 0.0
    %4379 = vmatprep.subr.mxu0 0.0
    %4380 = vmatpush1.xpose.msra.mxu0 0.0
    %4381 = vmatprep.subr.mxu0 0.0
    %4382 = vmatpush1.xpose.msra.mxu0 0.0
    %4383 = vmatprep.subr.mxu0 0.0
    %4384 = vmatpush1.xpose.msra.mxu0 0.0
    %4385 = vmatprep.subr.mxu0 0.0
    %4386 = vmatpush1.xpose.msra.mxu0 0.0
    %4387 = vmatprep.subr.mxu0 0.0
    %4388 = vmatpush1.xpose.msra.mxu0 0.0
    %4389 = vmatprep.subr.mxu0 0.0
    %4390 = vmatpush1.xpose.msra.mxu0 0.0
    %4391 = vmatprep.subr.mxu0 0.0
    %4392 = vmatpush1.xpose.msra.mxu0 0.0
    %4393 = vmatprep.subr.mxu0 0.0
    %4394 = vmatpush1.xpose.msra.mxu0 0.0
    %4395 = vmatprep.subr.mxu0 0.0
    %4396 = vmatpush1.xpose.msra.mxu0 0.0
    %4397 = vmatprep.subr.mxu0 0.0
    %4398 = vmatpush1.xpose.msra.mxu0 0.0
    %4399 = vmatprep.subr.mxu0 0.0
    %4400 = vmatpush1.xpose.msra.mxu0 0.0
    %4401 = vmatprep.subr.mxu0 0.0
    %4402 = vmatpush1.xpose.msra.mxu0 0.0
    %4403 = vmatprep.subr.mxu0 0.0
    %4404 = vmatpush1.xpose.msra.mxu0 0.0
    %4405 = vmatprep.subr.mxu0 0.0
    %4406 = vmatpush1.xpose.msra.mxu0 0.0
    %4407 = vmatprep.subr.mxu0 0.0
    %4408 = vmatpush1.xpose.msra.mxu0 0.0
    %4409 = vmatprep.subr.mxu0 0.0
    %4410 = vmatpush1.xpose.msra.mxu0 0.0
    %4411 = vmatprep.subr.mxu0 0.0
    %4412 = vmatpush1.xpose.msra.mxu0 0.0
    %4413 = vmatprep.mubr.f32.mxu0 0.0
    %4414 = vmatmul.mubr.f32.gmra.mrb[0].mxu0 %v4344
    %v4415 = vpop.f32.mrb[0].mxu0
    %v4416 = vadd.f32 0.0, %v4415
    %v4417 = vpop.f32.mrb[0].mxu0
    %4418 = vdwg.mxu0
    %v4419 = vmul.f32 %v4416, 0.35355338
    %v4420 = vsel %vm536, -1e+09, %v4419
    %v4421 = vsel %vm537, %v4420, -inf
    %4422 = vmax.xlane.f32.xlu0 %v4421
    %v4423 = vpop.xlane.xlu0 %4422
    %v4424 = vsub.f32 %v4420, %v4423
    %v4425 = vmul.f32 %v4424, 1.442695
    %v4426 = vpow.pop %v4425
    %v4427 = vsel %vm537, %v4426, 0.0
    %4428 = vadd.xlane.f32.xlu0 %v4427
    %v4429 = vpop.xlane.xlu0 %4428
    %v4430 = vrcp.pop %v4429
    %v4431 = vmul.f32 %v4426, %v4430
    %v4433 = vsel %vm537, %v4431, 0
    %4435 = vmatprep.subr.mxu0 0.0
    %4436 = vmatpush1.msra.mxu0 %v4335
    %4437 = vmatprep.subr.mxu0 0.0
    %4438 = vmatpush1.msra.mxu0 0.0
    %4439 = vmatprep.subr.mxu0 0.0
    %4440 = vmatpush1.msra.mxu0 0.0
    %4441 = vmatprep.subr.mxu0 0.0
    %4442 = vmatpush1.msra.mxu0 0.0
    %4443 = vmatprep.subr.mxu0 0.0
    %4444 = vmatpush1.msra.mxu0 0.0
    %4445 = vmatprep.subr.mxu0 0.0
    %4446 = vmatpush1.msra.mxu0 0.0
    %4447 = vmatprep.subr.mxu0 0.0
    %4448 = vmatpush1.msra.mxu0 0.0
    %4449 = vmatprep.subr.mxu0 0.0
    %4450 = vmatpush1.msra.mxu0 0.0
    %4451 = vmatprep.subr.mxu0 0.0
    %4452 = vmatpush1.msra.mxu0 0.0
    %4453 = vmatprep.subr.mxu0 0.0
    %4454 = vmatpush1.msra.mxu0 0.0
    %4455 = vmatprep.subr.mxu0 0.0
    %4456 = vmatpush1.msra.mxu0 0.0
    %4457 = vmatprep.subr.mxu0 0.0
    %4458 = vmatpush1.msra.mxu0 0.0
    %4459 = vmatprep.subr.mxu0 0.0
    %4460 = vmatpush1.msra.mxu0 0.0
    %4461 = vmatprep.subr.mxu0 0.0
    %4462 = vmatpush1.msra.mxu0 0.0
    %4463 = vmatprep.subr.mxu0 0.0
    %4464 = vmatpush1.msra.mxu0 0.0
    %4465 = vmatprep.subr.mxu0 0.0
    %4466 = vmatpush1.msra.mxu0 0.0
    %4467 = vmatprep.subr.mxu0 0.0
    %4468 = vmatpush1.msra.mxu0 0.0
    %4469 = vmatprep.subr.mxu0 0.0
    %4470 = vmatpush1.msra.mxu0 0.0
    %4471 = vmatprep.subr.mxu0 0.0
    %4472 = vmatpush1.msra.mxu0 0.0
    %4473 = vmatprep.subr.mxu0 0.0
    %4474 = vmatpush1.msra.mxu0 0.0
    %4475 = vmatprep.subr.mxu0 0.0
    %4476 = vmatpush1.msra.mxu0 0.0
    %4477 = vmatprep.subr.mxu0 0.0
    %4478 = vmatpush1.msra.mxu0 0.0
    %4479 = vmatprep.subr.mxu0 0.0
    %4480 = vmatpush1.msra.mxu0 0.0
    %4481 = vmatprep.subr.mxu0 0.0
    %4482 = vmatpush1.msra.mxu0 0.0
    %4483 = vmatprep.subr.mxu0 0.0
    %4484 = vmatpush1.msra.mxu0 0.0
    %4485 = vmatprep.subr.mxu0 0.0
    %4486 = vmatpush1.msra.mxu0 0.0
    %4487 = vmatprep.subr.mxu0 0.0
    %4488 = vmatpush1.msra.mxu0 0.0
    %4489 = vmatprep.subr.mxu0 0.0
    %4490 = vmatpush1.msra.mxu0 0.0
    %4491 = vmatprep.subr.mxu0 0.0
    %4492 = vmatpush1.msra.mxu0 0.0
    %4493 = vmatprep.subr.mxu0 0.0
    %4494 = vmatpush1.msra.mxu0 0.0
    %4495 = vmatprep.subr.mxu0 0.0
    %4496 = vmatpush1.msra.mxu0 0.0
    %4497 = vmatprep.subr.mxu0 0.0
    %4498 = vmatpush1.msra.mxu0 0.0
    %4499 = vmatprep.mubr.f32.mxu0 0.0
    %4500 = vmatmul.mubr.f32.gmra.mrb[0].mxu0 %v4433
    %v4501 = vpop.f32.mrb[0].mxu0
    %v4502 = vadd.f32 0.0, %v4501
    %v4503 = vpop.f32.mrb[0].mxu0
    %4504 = vdwg.mxu0
    %4505 = vst.msk [vmem:[#allocation2] sm:$0xff] %vm537, %v4502
    %4506 = vrot.lane.b32.xlu0 %v4173, 120
    %v4507 = vpop.permute.xlu0 %4506
    %4508 = vrot.lane.b32.xlu0 %v4254, 120
    %v4509 = vpop.permute.xlu0 %4508
    %v4510 = vsel %vm537, %v4507, 0
    %v4512 = vsel %vm537, %v4509, 0
    %4514 = vmatprep.subr.mxu0 0.0
    %4515 = vmatpush1.xpose.msra.mxu0 %v4512
    %4516 = vmatprep.subr.mxu0 0.0
    %4517 = vmatpush1.xpose.msra.mxu0 0.0
    %4518 = vmatprep.subr.mxu0 0.0
    %4519 = vmatpush1.xpose.msra.mxu0 0.0
    %4520 = vmatprep.subr.mxu0 0.0
    %4521 = vmatpush1.xpose.msra.mxu0 0.0
    %4522 = vmatprep.subr.mxu0 0.0
    %4523 = vmatpush1.xpose.msra.mxu0 0.0
    %4524 = vmatprep.subr.mxu0 0.0
    %4525 = vmatpush1.xpose.msra.mxu0 0.0
    %4526 = vmatprep.subr.mxu0 0.0
    %4527 = vmatpush1.xpose.msra.mxu0 0.0
    %4528 = vmatprep.subr.mxu0 0.0
    %4529 = vmatpush1.xpose.msra.mxu0 0.0
    %4530 = vmatprep.subr.mxu0 0.0
    %4531 = vmatpush1.xpose.msra.mxu0 0.0
    %4532 = vmatprep.subr.mxu0 0.0
    %4533 = vmatpush1.xpose.msra.mxu0 0.0
    %4534 = vmatprep.subr.mxu0 0.0
    %4535 = vmatpush1.xpose.msra.mxu0 0.0
    %4536 = vmatprep.subr.mxu0 0.0
    %4537 = vmatpush1.xpose.msra.mxu0 0.0
    %4538 = vmatprep.subr.mxu0 0.0
    %4539 = vmatpush1.xpose.msra.mxu0 0.0
    %4540 = vmatprep.subr.mxu0 0.0
    %4541 = vmatpush1.xpose.msra.mxu0 0.0
    %4542 = vmatprep.subr.mxu0 0.0
    %4543 = vmatpush1.xpose.msra.mxu0 0.0
    %4544 = vmatprep.subr.mxu0 0.0
    %4545 = vmatpush1.xpose.msra.mxu0 0.0
    %4546 = vmatprep.subr.mxu0 0.0
    %4547 = vmatpush1.xpose.msra.mxu0 0.0
    %4548 = vmatprep.subr.mxu0 0.0
    %4549 = vmatpush1.xpose.msra.mxu0 0.0
    %4550 = vmatprep.subr.mxu0 0.0
    %4551 = vmatpush1.xpose.msra.mxu0 0.0
    %4552 = vmatprep.subr.mxu0 0.0
    %4553 = vmatpush1.xpose.msra.mxu0 0.0
    %4554 = vmatprep.subr.mxu0 0.0
    %4555 = vmatpush1.xpose.msra.mxu0 0.0
    %4556 = vmatprep.subr.mxu0 0.0
    %4557 = vmatpush1.xpose.msra.mxu0 0.0
    %4558 = vmatprep.subr.mxu0 0.0
    %4559 = vmatpush1.xpose.msra.mxu0 0.0
    %4560 = vmatprep.subr.mxu0 0.0
    %4561 = vmatpush1.xpose.msra.mxu0 0.0
    %4562 = vmatprep.subr.mxu0 0.0
    %4563 = vmatpush1.xpose.msra.mxu0 0.0
    %4564 = vmatprep.subr.mxu0 0.0
    %4565 = vmatpush1.xpose.msra.mxu0 0.0
    %4566 = vmatprep.subr.mxu0 0.0
    %4567 = vmatpush1.xpose.msra.mxu0 0.0
    %4568 = vmatprep.subr.mxu0 0.0
    %4569 = vmatpush1.xpose.msra.mxu0 0.0
    %4570 = vmatprep.subr.mxu0 0.0
    %4571 = vmatpush1.xpose.msra.mxu0 0.0
    %4572 = vmatprep.subr.mxu0 0.0
    %4573 = vmatpush1.xpose.msra.mxu0 0.0
    %4574 = vmatprep.subr.mxu0 0.0
    %4575 = vmatpush1.xpose.msra.mxu0 0.0
    %4576 = vmatprep.subr.mxu0 0.0
    %4577 = vmatpush1.xpose.msra.mxu0 0.0
    %4578 = vmatprep.mubr.f32.mxu0 0.0
    %4579 = vmatmul.mubr.f32.gmra.mrb[0].mxu0 %v4510
    %v4580 = vpop.f32.mrb[0].mxu0
    %v4581 = vadd.f32 0.0, %v4580
    %v4582 = vpop.f32.mrb[0].mxu0
    %4583 = vdwg.mxu0
    %v4584 = vmul.f32 %v4581, 0.35355338
    %v4585 = vsel %vm536, -1e+09, %v4584
    %v4586 = vsel %vm537, %v4585, -inf
    %4587 = vmax.xlane.f32.xlu0 %v4586
    %v4588 = vpop.xlane.xlu0 %4587
    %v4589 = vsub.f32 %v4585, %v4588
    %v4590 = vmul.f32 %v4589, 1.442695
    %v4591 = vpow.pop %v4590
    %v4592 = vsel %vm537, %v4591, 0.0
    %4593 = vadd.xlane.f32.xlu0 %v4592
    %v4594 = vpop.xlane.xlu0 %4593
    %v4595 = vrcp.pop %v4594
    %v4596 = vmul.f32 %v4591, %v4595
    %4598 = vrot.lane.b32.xlu0 %v4335, 120
    %v4599 = vpop.permute.xlu0 %4598
    %v4602 = vsel %vm537, %v4596, 0
    %4604 = vmatprep.subr.mxu0 0.0
    %4605 = vmatpush1.msra.mxu0 %v4599
    %4606 = vmatprep.subr.mxu0 0.0
    %4607 = vmatpush1.msra.mxu0 0.0
    %4608 = vmatprep.subr.mxu0 0.0
    %4609 = vmatpush1.msra.mxu0 0.0
    %4610 = vmatprep.subr.mxu0 0.0
    %4611 = vmatpush1.msra.mxu0 0.0
    %4612 = vmatprep.subr.mxu0 0.0
    %4613 = vmatpush1.msra.mxu0 0.0
    %4614 = vmatprep.subr.mxu0 0.0
    %4615 = vmatpush1.msra.mxu0 0.0
    %4616 = vmatprep.subr.mxu0 0.0
    %4617 = vmatpush1.msra.mxu0 0.0
    %4618 = vmatprep.subr.mxu0 0.0
    %4619 = vmatpush1.msra.mxu0 0.0
    %4620 = vmatprep.subr.mxu0 0.0
    %4621 = vmatpush1.msra.mxu0 0.0
    %4622 = vmatprep.subr.mxu0 0.0
    %4623 = vmatpush1.msra.mxu0 0.0
    %4624 = vmatprep.subr.mxu0 0.0
    %4625 = vmatpush1.msra.mxu0 0.0
    %4626 = vmatprep.subr.mxu0 0.0
    %4627 = vmatpush1.msra.mxu0 0.0
    %4628 = vmatprep.subr.mxu0 0.0
    %4629 = vmatpush1.msra.mxu0 0.0
    %4630 = vmatprep.subr.mxu0 0.0
    %4631 = vmatpush1.msra.mxu0 0.0
    %4632 = vmatprep.subr.mxu0 0.0
    %4633 = vmatpush1.msra.mxu0 0.0
    %4634 = vmatprep.subr.mxu0 0.0
    %4635 = vmatpush1.msra.mxu0 0.0
    %4636 = vmatprep.subr.mxu0 0.0
    %4637 = vmatpush1.msra.mxu0 0.0
    %4638 = vmatprep.subr.mxu0 0.0
    %4639 = vmatpush1.msra.mxu0 0.0
    %4640 = vmatprep.subr.mxu0 0.0
    %4641 = vmatpush1.msra.mxu0 0.0
    %4642 = vmatprep.subr.mxu0 0.0
    %4643 = vmatpush1.msra.mxu0 0.0
    %4644 = vmatprep.subr.mxu0 0.0
    %4645 = vmatpush1.msra.mxu0 0.0
    %4646 = vmatprep.subr.mxu0 0.0
    %4647 = vmatpush1.msra.mxu0 0.0
    %4648 = vmatprep.subr.mxu0 0.0
    %4649 = vmatpush1.msra.mxu0 0.0
    %4650 = vmatprep.subr.mxu0 0.0
    %4651 = vmatpush1.msra.mxu0 0.0
    %4652 = vmatprep.subr.mxu0 0.0
    %4653 = vmatpush1.msra.mxu0 0.0
    %4654 = vmatprep.subr.mxu0 0.0
    %4655 = vmatpush1.msra.mxu0 0.0
    %4656 = vmatprep.subr.mxu0 0.0
    %4657 = vmatpush1.msra.mxu0 0.0
    %4658 = vmatprep.subr.mxu0 0.0
    %4659 = vmatpush1.msra.mxu0 0.0
    %4660 = vmatprep.subr.mxu0 0.0
    %4661 = vmatpush1.msra.mxu0 0.0
    %4662 = vmatprep.subr.mxu0 0.0
    %4663 = vmatpush1.msra.mxu0 0.0
    %4664 = vmatprep.subr.mxu0 0.0
    %4665 = vmatpush1.msra.mxu0 0.0
    %4666 = vmatprep.subr.mxu0 0.0
    %4667 = vmatpush1.msra.mxu0 0.0
    %4668 = vmatprep.mubr.f32.mxu0 0.0
    %4669 = vmatmul.mubr.f32.gmra.mrb[0].mxu0 %v4602
    %v4670 = vpop.f32.mrb[0].mxu0
    %v4671 = vadd.f32 0.0, %v4670
    %v4672 = vpop.f32.mrb[0].mxu0
    %4673 = vdwg.mxu0
    %4675 = vrot.lane.b32.xlu0 %v4671, 8
    %v4676 = vpop.permute.xlu0 %4675
    %4678 = vst.msk [vmem:[#allocation2] sm:$0xff] %vm873, %v4676
    %4679 = vrot.lane.b32.xlu0 %v4173, 112
    %v4680 = vpop.permute.xlu0 %4679
    %4681 = vrot.lane.b32.xlu0 %v4254, 112
    %v4682 = vpop.permute.xlu0 %4681
    %v4683 = vsel %vm537, %v4680, 0
    %v4685 = vsel %vm537, %v4682, 0
    %4687 = vmatprep.subr.mxu0 0.0
    %4688 = vmatpush1.xpose.msra.mxu0 %v4685
    %4689 = vmatprep.subr.mxu0 0.0
    %4690 = vmatpush1.xpose.msra.mxu0 0.0
    %4691 = vmatprep.subr.mxu0 0.0
    %4692 = vmatpush1.xpose.msra.mxu0 0.0
    %4693 = vmatprep.subr.mxu0 0.0
    %4694 = vmatpush1.xpose.msra.mxu0 0.0
    %4695 = vmatprep.subr.mxu0 0.0
    %4696 = vmatpush1.xpose.msra.mxu0 0.0
    %4697 = vmatprep.subr.mxu0 0.0
    %4698 = vmatpush1.xpose.msra.mxu0 0.0
    %4699 = vmatprep.subr.mxu0 0.0
    %4700 = vmatpush1.xpose.msra.mxu0 0.0
    %4701 = vmatprep.subr.mxu0 0.0
    %4702 = vmatpush1.xpose.msra.mxu0 0.0
    %4703 = vmatprep.subr.mxu0 0.0
    %4704 = vmatpush1.xpose.msra.mxu0 0.0
    %4705 = vmatprep.subr.mxu0 0.0
    %4706 = vmatpush1.xpose.msra.mxu0 0.0
    %4707 = vmatprep.subr.mxu0 0.0
    %4708 = vmatpush1.xpose.msra.mxu0 0.0
    %4709 = vmatprep.subr.mxu0 0.0
    %4710 = vmatpush1.xpose.msra.mxu0 0.0
    %4711 = vmatprep.subr.mxu0 0.0
    %4712 = vmatpush1.xpose.msra.mxu0 0.0
    %4713 = vmatprep.subr.mxu0 0.0
    %4714 = vmatpush1.xpose.msra.mxu0 0.0
    %4715 = vmatprep.subr.mxu0 0.0
    %4716 = vmatpush1.xpose.msra.mxu0 0.0
    %4717 = vmatprep.subr.mxu0 0.0
    %4718 = vmatpush1.xpose.msra.mxu0 0.0
    %4719 = vmatprep.subr.mxu0 0.0
    %4720 = vmatpush1.xpose.msra.mxu0 0.0
    %4721 = vmatprep.subr.mxu0 0.0
    %4722 = vmatpush1.xpose.msra.mxu0 0.0
    %4723 = vmatprep.subr.mxu0 0.0
    %4724 = vmatpush1.xpose.msra.mxu0 0.0
    %4725 = vmatprep.subr.mxu0 0.0
    %4726 = vmatpush1.xpose.msra.mxu0 0.0
    %4727 = vmatprep.subr.mxu0 0.0
    %4728 = vmatpush1.xpose.msra.mxu0 0.0
    %4729 = vmatprep.subr.mxu0 0.0
    %4730 = vmatpush1.xpose.msra.mxu0 0.0
    %4731 = vmatprep.subr.mxu0 0.0
    %4732 = vmatpush1.xpose.msra.mxu0 0.0
    %4733 = vmatprep.subr.mxu0 0.0
    %4734 = vmatpush1.xpose.msra.mxu0 0.0
    %4735 = vmatprep.subr.mxu0 0.0
    %4736 = vmatpush1.xpose.msra.mxu0 0.0
    %4737 = vmatprep.subr.mxu0 0.0
    %4738 = vmatpush1.xpose.msra.mxu0 0.0
    %4739 = vmatprep.subr.mxu0 0.0
    %4740 = vmatpush1.xpose.msra.mxu0 0.0
    %4741 = vmatprep.subr.mxu0 0.0
    %4742 = vmatpush1.xpose.msra.mxu0 0.0
    %4743 = vmatprep.subr.mxu0 0.0
    %4744 = vmatpush1.xpose.msra.mxu0 0.0
    %4745 = vmatprep.subr.mxu0 0.0
    %4746 = vmatpush1.xpose.msra.mxu0 0.0
    %4747 = vmatprep.subr.mxu0 0.0
    %4748 = vmatpush1.xpose.msra.mxu0 0.0
    %4749 = vmatprep.subr.mxu0 0.0
    %4750 = vmatpush1.xpose.msra.mxu0 0.0
    %4751 = vmatprep.mubr.f32.mxu0 0.0
    %4752 = vmatmul.mubr.f32.gmra.mrb[0].mxu0 %v4683
    %v4753 = vpop.f32.mrb[0].mxu0
    %v4754 = vadd.f32 0.0, %v4753
    %v4755 = vpop.f32.mrb[0].mxu0
    %4756 = vdwg.mxu0
    %v4757 = vmul.f32 %v4754, 0.35355338
    %v4758 = vsel %vm536, -1e+09, %v4757
    %v4759 = vsel %vm537, %v4758, -inf
    %4760 = vmax.xlane.f32.xlu0 %v4759
    %v4761 = vpop.xlane.xlu0 %4760
    %v4762 = vsub.f32 %v4758, %v4761
    %v4763 = vmul.f32 %v4762, 1.442695
    %v4764 = vpow.pop %v4763
    %v4765 = vsel %vm537, %v4764, 0.0
    %4766 = vadd.xlane.f32.xlu0 %v4765
    %v4767 = vpop.xlane.xlu0 %4766
    %v4768 = vrcp.pop %v4767
    %v4769 = vmul.f32 %v4764, %v4768
    %4770 = vrot.lane.b32.xlu0 %v4335, 112
    %v4771 = vpop.permute.xlu0 %4770
    %v4774 = vsel %vm537, %v4769, 0
    %4776 = vmatprep.subr.mxu0 0.0
    %4777 = vmatpush1.msra.mxu0 %v4771
    %4778 = vmatprep.subr.mxu0 0.0
    %4779 = vmatpush1.msra.mxu0 0.0
    %4780 = vmatprep.subr.mxu0 0.0
    %4781 = vmatpush1.msra.mxu0 0.0
    %4782 = vmatprep.subr.mxu0 0.0
    %4783 = vmatpush1.msra.mxu0 0.0
    %4784 = vmatprep.subr.mxu0 0.0
    %4785 = vmatpush1.msra.mxu0 0.0
    %4786 = vmatprep.subr.mxu0 0.0
    %4787 = vmatpush1.msra.mxu0 0.0
    %4788 = vmatprep.subr.mxu0 0.0
    %4789 = vmatpush1.msra.mxu0 0.0
    %4790 = vmatprep.subr.mxu0 0.0
    %4791 = vmatpush1.msra.mxu0 0.0
    %4792 = vmatprep.subr.mxu0 0.0
    %4793 = vmatpush1.msra.mxu0 0.0
    %4794 = vmatprep.subr.mxu0 0.0
    %4795 = vmatpush1.msra.mxu0 0.0
    %4796 = vmatprep.subr.mxu0 0.0
    %4797 = vmatpush1.msra.mxu0 0.0
    %4798 = vmatprep.subr.mxu0 0.0
    %4799 = vmatpush1.msra.mxu0 0.0
    %4800 = vmatprep.subr.mxu0 0.0
    %4801 = vmatpush1.msra.mxu0 0.0
    %4802 = vmatprep.subr.mxu0 0.0
    %4803 = vmatpush1.msra.mxu0 0.0
    %4804 = vmatprep.subr.mxu0 0.0
    %4805 = vmatpush1.msra.mxu0 0.0
    %4806 = vmatprep.subr.mxu0 0.0
    %4807 = vmatpush1.msra.mxu0 0.0
    %4808 = vmatprep.subr.mxu0 0.0
    %4809 = vmatpush1.msra.mxu0 0.0
    %4810 = vmatprep.subr.mxu0 0.0
    %4811 = vmatpush1.msra.mxu0 0.0
    %4812 = vmatprep.subr.mxu0 0.0
    %4813 = vmatpush1.msra.mxu0 0.0
    %4814 = vmatprep.subr.mxu0 0.0
    %4815 = vmatpush1.msra.mxu0 0.0
    %4816 = vmatprep.subr.mxu0 0.0
    %4817 = vmatpush1.msra.mxu0 0.0
    %4818 = vmatprep.subr.mxu0 0.0
    %4819 = vmatpush1.msra.mxu0 0.0
    %4820 = vmatprep.subr.mxu0 0.0
    %4821 = vmatpush1.msra.mxu0 0.0
    %4822 = vmatprep.subr.mxu0 0.0
    %4823 = vmatpush1.msra.mxu0 0.0
    %4824 = vmatprep.subr.mxu0 0.0
    %4825 = vmatpush1.msra.mxu0 0.0
    %4826 = vmatprep.subr.mxu0 0.0
    %4827 = vmatpush1.msra.mxu0 0.0
    %4828 = vmatprep.subr.mxu0 0.0
    %4829 = vmatpush1.msra.mxu0 0.0
    %4830 = vmatprep.subr.mxu0 0.0
    %4831 = vmatpush1.msra.mxu0 0.0
    %4832 = vmatprep.subr.mxu0 0.0
    %4833 = vmatpush1.msra.mxu0 0.0
    %4834 = vmatprep.subr.mxu0 0.0
    %4835 = vmatpush1.msra.mxu0 0.0
    %4836 = vmatprep.subr.mxu0 0.0
    %4837 = vmatpush1.msra.mxu0 0.0
    %4838 = vmatprep.subr.mxu0 0.0
    %4839 = vmatpush1.msra.mxu0 0.0
    %4840 = vmatprep.mubr.f32.mxu0 0.0
    %4841 = vmatmul.mubr.f32.gmra.mrb[0].mxu0 %v4774
    %v4842 = vpop.f32.mrb[0].mxu0
    %v4843 = vadd.f32 0.0, %v4842
    %v4844 = vpop.f32.mrb[0].mxu0
    %4845 = vdwg.mxu0
    %4847 = vrot.lane.b32.xlu0 %v4843, 16
    %v4848 = vpop.permute.xlu0 %4847
    %4850 = vst.msk [vmem:[#allocation2] sm:$0xff] %vm1046, %v4848
    %4851 = vrot.lane.b32.xlu0 %v4173, 104
    %v4852 = vpop.permute.xlu0 %4851
    %4853 = vrot.lane.b32.xlu0 %v4254, 104
    %v4854 = vpop.permute.xlu0 %4853
    %v4855 = vsel %vm537, %v4852, 0
    %v4857 = vsel %vm537, %v4854, 0
    %4859 = vmatprep.subr.mxu0 0.0
    %4860 = vmatpush1.xpose.msra.mxu0 %v4857
    %4861 = vmatprep.subr.mxu0 0.0
    %4862 = vmatpush1.xpose.msra.mxu0 0.0
    %4863 = vmatprep.subr.mxu0 0.0
    %4864 = vmatpush1.xpose.msra.mxu0 0.0
    %4865 = vmatprep.subr.mxu0 0.0
    %4866 = vmatpush1.xpose.msra.mxu0 0.0
    %4867 = vmatprep.subr.mxu0 0.0
    %4868 = vmatpush1.xpose.msra.mxu0 0.0
    %4869 = vmatprep.subr.mxu0 0.0
    %4870 = vmatpush1.xpose.msra.mxu0 0.0
    %4871 = vmatprep.subr.mxu0 0.0
    %4872 = vmatpush1.xpose.msra.mxu0 0.0
    %4873 = vmatprep.subr.mxu0 0.0
    %4874 = vmatpush1.xpose.msra.mxu0 0.0
    %4875 = vmatprep.subr.mxu0 0.0
    %4876 = vmatpush1.xpose.msra.mxu0 0.0
    %4877 = vmatprep.subr.mxu0 0.0
    %4878 = vmatpush1.xpose.msra.mxu0 0.0
    %4879 = vmatprep.subr.mxu0 0.0
    %4880 = vmatpush1.xpose.msra.mxu0 0.0
    %4881 = vmatprep.subr.mxu0 0.0
    %4882 = vmatpush1.xpose.msra.mxu0 0.0
    %4883 = vmatprep.subr.mxu0 0.0
    %4884 = vmatpush1.xpose.msra.mxu0 0.0
    %4885 = vmatprep.subr.mxu0 0.0
    %4886 = vmatpush1.xpose.msra.mxu0 0.0
    %4887 = vmatprep.subr.mxu0 0.0
    %4888 = vmatpush1.xpose.msra.mxu0 0.0
    %4889 = vmatprep.subr.mxu0 0.0
    %4890 = vmatpush1.xpose.msra.mxu0 0.0
    %4891 = vmatprep.subr.mxu0 0.0
    %4892 = vmatpush1.xpose.msra.mxu0 0.0
    %4893 = vmatprep.subr.mxu0 0.0
    %4894 = vmatpush1.xpose.msra.mxu0 0.0
    %4895 = vmatprep.subr.mxu0 0.0
    %4896 = vmatpush1.xpose.msra.mxu0 0.0
    %4897 = vmatprep.subr.mxu0 0.0
    %4898 = vmatpush1.xpose.msra.mxu0 0.0
    %4899 = vmatprep.subr.mxu0 0.0
    %4900 = vmatpush1.xpose.msra.mxu0 0.0
    %4901 = vmatprep.subr.mxu0 0.0
    %4902 = vmatpush1.xpose.msra.mxu0 0.0
    %4903 = vmatprep.subr.mxu0 0.0
    %4904 = vmatpush1.xpose.msra.mxu0 0.0
    %4905 = vmatprep.subr.mxu0 0.0
    %4906 = vmatpush1.xpose.msra.mxu0 0.0
    %4907 = vmatprep.subr.mxu0 0.0
    %4908 = vmatpush1.xpose.msra.mxu0 0.0
    %4909 = vmatprep.subr.mxu0 0.0
    %4910 = vmatpush1.xpose.msra.mxu0 0.0
    %4911 = vmatprep.subr.mxu0 0.0
    %4912 = vmatpush1.xpose.msra.mxu0 0.0
    %4913 = vmatprep.subr.mxu0 0.0
    %4914 = vmatpush1.xpose.msra.mxu0 0.0
    %4915 = vmatprep.subr.mxu0 0.0
    %4916 = vmatpush1.xpose.msra.mxu0 0.0
    %4917 = vmatprep.subr.mxu0 0.0
    %4918 = vmatpush1.xpose.msra.mxu0 0.0
    %4919 = vmatprep.subr.mxu0 0.0
    %4920 = vmatpush1.xpose.msra.mxu0 0.0
    %4921 = vmatprep.subr.mxu0 0.0
    %4922 = vmatpush1.xpose.msra.mxu0 0.0
    %4923 = vmatprep.mubr.f32.mxu0 0.0
    %4924 = vmatmul.mubr.f32.gmra.mrb[0].mxu0 %v4855
    %v4925 = vpop.f32.mrb[0].mxu0
    %v4926 = vadd.f32 0.0, %v4925
    %v4927 = vpop.f32.mrb[0].mxu0
    %4928 = vdwg.mxu0
    %v4929 = vmul.f32 %v4926, 0.35355338
    %v4930 = vsel %vm536, -1e+09, %v4929
    %v4931 = vsel %vm537, %v4930, -inf
    %4932 = vmax.xlane.f32.xlu0 %v4931
    %v4933 = vpop.xlane.xlu0 %4932
    %v4934 = vsub.f32 %v4930, %v4933
    %v4935 = vmul.f32 %v4934, 1.442695
    %v4936 = vpow.pop %v4935
    %v4937 = vsel %vm537, %v4936, 0.0
    %4938 = vadd.xlane.f32.xlu0 %v4937
    %v4939 = vpop.xlane.xlu0 %4938
    %v4940 = vrcp.pop %v4939
    %v4941 = vmul.f32 %v4936, %v4940
    %4942 = vrot.lane.b32.xlu0 %v4335, 104
    %v4943 = vpop.permute.xlu0 %4942
    %v4946 = vsel %vm537, %v4941, 0
    %4948 = vmatprep.subr.mxu0 0.0
    %4949 = vmatpush1.msra.mxu0 %v4943
    %4950 = vmatprep.subr.mxu0 0.0
    %4951 = vmatpush1.msra.mxu0 0.0
    %4952 = vmatprep.subr.mxu0 0.0
    %4953 = vmatpush1.msra.mxu0 0.0
    %4954 = vmatprep.subr.mxu0 0.0
    %4955 = vmatpush1.msra.mxu0 0.0
    %4956 = vmatprep.subr.mxu0 0.0
    %4957 = vmatpush1.msra.mxu0 0.0
    %4958 = vmatprep.subr.mxu0 0.0
    %4959 = vmatpush1.msra.mxu0 0.0
    %4960 = vmatprep.subr.mxu0 0.0
    %4961 = vmatpush1.msra.mxu0 0.0
    %4962 = vmatprep.subr.mxu0 0.0
    %4963 = vmatpush1.msra.mxu0 0.0
    %4964 = vmatprep.subr.mxu0 0.0
    %4965 = vmatpush1.msra.mxu0 0.0
    %4966 = vmatprep.subr.mxu0 0.0
    %4967 = vmatpush1.msra.mxu0 0.0
    %4968 = vmatprep.subr.mxu0 0.0
    %4969 = vmatpush1.msra.mxu0 0.0
    %4970 = vmatprep.subr.mxu0 0.0
    %4971 = vmatpush1.msra.mxu0 0.0
    %4972 = vmatprep.subr.mxu0 0.0
    %4973 = vmatpush1.msra.mxu0 0.0
    %4974 = vmatprep.subr.mxu0 0.0
    %4975 = vmatpush1.msra.mxu0 0.0
    %4976 = vmatprep.subr.mxu0 0.0
    %4977 = vmatpush1.msra.mxu0 0.0
    %4978 = vmatprep.subr.mxu0 0.0
    %4979 = vmatpush1.msra.mxu0 0.0
    %4980 = vmatprep.subr.mxu0 0.0
    %4981 = vmatpush1.msra.mxu0 0.0
    %4982 = vmatprep.subr.mxu0 0.0
    %4983 = vmatpush1.msra.mxu0 0.0
    %4984 = vmatprep.subr.mxu0 0.0
    %4985 = vmatpush1.msra.mxu0 0.0
    %4986 = vmatprep.subr.mxu0 0.0
    %4987 = vmatpush1.msra.mxu0 0.0
    %4988 = vmatprep.subr.mxu0 0.0
    %4989 = vmatpush1.msra.mxu0 0.0
    %4990 = vmatprep.subr.mxu0 0.0
    %4991 = vmatpush1.msra.mxu0 0.0
    %4992 = vmatprep.subr.mxu0 0.0
    %4993 = vmatpush1.msra.mxu0 0.0
    %4994 = vmatprep.subr.mxu0 0.0
    %4995 = vmatpush1.msra.mxu0 0.0
    %4996 = vmatprep.subr.mxu0 0.0
    %4997 = vmatpush1.msra.mxu0 0.0
    %4998 = vmatprep.subr.mxu0 0.0
    %4999 = vmatpush1.msra.mxu0 0.0
    %5000 = vmatprep.subr.mxu0 0.0
    %5001 = vmatpush1.msra.mxu0 0.0
    %5002 = vmatprep.subr.mxu0 0.0
    %5003 = vmatpush1.msra.mxu0 0.0
    %5004 = vmatprep.subr.mxu0 0.0
    %5005 = vmatpush1.msra.mxu0 0.0
    %5006 = vmatprep.subr.mxu0 0.0
    %5007 = vmatpush1.msra.mxu0 0.0
    %5008 = vmatprep.subr.mxu0 0.0
    %5009 = vmatpush1.msra.mxu0 0.0
    %5010 = vmatprep.subr.mxu0 0.0
    %5011 = vmatpush1.msra.mxu0 0.0
    %5012 = vmatprep.mubr.f32.mxu0 0.0
    %5013 = vmatmul.mubr.f32.gmra.mrb[0].mxu0 %v4946
    %v5014 = vpop.f32.mrb[0].mxu0
    %v5015 = vadd.f32 0.0, %v5014
    %v5016 = vpop.f32.mrb[0].mxu0
    %5017 = vdwg.mxu0
    %5019 = vrot.lane.b32.xlu0 %v5015, 24
    %v5020 = vpop.permute.xlu0 %5019
    %5022 = vst.msk [vmem:[#allocation2] sm:$0xff] %vm1219, %v5020
    %v5024 = vsel %vm537, %v4178, 0
    %v5027 = vsel %vm537, %v4259, 0
    %5029 = vmatprep.subr.mxu0 0.0
    %5030 = vmatpush1.xpose.msra.mxu0 %v5027
    %5031 = vmatprep.subr.mxu0 0.0
    %5032 = vmatpush1.xpose.msra.mxu0 0.0
    %5033 = vmatprep.subr.mxu0 0.0
    %5034 = vmatpush1.xpose.msra.mxu0 0.0
    %5035 = vmatprep.subr.mxu0 0.0
    %5036 = vmatpush1.xpose.msra.mxu0 0.0
    %5037 = vmatprep.subr.mxu0 0.0
    %5038 = vmatpush1.xpose.msra.mxu0 0.0
    %5039 = vmatprep.subr.mxu0 0.0
    %5040 = vmatpush1.xpose.msra.mxu0 0.0
    %5041 = vmatprep.subr.mxu0 0.0
    %5042 = vmatpush1.xpose.msra.mxu0 0.0
    %5043 = vmatprep.subr.mxu0 0.0
    %5044 = vmatpush1.xpose.msra.mxu0 0.0
    %5045 = vmatprep.subr.mxu0 0.0
    %5046 = vmatpush1.xpose.msra.mxu0 0.0
    %5047 = vmatprep.subr.mxu0 0.0
    %5048 = vmatpush1.xpose.msra.mxu0 0.0
    %5049 = vmatprep.subr.mxu0 0.0
    %5050 = vmatpush1.xpose.msra.mxu0 0.0
    %5051 = vmatprep.subr.mxu0 0.0
    %5052 = vmatpush1.xpose.msra.mxu0 0.0
    %5053 = vmatprep.subr.mxu0 0.0
    %5054 = vmatpush1.xpose.msra.mxu0 0.0
    %5055 = vmatprep.subr.mxu0 0.0
    %5056 = vmatpush1.xpose.msra.mxu0 0.0
    %5057 = vmatprep.subr.mxu0 0.0
    %5058 = vmatpush1.xpose.msra.mxu0 0.0
    %5059 = vmatprep.subr.mxu0 0.0
    %5060 = vmatpush1.xpose.msra.mxu0 0.0
    %5061 = vmatprep.subr.mxu0 0.0
    %5062 = vmatpush1.xpose.msra.mxu0 0.0
    %5063 = vmatprep.subr.mxu0 0.0
    %5064 = vmatpush1.xpose.msra.mxu0 0.0
    %5065 = vmatprep.subr.mxu0 0.0
    %5066 = vmatpush1.xpose.msra.mxu0 0.0
    %5067 = vmatprep.subr.mxu0 0.0
    %5068 = vmatpush1.xpose.msra.mxu0 0.0
    %5069 = vmatprep.subr.mxu0 0.0
    %5070 = vmatpush1.xpose.msra.mxu0 0.0
    %5071 = vmatprep.subr.mxu0 0.0
    %5072 = vmatpush1.xpose.msra.mxu0 0.0
    %5073 = vmatprep.subr.mxu0 0.0
    %5074 = vmatpush1.xpose.msra.mxu0 0.0
    %5075 = vmatprep.subr.mxu0 0.0
    %5076 = vmatpush1.xpose.msra.mxu0 0.0
    %5077 = vmatprep.subr.mxu0 0.0
    %5078 = vmatpush1.xpose.msra.mxu0 0.0
    %5079 = vmatprep.subr.mxu0 0.0
    %5080 = vmatpush1.xpose.msra.mxu0 0.0
    %5081 = vmatprep.subr.mxu0 0.0
    %5082 = vmatpush1.xpose.msra.mxu0 0.0
    %5083 = vmatprep.subr.mxu0 0.0
    %5084 = vmatpush1.xpose.msra.mxu0 0.0
    %5085 = vmatprep.subr.mxu0 0.0
    %5086 = vmatpush1.xpose.msra.mxu0 0.0
    %5087 = vmatprep.subr.mxu0 0.0
    %5088 = vmatpush1.xpose.msra.mxu0 0.0
    %5089 = vmatprep.subr.mxu0 0.0
    %5090 = vmatpush1.xpose.msra.mxu0 0.0
    %5091 = vmatprep.subr.mxu0 0.0
    %5092 = vmatpush1.xpose.msra.mxu0 0.0
    %5093 = vmatprep.mubr.f32.mxu0 0.0
    %5094 = vmatmul.mubr.f32.gmra.mrb[0].mxu0 %v5024
    %v5095 = vpop.f32.mrb[0].mxu0
    %v5096 = vadd.f32 0.0, %v5095
    %v5097 = vpop.f32.mrb[0].mxu0
    %5098 = vdwg.mxu0
    %v5099 = vmul.f32 %v5096, 0.35355338
    %v5100 = vsel %vm1226, -1e+09, %v5099
    %v5101 = vsel %vm537, %v5100, -inf
    %5102 = vmax.xlane.f32.xlu0 %v5101
    %v5103 = vpop.xlane.xlu0 %5102
    %v5104 = vsub.f32 %v5100, %v5103
    %v5105 = vmul.f32 %v5104, 1.442695
    %v5106 = vpow.pop %v5105
    %v5107 = vsel %vm537, %v5106, 0.0
    %5108 = vadd.xlane.f32.xlu0 %v5107
    %v5109 = vpop.xlane.xlu0 %5108
    %v5110 = vrcp.pop %v5109
    %v5111 = vmul.f32 %v5106, %v5110
    %v5113 = vsel %vm537, %v5111, 0
    %5115 = vmatprep.subr.mxu0 0.0
    %5116 = vmatpush1.msra.mxu0 %v4340
    %5117 = vmatprep.subr.mxu0 0.0
    %5118 = vmatpush1.msra.mxu0 0.0
    %5119 = vmatprep.subr.mxu0 0.0
    %5120 = vmatpush1.msra.mxu0 0.0
    %5121 = vmatprep.subr.mxu0 0.0
    %5122 = vmatpush1.msra.mxu0 0.0
    %5123 = vmatprep.subr.mxu0 0.0
    %5124 = vmatpush1.msra.mxu0 0.0
    %5125 = vmatprep.subr.mxu0 0.0
    %5126 = vmatpush1.msra.mxu0 0.0
    %5127 = vmatprep.subr.mxu0 0.0
    %5128 = vmatpush1.msra.mxu0 0.0
    %5129 = vmatprep.subr.mxu0 0.0
    %5130 = vmatpush1.msra.mxu0 0.0
    %5131 = vmatprep.subr.mxu0 0.0
    %5132 = vmatpush1.msra.mxu0 0.0
    %5133 = vmatprep.subr.mxu0 0.0
    %5134 = vmatpush1.msra.mxu0 0.0
    %5135 = vmatprep.subr.mxu0 0.0
    %5136 = vmatpush1.msra.mxu0 0.0
    %5137 = vmatprep.subr.mxu0 0.0
    %5138 = vmatpush1.msra.mxu0 0.0
    %5139 = vmatprep.subr.mxu0 0.0
    %5140 = vmatpush1.msra.mxu0 0.0
    %5141 = vmatprep.subr.mxu0 0.0
    %5142 = vmatpush1.msra.mxu0 0.0
    %5143 = vmatprep.subr.mxu0 0.0
    %5144 = vmatpush1.msra.mxu0 0.0
    %5145 = vmatprep.subr.mxu0 0.0
    %5146 = vmatpush1.msra.mxu0 0.0
    %5147 = vmatprep.subr.mxu0 0.0
    %5148 = vmatpush1.msra.mxu0 0.0
    %5149 = vmatprep.subr.mxu0 0.0
    %5150 = vmatpush1.msra.mxu0 0.0
    %5151 = vmatprep.subr.mxu0 0.0
    %5152 = vmatpush1.msra.mxu0 0.0
    %5153 = vmatprep.subr.mxu0 0.0
    %5154 = vmatpush1.msra.mxu0 0.0
    %5155 = vmatprep.subr.mxu0 0.0
    %5156 = vmatpush1.msra.mxu0 0.0
    %5157 = vmatprep.subr.mxu0 0.0
    %5158 = vmatpush1.msra.mxu0 0.0
    %5159 = vmatprep.subr.mxu0 0.0
    %5160 = vmatpush1.msra.mxu0 0.0
    %5161 = vmatprep.subr.mxu0 0.0
    %5162 = vmatpush1.msra.mxu0 0.0
    %5163 = vmatprep.subr.mxu0 0.0
    %5164 = vmatpush1.msra.mxu0 0.0
    %5165 = vmatprep.subr.mxu0 0.0
    %5166 = vmatpush1.msra.mxu0 0.0
    %5167 = vmatprep.subr.mxu0 0.0
    %5168 = vmatpush1.msra.mxu0 0.0
    %5169 = vmatprep.subr.mxu0 0.0
    %5170 = vmatpush1.msra.mxu0 0.0
    %5171 = vmatprep.subr.mxu0 0.0
    %5172 = vmatpush1.msra.mxu0 0.0
    %5173 = vmatprep.subr.mxu0 0.0
    %5174 = vmatpush1.msra.mxu0 0.0
    %5175 = vmatprep.subr.mxu0 0.0
    %5176 = vmatpush1.msra.mxu0 0.0
    %5177 = vmatprep.subr.mxu0 0.0
    %5178 = vmatpush1.msra.mxu0 0.0
    %5179 = vmatprep.mubr.f32.mxu0 0.0
    %5180 = vmatmul.mubr.f32.gmra.mrb[0].mxu0 %v5113
    %v5181 = vpop.f32.mrb[0].mxu0
    %v5182 = vadd.f32 0.0, %v5181
    %v5183 = vpop.f32.mrb[0].mxu0
    %5184 = vdwg.mxu0
    %5185 = vst.msk [vmem:[#allocation2 + $0x8] sm:$0xff] %vm537, %v5182
    %5186 = vrot.lane.b32.xlu0 %v4178, 120
    %v5187 = vpop.permute.xlu0 %5186
    %5188 = vrot.lane.b32.xlu0 %v4259, 120
    %v5189 = vpop.permute.xlu0 %5188
    %v5190 = vsel %vm537, %v5187, 0
    %v5192 = vsel %vm537, %v5189, 0
    %5194 = vmatprep.subr.mxu0 0.0
    %5195 = vmatpush1.xpose.msra.mxu0 %v5192
    %5196 = vmatprep.subr.mxu0 0.0
    %5197 = vmatpush1.xpose.msra.mxu0 0.0
    %5198 = vmatprep.subr.mxu0 0.0
    %5199 = vmatpush1.xpose.msra.mxu0 0.0
    %5200 = vmatprep.subr.mxu0 0.0
    %5201 = vmatpush1.xpose.msra.mxu0 0.0
    %5202 = vmatprep.subr.mxu0 0.0
    %5203 = vmatpush1.xpose.msra.mxu0 0.0
    %5204 = vmatprep.subr.mxu0 0.0
    %5205 = vmatpush1.xpose.msra.mxu0 0.0
    %5206 = vmatprep.subr.mxu0 0.0
    %5207 = vmatpush1.xpose.msra.mxu0 0.0
    %5208 = vmatprep.subr.mxu0 0.0
    %5209 = vmatpush1.xpose.msra.mxu0 0.0
    %5210 = vmatprep.subr.mxu0 0.0
    %5211 = vmatpush1.xpose.msra.mxu0 0.0
    %5212 = vmatprep.subr.mxu0 0.0
    %5213 = vmatpush1.xpose.msra.mxu0 0.0
    %5214 = vmatprep.subr.mxu0 0.0
    %5215 = vmatpush1.xpose.msra.mxu0 0.0
    %5216 = vmatprep.subr.mxu0 0.0
    %5217 = vmatpush1.xpose.msra.mxu0 0.0
    %5218 = vmatprep.subr.mxu0 0.0
    %5219 = vmatpush1.xpose.msra.mxu0 0.0
    %5220 = vmatprep.subr.mxu0 0.0
    %5221 = vmatpush1.xpose.msra.mxu0 0.0
    %5222 = vmatprep.subr.mxu0 0.0
    %5223 = vmatpush1.xpose.msra.mxu0 0.0
    %5224 = vmatprep.subr.mxu0 0.0
    %5225 = vmatpush1.xpose.msra.mxu0 0.0
    %5226 = vmatprep.subr.mxu0 0.0
    %5227 = vmatpush1.xpose.msra.mxu0 0.0
    %5228 = vmatprep.subr.mxu0 0.0
    %5229 = vmatpush1.xpose.msra.mxu0 0.0
    %5230 = vmatprep.subr.mxu0 0.0
    %5231 = vmatpush1.xpose.msra.mxu0 0.0
    %5232 = vmatprep.subr.mxu0 0.0
    %5233 = vmatpush1.xpose.msra.mxu0 0.0
    %5234 = vmatprep.subr.mxu0 0.0
    %5235 = vmatpush1.xpose.msra.mxu0 0.0
    %5236 = vmatprep.subr.mxu0 0.0
    %5237 = vmatpush1.xpose.msra.mxu0 0.0
    %5238 = vmatprep.subr.mxu0 0.0
    %5239 = vmatpush1.xpose.msra.mxu0 0.0
    %5240 = vmatprep.subr.mxu0 0.0
    %5241 = vmatpush1.xpose.msra.mxu0 0.0
    %5242 = vmatprep.subr.mxu0 0.0
    %5243 = vmatpush1.xpose.msra.mxu0 0.0
    %5244 = vmatprep.subr.mxu0 0.0
    %5245 = vmatpush1.xpose.msra.mxu0 0.0
    %5246 = vmatprep.subr.mxu0 0.0
    %5247 = vmatpush1.xpose.msra.mxu0 0.0
    %5248 = vmatprep.subr.mxu0 0.0
    %5249 = vmatpush1.xpose.msra.mxu0 0.0
    %5250 = vmatprep.subr.mxu0 0.0
    %5251 = vmatpush1.xpose.msra.mxu0 0.0
    %5252 = vmatprep.subr.mxu0 0.0
    %5253 = vmatpush1.xpose.msra.mxu0 0.0
    %5254 = vmatprep.subr.mxu0 0.0
    %5255 = vmatpush1.xpose.msra.mxu0 0.0
    %5256 = vmatprep.subr.mxu0 0.0
    %5257 = vmatpush1.xpose.msra.mxu0 0.0
    %5258 = vmatprep.mubr.f32.mxu0 0.0
    %5259 = vmatmul.mubr.f32.gmra.mrb[0].mxu0 %v5190
    %v5260 = vpop.f32.mrb[0].mxu0
    %v5261 = vadd.f32 0.0, %v5260
    %v5262 = vpop.f32.mrb[0].mxu0
    %5263 = vdwg.mxu0
    %v5264 = vmul.f32 %v5261, 0.35355338
    %v5265 = vsel %vm1226, -1e+09, %v5264
    %v5266 = vsel %vm537, %v5265, -inf
    %5267 = vmax.xlane.f32.xlu0 %v5266
    %v5268 = vpop.xlane.xlu0 %5267
    %v5269 = vsub.f32 %v5265, %v5268
    %v5270 = vmul.f32 %v5269, 1.442695
    %v5271 = vpow.pop %v5270
    %v5272 = vsel %vm537, %v5271, 0.0
    %5273 = vadd.xlane.f32.xlu0 %v5272
    %v5274 = vpop.xlane.xlu0 %5273
    %v5275 = vrcp.pop %v5274
    %v5276 = vmul.f32 %v5271, %v5275
    %5278 = vrot.lane.b32.xlu0 %v4340, 120
    %v5279 = vpop.permute.xlu0 %5278
    %v5282 = vsel %vm537, %v5276, 0
    %5284 = vmatprep.subr.mxu0 0.0
    %5285 = vmatpush1.msra.mxu0 %v5279
    %5286 = vmatprep.subr.mxu0 0.0
    %5287 = vmatpush1.msra.mxu0 0.0
    %5288 = vmatprep.subr.mxu0 0.0
    %5289 = vmatpush1.msra.mxu0 0.0
    %5290 = vmatprep.subr.mxu0 0.0
    %5291 = vmatpush1.msra.mxu0 0.0
    %5292 = vmatprep.subr.mxu0 0.0
    %5293 = vmatpush1.msra.mxu0 0.0
    %5294 = vmatprep.subr.mxu0 0.0
    %5295 = vmatpush1.msra.mxu0 0.0
    %5296 = vmatprep.subr.mxu0 0.0
    %5297 = vmatpush1.msra.mxu0 0.0
    %5298 = vmatprep.subr.mxu0 0.0
    %5299 = vmatpush1.msra.mxu0 0.0
    %5300 = vmatprep.subr.mxu0 0.0
    %5301 = vmatpush1.msra.mxu0 0.0
    %5302 = vmatprep.subr.mxu0 0.0
    %5303 = vmatpush1.msra.mxu0 0.0
    %5304 = vmatprep.subr.mxu0 0.0
    %5305 = vmatpush1.msra.mxu0 0.0
    %5306 = vmatprep.subr.mxu0 0.0
    %5307 = vmatpush1.msra.mxu0 0.0
    %5308 = vmatprep.subr.mxu0 0.0
    %5309 = vmatpush1.msra.mxu0 0.0
    %5310 = vmatprep.subr.mxu0 0.0
    %5311 = vmatpush1.msra.mxu0 0.0
    %5312 = vmatprep.subr.mxu0 0.0
    %5313 = vmatpush1.msra.mxu0 0.0
    %5314 = vmatprep.subr.mxu0 0.0
    %5315 = vmatpush1.msra.mxu0 0.0
    %5316 = vmatprep.subr.mxu0 0.0
    %5317 = vmatpush1.msra.mxu0 0.0
    %5318 = vmatprep.subr.mxu0 0.0
    %5319 = vmatpush1.msra.mxu0 0.0
    %5320 = vmatprep.subr.mxu0 0.0
    %5321 = vmatpush1.msra.mxu0 0.0
    %5322 = vmatprep.subr.mxu0 0.0
    %5323 = vmatpush1.msra.mxu0 0.0
    %5324 = vmatprep.subr.mxu0 0.0
    %5325 = vmatpush1.msra.mxu0 0.0
    %5326 = vmatprep.subr.mxu0 0.0
    %5327 = vmatpush1.msra.mxu0 0.0
    %5328 = vmatprep.subr.mxu0 0.0
    %5329 = vmatpush1.msra.mxu0 0.0
    %5330 = vmatprep.subr.mxu0 0.0
    %5331 = vmatpush1.msra.mxu0 0.0
    %5332 = vmatprep.subr.mxu0 0.0
    %5333 = vmatpush1.msra.mxu0 0.0
    %5334 = vmatprep.subr.mxu0 0.0
    %5335 = vmatpush1.msra.mxu0 0.0
    %5336 = vmatprep.subr.mxu0 0.0
    %5337 = vmatpush1.msra.mxu0 0.0
    %5338 = vmatprep.subr.mxu0 0.0
    %5339 = vmatpush1.msra.mxu0 0.0
    %5340 = vmatprep.subr.mxu0 0.0
    %5341 = vmatpush1.msra.mxu0 0.0
    %5342 = vmatprep.subr.mxu0 0.0
    %5343 = vmatpush1.msra.mxu0 0.0
    %5344 = vmatprep.subr.mxu0 0.0
    %5345 = vmatpush1.msra.mxu0 0.0
    %5346 = vmatprep.subr.mxu0 0.0
    %5347 = vmatpush1.msra.mxu0 0.0
    %5348 = vmatprep.mubr.f32.mxu0 0.0
    %5349 = vmatmul.mubr.f32.gmra.mrb[0].mxu0 %v5282
    %v5350 = vpop.f32.mrb[0].mxu0
    %v5351 = vadd.f32 0.0, %v5350
    %v5352 = vpop.f32.mrb[0].mxu0
    %5353 = vdwg.mxu0
    %5355 = vrot.lane.b32.xlu0 %v5351, 8
    %v5356 = vpop.permute.xlu0 %5355
    %5358 = vst.msk [vmem:[#allocation2 + $0x8] sm:$0xff] %vm873, %v5356
    %5359 = vrot.lane.b32.xlu0 %v4178, 112
    %v5360 = vpop.permute.xlu0 %5359
    %5361 = vrot.lane.b32.xlu0 %v4259, 112
    %v5362 = vpop.permute.xlu0 %5361
    %v5363 = vsel %vm537, %v5360, 0
    %v5365 = vsel %vm537, %v5362, 0
    %5367 = vmatprep.subr.mxu0 0.0
    %5368 = vmatpush1.xpose.msra.mxu0 %v5365
    %5369 = vmatprep.subr.mxu0 0.0
    %5370 = vmatpush1.xpose.msra.mxu0 0.0
    %5371 = vmatprep.subr.mxu0 0.0
    %5372 = vmatpush1.xpose.msra.mxu0 0.0
    %5373 = vmatprep.subr.mxu0 0.0
    %5374 = vmatpush1.xpose.msra.mxu0 0.0
    %5375 = vmatprep.subr.mxu0 0.0
    %5376 = vmatpush1.xpose.msra.mxu0 0.0
    %5377 = vmatprep.subr.mxu0 0.0
    %5378 = vmatpush1.xpose.msra.mxu0 0.0
    %5379 = vmatprep.subr.mxu0 0.0
    %5380 = vmatpush1.xpose.msra.mxu0 0.0
    %5381 = vmatprep.subr.mxu0 0.0
    %5382 = vmatpush1.xpose.msra.mxu0 0.0
    %5383 = vmatprep.subr.mxu0 0.0
    %5384 = vmatpush1.xpose.msra.mxu0 0.0
    %5385 = vmatprep.subr.mxu0 0.0
    %5386 = vmatpush1.xpose.msra.mxu0 0.0
    %5387 = vmatprep.subr.mxu0 0.0
    %5388 = vmatpush1.xpose.msra.mxu0 0.0
    %5389 = vmatprep.subr.mxu0 0.0
    %5390 = vmatpush1.xpose.msra.mxu0 0.0
    %5391 = vmatprep.subr.mxu0 0.0
    %5392 = vmatpush1.xpose.msra.mxu0 0.0
    %5393 = vmatprep.subr.mxu0 0.0
    %5394 = vmatpush1.xpose.msra.mxu0 0.0
    %5395 = vmatprep.subr.mxu0 0.0
    %5396 = vmatpush1.xpose.msra.mxu0 0.0
    %5397 = vmatprep.subr.mxu0 0.0
    %5398 = vmatpush1.xpose.msra.mxu0 0.0
    %5399 = vmatprep.subr.mxu0 0.0
    %5400 = vmatpush1.xpose.msra.mxu0 0.0
    %5401 = vmatprep.subr.mxu0 0.0
    %5402 = vmatpush1.xpose.msra.mxu0 0.0
    %5403 = vmatprep.subr.mxu0 0.0
    %5404 = vmatpush1.xpose.msra.mxu0 0.0
    %5405 = vmatprep.subr.mxu0 0.0
    %5406 = vmatpush1.xpose.msra.mxu0 0.0
    %5407 = vmatprep.subr.mxu0 0.0
    %5408 = vmatpush1.xpose.msra.mxu0 0.0
    %5409 = vmatprep.subr.mxu0 0.0
    %5410 = vmatpush1.xpose.msra.mxu0 0.0
    %5411 = vmatprep.subr.mxu0 0.0
    %5412 = vmatpush1.xpose.msra.mxu0 0.0
    %5413 = vmatprep.subr.mxu0 0.0
    %5414 = vmatpush1.xpose.msra.mxu0 0.0
    %5415 = vmatprep.subr.mxu0 0.0
    %5416 = vmatpush1.xpose.msra.mxu0 0.0
    %5417 = vmatprep.subr.mxu0 0.0
    %5418 = vmatpush1.xpose.msra.mxu0 0.0
    %5419 = vmatprep.subr.mxu0 0.0
    %5420 = vmatpush1.xpose.msra.mxu0 0.0
    %5421 = vmatprep.subr.mxu0 0.0
    %5422 = vmatpush1.xpose.msra.mxu0 0.0
    %5423 = vmatprep.subr.mxu0 0.0
    %5424 = vmatpush1.xpose.msra.mxu0 0.0
    %5425 = vmatprep.subr.mxu0 0.0
    %5426 = vmatpush1.xpose.msra.mxu0 0.0
    %5427 = vmatprep.subr.mxu0 0.0
    %5428 = vmatpush1.xpose.msra.mxu0 0.0
    %5429 = vmatprep.subr.mxu0 0.0
    %5430 = vmatpush1.xpose.msra.mxu0 0.0
    %5431 = vmatprep.mubr.f32.mxu0 0.0
    %5432 = vmatmul.mubr.f32.gmra.mrb[0].mxu0 %v5363
    %v5433 = vpop.f32.mrb[0].mxu0
    %v5434 = vadd.f32 0.0, %v5433
    %v5435 = vpop.f32.mrb[0].mxu0
    %5436 = vdwg.mxu0
    %v5437 = vmul.f32 %v5434, 0.35355338
    %v5438 = vsel %vm1226, -1e+09, %v5437
    %v5439 = vsel %vm537, %v5438, -inf
    %5440 = vmax.xlane.f32.xlu0 %v5439
    %v5441 = vpop.xlane.xlu0 %5440
    %v5442 = vsub.f32 %v5438, %v5441
    %v5443 = vmul.f32 %v5442, 1.442695
    %v5444 = vpow.pop %v5443
    %v5445 = vsel %vm537, %v5444, 0.0
    %5446 = vadd.xlane.f32.xlu0 %v5445
    %v5447 = vpop.xlane.xlu0 %5446
    %v5448 = vrcp.pop %v5447
    %v5449 = vmul.f32 %v5444, %v5448
    %5450 = vrot.lane.b32.xlu0 %v4340, 112
    %v5451 = vpop.permute.xlu0 %5450
    %v5454 = vsel %vm537, %v5449, 0
    %5456 = vmatprep.subr.mxu0 0.0
    %5457 = vmatpush1.msra.mxu0 %v5451
    %5458 = vmatprep.subr.mxu0 0.0
    %5459 = vmatpush1.msra.mxu0 0.0
    %5460 = vmatprep.subr.mxu0 0.0
    %5461 = vmatpush1.msra.mxu0 0.0
    %5462 = vmatprep.subr.mxu0 0.0
    %5463 = vmatpush1.msra.mxu0 0.0
    %5464 = vmatprep.subr.mxu0 0.0
    %5465 = vmatpush1.msra.mxu0 0.0
    %5466 = vmatprep.subr.mxu0 0.0
    %5467 = vmatpush1.msra.mxu0 0.0
    %5468 = vmatprep.subr.mxu0 0.0
    %5469 = vmatpush1.msra.mxu0 0.0
    %5470 = vmatprep.subr.mxu0 0.0
    %5471 = vmatpush1.msra.mxu0 0.0
    %5472 = vmatprep.subr.mxu0 0.0
    %5473 = vmatpush1.msra.mxu0 0.0
    %5474 = vmatprep.subr.mxu0 0.0
    %5475 = vmatpush1.msra.mxu0 0.0
    %5476 = vmatprep.subr.mxu0 0.0
    %5477 = vmatpush1.msra.mxu0 0.0
    %5478 = vmatprep.subr.mxu0 0.0
    %5479 = vmatpush1.msra.mxu0 0.0
    %5480 = vmatprep.subr.mxu0 0.0
    %5481 = vmatpush1.msra.mxu0 0.0
    %5482 = vmatprep.subr.mxu0 0.0
    %5483 = vmatpush1.msra.mxu0 0.0
    %5484 = vmatprep.subr.mxu0 0.0
    %5485 = vmatpush1.msra.mxu0 0.0
    %5486 = vmatprep.subr.mxu0 0.0
    %5487 = vmatpush1.msra.mxu0 0.0
    %5488 = vmatprep.subr.mxu0 0.0
    %5489 = vmatpush1.msra.mxu0 0.0
    %5490 = vmatprep.subr.mxu0 0.0
    %5491 = vmatpush1.msra.mxu0 0.0
    %5492 = vmatprep.subr.mxu0 0.0
    %5493 = vmatpush1.msra.mxu0 0.0
    %5494 = vmatprep.subr.mxu0 0.0
    %5495 = vmatpush1.msra.mxu0 0.0
    %5496 = vmatprep.subr.mxu0 0.0
    %5497 = vmatpush1.msra.mxu0 0.0
    %5498 = vmatprep.subr.mxu0 0.0
    %5499 = vmatpush1.msra.mxu0 0.0
    %5500 = vmatprep.subr.mxu0 0.0
    %5501 = vmatpush1.msra.mxu0 0.0
    %5502 = vmatprep.subr.mxu0 0.0
    %5503 = vmatpush1.msra.mxu0 0.0
    %5504 = vmatprep.subr.mxu0 0.0
    %5505 = vmatpush1.msra.mxu0 0.0
    %5506 = vmatprep.subr.mxu0 0.0
    %5507 = vmatpush1.msra.mxu0 0.0
    %5508 = vmatprep.subr.mxu0 0.0
    %5509 = vmatpush1.msra.mxu0 0.0
    %5510 = vmatprep.subr.mxu0 0.0
    %5511 = vmatpush1.msra.mxu0 0.0
    %5512 = vmatprep.subr.mxu0 0.0
    %5513 = vmatpush1.msra.mxu0 0.0
    %5514 = vmatprep.subr.mxu0 0.0
    %5515 = vmatpush1.msra.mxu0 0.0
    %5516 = vmatprep.subr.mxu0 0.0
    %5517 = vmatpush1.msra.mxu0 0.0
    %5518 = vmatprep.subr.mxu0 0.0
    %5519 = vmatpush1.msra.mxu0 0.0
    %5520 = vmatprep.mubr.f32.mxu0 0.0
    %5521 = vmatmul.mubr.f32.gmra.mrb[0].mxu0 %v5454
    %v5522 = vpop.f32.mrb[0].mxu0
    %v5523 = vadd.f32 0.0, %v5522
    %v5524 = vpop.f32.mrb[0].mxu0
    %5525 = vdwg.mxu0
    %5527 = vrot.lane.b32.xlu0 %v5523, 16
    %v5528 = vpop.permute.xlu0 %5527
    %5530 = vst.msk [vmem:[#allocation2 + $0x8] sm:$0xff] %vm1046, %v5528
    %5531 = vrot.lane.b32.xlu0 %v4178, 104
    %v5532 = vpop.permute.xlu0 %5531
    %5533 = vrot.lane.b32.xlu0 %v4259, 104
    %v5534 = vpop.permute.xlu0 %5533
    %v5535 = vsel %vm537, %v5532, 0
    %v5537 = vsel %vm537, %v5534, 0
    %5539 = vmatprep.subr.mxu0 0.0
    %5540 = vmatpush1.xpose.msra.mxu0 %v5537
    %5541 = vmatprep.subr.mxu0 0.0
    %5542 = vmatpush1.xpose.msra.mxu0 0.0
    %5543 = vmatprep.subr.mxu0 0.0
    %5544 = vmatpush1.xpose.msra.mxu0 0.0
    %5545 = vmatprep.subr.mxu0 0.0
    %5546 = vmatpush1.xpose.msra.mxu0 0.0
    %5547 = vmatprep.subr.mxu0 0.0
    %5548 = vmatpush1.xpose.msra.mxu0 0.0
    %5549 = vmatprep.subr.mxu0 0.0
    %5550 = vmatpush1.xpose.msra.mxu0 0.0
    %5551 = vmatprep.subr.mxu0 0.0
    %5552 = vmatpush1.xpose.msra.mxu0 0.0
    %5553 = vmatprep.subr.mxu0 0.0
    %5554 = vmatpush1.xpose.msra.mxu0 0.0
    %5555 = vmatprep.subr.mxu0 0.0
    %5556 = vmatpush1.xpose.msra.mxu0 0.0
    %5557 = vmatprep.subr.mxu0 0.0
    %5558 = vmatpush1.xpose.msra.mxu0 0.0
    %5559 = vmatprep.subr.mxu0 0.0
    %5560 = vmatpush1.xpose.msra.mxu0 0.0
    %5561 = vmatprep.subr.mxu0 0.0
    %5562 = vmatpush1.xpose.msra.mxu0 0.0
    %5563 = vmatprep.subr.mxu0 0.0
    %5564 = vmatpush1.xpose.msra.mxu0 0.0
    %5565 = vmatprep.subr.mxu0 0.0
    %5566 = vmatpush1.xpose.msra.mxu0 0.0
    %5567 = vmatprep.subr.mxu0 0.0
    %5568 = vmatpush1.xpose.msra.mxu0 0.0
    %5569 = vmatprep.subr.mxu0 0.0
    %5570 = vmatpush1.xpose.msra.mxu0 0.0
    %5571 = vmatprep.subr.mxu0 0.0
    %5572 = vmatpush1.xpose.msra.mxu0 0.0
    %5573 = vmatprep.subr.mxu0 0.0
    %5574 = vmatpush1.xpose.msra.mxu0 0.0
    %5575 = vmatprep.subr.mxu0 0.0
    %5576 = vmatpush1.xpose.msra.mxu0 0.0
    %5577 = vmatprep.subr.mxu0 0.0
    %5578 = vmatpush1.xpose.msra.mxu0 0.0
    %5579 = vmatprep.subr.mxu0 0.0
    %5580 = vmatpush1.xpose.msra.mxu0 0.0
    %5581 = vmatprep.subr.mxu0 0.0
    %5582 = vmatpush1.xpose.msra.mxu0 0.0
    %5583 = vmatprep.subr.mxu0 0.0
    %5584 = vmatpush1.xpose.msra.mxu0 0.0
    %5585 = vmatprep.subr.mxu0 0.0
    %5586 = vmatpush1.xpose.msra.mxu0 0.0
    %5587 = vmatprep.subr.mxu0 0.0
    %5588 = vmatpush1.xpose.msra.mxu0 0.0
    %5589 = vmatprep.subr.mxu0 0.0
    %5590 = vmatpush1.xpose.msra.mxu0 0.0
    %5591 = vmatprep.subr.mxu0 0.0
    %5592 = vmatpush1.xpose.msra.mxu0 0.0
    %5593 = vmatprep.subr.mxu0 0.0
    %5594 = vmatpush1.xpose.msra.mxu0 0.0
    %5595 = vmatprep.subr.mxu0 0.0
    %5596 = vmatpush1.xpose.msra.mxu0 0.0
    %5597 = vmatprep.subr.mxu0 0.0
    %5598 = vmatpush1.xpose.msra.mxu0 0.0
    %5599 = vmatprep.subr.mxu0 0.0
    %5600 = vmatpush1.xpose.msra.mxu0 0.0
    %5601 = vmatprep.subr.mxu0 0.0
    %5602 = vmatpush1.xpose.msra.mxu0 0.0
    %5603 = vmatprep.mubr.f32.mxu0 0.0
    %5604 = vmatmul.mubr.f32.gmra.mrb[0].mxu0 %v5535
    %v5605 = vpop.f32.mrb[0].mxu0
    %v5606 = vadd.f32 0.0, %v5605
    %v5607 = vpop.f32.mrb[0].mxu0
    %5608 = vdwg.mxu0
    %v5609 = vmul.f32 %v5606, 0.35355338
    %v5610 = vsel %vm1226, -1e+09, %v5609
    %v5611 = vsel %vm537, %v5610, -inf
    %5612 = vmax.xlane.f32.xlu0 %v5611
    %v5613 = vpop.xlane.xlu0 %5612
    %v5614 = vsub.f32 %v5610, %v5613
    %v5615 = vmul.f32 %v5614, 1.442695
    %v5616 = vpow.pop %v5615
    %v5617 = vsel %vm537, %v5616, 0.0
    %5618 = vadd.xlane.f32.xlu0 %v5617
    %v5619 = vpop.xlane.xlu0 %5618
    %v5620 = vrcp.pop %v5619
    %v5621 = vmul.f32 %v5616, %v5620
    %5622 = vrot.lane.b32.xlu0 %v4340, 104
    %v5623 = vpop.permute.xlu0 %5622
    %v5626 = vsel %vm537, %v5621, 0
    %5628 = vmatprep.subr.mxu0 0.0
    %5629 = vmatpush1.msra.mxu0 %v5623
    %5630 = vmatprep.subr.mxu0 0.0
    %5631 = vmatpush1.msra.mxu0 0.0
    %5632 = vmatprep.subr.mxu0 0.0
    %5633 = vmatpush1.msra.mxu0 0.0
    %5634 = vmatprep.subr.mxu0 0.0
    %5635 = vmatpush1.msra.mxu0 0.0
    %5636 = vmatprep.subr.mxu0 0.0
    %5637 = vmatpush1.msra.mxu0 0.0
    %5638 = vmatprep.subr.mxu0 0.0
    %5639 = vmatpush1.msra.mxu0 0.0
    %5640 = vmatprep.subr.mxu0 0.0
    %5641 = vmatpush1.msra.mxu0 0.0
    %5642 = vmatprep.subr.mxu0 0.0
    %5643 = vmatpush1.msra.mxu0 0.0
    %5644 = vmatprep.subr.mxu0 0.0
    %5645 = vmatpush1.msra.mxu0 0.0
    %5646 = vmatprep.subr.mxu0 0.0
    %5647 = vmatpush1.msra.mxu0 0.0
    %5648 = vmatprep.subr.mxu0 0.0
    %5649 = vmatpush1.msra.mxu0 0.0
    %5650 = vmatprep.subr.mxu0 0.0
    %5651 = vmatpush1.msra.mxu0 0.0
    %5652 = vmatprep.subr.mxu0 0.0
    %5653 = vmatpush1.msra.mxu0 0.0
    %5654 = vmatprep.subr.mxu0 0.0
    %5655 = vmatpush1.msra.mxu0 0.0
    %5656 = vmatprep.subr.mxu0 0.0
    %5657 = vmatpush1.msra.mxu0 0.0
    %5658 = vmatprep.subr.mxu0 0.0
    %5659 = vmatpush1.msra.mxu0 0.0
    %5660 = vmatprep.subr.mxu0 0.0
    %5661 = vmatpush1.msra.mxu0 0.0
    %5662 = vmatprep.subr.mxu0 0.0
    %5663 = vmatpush1.msra.mxu0 0.0
    %5664 = vmatprep.subr.mxu0 0.0
    %5665 = vmatpush1.msra.mxu0 0.0
    %5666 = vmatprep.subr.mxu0 0.0
    %5667 = vmatpush1.msra.mxu0 0.0
    %5668 = vmatprep.subr.mxu0 0.0
    %5669 = vmatpush1.msra.mxu0 0.0
    %5670 = vmatprep.subr.mxu0 0.0
    %5671 = vmatpush1.msra.mxu0 0.0
    %5672 = vmatprep.subr.mxu0 0.0
    %5673 = vmatpush1.msra.mxu0 0.0
    %5674 = vmatprep.subr.mxu0 0.0
    %5675 = vmatpush1.msra.mxu0 0.0
    %5676 = vmatprep.subr.mxu0 0.0
    %5677 = vmatpush1.msra.mxu0 0.0
    %5678 = vmatprep.subr.mxu0 0.0
    %5679 = vmatpush1.msra.mxu0 0.0
    %5680 = vmatprep.subr.mxu0 0.0
    %5681 = vmatpush1.msra.mxu0 0.0
    %5682 = vmatprep.subr.mxu0 0.0
    %5683 = vmatpush1.msra.mxu0 0.0
    %5684 = vmatprep.subr.mxu0 0.0
    %5685 = vmatpush1.msra.mxu0 0.0
    %5686 = vmatprep.subr.mxu0 0.0
    %5687 = vmatpush1.msra.mxu0 0.0
    %5688 = vmatprep.subr.mxu0 0.0
    %5689 = vmatpush1.msra.mxu0 0.0
    %5690 = vmatprep.subr.mxu0 0.0
    %5691 = vmatpush1.msra.mxu0 0.0
    %5692 = vmatprep.mubr.f32.mxu0 0.0
    %5693 = vmatmul.mubr.f32.gmra.mrb[0].mxu0 %v5626
    %v5694 = vpop.f32.mrb[0].mxu0
    %v5695 = vadd.f32 0.0, %v5694
    %v5696 = vpop.f32.mrb[0].mxu0
    %5697 = vdwg.mxu0
    %5699 = vrot.lane.b32.xlu0 %v5695, 24
    %v5700 = vpop.permute.xlu0 %5699
    %5702 = vst.msk [vmem:[#allocation2 + $0x8] sm:$0xff] %vm1219, %v5700
    %v5703 = vld [vmem:[#allocation2] sm:$0xff]
    %v5704 = vld [vmem:[#allocation2 + $0x8] sm:$0xff]
    %v5706 = vlaneseq
    %v5707 = vshrl.u32 %v5706, 7
    %v5708 = vsub.s32 0, %v5707
    %v5709 = vrot.slane %v4089, %v5708
    %v5712 = vsel %vm280, %v5703, 0
    %v5715 = vsel %vm280, %v5704, 0
    %5717 = vmatprep.subr.mxu0 0.0
    %5718 = vmatpush1.msra.mxu0 %v4084
    %5719 = vmatprep.subr.mxu0 0.0
    %5720 = vmatpush1.msra.mxu0 %v4085
    %5721 = vmatprep.subr.mxu0 0.0
    %5722 = vmatpush1.msra.mxu0 %v4086
    %5723 = vmatprep.subr.mxu0 0.0
    %5724 = vmatpush1.msra.mxu0 %v4087
    %5725 = vmatprep.subr.mxu0 0.0
    %5726 = vmatpush1.msra.mxu0 0.0
    %5727 = vmatprep.subr.mxu0 0.0
    %5728 = vmatpush1.msra.mxu0 0.0
    %5729 = vmatprep.subr.mxu0 0.0
    %5730 = vmatpush1.msra.mxu0 0.0
    %5731 = vmatprep.subr.mxu0 0.0
    %5732 = vmatpush1.msra.mxu0 0.0
    %5733 = vmatprep.subr.mxu0 0.0
    %5734 = vmatpush1.msra.mxu0 0.0
    %5735 = vmatprep.subr.mxu0 0.0
    %5736 = vmatpush1.msra.mxu0 0.0
    %5737 = vmatprep.subr.mxu0 0.0
    %5738 = vmatpush1.msra.mxu0 0.0
    %5739 = vmatprep.subr.mxu0 0.0
    %5740 = vmatpush1.msra.mxu0 0.0
    %5741 = vmatprep.subr.mxu0 0.0
    %5742 = vmatpush1.msra.mxu0 0.0
    %5743 = vmatprep.subr.mxu0 0.0
    %5744 = vmatpush1.msra.mxu0 0.0
    %5745 = vmatprep.subr.mxu0 0.0
    %5746 = vmatpush1.msra.mxu0 0.0
    %5747 = vmatprep.subr.mxu0 0.0
    %5748 = vmatpush1.msra.mxu0 0.0
    %5749 = vmatprep.subr.mxu0 0.0
    %5750 = vmatpush1.msra.mxu0 0.0
    %5751 = vmatprep.subr.mxu0 0.0
    %5752 = vmatpush1.msra.mxu0 0.0
    %5753 = vmatprep.subr.mxu0 0.0
    %5754 = vmatpush1.msra.mxu0 0.0
    %5755 = vmatprep.subr.mxu0 0.0
    %5756 = vmatpush1.msra.mxu0 0.0
    %5757 = vmatprep.subr.mxu0 0.0
    %5758 = vmatpush1.msra.mxu0 0.0
    %5759 = vmatprep.subr.mxu0 0.0
    %5760 = vmatpush1.msra.mxu0 0.0
    %5761 = vmatprep.subr.mxu0 0.0
    %5762 = vmatpush1.msra.mxu0 0.0
    %5763 = vmatprep.subr.mxu0 0.0
    %5764 = vmatpush1.msra.mxu0 0.0
    %5765 = vmatprep.subr.mxu0 0.0
    %5766 = vmatpush1.msra.mxu0 0.0
    %5767 = vmatprep.subr.mxu0 0.0
    %5768 = vmatpush1.msra.mxu0 0.0
    %5769 = vmatprep.subr.mxu0 0.0
    %5770 = vmatpush1.msra.mxu0 0.0
    %5771 = vmatprep.subr.mxu0 0.0
    %5772 = vmatpush1.msra.mxu0 0.0
    %5773 = vmatprep.subr.mxu0 0.0
    %5774 = vmatpush1.msra.mxu0 0.0
    %5775 = vmatprep.subr.mxu0 0.0
    %5776 = vmatpush1.msra.mxu0 0.0
    %5777 = vmatprep.subr.mxu0 0.0
    %5778 = vmatpush1.msra.mxu0 0.0
    %5779 = vmatprep.subr.mxu0 0.0
    %5780 = vmatpush1.msra.mxu0 0.0
    %5781 = vmatprep.mubr.f32.mxu0 0.0
    %5782 = vmatmul.mubr.f32.gmra.mrb[0].mxu0 %v5712
    %v5783 = vpop.f32.mrb[0].mxu0
    %v5784 = vadd.f32 %v5709, %v5783
    %v5785 = vpop.f32.mrb[0].mxu0
    %5786 = vmatprep.mubr.f32.mxu0 0.0
    %5787 = vmatmul.mubr.f32.gmra.mrb[0].mxu0 %v5715
    %v5788 = vpop.f32.mrb[0].mxu0
    %v5789 = vadd.f32 %v5709, %v5788
    %v5790 = vpop.f32.mrb[0].mxu0
    %5791 = vdwg.mxu0
    %v5792 = vadd.f32 %v5784, %v4060
    %v5793 = vadd.f32 %v5789, %v4061
    %v5794 = vsel %vm280, %v5792, 0.0
    %5795 = vadd.xlane.f32.xlu0 %v5794
    %v5796 = vpop.xlane.xlu0 %5795
    %v5797 = vsel %vm280, %v5793, 0.0
    %5798 = vadd.xlane.f32.xlu0 %v5797
    %v5799 = vpop.xlane.xlu0 %5798
    %v5800 = vmul.f32 %v5796, %v2004
    %v5801 = vmul.f32 %v5799, %v2004
    %v5802 = vsub.f32 %v5792, %v5800
    %v5803 = vsub.f32 %v5793, %v5801
    %v5804 = vmul.f32 %v5802, %v5802
    %v5805 = vmul.f32 %v5803, %v5803
    %v5806 = vsel %vm280, %v5804, 0.0
    %5807 = vadd.xlane.f32.xlu0 %v5806
    %v5808 = vpop.xlane.xlu0 %5807
    %v5809 = vsel %vm280, %v5805, 0.0
    %5810 = vadd.xlane.f32.xlu0 %v5809
    %v5811 = vpop.xlane.xlu0 %5810
    %v5812 = vmul.f32 %v5808, %v2004
    %v5813 = vmul.f32 %v5811, %v2004
    %v5814 = vadd.f32 %v5812, 1e-05
    %v5815 = vadd.f32 %v5813, 1e-05
    %v5816 = vrsqrt.pop %v5814
    %v5817 = vrsqrt.pop %v5815
    %v5818 = vmul.f32 %v5802, %v5816
    %v5819 = vmul.f32 %v5803, %v5817
    %v5821 = vlaneseq
    %v5822 = vshrl.u32 %v5821, 7
    %v5823 = vsub.s32 0, %v5822
    %v5824 = vrot.slane %v4091, %v5823
    %v5826 = vmul.f32 %v5818, %v5824
    %v5827 = vmul.f32 %v5819, %v5824
    %v5829 = vlaneseq
    %v5830 = vshrl.u32 %v5829, 7
    %v5831 = vsub.s32 0, %v5830
    %v5832 = vrot.slane %v4093, %v5831
    %v5834 = vadd.f32 %v5826, %v5832
    %v5835 = vadd.f32 %v5827, %v5832
    %s5836 = scalar_lea.vmem %s31, 32
    %v5837 = vld [vmem:[%s5836] sm:$0xff]
    %v5838 = vld [vmem:[%s5836 + $0x8] sm:$0xff]
    %v5839 = vld [vmem:[%s5836 + $0x10] sm:$0xff]
    %v5840 = vld [vmem:[%s5836 + $0x18] sm:$0xff]
    %s5841 = scalar_lea.vmem %s33, 32
    %v5842 = vld [vmem:[%s5841] sm:$0xff]
    %v5843 = vld [vmem:[%s5841 + $0x8] sm:$0xff]
    %v5844 = vld [vmem:[%s5841 + $0x10] sm:$0xff]
    %v5845 = vld [vmem:[%s5841 + $0x18] sm:$0xff]
    %s5846 = scalar_lea.vmem [#allocation6], 32
    %v5847 = vld [vmem:[%s5846] sm:$0xff]
    %v5848 = vld [vmem:[%s5846 + $0x8] sm:$0xff]
    %v5849 = vld [vmem:[%s5846 + $0x10] sm:$0xff]
    %v5850 = vld [vmem:[%s5846 + $0x18] sm:$0xff]
    %s5851 = scalar_lea.vmem [#allocation8], 1
    %v5852 = vld [vmem:[%s5851] sm:$0x1]
    %s5853 = scalar_lea.vmem [#allocation9], 1
    %v5854 = vld [vmem:[%s5853] sm:$0x1]
    %s5855 = scalar_lea.vmem %s41, 1
    %v5856 = vld [vmem:[%s5855] sm:$0x1]
    %s5857 = scalar_lea.vmem [#allocation11], 32
    %v5858 = vld [vmem:[%s5857] sm:$0xff]
    %v5859 = vld [vmem:[%s5857 + $0x8] sm:$0xff]
    %v5860 = vld [vmem:[%s5857 + $0x10] sm:$0xff]
    %v5861 = vld [vmem:[%s5857 + $0x18] sm:$0xff]
    %s5862 = scalar_lea.vmem [#allocation12], 1
    %v5863 = vld [vmem:[%s5862] sm:$0x1]
    %s5864 = scalar_lea.vmem %s47, 1
    %v5865 = vld [vmem:[%s5864] sm:$0x1]
    %s5866 = scalar_lea.vmem [#allocation14], 1
    %v5867 = vld [vmem:[%s5866] sm:$0x1]
    %v5869 = vlaneseq
    %v5870 = vshrl.u32 %v5869, 7
    %v5871 = vsub.s32 0, %v5870
    %v5872 = vrot.slane %v5852, %v5871
    %v5875 = vsel %vm280, %v5834, 0
    %v5878 = vsel %vm280, %v5835, 0
    %5880 = vmatprep.subr.mxu0 0.0
    %5881 = vmatpush1.msra.mxu0 %v5837
    %5882 = vmatprep.subr.mxu0 0.0
    %5883 = vmatpush1.msra.mxu0 %v5838
    %5884 = vmatprep.subr.mxu0 0.0
    %5885 = vmatpush1.msra.mxu0 %v5839
    %5886 = vmatprep.subr.mxu0 0.0
    %5887 = vmatpush1.msra.mxu0 %v5840
    %5888 = vmatprep.subr.mxu0 0.0
    %5889 = vmatpush1.msra.mxu0 0.0
    %5890 = vmatprep.subr.mxu0 0.0
    %5891 = vmatpush1.msra.mxu0 0.0
    %5892 = vmatprep.subr.mxu0 0.0
    %5893 = vmatpush1.msra.mxu0 0.0
    %5894 = vmatprep.subr.mxu0 0.0
    %5895 = vmatpush1.msra.mxu0 0.0
    %5896 = vmatprep.subr.mxu0 0.0
    %5897 = vmatpush1.msra.mxu0 0.0
    %5898 = vmatprep.subr.mxu0 0.0
    %5899 = vmatpush1.msra.mxu0 0.0
    %5900 = vmatprep.subr.mxu0 0.0
    %5901 = vmatpush1.msra.mxu0 0.0
    %5902 = vmatprep.subr.mxu0 0.0
    %5903 = vmatpush1.msra.mxu0 0.0
    %5904 = vmatprep.subr.mxu0 0.0
    %5905 = vmatpush1.msra.mxu0 0.0
    %5906 = vmatprep.subr.mxu0 0.0
    %5907 = vmatpush1.msra.mxu0 0.0
    %5908 = vmatprep.subr.mxu0 0.0
    %5909 = vmatpush1.msra.mxu0 0.0
    %5910 = vmatprep.subr.mxu0 0.0
    %5911 = vmatpush1.msra.mxu0 0.0
    %5912 = vmatprep.subr.mxu0 0.0
    %5913 = vmatpush1.msra.mxu0 0.0
    %5914 = vmatprep.subr.mxu0 0.0
    %5915 = vmatpush1.msra.mxu0 0.0
    %5916 = vmatprep.subr.mxu0 0.0
    %5917 = vmatpush1.msra.mxu0 0.0
    %5918 = vmatprep.subr.mxu0 0.0
    %5919 = vmatpush1.msra.mxu0 0.0
    %5920 = vmatprep.subr.mxu0 0.0
    %5921 = vmatpush1.msra.mxu0 0.0
    %5922 = vmatprep.subr.mxu0 0.0
    %5923 = vmatpush1.msra.mxu0 0.0
    %5924 = vmatprep.subr.mxu0 0.0
    %5925 = vmatpush1.msra.mxu0 0.0
    %5926 = vmatprep.subr.mxu0 0.0
    %5927 = vmatpush1.msra.mxu0 0.0
    %5928 = vmatprep.subr.mxu0 0.0
    %5929 = vmatpush1.msra.mxu0 0.0
    %5930 = vmatprep.subr.mxu0 0.0
    %5931 = vmatpush1.msra.mxu0 0.0
    %5932 = vmatprep.subr.mxu0 0.0
    %5933 = vmatpush1.msra.mxu0 0.0
    %5934 = vmatprep.subr.mxu0 0.0
    %5935 = vmatpush1.msra.mxu0 0.0
    %5936 = vmatprep.subr.mxu0 0.0
    %5937 = vmatpush1.msra.mxu0 0.0
    %5938 = vmatprep.subr.mxu0 0.0
    %5939 = vmatpush1.msra.mxu0 0.0
    %5940 = vmatprep.subr.mxu0 0.0
    %5941 = vmatpush1.msra.mxu0 0.0
    %5942 = vmatprep.subr.mxu0 0.0
    %5943 = vmatpush1.msra.mxu0 0.0
    %5944 = vmatprep.mubr.f32.mxu0 0.0
    %5945 = vmatmul.mubr.f32.gmra.mrb[0].mxu0 %v5875
    %v5946 = vpop.f32.mrb[0].mxu0
    %v5947 = vadd.f32 %v5872, %v5946
    %v5948 = vpop.f32.mrb[0].mxu0
    %5949 = vmatprep.mubr.f32.mxu0 0.0
    %5950 = vmatmul.mubr.f32.gmra.mrb[0].mxu0 %v5878
    %v5951 = vpop.f32.mrb[0].mxu0
    %v5952 = vadd.f32 %v5872, %v5951
    %v5953 = vpop.f32.mrb[0].mxu0
    %5954 = vdwg.mxu0
    %v5956 = vlaneseq
    %v5957 = vshrl.u32 %v5956, 7
    %v5958 = vsub.s32 0, %v5957
    %v5959 = vrot.slane %v5854, %v5958
    %5961 = vmatprep.subr.mxu0 0.0
    %5962 = vmatpush1.msra.mxu0 %v5842
    %5963 = vmatprep.subr.mxu0 0.0
    %5964 = vmatpush1.msra.mxu0 %v5843
    %5965 = vmatprep.subr.mxu0 0.0
    %5966 = vmatpush1.msra.mxu0 %v5844
    %5967 = vmatprep.subr.mxu0 0.0
    %5968 = vmatpush1.msra.mxu0 %v5845
    %5969 = vmatprep.subr.mxu0 0.0
    %5970 = vmatpush1.msra.mxu0 0.0
    %5971 = vmatprep.subr.mxu0 0.0
    %5972 = vmatpush1.msra.mxu0 0.0
    %5973 = vmatprep.subr.mxu0 0.0
    %5974 = vmatpush1.msra.mxu0 0.0
    %5975 = vmatprep.subr.mxu0 0.0
    %5976 = vmatpush1.msra.mxu0 0.0
    %5977 = vmatprep.subr.mxu0 0.0
    %5978 = vmatpush1.msra.mxu0 0.0
    %5979 = vmatprep.subr.mxu0 0.0
    %5980 = vmatpush1.msra.mxu0 0.0
    %5981 = vmatprep.subr.mxu0 0.0
    %5982 = vmatpush1.msra.mxu0 0.0
    %5983 = vmatprep.subr.mxu0 0.0
    %5984 = vmatpush1.msra.mxu0 0.0
    %5985 = vmatprep.subr.mxu0 0.0
    %5986 = vmatpush1.msra.mxu0 0.0
    %5987 = vmatprep.subr.mxu0 0.0
    %5988 = vmatpush1.msra.mxu0 0.0
    %5989 = vmatprep.subr.mxu0 0.0
    %5990 = vmatpush1.msra.mxu0 0.0
    %5991 = vmatprep.subr.mxu0 0.0
    %5992 = vmatpush1.msra.mxu0 0.0
    %5993 = vmatprep.subr.mxu0 0.0
    %5994 = vmatpush1.msra.mxu0 0.0
    %5995 = vmatprep.subr.mxu0 0.0
    %5996 = vmatpush1.msra.mxu0 0.0
    %5997 = vmatprep.subr.mxu0 0.0
    %5998 = vmatpush1.msra.mxu0 0.0
    %5999 = vmatprep.subr.mxu0 0.0
    %6000 = vmatpush1.msra.mxu0 0.0
    %6001 = vmatprep.subr.mxu0 0.0
    %6002 = vmatpush1.msra.mxu0 0.0
    %6003 = vmatprep.subr.mxu0 0.0
    %6004 = vmatpush1.msra.mxu0 0.0
    %6005 = vmatprep.subr.mxu0 0.0
    %6006 = vmatpush1.msra.mxu0 0.0
    %6007 = vmatprep.subr.mxu0 0.0
    %6008 = vmatpush1.msra.mxu0 0.0
    %6009 = vmatprep.subr.mxu0 0.0
    %6010 = vmatpush1.msra.mxu0 0.0
    %6011 = vmatprep.subr.mxu0 0.0
    %6012 = vmatpush1.msra.mxu0 0.0
    %6013 = vmatprep.subr.mxu0 0.0
    %6014 = vmatpush1.msra.mxu0 0.0
    %6015 = vmatprep.subr.mxu0 0.0
    %6016 = vmatpush1.msra.mxu0 0.0
    %6017 = vmatprep.subr.mxu0 0.0
    %6018 = vmatpush1.msra.mxu0 0.0
    %6019 = vmatprep.subr.mxu0 0.0
    %6020 = vmatpush1.msra.mxu0 0.0
    %6021 = vmatprep.subr.mxu0 0.0
    %6022 = vmatpush1.msra.mxu0 0.0
    %6023 = vmatprep.subr.mxu0 0.0
    %6024 = vmatpush1.msra.mxu0 0.0
    %6025 = vmatprep.mubr.f32.mxu0 0.0
    %6026 = vmatmul.mubr.f32.gmra.mrb[0].mxu0 %v2157
    %v6027 = vpop.f32.mrb[0].mxu0
    %v6028 = vadd.f32 %v5959, %v6027
    %v6029 = vpop.f32.mrb[0].mxu0
    %6030 = vmatprep.mubr.f32.mxu0 0.0
    %6031 = vmatmul.mubr.f32.gmra.mrb[0].mxu0 %v2160
    %v6032 = vpop.f32.mrb[0].mxu0
    %v6033 = vadd.f32 %v5959, %v6032
    %v6034 = vpop.f32.mrb[0].mxu0
    %6035 = vdwg.mxu0
    %v6037 = vlaneseq
    %v6038 = vshrl.u32 %v6037, 7
    %v6039 = vsub.s32 0, %v6038
    %v6040 = vrot.slane %v5856, %v6039
    %6042 = vmatprep.subr.mxu0 0.0
    %6043 = vmatpush1.msra.mxu0 %v5847
    %6044 = vmatprep.subr.mxu0 0.0
    %6045 = vmatpush1.msra.mxu0 %v5848
    %6046 = vmatprep.subr.mxu0 0.0
    %6047 = vmatpush1.msra.mxu0 %v5849
    %6048 = vmatprep.subr.mxu0 0.0
    %6049 = vmatpush1.msra.mxu0 %v5850
    %6050 = vmatprep.subr.mxu0 0.0
    %6051 = vmatpush1.msra.mxu0 0.0
    %6052 = vmatprep.subr.mxu0 0.0
    %6053 = vmatpush1.msra.mxu0 0.0
    %6054 = vmatprep.subr.mxu0 0.0
    %6055 = vmatpush1.msra.mxu0 0.0
    %6056 = vmatprep.subr.mxu0 0.0
    %6057 = vmatpush1.msra.mxu0 0.0
    %6058 = vmatprep.subr.mxu0 0.0
    %6059 = vmatpush1.msra.mxu0 0.0
    %6060 = vmatprep.subr.mxu0 0.0
    %6061 = vmatpush1.msra.mxu0 0.0
    %6062 = vmatprep.subr.mxu0 0.0
    %6063 = vmatpush1.msra.mxu0 0.0
    %6064 = vmatprep.subr.mxu0 0.0
    %6065 = vmatpush1.msra.mxu0 0.0
    %6066 = vmatprep.subr.mxu0 0.0
    %6067 = vmatpush1.msra.mxu0 0.0
    %6068 = vmatprep.subr.mxu0 0.0
    %6069 = vmatpush1.msra.mxu0 0.0
    %6070 = vmatprep.subr.mxu0 0.0
    %6071 = vmatpush1.msra.mxu0 0.0
    %6072 = vmatprep.subr.mxu0 0.0
    %6073 = vmatpush1.msra.mxu0 0.0
    %6074 = vmatprep.subr.mxu0 0.0
    %6075 = vmatpush1.msra.mxu0 0.0
    %6076 = vmatprep.subr.mxu0 0.0
    %6077 = vmatpush1.msra.mxu0 0.0
    %6078 = vmatprep.subr.mxu0 0.0
    %6079 = vmatpush1.msra.mxu0 0.0
    %6080 = vmatprep.subr.mxu0 0.0
    %6081 = vmatpush1.msra.mxu0 0.0
    %6082 = vmatprep.subr.mxu0 0.0
    %6083 = vmatpush1.msra.mxu0 0.0
    %6084 = vmatprep.subr.mxu0 0.0
    %6085 = vmatpush1.msra.mxu0 0.0
    %6086 = vmatprep.subr.mxu0 0.0
    %6087 = vmatpush1.msra.mxu0 0.0
    %6088 = vmatprep.subr.mxu0 0.0
    %6089 = vmatpush1.msra.mxu0 0.0
    %6090 = vmatprep.subr.mxu0 0.0
    %6091 = vmatpush1.msra.mxu0 0.0
    %6092 = vmatprep.subr.mxu0 0.0
    %6093 = vmatpush1.msra.mxu0 0.0
    %6094 = vmatprep.subr.mxu0 0.0
    %6095 = vmatpush1.msra.mxu0 0.0
    %6096 = vmatprep.subr.mxu0 0.0
    %6097 = vmatpush1.msra.mxu0 0.0
    %6098 = vmatprep.subr.mxu0 0.0
    %6099 = vmatpush1.msra.mxu0 0.0
    %6100 = vmatprep.subr.mxu0 0.0
    %6101 = vmatpush1.msra.mxu0 0.0
    %6102 = vmatprep.subr.mxu0 0.0
    %6103 = vmatpush1.msra.mxu0 0.0
    %6104 = vmatprep.subr.mxu0 0.0
    %6105 = vmatpush1.msra.mxu0 0.0
    %6106 = vmatprep.mubr.f32.mxu0 0.0
    %6107 = vmatmul.mubr.f32.gmra.mrb[0].mxu0 %v2157
    %v6108 = vpop.f32.mrb[0].mxu0
    %v6109 = vadd.f32 %v6040, %v6108
    %v6110 = vpop.f32.mrb[0].mxu0
    %6111 = vmatprep.mubr.f32.mxu0 0.0
    %6112 = vmatmul.mubr.f32.gmra.mrb[0].mxu0 %v2160
    %v6113 = vpop.f32.mrb[0].mxu0
    %v6114 = vadd.f32 %v6040, %v6113
    %v6115 = vpop.f32.mrb[0].mxu0
    %6116 = vdwg.mxu0
    %v6118 = vsel %vm537, %v5947, 0
    %v6121 = vsel %vm537, %v6028, 0
    %6123 = vmatprep.subr.mxu0 0.0
    %6124 = vmatpush1.xpose.msra.mxu0 %v6121
    %6125 = vmatprep.subr.mxu0 0.0
    %6126 = vmatpush1.xpose.msra.mxu0 0.0
    %6127 = vmatprep.subr.mxu0 0.0
    %6128 = vmatpush1.xpose.msra.mxu0 0.0
    %6129 = vmatprep.subr.mxu0 0.0
    %6130 = vmatpush1.xpose.msra.mxu0 0.0
    %6131 = vmatprep.subr.mxu0 0.0
    %6132 = vmatpush1.xpose.msra.mxu0 0.0
    %6133 = vmatprep.subr.mxu0 0.0
    %6134 = vmatpush1.xpose.msra.mxu0 0.0
    %6135 = vmatprep.subr.mxu0 0.0
    %6136 = vmatpush1.xpose.msra.mxu0 0.0
    %6137 = vmatprep.subr.mxu0 0.0
    %6138 = vmatpush1.xpose.msra.mxu0 0.0
    %6139 = vmatprep.subr.mxu0 0.0
    %6140 = vmatpush1.xpose.msra.mxu0 0.0
    %6141 = vmatprep.subr.mxu0 0.0
    %6142 = vmatpush1.xpose.msra.mxu0 0.0
    %6143 = vmatprep.subr.mxu0 0.0
    %6144 = vmatpush1.xpose.msra.mxu0 0.0
    %6145 = vmatprep.subr.mxu0 0.0
    %6146 = vmatpush1.xpose.msra.mxu0 0.0
    %6147 = vmatprep.subr.mxu0 0.0
    %6148 = vmatpush1.xpose.msra.mxu0 0.0
    %6149 = vmatprep.subr.mxu0 0.0
    %6150 = vmatpush1.xpose.msra.mxu0 0.0
    %6151 = vmatprep.subr.mxu0 0.0
    %6152 = vmatpush1.xpose.msra.mxu0 0.0
    %6153 = vmatprep.subr.mxu0 0.0
    %6154 = vmatpush1.xpose.msra.mxu0 0.0
    %6155 = vmatprep.subr.mxu0 0.0
    %6156 = vmatpush1.xpose.msra.mxu0 0.0
    %6157 = vmatprep.subr.mxu0 0.0
    %6158 = vmatpush1.xpose.msra.mxu0 0.0
    %6159 = vmatprep.subr.mxu0 0.0
    %6160 = vmatpush1.xpose.msra.mxu0 0.0
    %6161 = vmatprep.subr.mxu0 0.0
    %6162 = vmatpush1.xpose.msra.mxu0 0.0
    %6163 = vmatprep.subr.mxu0 0.0
    %6164 = vmatpush1.xpose.msra.mxu0 0.0
    %6165 = vmatprep.subr.mxu0 0.0
    %6166 = vmatpush1.xpose.msra.mxu0 0.0
    %6167 = vmatprep.subr.mxu0 0.0
    %6168 = vmatpush1.xpose.msra.mxu0 0.0
    %6169 = vmatprep.subr.mxu0 0.0
    %6170 = vmatpush1.xpose.msra.mxu0 0.0
    %6171 = vmatprep.subr.mxu0 0.0
    %6172 = vmatpush1.xpose.msra.mxu0 0.0
    %6173 = vmatprep.subr.mxu0 0.0
    %6174 = vmatpush1.xpose.msra.mxu0 0.0
    %6175 = vmatprep.subr.mxu0 0.0
    %6176 = vmatpush1.xpose.msra.mxu0 0.0
    %6177 = vmatprep.subr.mxu0 0.0
    %6178 = vmatpush1.xpose.msra.mxu0 0.0
    %6179 = vmatprep.subr.mxu0 0.0
    %6180 = vmatpush1.xpose.msra.mxu0 0.0
    %6181 = vmatprep.subr.mxu0 0.0
    %6182 = vmatpush1.xpose.msra.mxu0 0.0
    %6183 = vmatprep.subr.mxu0 0.0
    %6184 = vmatpush1.xpose.msra.mxu0 0.0
    %6185 = vmatprep.subr.mxu0 0.0
    %6186 = vmatpush1.xpose.msra.mxu0 0.0
    %6187 = vmatprep.mubr.f32.mxu0 0.0
    %6188 = vmatmul.mubr.f32.gmra.mrb[0].mxu0 %v6118
    %v6189 = vpop.f32.mrb[0].mxu0
    %v6190 = vadd.f32 0.0, %v6189
    %v6191 = vpop.f32.mrb[0].mxu0
    %6192 = vdwg.mxu0
    %v6193 = vmul.f32 %v6190, 0.35355338
    %v6194 = vsel %vm2325, -1e+09, %v6193
    %v6195 = vsel %vm537, %v6194, -inf
    %6196 = vmax.xlane.f32.xlu0 %v6195
    %v6197 = vpop.xlane.xlu0 %6196
    %v6198 = vsub.f32 %v6194, %v6197
    %v6199 = vmul.f32 %v6198, 1.442695
    %v6200 = vpow.pop %v6199
    %v6201 = vsel %vm537, %v6200, 0.0
    %6202 = vadd.xlane.f32.xlu0 %v6201
    %v6203 = vpop.xlane.xlu0 %6202
    %v6204 = vrcp.pop %v6203
    %v6205 = vmul.f32 %v6200, %v6204
    %v6207 = vsel %vm537, %v6205, 0
    %6209 = vmatprep.subr.mxu0 0.0
    %6210 = vmatpush1.msra.mxu0 %v6109
    %6211 = vmatprep.subr.mxu0 0.0
    %6212 = vmatpush1.msra.mxu0 0.0
    %6213 = vmatprep.subr.mxu0 0.0
    %6214 = vmatpush1.msra.mxu0 0.0
    %6215 = vmatprep.subr.mxu0 0.0
    %6216 = vmatpush1.msra.mxu0 0.0
    %6217 = vmatprep.subr.mxu0 0.0
    %6218 = vmatpush1.msra.mxu0 0.0
    %6219 = vmatprep.subr.mxu0 0.0
    %6220 = vmatpush1.msra.mxu0 0.0
    %6221 = vmatprep.subr.mxu0 0.0
    %6222 = vmatpush1.msra.mxu0 0.0
    %6223 = vmatprep.subr.mxu0 0.0
    %6224 = vmatpush1.msra.mxu0 0.0
    %6225 = vmatprep.subr.mxu0 0.0
    %6226 = vmatpush1.msra.mxu0 0.0
    %6227 = vmatprep.subr.mxu0 0.0
    %6228 = vmatpush1.msra.mxu0 0.0
    %6229 = vmatprep.subr.mxu0 0.0
    %6230 = vmatpush1.msra.mxu0 0.0
    %6231 = vmatprep.subr.mxu0 0.0
    %6232 = vmatpush1.msra.mxu0 0.0
    %6233 = vmatprep.subr.mxu0 0.0
    %6234 = vmatpush1.msra.mxu0 0.0
    %6235 = vmatprep.subr.mxu0 0.0
    %6236 = vmatpush1.msra.mxu0 0.0
    %6237 = vmatprep.subr.mxu0 0.0
    %6238 = vmatpush1.msra.mxu0 0.0
    %6239 = vmatprep.subr.mxu0 0.0
    %6240 = vmatpush1.msra.mxu0 0.0
    %6241 = vmatprep.subr.mxu0 0.0
    %6242 = vmatpush1.msra.mxu0 0.0
    %6243 = vmatprep.subr.mxu0 0.0
    %6244 = vmatpush1.msra.mxu0 0.0
    %6245 = vmatprep.subr.mxu0 0.0
    %6246 = vmatpush1.msra.mxu0 0.0
    %6247 = vmatprep.subr.mxu0 0.0
    %6248 = vmatpush1.msra.mxu0 0.0
    %6249 = vmatprep.subr.mxu0 0.0
    %6250 = vmatpush1.msra.mxu0 0.0
    %6251 = vmatprep.subr.mxu0 0.0
    %6252 = vmatpush1.msra.mxu0 0.0
    %6253 = vmatprep.subr.mxu0 0.0
    %6254 = vmatpush1.msra.mxu0 0.0
    %6255 = vmatprep.subr.mxu0 0.0
    %6256 = vmatpush1.msra.mxu0 0.0
    %6257 = vmatprep.subr.mxu0 0.0
    %6258 = vmatpush1.msra.mxu0 0.0
    %6259 = vmatprep.subr.mxu0 0.0
    %6260 = vmatpush1.msra.mxu0 0.0
    %6261 = vmatprep.subr.mxu0 0.0
    %6262 = vmatpush1.msra.mxu0 0.0
    %6263 = vmatprep.subr.mxu0 0.0
    %6264 = vmatpush1.msra.mxu0 0.0
    %6265 = vmatprep.subr.mxu0 0.0
    %6266 = vmatpush1.msra.mxu0 0.0
    %6267 = vmatprep.subr.mxu0 0.0
    %6268 = vmatpush1.msra.mxu0 0.0
    %6269 = vmatprep.subr.mxu0 0.0
    %6270 = vmatpush1.msra.mxu0 0.0
    %6271 = vmatprep.subr.mxu0 0.0
    %6272 = vmatpush1.msra.mxu0 0.0
    %6273 = vmatprep.mubr.f32.mxu0 0.0
    %6274 = vmatmul.mubr.f32.gmra.mrb[0].mxu0 %v6207
    %v6275 = vpop.f32.mrb[0].mxu0
    %v6276 = vadd.f32 0.0, %v6275
    %v6277 = vpop.f32.mrb[0].mxu0
    %6278 = vdwg.mxu0
    %6279 = vst.msk [vmem:[#allocation2] sm:$0xff] %vm537, %v6276
    %6280 = vrot.lane.b32.xlu0 %v5947, 120
    %v6281 = vpop.permute.xlu0 %6280
    %6282 = vrot.lane.b32.xlu0 %v6028, 120
    %v6283 = vpop.permute.xlu0 %6282
    %v6284 = vsel %vm537, %v6281, 0
    %v6286 = vsel %vm537, %v6283, 0
    %6288 = vmatprep.subr.mxu0 0.0
    %6289 = vmatpush1.xpose.msra.mxu0 %v6286
    %6290 = vmatprep.subr.mxu0 0.0
    %6291 = vmatpush1.xpose.msra.mxu0 0.0
    %6292 = vmatprep.subr.mxu0 0.0
    %6293 = vmatpush1.xpose.msra.mxu0 0.0
    %6294 = vmatprep.subr.mxu0 0.0
    %6295 = vmatpush1.xpose.msra.mxu0 0.0
    %6296 = vmatprep.subr.mxu0 0.0
    %6297 = vmatpush1.xpose.msra.mxu0 0.0
    %6298 = vmatprep.subr.mxu0 0.0
    %6299 = vmatpush1.xpose.msra.mxu0 0.0
    %6300 = vmatprep.subr.mxu0 0.0
    %6301 = vmatpush1.xpose.msra.mxu0 0.0
    %6302 = vmatprep.subr.mxu0 0.0
    %6303 = vmatpush1.xpose.msra.mxu0 0.0
    %6304 = vmatprep.subr.mxu0 0.0
    %6305 = vmatpush1.xpose.msra.mxu0 0.0
    %6306 = vmatprep.subr.mxu0 0.0
    %6307 = vmatpush1.xpose.msra.mxu0 0.0
    %6308 = vmatprep.subr.mxu0 0.0
    %6309 = vmatpush1.xpose.msra.mxu0 0.0
    %6310 = vmatprep.subr.mxu0 0.0
    %6311 = vmatpush1.xpose.msra.mxu0 0.0
    %6312 = vmatprep.subr.mxu0 0.0
    %6313 = vmatpush1.xpose.msra.mxu0 0.0
    %6314 = vmatprep.subr.mxu0 0.0
    %6315 = vmatpush1.xpose.msra.mxu0 0.0
    %6316 = vmatprep.subr.mxu0 0.0
    %6317 = vmatpush1.xpose.msra.mxu0 0.0
    %6318 = vmatprep.subr.mxu0 0.0
    %6319 = vmatpush1.xpose.msra.mxu0 0.0
    %6320 = vmatprep.subr.mxu0 0.0
    %6321 = vmatpush1.xpose.msra.mxu0 0.0
    %6322 = vmatprep.subr.mxu0 0.0
    %6323 = vmatpush1.xpose.msra.mxu0 0.0
    %6324 = vmatprep.subr.mxu0 0.0
    %6325 = vmatpush1.xpose.msra.mxu0 0.0
    %6326 = vmatprep.subr.mxu0 0.0
    %6327 = vmatpush1.xpose.msra.mxu0 0.0
    %6328 = vmatprep.subr.mxu0 0.0
    %6329 = vmatpush1.xpose.msra.mxu0 0.0
    %6330 = vmatprep.subr.mxu0 0.0
    %6331 = vmatpush1.xpose.msra.mxu0 0.0
    %6332 = vmatprep.subr.mxu0 0.0
    %6333 = vmatpush1.xpose.msra.mxu0 0.0
    %6334 = vmatprep.subr.mxu0 0.0
    %6335 = vmatpush1.xpose.msra.mxu0 0.0
    %6336 = vmatprep.subr.mxu0 0.0
    %6337 = vmatpush1.xpose.msra.mxu0 0.0
    %6338 = vmatprep.subr.mxu0 0.0
    %6339 = vmatpush1.xpose.msra.mxu0 0.0
    %6340 = vmatprep.subr.mxu0 0.0
    %6341 = vmatpush1.xpose.msra.mxu0 0.0
    %6342 = vmatprep.subr.mxu0 0.0
    %6343 = vmatpush1.xpose.msra.mxu0 0.0
    %6344 = vmatprep.subr.mxu0 0.0
    %6345 = vmatpush1.xpose.msra.mxu0 0.0
    %6346 = vmatprep.subr.mxu0 0.0
    %6347 = vmatpush1.xpose.msra.mxu0 0.0
    %6348 = vmatprep.subr.mxu0 0.0
    %6349 = vmatpush1.xpose.msra.mxu0 0.0
    %6350 = vmatprep.subr.mxu0 0.0
    %6351 = vmatpush1.xpose.msra.mxu0 0.0
    %6352 = vmatprep.mubr.f32.mxu0 0.0
    %6353 = vmatmul.mubr.f32.gmra.mrb[0].mxu0 %v6284
    %v6354 = vpop.f32.mrb[0].mxu0
    %v6355 = vadd.f32 0.0, %v6354
    %v6356 = vpop.f32.mrb[0].mxu0
    %6357 = vdwg.mxu0
    %v6358 = vmul.f32 %v6355, 0.35355338
    %v6359 = vsel %vm2325, -1e+09, %v6358
    %v6360 = vsel %vm537, %v6359, -inf
    %6361 = vmax.xlane.f32.xlu0 %v6360
    %v6362 = vpop.xlane.xlu0 %6361
    %v6363 = vsub.f32 %v6359, %v6362
    %v6364 = vmul.f32 %v6363, 1.442695
    %v6365 = vpow.pop %v6364
    %v6366 = vsel %vm537, %v6365, 0.0
    %6367 = vadd.xlane.f32.xlu0 %v6366
    %v6368 = vpop.xlane.xlu0 %6367
    %v6369 = vrcp.pop %v6368
    %v6370 = vmul.f32 %v6365, %v6369
    %6372 = vrot.lane.b32.xlu0 %v6109, 120
    %v6373 = vpop.permute.xlu0 %6372
    %v6376 = vsel %vm537, %v6370, 0
    %6378 = vmatprep.subr.mxu0 0.0
    %6379 = vmatpush1.msra.mxu0 %v6373
    %6380 = vmatprep.subr.mxu0 0.0
    %6381 = vmatpush1.msra.mxu0 0.0
    %6382 = vmatprep.subr.mxu0 0.0
    %6383 = vmatpush1.msra.mxu0 0.0
    %6384 = vmatprep.subr.mxu0 0.0
    %6385 = vmatpush1.msra.mxu0 0.0
    %6386 = vmatprep.subr.mxu0 0.0
    %6387 = vmatpush1.msra.mxu0 0.0
    %6388 = vmatprep.subr.mxu0 0.0
    %6389 = vmatpush1.msra.mxu0 0.0
    %6390 = vmatprep.subr.mxu0 0.0
    %6391 = vmatpush1.msra.mxu0 0.0
    %6392 = vmatprep.subr.mxu0 0.0
    %6393 = vmatpush1.msra.mxu0 0.0
    %6394 = vmatprep.subr.mxu0 0.0
    %6395 = vmatpush1.msra.mxu0 0.0
    %6396 = vmatprep.subr.mxu0 0.0
    %6397 = vmatpush1.msra.mxu0 0.0
    %6398 = vmatprep.subr.mxu0 0.0
    %6399 = vmatpush1.msra.mxu0 0.0
    %6400 = vmatprep.subr.mxu0 0.0
    %6401 = vmatpush1.msra.mxu0 0.0
    %6402 = vmatprep.subr.mxu0 0.0
    %6403 = vmatpush1.msra.mxu0 0.0
    %6404 = vmatprep.subr.mxu0 0.0
    %6405 = vmatpush1.msra.mxu0 0.0
    %6406 = vmatprep.subr.mxu0 0.0
    %6407 = vmatpush1.msra.mxu0 0.0
    %6408 = vmatprep.subr.mxu0 0.0
    %6409 = vmatpush1.msra.mxu0 0.0
    %6410 = vmatprep.subr.mxu0 0.0
    %6411 = vmatpush1.msra.mxu0 0.0
    %6412 = vmatprep.subr.mxu0 0.0
    %6413 = vmatpush1.msra.mxu0 0.0
    %6414 = vmatprep.subr.mxu0 0.0
    %6415 = vmatpush1.msra.mxu0 0.0
    %6416 = vmatprep.subr.mxu0 0.0
    %6417 = vmatpush1.msra.mxu0 0.0
    %6418 = vmatprep.subr.mxu0 0.0
    %6419 = vmatpush1.msra.mxu0 0.0
    %6420 = vmatprep.subr.mxu0 0.0
    %6421 = vmatpush1.msra.mxu0 0.0
    %6422 = vmatprep.subr.mxu0 0.0
    %6423 = vmatpush1.msra.mxu0 0.0
    %6424 = vmatprep.subr.mxu0 0.0
    %6425 = vmatpush1.msra.mxu0 0.0
    %6426 = vmatprep.subr.mxu0 0.0
    %6427 = vmatpush1.msra.mxu0 0.0
    %6428 = vmatprep.subr.mxu0 0.0
    %6429 = vmatpush1.msra.mxu0 0.0
    %6430 = vmatprep.subr.mxu0 0.0
    %6431 = vmatpush1.msra.mxu0 0.0
    %6432 = vmatprep.subr.mxu0 0.0
    %6433 = vmatpush1.msra.mxu0 0.0
    %6434 = vmatprep.subr.mxu0 0.0
    %6435 = vmatpush1.msra.mxu0 0.0
    %6436 = vmatprep.subr.mxu0 0.0
    %6437 = vmatpush1.msra.mxu0 0.0
    %6438 = vmatprep.subr.mxu0 0.0
    %6439 = vmatpush1.msra.mxu0 0.0
    %6440 = vmatprep.subr.mxu0 0.0
    %6441 = vmatpush1.msra.mxu0 0.0
    %6442 = vmatprep.mubr.f32.mxu0 0.0
    %6443 = vmatmul.mubr.f32.gmra.mrb[0].mxu0 %v6376
    %v6444 = vpop.f32.mrb[0].mxu0
    %v6445 = vadd.f32 0.0, %v6444
    %v6446 = vpop.f32.mrb[0].mxu0
    %6447 = vdwg.mxu0
    %6449 = vrot.lane.b32.xlu0 %v6445, 8
    %v6450 = vpop.permute.xlu0 %6449
    %6452 = vst.msk [vmem:[#allocation2] sm:$0xff] %vm873, %v6450
    %6453 = vrot.lane.b32.xlu0 %v5947, 112
    %v6454 = vpop.permute.xlu0 %6453
    %6455 = vrot.lane.b32.xlu0 %v6028, 112
    %v6456 = vpop.permute.xlu0 %6455
    %v6457 = vsel %vm537, %v6454, 0
    %v6459 = vsel %vm537, %v6456, 0
    %6461 = vmatprep.subr.mxu0 0.0
    %6462 = vmatpush1.xpose.msra.mxu0 %v6459
    %6463 = vmatprep.subr.mxu0 0.0
    %6464 = vmatpush1.xpose.msra.mxu0 0.0
    %6465 = vmatprep.subr.mxu0 0.0
    %6466 = vmatpush1.xpose.msra.mxu0 0.0
    %6467 = vmatprep.subr.mxu0 0.0
    %6468 = vmatpush1.xpose.msra.mxu0 0.0
    %6469 = vmatprep.subr.mxu0 0.0
    %6470 = vmatpush1.xpose.msra.mxu0 0.0
    %6471 = vmatprep.subr.mxu0 0.0
    %6472 = vmatpush1.xpose.msra.mxu0 0.0
    %6473 = vmatprep.subr.mxu0 0.0
    %6474 = vmatpush1.xpose.msra.mxu0 0.0
    %6475 = vmatprep.subr.mxu0 0.0
    %6476 = vmatpush1.xpose.msra.mxu0 0.0
    %6477 = vmatprep.subr.mxu0 0.0
    %6478 = vmatpush1.xpose.msra.mxu0 0.0
    %6479 = vmatprep.subr.mxu0 0.0
    %6480 = vmatpush1.xpose.msra.mxu0 0.0
    %6481 = vmatprep.subr.mxu0 0.0
    %6482 = vmatpush1.xpose.msra.mxu0 0.0
    %6483 = vmatprep.subr.mxu0 0.0
    %6484 = vmatpush1.xpose.msra.mxu0 0.0
    %6485 = vmatprep.subr.mxu0 0.0
    %6486 = vmatpush1.xpose.msra.mxu0 0.0
    %6487 = vmatprep.subr.mxu0 0.0
    %6488 = vmatpush1.xpose.msra.mxu0 0.0
    %6489 = vmatprep.subr.mxu0 0.0
    %6490 = vmatpush1.xpose.msra.mxu0 0.0
    %6491 = vmatprep.subr.mxu0 0.0
    %6492 = vmatpush1.xpose.msra.mxu0 0.0
    %6493 = vmatprep.subr.mxu0 0.0
    %6494 = vmatpush1.xpose.msra.mxu0 0.0
    %6495 = vmatprep.subr.mxu0 0.0
    %6496 = vmatpush1.xpose.msra.mxu0 0.0
    %6497 = vmatprep.subr.mxu0 0.0
    %6498 = vmatpush1.xpose.msra.mxu0 0.0
    %6499 = vmatprep.subr.mxu0 0.0
    %6500 = vmatpush1.xpose.msra.mxu0 0.0
    %6501 = vmatprep.subr.mxu0 0.0
    %6502 = vmatpush1.xpose.msra.mxu0 0.0
    %6503 = vmatprep.subr.mxu0 0.0
    %6504 = vmatpush1.xpose.msra.mxu0 0.0
    %6505 = vmatprep.subr.mxu0 0.0
    %6506 = vmatpush1.xpose.msra.mxu0 0.0
    %6507 = vmatprep.subr.mxu0 0.0
    %6508 = vmatpush1.xpose.msra.mxu0 0.0
    %6509 = vmatprep.subr.mxu0 0.0
    %6510 = vmatpush1.xpose.msra.mxu0 0.0
    %6511 = vmatprep.subr.mxu0 0.0
    %6512 = vmatpush1.xpose.msra.mxu0 0.0
    %6513 = vmatprep.subr.mxu0 0.0
    %6514 = vmatpush1.xpose.msra.mxu0 0.0
    %6515 = vmatprep.subr.mxu0 0.0
    %6516 = vmatpush1.xpose.msra.mxu0 0.0
    %6517 = vmatprep.subr.mxu0 0.0
    %6518 = vmatpush1.xpose.msra.mxu0 0.0
    %6519 = vmatprep.subr.mxu0 0.0
    %6520 = vmatpush1.xpose.msra.mxu0 0.0
    %6521 = vmatprep.subr.mxu0 0.0
    %6522 = vmatpush1.xpose.msra.mxu0 0.0
    %6523 = vmatprep.subr.mxu0 0.0
    %6524 = vmatpush1.xpose.msra.mxu0 0.0
    %6525 = vmatprep.mubr.f32.mxu0 0.0
    %6526 = vmatmul.mubr.f32.gmra.mrb[0].mxu0 %v6457
    %v6527 = vpop.f32.mrb[0].mxu0
    %v6528 = vadd.f32 0.0, %v6527
    %v6529 = vpop.f32.mrb[0].mxu0
    %6530 = vdwg.mxu0
    %v6531 = vmul.f32 %v6528, 0.35355338
    %v6532 = vsel %vm2325, -1e+09, %v6531
    %v6533 = vsel %vm537, %v6532, -inf
    %6534 = vmax.xlane.f32.xlu0 %v6533
    %v6535 = vpop.xlane.xlu0 %6534
    %v6536 = vsub.f32 %v6532, %v6535
    %v6537 = vmul.f32 %v6536, 1.442695
    %v6538 = vpow.pop %v6537
    %v6539 = vsel %vm537, %v6538, 0.0
    %6540 = vadd.xlane.f32.xlu0 %v6539
    %v6541 = vpop.xlane.xlu0 %6540
    %v6542 = vrcp.pop %v6541
    %v6543 = vmul.f32 %v6538, %v6542
    %6544 = vrot.lane.b32.xlu0 %v6109, 112
    %v6545 = vpop.permute.xlu0 %6544
    %v6548 = vsel %vm537, %v6543, 0
    %6550 = vmatprep.subr.mxu0 0.0
    %6551 = vmatpush1.msra.mxu0 %v6545
    %6552 = vmatprep.subr.mxu0 0.0
    %6553 = vmatpush1.msra.mxu0 0.0
    %6554 = vmatprep.subr.mxu0 0.0
    %6555 = vmatpush1.msra.mxu0 0.0
    %6556 = vmatprep.subr.mxu0 0.0
    %6557 = vmatpush1.msra.mxu0 0.0
    %6558 = vmatprep.subr.mxu0 0.0
    %6559 = vmatpush1.msra.mxu0 0.0
    %6560 = vmatprep.subr.mxu0 0.0
    %6561 = vmatpush1.msra.mxu0 0.0
    %6562 = vmatprep.subr.mxu0 0.0
    %6563 = vmatpush1.msra.mxu0 0.0
    %6564 = vmatprep.subr.mxu0 0.0
    %6565 = vmatpush1.msra.mxu0 0.0
    %6566 = vmatprep.subr.mxu0 0.0
    %6567 = vmatpush1.msra.mxu0 0.0
    %6568 = vmatprep.subr.mxu0 0.0
    %6569 = vmatpush1.msra.mxu0 0.0
    %6570 = vmatprep.subr.mxu0 0.0
    %6571 = vmatpush1.msra.mxu0 0.0
    %6572 = vmatprep.subr.mxu0 0.0
    %6573 = vmatpush1.msra.mxu0 0.0
    %6574 = vmatprep.subr.mxu0 0.0
    %6575 = vmatpush1.msra.mxu0 0.0
    %6576 = vmatprep.subr.mxu0 0.0
    %6577 = vmatpush1.msra.mxu0 0.0
    %6578 = vmatprep.subr.mxu0 0.0
    %6579 = vmatpush1.msra.mxu0 0.0
    %6580 = vmatprep.subr.mxu0 0.0
    %6581 = vmatpush1.msra.mxu0 0.0
    %6582 = vmatprep.subr.mxu0 0.0
    %6583 = vmatpush1.msra.mxu0 0.0
    %6584 = vmatprep.subr.mxu0 0.0
    %6585 = vmatpush1.msra.mxu0 0.0
    %6586 = vmatprep.subr.mxu0 0.0
    %6587 = vmatpush1.msra.mxu0 0.0
    %6588 = vmatprep.subr.mxu0 0.0
    %6589 = vmatpush1.msra.mxu0 0.0
    %6590 = vmatprep.subr.mxu0 0.0
    %6591 = vmatpush1.msra.mxu0 0.0
    %6592 = vmatprep.subr.mxu0 0.0
    %6593 = vmatpush1.msra.mxu0 0.0
    %6594 = vmatprep.subr.mxu0 0.0
    %6595 = vmatpush1.msra.mxu0 0.0
    %6596 = vmatprep.subr.mxu0 0.0
    %6597 = vmatpush1.msra.mxu0 0.0
    %6598 = vmatprep.subr.mxu0 0.0
    %6599 = vmatpush1.msra.mxu0 0.0
    %6600 = vmatprep.subr.mxu0 0.0
    %6601 = vmatpush1.msra.mxu0 0.0
    %6602 = vmatprep.subr.mxu0 0.0
    %6603 = vmatpush1.msra.mxu0 0.0
    %6604 = vmatprep.subr.mxu0 0.0
    %6605 = vmatpush1.msra.mxu0 0.0
    %6606 = vmatprep.subr.mxu0 0.0
    %6607 = vmatpush1.msra.mxu0 0.0
    %6608 = vmatprep.subr.mxu0 0.0
    %6609 = vmatpush1.msra.mxu0 0.0
    %6610 = vmatprep.subr.mxu0 0.0
    %6611 = vmatpush1.msra.mxu0 0.0
    %6612 = vmatprep.subr.mxu0 0.0
    %6613 = vmatpush1.msra.mxu0 0.0
    %6614 = vmatprep.mubr.f32.mxu0 0.0
    %6615 = vmatmul.mubr.f32.gmra.mrb[0].mxu0 %v6548
    %v6616 = vpop.f32.mrb[0].mxu0
    %v6617 = vadd.f32 0.0, %v6616
    %v6618 = vpop.f32.mrb[0].mxu0
    %6619 = vdwg.mxu0
    %6621 = vrot.lane.b32.xlu0 %v6617, 16
    %v6622 = vpop.permute.xlu0 %6621
    %6624 = vst.msk [vmem:[#allocation2] sm:$0xff] %vm1046, %v6622
    %6625 = vrot.lane.b32.xlu0 %v5947, 104
    %v6626 = vpop.permute.xlu0 %6625
    %6627 = vrot.lane.b32.xlu0 %v6028, 104
    %v6628 = vpop.permute.xlu0 %6627
    %v6629 = vsel %vm537, %v6626, 0
    %v6631 = vsel %vm537, %v6628, 0
    %6633 = vmatprep.subr.mxu0 0.0
    %6634 = vmatpush1.xpose.msra.mxu0 %v6631
    %6635 = vmatprep.subr.mxu0 0.0
    %6636 = vmatpush1.xpose.msra.mxu0 0.0
    %6637 = vmatprep.subr.mxu0 0.0
    %6638 = vmatpush1.xpose.msra.mxu0 0.0
    %6639 = vmatprep.subr.mxu0 0.0
    %6640 = vmatpush1.xpose.msra.mxu0 0.0
    %6641 = vmatprep.subr.mxu0 0.0
    %6642 = vmatpush1.xpose.msra.mxu0 0.0
    %6643 = vmatprep.subr.mxu0 0.0
    %6644 = vmatpush1.xpose.msra.mxu0 0.0
    %6645 = vmatprep.subr.mxu0 0.0
    %6646 = vmatpush1.xpose.msra.mxu0 0.0
    %6647 = vmatprep.subr.mxu0 0.0
    %6648 = vmatpush1.xpose.msra.mxu0 0.0
    %6649 = vmatprep.subr.mxu0 0.0
    %6650 = vmatpush1.xpose.msra.mxu0 0.0
    %6651 = vmatprep.subr.mxu0 0.0
    %6652 = vmatpush1.xpose.msra.mxu0 0.0
    %6653 = vmatprep.subr.mxu0 0.0
    %6654 = vmatpush1.xpose.msra.mxu0 0.0
    %6655 = vmatprep.subr.mxu0 0.0
    %6656 = vmatpush1.xpose.msra.mxu0 0.0
    %6657 = vmatprep.subr.mxu0 0.0
    %6658 = vmatpush1.xpose.msra.mxu0 0.0
    %6659 = vmatprep.subr.mxu0 0.0
    %6660 = vmatpush1.xpose.msra.mxu0 0.0
    %6661 = vmatprep.subr.mxu0 0.0
    %6662 = vmatpush1.xpose.msra.mxu0 0.0
    %6663 = vmatprep.subr.mxu0 0.0
    %6664 = vmatpush1.xpose.msra.mxu0 0.0
    %6665 = vmatprep.subr.mxu0 0.0
    %6666 = vmatpush1.xpose.msra.mxu0 0.0
    %6667 = vmatprep.subr.mxu0 0.0
    %6668 = vmatpush1.xpose.msra.mxu0 0.0
    %6669 = vmatprep.subr.mxu0 0.0
    %6670 = vmatpush1.xpose.msra.mxu0 0.0
    %6671 = vmatprep.subr.mxu0 0.0
    %6672 = vmatpush1.xpose.msra.mxu0 0.0
    %6673 = vmatprep.subr.mxu0 0.0
    %6674 = vmatpush1.xpose.msra.mxu0 0.0
    %6675 = vmatprep.subr.mxu0 0.0
    %6676 = vmatpush1.xpose.msra.mxu0 0.0
    %6677 = vmatprep.subr.mxu0 0.0
    %6678 = vmatpush1.xpose.msra.mxu0 0.0
    %6679 = vmatprep.subr.mxu0 0.0
    %6680 = vmatpush1.xpose.msra.mxu0 0.0
    %6681 = vmatprep.subr.mxu0 0.0
    %6682 = vmatpush1.xpose.msra.mxu0 0.0
    %6683 = vmatprep.subr.mxu0 0.0
    %6684 = vmatpush1.xpose.msra.mxu0 0.0
    %6685 = vmatprep.subr.mxu0 0.0
    %6686 = vmatpush1.xpose.msra.mxu0 0.0
    %6687 = vmatprep.subr.mxu0 0.0
    %6688 = vmatpush1.xpose.msra.mxu0 0.0
    %6689 = vmatprep.subr.mxu0 0.0
    %6690 = vmatpush1.xpose.msra.mxu0 0.0
    %6691 = vmatprep.subr.mxu0 0.0
    %6692 = vmatpush1.xpose.msra.mxu0 0.0
    %6693 = vmatprep.subr.mxu0 0.0
    %6694 = vmatpush1.xpose.msra.mxu0 0.0
    %6695 = vmatprep.subr.mxu0 0.0
    %6696 = vmatpush1.xpose.msra.mxu0 0.0
    %6697 = vmatprep.mubr.f32.mxu0 0.0
    %6698 = vmatmul.mubr.f32.gmra.mrb[0].mxu0 %v6629
    %v6699 = vpop.f32.mrb[0].mxu0
    %v6700 = vadd.f32 0.0, %v6699
    %v6701 = vpop.f32.mrb[0].mxu0
    %6702 = vdwg.mxu0
    %v6703 = vmul.f32 %v6700, 0.35355338
    %v6704 = vsel %vm2325, -1e+09, %v6703
    %v6705 = vsel %vm537, %v6704, -inf
    %6706 = vmax.xlane.f32.xlu0 %v6705
    %v6707 = vpop.xlane.xlu0 %6706
    %v6708 = vsub.f32 %v6704, %v6707
    %v6709 = vmul.f32 %v6708, 1.442695
    %v6710 = vpow.pop %v6709
    %v6711 = vsel %vm537, %v6710, 0.0
    %6712 = vadd.xlane.f32.xlu0 %v6711
    %v6713 = vpop.xlane.xlu0 %6712
    %v6714 = vrcp.pop %v6713
    %v6715 = vmul.f32 %v6710, %v6714
    %6716 = vrot.lane.b32.xlu0 %v6109, 104
    %v6717 = vpop.permute.xlu0 %6716
    %v6720 = vsel %vm537, %v6715, 0
    %6722 = vmatprep.subr.mxu0 0.0
    %6723 = vmatpush1.msra.mxu0 %v6717
    %6724 = vmatprep.subr.mxu0 0.0
    %6725 = vmatpush1.msra.mxu0 0.0
    %6726 = vmatprep.subr.mxu0 0.0
    %6727 = vmatpush1.msra.mxu0 0.0
    %6728 = vmatprep.subr.mxu0 0.0
    %6729 = vmatpush1.msra.mxu0 0.0
    %6730 = vmatprep.subr.mxu0 0.0
    %6731 = vmatpush1.msra.mxu0 0.0
    %6732 = vmatprep.subr.mxu0 0.0
    %6733 = vmatpush1.msra.mxu0 0.0
    %6734 = vmatprep.subr.mxu0 0.0
    %6735 = vmatpush1.msra.mxu0 0.0
    %6736 = vmatprep.subr.mxu0 0.0
    %6737 = vmatpush1.msra.mxu0 0.0
    %6738 = vmatprep.subr.mxu0 0.0
    %6739 = vmatpush1.msra.mxu0 0.0
    %6740 = vmatprep.subr.mxu0 0.0
    %6741 = vmatpush1.msra.mxu0 0.0
    %6742 = vmatprep.subr.mxu0 0.0
    %6743 = vmatpush1.msra.mxu0 0.0
    %6744 = vmatprep.subr.mxu0 0.0
    %6745 = vmatpush1.msra.mxu0 0.0
    %6746 = vmatprep.subr.mxu0 0.0
    %6747 = vmatpush1.msra.mxu0 0.0
    %6748 = vmatprep.subr.mxu0 0.0
    %6749 = vmatpush1.msra.mxu0 0.0
    %6750 = vmatprep.subr.mxu0 0.0
    %6751 = vmatpush1.msra.mxu0 0.0
    %6752 = vmatprep.subr.mxu0 0.0
    %6753 = vmatpush1.msra.mxu0 0.0
    %6754 = vmatprep.subr.mxu0 0.0
    %6755 = vmatpush1.msra.mxu0 0.0
    %6756 = vmatprep.subr.mxu0 0.0
    %6757 = vmatpush1.msra.mxu0 0.0
    %6758 = vmatprep.subr.mxu0 0.0
    %6759 = vmatpush1.msra.mxu0 0.0
    %6760 = vmatprep.subr.mxu0 0.0
    %6761 = vmatpush1.msra.mxu0 0.0
    %6762 = vmatprep.subr.mxu0 0.0
    %6763 = vmatpush1.msra.mxu0 0.0
    %6764 = vmatprep.subr.mxu0 0.0
    %6765 = vmatpush1.msra.mxu0 0.0
    %6766 = vmatprep.subr.mxu0 0.0
    %6767 = vmatpush1.msra.mxu0 0.0
    %6768 = vmatprep.subr.mxu0 0.0
    %6769 = vmatpush1.msra.mxu0 0.0
    %6770 = vmatprep.subr.mxu0 0.0
    %6771 = vmatpush1.msra.mxu0 0.0
    %6772 = vmatprep.subr.mxu0 0.0
    %6773 = vmatpush1.msra.mxu0 0.0
    %6774 = vmatprep.subr.mxu0 0.0
    %6775 = vmatpush1.msra.mxu0 0.0
    %6776 = vmatprep.subr.mxu0 0.0
    %6777 = vmatpush1.msra.mxu0 0.0
    %6778 = vmatprep.subr.mxu0 0.0
    %6779 = vmatpush1.msra.mxu0 0.0
    %6780 = vmatprep.subr.mxu0 0.0
    %6781 = vmatpush1.msra.mxu0 0.0
    %6782 = vmatprep.subr.mxu0 0.0
    %6783 = vmatpush1.msra.mxu0 0.0
    %6784 = vmatprep.subr.mxu0 0.0
    %6785 = vmatpush1.msra.mxu0 0.0
    %6786 = vmatprep.mubr.f32.mxu0 0.0
    %6787 = vmatmul.mubr.f32.gmra.mrb[0].mxu0 %v6720
    %v6788 = vpop.f32.mrb[0].mxu0
    %v6789 = vadd.f32 0.0, %v6788
    %v6790 = vpop.f32.mrb[0].mxu0
    %6791 = vdwg.mxu0
    %6793 = vrot.lane.b32.xlu0 %v6789, 24
    %v6794 = vpop.permute.xlu0 %6793
    %6796 = vst.msk [vmem:[#allocation2] sm:$0xff] %vm1219, %v6794
    %v6798 = vsel %vm537, %v5952, 0
    %v6801 = vsel %vm537, %v6033, 0
    %6803 = vmatprep.subr.mxu0 0.0
    %6804 = vmatpush1.xpose.msra.mxu0 %v6801
    %6805 = vmatprep.subr.mxu0 0.0
    %6806 = vmatpush1.xpose.msra.mxu0 0.0
    %6807 = vmatprep.subr.mxu0 0.0
    %6808 = vmatpush1.xpose.msra.mxu0 0.0
    %6809 = vmatprep.subr.mxu0 0.0
    %6810 = vmatpush1.xpose.msra.mxu0 0.0
    %6811 = vmatprep.subr.mxu0 0.0
    %6812 = vmatpush1.xpose.msra.mxu0 0.0
    %6813 = vmatprep.subr.mxu0 0.0
    %6814 = vmatpush1.xpose.msra.mxu0 0.0
    %6815 = vmatprep.subr.mxu0 0.0
    %6816 = vmatpush1.xpose.msra.mxu0 0.0
    %6817 = vmatprep.subr.mxu0 0.0
    %6818 = vmatpush1.xpose.msra.mxu0 0.0
    %6819 = vmatprep.subr.mxu0 0.0
    %6820 = vmatpush1.xpose.msra.mxu0 0.0
    %6821 = vmatprep.subr.mxu0 0.0
    %6822 = vmatpush1.xpose.msra.mxu0 0.0
    %6823 = vmatprep.subr.mxu0 0.0
    %6824 = vmatpush1.xpose.msra.mxu0 0.0
    %6825 = vmatprep.subr.mxu0 0.0
    %6826 = vmatpush1.xpose.msra.mxu0 0.0
    %6827 = vmatprep.subr.mxu0 0.0
    %6828 = vmatpush1.xpose.msra.mxu0 0.0
    %6829 = vmatprep.subr.mxu0 0.0
    %6830 = vmatpush1.xpose.msra.mxu0 0.0
    %6831 = vmatprep.subr.mxu0 0.0
    %6832 = vmatpush1.xpose.msra.mxu0 0.0
    %6833 = vmatprep.subr.mxu0 0.0
    %6834 = vmatpush1.xpose.msra.mxu0 0.0
    %6835 = vmatprep.subr.mxu0 0.0
    %6836 = vmatpush1.xpose.msra.mxu0 0.0
    %6837 = vmatprep.subr.mxu0 0.0
    %6838 = vmatpush1.xpose.msra.mxu0 0.0
    %6839 = vmatprep.subr.mxu0 0.0
    %6840 = vmatpush1.xpose.msra.mxu0 0.0
    %6841 = vmatprep.subr.mxu0 0.0
    %6842 = vmatpush1.xpose.msra.mxu0 0.0
    %6843 = vmatprep.subr.mxu0 0.0
    %6844 = vmatpush1.xpose.msra.mxu0 0.0
    %6845 = vmatprep.subr.mxu0 0.0
    %6846 = vmatpush1.xpose.msra.mxu0 0.0
    %6847 = vmatprep.subr.mxu0 0.0
    %6848 = vmatpush1.xpose.msra.mxu0 0.0
    %6849 = vmatprep.subr.mxu0 0.0
    %6850 = vmatpush1.xpose.msra.mxu0 0.0
    %6851 = vmatprep.subr.mxu0 0.0
    %6852 = vmatpush1.xpose.msra.mxu0 0.0
    %6853 = vmatprep.subr.mxu0 0.0
    %6854 = vmatpush1.xpose.msra.mxu0 0.0
    %6855 = vmatprep.subr.mxu0 0.0
    %6856 = vmatpush1.xpose.msra.mxu0 0.0
    %6857 = vmatprep.subr.mxu0 0.0
    %6858 = vmatpush1.xpose.msra.mxu0 0.0
    %6859 = vmatprep.subr.mxu0 0.0
    %6860 = vmatpush1.xpose.msra.mxu0 0.0
    %6861 = vmatprep.subr.mxu0 0.0
    %6862 = vmatpush1.xpose.msra.mxu0 0.0
    %6863 = vmatprep.subr.mxu0 0.0
    %6864 = vmatpush1.xpose.msra.mxu0 0.0
    %6865 = vmatprep.subr.mxu0 0.0
    %6866 = vmatpush1.xpose.msra.mxu0 0.0
    %6867 = vmatprep.mubr.f32.mxu0 0.0
    %6868 = vmatmul.mubr.f32.gmra.mrb[0].mxu0 %v6798
    %v6869 = vpop.f32.mrb[0].mxu0
    %v6870 = vadd.f32 0.0, %v6869
    %v6871 = vpop.f32.mrb[0].mxu0
    %6872 = vdwg.mxu0
    %v6873 = vmul.f32 %v6870, 0.35355338
    %v6874 = vsel %vm3011, -1e+09, %v6873
    %v6875 = vsel %vm537, %v6874, -inf
    %6876 = vmax.xlane.f32.xlu0 %v6875
    %v6877 = vpop.xlane.xlu0 %6876
    %v6878 = vsub.f32 %v6874, %v6877
    %v6879 = vmul.f32 %v6878, 1.442695
    %v6880 = vpow.pop %v6879
    %v6881 = vsel %vm537, %v6880, 0.0
    %6882 = vadd.xlane.f32.xlu0 %v6881
    %v6883 = vpop.xlane.xlu0 %6882
    %v6884 = vrcp.pop %v6883
    %v6885 = vmul.f32 %v6880, %v6884
    %v6887 = vsel %vm537, %v6885, 0
    %6889 = vmatprep.subr.mxu0 0.0
    %6890 = vmatpush1.msra.mxu0 %v6114
    %6891 = vmatprep.subr.mxu0 0.0
    %6892 = vmatpush1.msra.mxu0 0.0
    %6893 = vmatprep.subr.mxu0 0.0
    %6894 = vmatpush1.msra.mxu0 0.0
    %6895 = vmatprep.subr.mxu0 0.0
    %6896 = vmatpush1.msra.mxu0 0.0
    %6897 = vmatprep.subr.mxu0 0.0
    %6898 = vmatpush1.msra.mxu0 0.0
    %6899 = vmatprep.subr.mxu0 0.0
    %6900 = vmatpush1.msra.mxu0 0.0
    %6901 = vmatprep.subr.mxu0 0.0
    %6902 = vmatpush1.msra.mxu0 0.0
    %6903 = vmatprep.subr.mxu0 0.0
    %6904 = vmatpush1.msra.mxu0 0.0
    %6905 = vmatprep.subr.mxu0 0.0
    %6906 = vmatpush1.msra.mxu0 0.0
    %6907 = vmatprep.subr.mxu0 0.0
    %6908 = vmatpush1.msra.mxu0 0.0
    %6909 = vmatprep.subr.mxu0 0.0
    %6910 = vmatpush1.msra.mxu0 0.0
    %6911 = vmatprep.subr.mxu0 0.0
    %6912 = vmatpush1.msra.mxu0 0.0
    %6913 = vmatprep.subr.mxu0 0.0
    %6914 = vmatpush1.msra.mxu0 0.0
    %6915 = vmatprep.subr.mxu0 0.0
    %6916 = vmatpush1.msra.mxu0 0.0
    %6917 = vmatprep.subr.mxu0 0.0
    %6918 = vmatpush1.msra.mxu0 0.0
    %6919 = vmatprep.subr.mxu0 0.0
    %6920 = vmatpush1.msra.mxu0 0.0
    %6921 = vmatprep.subr.mxu0 0.0
    %6922 = vmatpush1.msra.mxu0 0.0
    %6923 = vmatprep.subr.mxu0 0.0
    %6924 = vmatpush1.msra.mxu0 0.0
    %6925 = vmatprep.subr.mxu0 0.0
    %6926 = vmatpush1.msra.mxu0 0.0
    %6927 = vmatprep.subr.mxu0 0.0
    %6928 = vmatpush1.msra.mxu0 0.0
    %6929 = vmatprep.subr.mxu0 0.0
    %6930 = vmatpush1.msra.mxu0 0.0
    %6931 = vmatprep.subr.mxu0 0.0
    %6932 = vmatpush1.msra.mxu0 0.0
    %6933 = vmatprep.subr.mxu0 0.0
    %6934 = vmatpush1.msra.mxu0 0.0
    %6935 = vmatprep.subr.mxu0 0.0
    %6936 = vmatpush1.msra.mxu0 0.0
    %6937 = vmatprep.subr.mxu0 0.0
    %6938 = vmatpush1.msra.mxu0 0.0
    %6939 = vmatprep.subr.mxu0 0.0
    %6940 = vmatpush1.msra.mxu0 0.0
    %6941 = vmatprep.subr.mxu0 0.0
    %6942 = vmatpush1.msra.mxu0 0.0
    %6943 = vmatprep.subr.mxu0 0.0
    %6944 = vmatpush1.msra.mxu0 0.0
    %6945 = vmatprep.subr.mxu0 0.0
    %6946 = vmatpush1.msra.mxu0 0.0
    %6947 = vmatprep.subr.mxu0 0.0
    %6948 = vmatpush1.msra.mxu0 0.0
    %6949 = vmatprep.subr.mxu0 0.0
    %6950 = vmatpush1.msra.mxu0 0.0
    %6951 = vmatprep.subr.mxu0 0.0
    %6952 = vmatpush1.msra.mxu0 0.0
    %6953 = vmatprep.mubr.f32.mxu0 0.0
    %6954 = vmatmul.mubr.f32.gmra.mrb[0].mxu0 %v6887
    %v6955 = vpop.f32.mrb[0].mxu0
    %v6956 = vadd.f32 0.0, %v6955
    %v6957 = vpop.f32.mrb[0].mxu0
    %6958 = vdwg.mxu0
    %6959 = vst.msk [vmem:[#allocation2 + $0x8] sm:$0xff] %vm537, %v6956
    %6960 = vrot.lane.b32.xlu0 %v5952, 120
    %v6961 = vpop.permute.xlu0 %6960
    %6962 = vrot.lane.b32.xlu0 %v6033, 120
    %v6963 = vpop.permute.xlu0 %6962
    %v6964 = vsel %vm537, %v6961, 0
    %v6966 = vsel %vm537, %v6963, 0
    %6968 = vmatprep.subr.mxu0 0.0
    %6969 = vmatpush1.xpose.msra.mxu0 %v6966
    %6970 = vmatprep.subr.mxu0 0.0
    %6971 = vmatpush1.xpose.msra.mxu0 0.0
    %6972 = vmatprep.subr.mxu0 0.0
    %6973 = vmatpush1.xpose.msra.mxu0 0.0
    %6974 = vmatprep.subr.mxu0 0.0
    %6975 = vmatpush1.xpose.msra.mxu0 0.0
    %6976 = vmatprep.subr.mxu0 0.0
    %6977 = vmatpush1.xpose.msra.mxu0 0.0
    %6978 = vmatprep.subr.mxu0 0.0
    %6979 = vmatpush1.xpose.msra.mxu0 0.0
    %6980 = vmatprep.subr.mxu0 0.0
    %6981 = vmatpush1.xpose.msra.mxu0 0.0
    %6982 = vmatprep.subr.mxu0 0.0
    %6983 = vmatpush1.xpose.msra.mxu0 0.0
    %6984 = vmatprep.subr.mxu0 0.0
    %6985 = vmatpush1.xpose.msra.mxu0 0.0
    %6986 = vmatprep.subr.mxu0 0.0
    %6987 = vmatpush1.xpose.msra.mxu0 0.0
    %6988 = vmatprep.subr.mxu0 0.0
    %6989 = vmatpush1.xpose.msra.mxu0 0.0
    %6990 = vmatprep.subr.mxu0 0.0
    %6991 = vmatpush1.xpose.msra.mxu0 0.0
    %6992 = vmatprep.subr.mxu0 0.0
    %6993 = vmatpush1.xpose.msra.mxu0 0.0
    %6994 = vmatprep.subr.mxu0 0.0
    %6995 = vmatpush1.xpose.msra.mxu0 0.0
    %6996 = vmatprep.subr.mxu0 0.0
    %6997 = vmatpush1.xpose.msra.mxu0 0.0
    %6998 = vmatprep.subr.mxu0 0.0
    %6999 = vmatpush1.xpose.msra.mxu0 0.0
    %7000 = vmatprep.subr.mxu0 0.0
    %7001 = vmatpush1.xpose.msra.mxu0 0.0
    %7002 = vmatprep.subr.mxu0 0.0
    %7003 = vmatpush1.xpose.msra.mxu0 0.0
    %7004 = vmatprep.subr.mxu0 0.0
    %7005 = vmatpush1.xpose.msra.mxu0 0.0
    %7006 = vmatprep.subr.mxu0 0.0
    %7007 = vmatpush1.xpose.msra.mxu0 0.0
    %7008 = vmatprep.subr.mxu0 0.0
    %7009 = vmatpush1.xpose.msra.mxu0 0.0
    %7010 = vmatprep.subr.mxu0 0.0
    %7011 = vmatpush1.xpose.msra.mxu0 0.0
    %7012 = vmatprep.subr.mxu0 0.0
    %7013 = vmatpush1.xpose.msra.mxu0 0.0
    %7014 = vmatprep.subr.mxu0 0.0
    %7015 = vmatpush1.xpose.msra.mxu0 0.0
    %7016 = vmatprep.subr.mxu0 0.0
    %7017 = vmatpush1.xpose.msra.mxu0 0.0
    %7018 = vmatprep.subr.mxu0 0.0
    %7019 = vmatpush1.xpose.msra.mxu0 0.0
    %7020 = vmatprep.subr.mxu0 0.0
    %7021 = vmatpush1.xpose.msra.mxu0 0.0
    %7022 = vmatprep.subr.mxu0 0.0
    %7023 = vmatpush1.xpose.msra.mxu0 0.0
    %7024 = vmatprep.subr.mxu0 0.0
    %7025 = vmatpush1.xpose.msra.mxu0 0.0
    %7026 = vmatprep.subr.mxu0 0.0
    %7027 = vmatpush1.xpose.msra.mxu0 0.0
    %7028 = vmatprep.subr.mxu0 0.0
    %7029 = vmatpush1.xpose.msra.mxu0 0.0
    %7030 = vmatprep.subr.mxu0 0.0
    %7031 = vmatpush1.xpose.msra.mxu0 0.0
    %7032 = vmatprep.mubr.f32.mxu0 0.0
    %7033 = vmatmul.mubr.f32.gmra.mrb[0].mxu0 %v6964
    %v7034 = vpop.f32.mrb[0].mxu0
    %v7035 = vadd.f32 0.0, %v7034
    %v7036 = vpop.f32.mrb[0].mxu0
    %7037 = vdwg.mxu0
    %v7038 = vmul.f32 %v7035, 0.35355338
    %v7039 = vsel %vm3011, -1e+09, %v7038
    %v7040 = vsel %vm537, %v7039, -inf
    %7041 = vmax.xlane.f32.xlu0 %v7040
    %v7042 = vpop.xlane.xlu0 %7041
    %v7043 = vsub.f32 %v7039, %v7042
    %v7044 = vmul.f32 %v7043, 1.442695
    %v7045 = vpow.pop %v7044
    %v7046 = vsel %vm537, %v7045, 0.0
    %7047 = vadd.xlane.f32.xlu0 %v7046
    %v7048 = vpop.xlane.xlu0 %7047
    %v7049 = vrcp.pop %v7048
    %v7050 = vmul.f32 %v7045, %v7049
    %7052 = vrot.lane.b32.xlu0 %v6114, 120
    %v7053 = vpop.permute.xlu0 %7052
    %v7056 = vsel %vm537, %v7050, 0
    %7058 = vmatprep.subr.mxu0 0.0
    %7059 = vmatpush1.msra.mxu0 %v7053
    %7060 = vmatprep.subr.mxu0 0.0
    %7061 = vmatpush1.msra.mxu0 0.0
    %7062 = vmatprep.subr.mxu0 0.0
    %7063 = vmatpush1.msra.mxu0 0.0
    %7064 = vmatprep.subr.mxu0 0.0
    %7065 = vmatpush1.msra.mxu0 0.0
    %7066 = vmatprep.subr.mxu0 0.0
    %7067 = vmatpush1.msra.mxu0 0.0
    %7068 = vmatprep.subr.mxu0 0.0
    %7069 = vmatpush1.msra.mxu0 0.0
    %7070 = vmatprep.subr.mxu0 0.0
    %7071 = vmatpush1.msra.mxu0 0.0
    %7072 = vmatprep.subr.mxu0 0.0
    %7073 = vmatpush1.msra.mxu0 0.0
    %7074 = vmatprep.subr.mxu0 0.0
    %7075 = vmatpush1.msra.mxu0 0.0
    %7076 = vmatprep.subr.mxu0 0.0
    %7077 = vmatpush1.msra.mxu0 0.0
    %7078 = vmatprep.subr.mxu0 0.0
    %7079 = vmatpush1.msra.mxu0 0.0
    %7080 = vmatprep.subr.mxu0 0.0
    %7081 = vmatpush1.msra.mxu0 0.0
    %7082 = vmatprep.subr.mxu0 0.0
    %7083 = vmatpush1.msra.mxu0 0.0
    %7084 = vmatprep.subr.mxu0 0.0
    %7085 = vmatpush1.msra.mxu0 0.0
    %7086 = vmatprep.subr.mxu0 0.0
    %7087 = vmatpush1.msra.mxu0 0.0
    %7088 = vmatprep.subr.mxu0 0.0
    %7089 = vmatpush1.msra.mxu0 0.0
    %7090 = vmatprep.subr.mxu0 0.0
    %7091 = vmatpush1.msra.mxu0 0.0
    %7092 = vmatprep.subr.mxu0 0.0
    %7093 = vmatpush1.msra.mxu0 0.0
    %7094 = vmatprep.subr.mxu0 0.0
    %7095 = vmatpush1.msra.mxu0 0.0
    %7096 = vmatprep.subr.mxu0 0.0
    %7097 = vmatpush1.msra.mxu0 0.0
    %7098 = vmatprep.subr.mxu0 0.0
    %7099 = vmatpush1.msra.mxu0 0.0
    %7100 = vmatprep.subr.mxu0 0.0
    %7101 = vmatpush1.msra.mxu0 0.0
    %7102 = vmatprep.subr.mxu0 0.0
    %7103 = vmatpush1.msra.mxu0 0.0
    %7104 = vmatprep.subr.mxu0 0.0
    %7105 = vmatpush1.msra.mxu0 0.0
    %7106 = vmatprep.subr.mxu0 0.0
    %7107 = vmatpush1.msra.mxu0 0.0
    %7108 = vmatprep.subr.mxu0 0.0
    %7109 = vmatpush1.msra.mxu0 0.0
    %7110 = vmatprep.subr.mxu0 0.0
    %7111 = vmatpush1.msra.mxu0 0.0
    %7112 = vmatprep.subr.mxu0 0.0
    %7113 = vmatpush1.msra.mxu0 0.0
    %7114 = vmatprep.subr.mxu0 0.0
    %7115 = vmatpush1.msra.mxu0 0.0
    %7116 = vmatprep.subr.mxu0 0.0
    %7117 = vmatpush1.msra.mxu0 0.0
    %7118 = vmatprep.subr.mxu0 0.0
    %7119 = vmatpush1.msra.mxu0 0.0
    %7120 = vmatprep.subr.mxu0 0.0
    %7121 = vmatpush1.msra.mxu0 0.0
    %7122 = vmatprep.mubr.f32.mxu0 0.0
    %7123 = vmatmul.mubr.f32.gmra.mrb[0].mxu0 %v7056
    %v7124 = vpop.f32.mrb[0].mxu0
    %v7125 = vadd.f32 0.0, %v7124
    %v7126 = vpop.f32.mrb[0].mxu0
    %7127 = vdwg.mxu0
    %7129 = vrot.lane.b32.xlu0 %v7125, 8
    %v7130 = vpop.permute.xlu0 %7129
    %7132 = vst.msk [vmem:[#allocation2 + $0x8] sm:$0xff] %vm873, %v7130
    %7133 = vrot.lane.b32.xlu0 %v5952, 112
    %v7134 = vpop.permute.xlu0 %7133
    %7135 = vrot.lane.b32.xlu0 %v6033, 112
    %v7136 = vpop.permute.xlu0 %7135
    %v7137 = vsel %vm537, %v7134, 0
    %v7139 = vsel %vm537, %v7136, 0
    %7141 = vmatprep.subr.mxu0 0.0
    %7142 = vmatpush1.xpose.msra.mxu0 %v7139
    %7143 = vmatprep.subr.mxu0 0.0
    %7144 = vmatpush1.xpose.msra.mxu0 0.0
    %7145 = vmatprep.subr.mxu0 0.0
    %7146 = vmatpush1.xpose.msra.mxu0 0.0
    %7147 = vmatprep.subr.mxu0 0.0
    %7148 = vmatpush1.xpose.msra.mxu0 0.0
    %7149 = vmatprep.subr.mxu0 0.0
    %7150 = vmatpush1.xpose.msra.mxu0 0.0
    %7151 = vmatprep.subr.mxu0 0.0
    %7152 = vmatpush1.xpose.msra.mxu0 0.0
    %7153 = vmatprep.subr.mxu0 0.0
    %7154 = vmatpush1.xpose.msra.mxu0 0.0
    %7155 = vmatprep.subr.mxu0 0.0
    %7156 = vmatpush1.xpose.msra.mxu0 0.0
    %7157 = vmatprep.subr.mxu0 0.0
    %7158 = vmatpush1.xpose.msra.mxu0 0.0
    %7159 = vmatprep.subr.mxu0 0.0
    %7160 = vmatpush1.xpose.msra.mxu0 0.0
    %7161 = vmatprep.subr.mxu0 0.0
    %7162 = vmatpush1.xpose.msra.mxu0 0.0
    %7163 = vmatprep.subr.mxu0 0.0
    %7164 = vmatpush1.xpose.msra.mxu0 0.0
    %7165 = vmatprep.subr.mxu0 0.0
    %7166 = vmatpush1.xpose.msra.mxu0 0.0
    %7167 = vmatprep.subr.mxu0 0.0
    %7168 = vmatpush1.xpose.msra.mxu0 0.0
    %7169 = vmatprep.subr.mxu0 0.0
    %7170 = vmatpush1.xpose.msra.mxu0 0.0
    %7171 = vmatprep.subr.mxu0 0.0
    %7172 = vmatpush1.xpose.msra.mxu0 0.0
    %7173 = vmatprep.subr.mxu0 0.0
    %7174 = vmatpush1.xpose.msra.mxu0 0.0
    %7175 = vmatprep.subr.mxu0 0.0
    %7176 = vmatpush1.xpose.msra.mxu0 0.0
    %7177 = vmatprep.subr.mxu0 0.0
    %7178 = vmatpush1.xpose.msra.mxu0 0.0
    %7179 = vmatprep.subr.mxu0 0.0
    %7180 = vmatpush1.xpose.msra.mxu0 0.0
    %7181 = vmatprep.subr.mxu0 0.0
    %7182 = vmatpush1.xpose.msra.mxu0 0.0
    %7183 = vmatprep.subr.mxu0 0.0
    %7184 = vmatpush1.xpose.msra.mxu0 0.0
    %7185 = vmatprep.subr.mxu0 0.0
    %7186 = vmatpush1.xpose.msra.mxu0 0.0
    %7187 = vmatprep.subr.mxu0 0.0
    %7188 = vmatpush1.xpose.msra.mxu0 0.0
    %7189 = vmatprep.subr.mxu0 0.0
    %7190 = vmatpush1.xpose.msra.mxu0 0.0
    %7191 = vmatprep.subr.mxu0 0.0
    %7192 = vmatpush1.xpose.msra.mxu0 0.0
    %7193 = vmatprep.subr.mxu0 0.0
    %7194 = vmatpush1.xpose.msra.mxu0 0.0
    %7195 = vmatprep.subr.mxu0 0.0
    %7196 = vmatpush1.xpose.msra.mxu0 0.0
    %7197 = vmatprep.subr.mxu0 0.0
    %7198 = vmatpush1.xpose.msra.mxu0 0.0
    %7199 = vmatprep.subr.mxu0 0.0
    %7200 = vmatpush1.xpose.msra.mxu0 0.0
    %7201 = vmatprep.subr.mxu0 0.0
    %7202 = vmatpush1.xpose.msra.mxu0 0.0
    %7203 = vmatprep.subr.mxu0 0.0
    %7204 = vmatpush1.xpose.msra.mxu0 0.0
    %7205 = vmatprep.mubr.f32.mxu0 0.0
    %7206 = vmatmul.mubr.f32.gmra.mrb[0].mxu0 %v7137
    %v7207 = vpop.f32.mrb[0].mxu0
    %v7208 = vadd.f32 0.0, %v7207
    %v7209 = vpop.f32.mrb[0].mxu0
    %7210 = vdwg.mxu0
    %v7211 = vmul.f32 %v7208, 0.35355338
    %v7212 = vsel %vm3011, -1e+09, %v7211
    %v7213 = vsel %vm537, %v7212, -inf
    %7214 = vmax.xlane.f32.xlu0 %v7213
    %v7215 = vpop.xlane.xlu0 %7214
    %v7216 = vsub.f32 %v7212, %v7215
    %v7217 = vmul.f32 %v7216, 1.442695
    %v7218 = vpow.pop %v7217
    %v7219 = vsel %vm537, %v7218, 0.0
    %7220 = vadd.xlane.f32.xlu0 %v7219
    %v7221 = vpop.xlane.xlu0 %7220
    %v7222 = vrcp.pop %v7221
    %v7223 = vmul.f32 %v7218, %v7222
    %7224 = vrot.lane.b32.xlu0 %v6114, 112
    %v7225 = vpop.permute.xlu0 %7224
    %v7228 = vsel %vm537, %v7223, 0
    %7230 = vmatprep.subr.mxu0 0.0
    %7231 = vmatpush1.msra.mxu0 %v7225
    %7232 = vmatprep.subr.mxu0 0.0
    %7233 = vmatpush1.msra.mxu0 0.0
    %7234 = vmatprep.subr.mxu0 0.0
    %7235 = vmatpush1.msra.mxu0 0.0
    %7236 = vmatprep.subr.mxu0 0.0
    %7237 = vmatpush1.msra.mxu0 0.0
    %7238 = vmatprep.subr.mxu0 0.0
    %7239 = vmatpush1.msra.mxu0 0.0
    %7240 = vmatprep.subr.mxu0 0.0
    %7241 = vmatpush1.msra.mxu0 0.0
    %7242 = vmatprep.subr.mxu0 0.0
    %7243 = vmatpush1.msra.mxu0 0.0
    %7244 = vmatprep.subr.mxu0 0.0
    %7245 = vmatpush1.msra.mxu0 0.0
    %7246 = vmatprep.subr.mxu0 0.0
    %7247 = vmatpush1.msra.mxu0 0.0
    %7248 = vmatprep.subr.mxu0 0.0
    %7249 = vmatpush1.msra.mxu0 0.0
    %7250 = vmatprep.subr.mxu0 0.0
    %7251 = vmatpush1.msra.mxu0 0.0
    %7252 = vmatprep.subr.mxu0 0.0
    %7253 = vmatpush1.msra.mxu0 0.0
    %7254 = vmatprep.subr.mxu0 0.0
    %7255 = vmatpush1.msra.mxu0 0.0
    %7256 = vmatprep.subr.mxu0 0.0
    %7257 = vmatpush1.msra.mxu0 0.0
    %7258 = vmatprep.subr.mxu0 0.0
    %7259 = vmatpush1.msra.mxu0 0.0
    %7260 = vmatprep.subr.mxu0 0.0
    %7261 = vmatpush1.msra.mxu0 0.0
    %7262 = vmatprep.subr.mxu0 0.0
    %7263 = vmatpush1.msra.mxu0 0.0
    %7264 = vmatprep.subr.mxu0 0.0
    %7265 = vmatpush1.msra.mxu0 0.0
    %7266 = vmatprep.subr.mxu0 0.0
    %7267 = vmatpush1.msra.mxu0 0.0
    %7268 = vmatprep.subr.mxu0 0.0
    %7269 = vmatpush1.msra.mxu0 0.0
    %7270 = vmatprep.subr.mxu0 0.0
    %7271 = vmatpush1.msra.mxu0 0.0
    %7272 = vmatprep.subr.mxu0 0.0
    %7273 = vmatpush1.msra.mxu0 0.0
    %7274 = vmatprep.subr.mxu0 0.0
    %7275 = vmatpush1.msra.mxu0 0.0
    %7276 = vmatprep.subr.mxu0 0.0
    %7277 = vmatpush1.msra.mxu0 0.0
    %7278 = vmatprep.subr.mxu0 0.0
    %7279 = vmatpush1.msra.mxu0 0.0
    %7280 = vmatprep.subr.mxu0 0.0
    %7281 = vmatpush1.msra.mxu0 0.0
    %7282 = vmatprep.subr.mxu0 0.0
    %7283 = vmatpush1.msra.mxu0 0.0
    %7284 = vmatprep.subr.mxu0 0.0
    %7285 = vmatpush1.msra.mxu0 0.0
    %7286 = vmatprep.subr.mxu0 0.0
    %7287 = vmatpush1.msra.mxu0 0.0
    %7288 = vmatprep.subr.mxu0 0.0
    %7289 = vmatpush1.msra.mxu0 0.0
    %7290 = vmatprep.subr.mxu0 0.0
    %7291 = vmatpush1.msra.mxu0 0.0
    %7292 = vmatprep.subr.mxu0 0.0
    %7293 = vmatpush1.msra.mxu0 0.0
    %7294 = vmatprep.mubr.f32.mxu0 0.0
    %7295 = vmatmul.mubr.f32.gmra.mrb[0].mxu0 %v7228
    %v7296 = vpop.f32.mrb[0].mxu0
    %v7297 = vadd.f32 0.0, %v7296
    %v7298 = vpop.f32.mrb[0].mxu0
    %7299 = vdwg.mxu0
    %7301 = vrot.lane.b32.xlu0 %v7297, 16
    %v7302 = vpop.permute.xlu0 %7301
    %7304 = vst.msk [vmem:[#allocation2 + $0x8] sm:$0xff] %vm1046, %v7302
    %7305 = vrot.lane.b32.xlu0 %v5952, 104
    %v7306 = vpop.permute.xlu0 %7305
    %7307 = vrot.lane.b32.xlu0 %v6033, 104
    %v7308 = vpop.permute.xlu0 %7307
    %v7309 = vsel %vm537, %v7306, 0
    %v7311 = vsel %vm537, %v7308, 0
    %7313 = vmatprep.subr.mxu0 0.0
    %7314 = vmatpush1.xpose.msra.mxu0 %v7311
    %7315 = vmatprep.subr.mxu0 0.0
    %7316 = vmatpush1.xpose.msra.mxu0 0.0
    %7317 = vmatprep.subr.mxu0 0.0
    %7318 = vmatpush1.xpose.msra.mxu0 0.0
    %7319 = vmatprep.subr.mxu0 0.0
    %7320 = vmatpush1.xpose.msra.mxu0 0.0
    %7321 = vmatprep.subr.mxu0 0.0
    %7322 = vmatpush1.xpose.msra.mxu0 0.0
    %7323 = vmatprep.subr.mxu0 0.0
    %7324 = vmatpush1.xpose.msra.mxu0 0.0
    %7325 = vmatprep.subr.mxu0 0.0
    %7326 = vmatpush1.xpose.msra.mxu0 0.0
    %7327 = vmatprep.subr.mxu0 0.0
    %7328 = vmatpush1.xpose.msra.mxu0 0.0
    %7329 = vmatprep.subr.mxu0 0.0
    %7330 = vmatpush1.xpose.msra.mxu0 0.0
    %7331 = vmatprep.subr.mxu0 0.0
    %7332 = vmatpush1.xpose.msra.mxu0 0.0
    %7333 = vmatprep.subr.mxu0 0.0
    %7334 = vmatpush1.xpose.msra.mxu0 0.0
    %7335 = vmatprep.subr.mxu0 0.0
    %7336 = vmatpush1.xpose.msra.mxu0 0.0
    %7337 = vmatprep.subr.mxu0 0.0
    %7338 = vmatpush1.xpose.msra.mxu0 0.0
    %7339 = vmatprep.subr.mxu0 0.0
    %7340 = vmatpush1.xpose.msra.mxu0 0.0
    %7341 = vmatprep.subr.mxu0 0.0
    %7342 = vmatpush1.xpose.msra.mxu0 0.0
    %7343 = vmatprep.subr.mxu0 0.0
    %7344 = vmatpush1.xpose.msra.mxu0 0.0
    %7345 = vmatprep.subr.mxu0 0.0
    %7346 = vmatpush1.xpose.msra.mxu0 0.0
    %7347 = vmatprep.subr.mxu0 0.0
    %7348 = vmatpush1.xpose.msra.mxu0 0.0
    %7349 = vmatprep.subr.mxu0 0.0
    %7350 = vmatpush1.xpose.msra.mxu0 0.0
    %7351 = vmatprep.subr.mxu0 0.0
    %7352 = vmatpush1.xpose.msra.mxu0 0.0
    %7353 = vmatprep.subr.mxu0 0.0
    %7354 = vmatpush1.xpose.msra.mxu0 0.0
    %7355 = vmatprep.subr.mxu0 0.0
    %7356 = vmatpush1.xpose.msra.mxu0 0.0
    %7357 = vmatprep.subr.mxu0 0.0
    %7358 = vmatpush1.xpose.msra.mxu0 0.0
    %7359 = vmatprep.subr.mxu0 0.0
    %7360 = vmatpush1.xpose.msra.mxu0 0.0
    %7361 = vmatprep.subr.mxu0 0.0
    %7362 = vmatpush1.xpose.msra.mxu0 0.0
    %7363 = vmatprep.subr.mxu0 0.0
    %7364 = vmatpush1.xpose.msra.mxu0 0.0
    %7365 = vmatprep.subr.mxu0 0.0
    %7366 = vmatpush1.xpose.msra.mxu0 0.0
    %7367 = vmatprep.subr.mxu0 0.0
    %7368 = vmatpush1.xpose.msra.mxu0 0.0
    %7369 = vmatprep.subr.mxu0 0.0
    %7370 = vmatpush1.xpose.msra.mxu0 0.0
    %7371 = vmatprep.subr.mxu0 0.0
    %7372 = vmatpush1.xpose.msra.mxu0 0.0
    %7373 = vmatprep.subr.mxu0 0.0
    %7374 = vmatpush1.xpose.msra.mxu0 0.0
    %7375 = vmatprep.subr.mxu0 0.0
    %7376 = vmatpush1.xpose.msra.mxu0 0.0
    %7377 = vmatprep.mubr.f32.mxu0 0.0
    %7378 = vmatmul.mubr.f32.gmra.mrb[0].mxu0 %v7309
    %v7379 = vpop.f32.mrb[0].mxu0
    %v7380 = vadd.f32 0.0, %v7379
    %v7381 = vpop.f32.mrb[0].mxu0
    %7382 = vdwg.mxu0
    %v7383 = vmul.f32 %v7380, 0.35355338
    %v7384 = vsel %vm3011, -1e+09, %v7383
    %v7385 = vsel %vm537, %v7384, -inf
    %7386 = vmax.xlane.f32.xlu0 %v7385
    %v7387 = vpop.xlane.xlu0 %7386
    %v7388 = vsub.f32 %v7384, %v7387
    %v7389 = vmul.f32 %v7388, 1.442695
    %v7390 = vpow.pop %v7389
    %v7391 = vsel %vm537, %v7390, 0.0
    %7392 = vadd.xlane.f32.xlu0 %v7391
    %v7393 = vpop.xlane.xlu0 %7392
    %v7394 = vrcp.pop %v7393
    %v7395 = vmul.f32 %v7390, %v7394
    %7396 = vrot.lane.b32.xlu0 %v6114, 104
    %v7397 = vpop.permute.xlu0 %7396
    %v7400 = vsel %vm537, %v7395, 0
    %7402 = vmatprep.subr.mxu0 0.0
    %7403 = vmatpush1.msra.mxu0 %v7397
    %7404 = vmatprep.subr.mxu0 0.0
    %7405 = vmatpush1.msra.mxu0 0.0
    %7406 = vmatprep.subr.mxu0 0.0
    %7407 = vmatpush1.msra.mxu0 0.0
    %7408 = vmatprep.subr.mxu0 0.0
    %7409 = vmatpush1.msra.mxu0 0.0
    %7410 = vmatprep.subr.mxu0 0.0
    %7411 = vmatpush1.msra.mxu0 0.0
    %7412 = vmatprep.subr.mxu0 0.0
    %7413 = vmatpush1.msra.mxu0 0.0
    %7414 = vmatprep.subr.mxu0 0.0
    %7415 = vmatpush1.msra.mxu0 0.0
    %7416 = vmatprep.subr.mxu0 0.0
    %7417 = vmatpush1.msra.mxu0 0.0
    %7418 = vmatprep.subr.mxu0 0.0
    %7419 = vmatpush1.msra.mxu0 0.0
    %7420 = vmatprep.subr.mxu0 0.0
    %7421 = vmatpush1.msra.mxu0 0.0
    %7422 = vmatprep.subr.mxu0 0.0
    %7423 = vmatpush1.msra.mxu0 0.0
    %7424 = vmatprep.subr.mxu0 0.0
    %7425 = vmatpush1.msra.mxu0 0.0
    %7426 = vmatprep.subr.mxu0 0.0
    %7427 = vmatpush1.msra.mxu0 0.0
    %7428 = vmatprep.subr.mxu0 0.0
    %7429 = vmatpush1.msra.mxu0 0.0
    %7430 = vmatprep.subr.mxu0 0.0
    %7431 = vmatpush1.msra.mxu0 0.0
    %7432 = vmatprep.subr.mxu0 0.0
    %7433 = vmatpush1.msra.mxu0 0.0
    %7434 = vmatprep.subr.mxu0 0.0
    %7435 = vmatpush1.msra.mxu0 0.0
    %7436 = vmatprep.subr.mxu0 0.0
    %7437 = vmatpush1.msra.mxu0 0.0
    %7438 = vmatprep.subr.mxu0 0.0
    %7439 = vmatpush1.msra.mxu0 0.0
    %7440 = vmatprep.subr.mxu0 0.0
    %7441 = vmatpush1.msra.mxu0 0.0
    %7442 = vmatprep.subr.mxu0 0.0
    %7443 = vmatpush1.msra.mxu0 0.0
    %7444 = vmatprep.subr.mxu0 0.0
    %7445 = vmatpush1.msra.mxu0 0.0
    %7446 = vmatprep.subr.mxu0 0.0
    %7447 = vmatpush1.msra.mxu0 0.0
    %7448 = vmatprep.subr.mxu0 0.0
    %7449 = vmatpush1.msra.mxu0 0.0
    %7450 = vmatprep.subr.mxu0 0.0
    %7451 = vmatpush1.msra.mxu0 0.0
    %7452 = vmatprep.subr.mxu0 0.0
    %7453 = vmatpush1.msra.mxu0 0.0
    %7454 = vmatprep.subr.mxu0 0.0
    %7455 = vmatpush1.msra.mxu0 0.0
    %7456 = vmatprep.subr.mxu0 0.0
    %7457 = vmatpush1.msra.mxu0 0.0
    %7458 = vmatprep.subr.mxu0 0.0
    %7459 = vmatpush1.msra.mxu0 0.0
    %7460 = vmatprep.subr.mxu0 0.0
    %7461 = vmatpush1.msra.mxu0 0.0
    %7462 = vmatprep.subr.mxu0 0.0
    %7463 = vmatpush1.msra.mxu0 0.0
    %7464 = vmatprep.subr.mxu0 0.0
    %7465 = vmatpush1.msra.mxu0 0.0
    %7466 = vmatprep.mubr.f32.mxu0 0.0
    %7467 = vmatmul.mubr.f32.gmra.mrb[0].mxu0 %v7400
    %v7468 = vpop.f32.mrb[0].mxu0
    %v7469 = vadd.f32 0.0, %v7468
    %v7470 = vpop.f32.mrb[0].mxu0
    %7471 = vdwg.mxu0
    %7473 = vrot.lane.b32.xlu0 %v7469, 24
    %v7474 = vpop.permute.xlu0 %7473
    %7476 = vst.msk [vmem:[#allocation2 + $0x8] sm:$0xff] %vm1219, %v7474
    %v7477 = vld [vmem:[#allocation2] sm:$0xff]
    %v7478 = vld [vmem:[#allocation2 + $0x8] sm:$0xff]
    %v7480 = vlaneseq
    %v7481 = vshrl.u32 %v7480, 7
    %v7482 = vsub.s32 0, %v7481
    %v7483 = vrot.slane %v5863, %v7482
    %v7486 = vsel %vm280, %v7477, 0
    %v7489 = vsel %vm280, %v7478, 0
    %7491 = vmatprep.subr.mxu0 0.0
    %7492 = vmatpush1.msra.mxu0 %v5858
    %7493 = vmatprep.subr.mxu0 0.0
    %7494 = vmatpush1.msra.mxu0 %v5859
    %7495 = vmatprep.subr.mxu0 0.0
    %7496 = vmatpush1.msra.mxu0 %v5860
    %7497 = vmatprep.subr.mxu0 0.0
    %7498 = vmatpush1.msra.mxu0 %v5861
    %7499 = vmatprep.subr.mxu0 0.0
    %7500 = vmatpush1.msra.mxu0 0.0
    %7501 = vmatprep.subr.mxu0 0.0
    %7502 = vmatpush1.msra.mxu0 0.0
    %7503 = vmatprep.subr.mxu0 0.0
    %7504 = vmatpush1.msra.mxu0 0.0
    %7505 = vmatprep.subr.mxu0 0.0
    %7506 = vmatpush1.msra.mxu0 0.0
    %7507 = vmatprep.subr.mxu0 0.0
    %7508 = vmatpush1.msra.mxu0 0.0
    %7509 = vmatprep.subr.mxu0 0.0
    %7510 = vmatpush1.msra.mxu0 0.0
    %7511 = vmatprep.subr.mxu0 0.0
    %7512 = vmatpush1.msra.mxu0 0.0
    %7513 = vmatprep.subr.mxu0 0.0
    %7514 = vmatpush1.msra.mxu0 0.0
    %7515 = vmatprep.subr.mxu0 0.0
    %7516 = vmatpush1.msra.mxu0 0.0
    %7517 = vmatprep.subr.mxu0 0.0
    %7518 = vmatpush1.msra.mxu0 0.0
    %7519 = vmatprep.subr.mxu0 0.0
    %7520 = vmatpush1.msra.mxu0 0.0
    %7521 = vmatprep.subr.mxu0 0.0
    %7522 = vmatpush1.msra.mxu0 0.0
    %7523 = vmatprep.subr.mxu0 0.0
    %7524 = vmatpush1.msra.mxu0 0.0
    %7525 = vmatprep.subr.mxu0 0.0
    %7526 = vmatpush1.msra.mxu0 0.0
    %7527 = vmatprep.subr.mxu0 0.0
    %7528 = vmatpush1.msra.mxu0 0.0
    %7529 = vmatprep.subr.mxu0 0.0
    %7530 = vmatpush1.msra.mxu0 0.0
    %7531 = vmatprep.subr.mxu0 0.0
    %7532 = vmatpush1.msra.mxu0 0.0
    %7533 = vmatprep.subr.mxu0 0.0
    %7534 = vmatpush1.msra.mxu0 0.0
    %7535 = vmatprep.subr.mxu0 0.0
    %7536 = vmatpush1.msra.mxu0 0.0
    %7537 = vmatprep.subr.mxu0 0.0
    %7538 = vmatpush1.msra.mxu0 0.0
    %7539 = vmatprep.subr.mxu0 0.0
    %7540 = vmatpush1.msra.mxu0 0.0
    %7541 = vmatprep.subr.mxu0 0.0
    %7542 = vmatpush1.msra.mxu0 0.0
    %7543 = vmatprep.subr.mxu0 0.0
    %7544 = vmatpush1.msra.mxu0 0.0
    %7545 = vmatprep.subr.mxu0 0.0
    %7546 = vmatpush1.msra.mxu0 0.0
    %7547 = vmatprep.subr.mxu0 0.0
    %7548 = vmatpush1.msra.mxu0 0.0
    %7549 = vmatprep.subr.mxu0 0.0
    %7550 = vmatpush1.msra.mxu0 0.0
    %7551 = vmatprep.subr.mxu0 0.0
    %7552 = vmatpush1.msra.mxu0 0.0
    %7553 = vmatprep.subr.mxu0 0.0
    %7554 = vmatpush1.msra.mxu0 0.0
    %7555 = vmatprep.mubr.f32.mxu0 0.0
    %7556 = vmatmul.mubr.f32.gmra.mrb[0].mxu0 %v7486
    %v7557 = vpop.f32.mrb[0].mxu0
    %v7558 = vadd.f32 %v7483, %v7557
    %v7559 = vpop.f32.mrb[0].mxu0
    %7560 = vmatprep.mubr.f32.mxu0 0.0
    %7561 = vmatmul.mubr.f32.gmra.mrb[0].mxu0 %v7489
    %v7562 = vpop.f32.mrb[0].mxu0
    %v7563 = vadd.f32 %v7483, %v7562
    %v7564 = vpop.f32.mrb[0].mxu0
    %7565 = vdwg.mxu0
    %v7566 = vadd.f32 %v7558, %v5834
    %v7567 = vadd.f32 %v7563, %v5835
    %v7568 = vsel %vm280, %v7566, 0.0
    %7569 = vadd.xlane.f32.xlu0 %v7568
    %v7570 = vpop.xlane.xlu0 %7569
    %v7571 = vsel %vm280, %v7567, 0.0
    %7572 = vadd.xlane.f32.xlu0 %v7571
    %v7573 = vpop.xlane.xlu0 %7572
    %v7574 = vmul.f32 %v7570, %v2004
    %v7575 = vmul.f32 %v7573, %v2004
    %v7576 = vsub.f32 %v7566, %v7574
    %v7577 = vsub.f32 %v7567, %v7575
    %v7578 = vmul.f32 %v7576, %v7576
    %v7579 = vmul.f32 %v7577, %v7577
    %v7580 = vsel %vm280, %v7578, 0.0
    %7581 = vadd.xlane.f32.xlu0 %v7580
    %v7582 = vpop.xlane.xlu0 %7581
    %v7583 = vsel %vm280, %v7579, 0.0
    %7584 = vadd.xlane.f32.xlu0 %v7583
    %v7585 = vpop.xlane.xlu0 %7584
    %v7586 = vmul.f32 %v7582, %v2004
    %v7587 = vmul.f32 %v7585, %v2004
    %v7588 = vadd.f32 %v7586, 1e-05
    %v7589 = vadd.f32 %v7587, 1e-05
    %v7590 = vrsqrt.pop %v7588
    %v7591 = vrsqrt.pop %v7589
    %v7592 = vmul.f32 %v7576, %v7590
    %v7593 = vmul.f32 %v7577, %v7591
    %v7595 = vlaneseq
    %v7596 = vshrl.u32 %v7595, 7
    %v7597 = vsub.s32 0, %v7596
    %v7598 = vrot.slane %v5865, %v7597
    %v7600 = vmul.f32 %v7592, %v7598
    %v7601 = vmul.f32 %v7593, %v7598
    %v7603 = vlaneseq
    %v7604 = vshrl.u32 %v7603, 7
    %v7605 = vsub.s32 0, %v7604
    %v7606 = vrot.slane %v5867, %v7605
    %v7608 = vadd.f32 %v7600, %v7606
    %v7609 = vadd.f32 %v7601, %v7606
    %s7610 = scalar_lea.vmem [#allocation15], 32
    %v7611 = vld [vmem:[%s7610] sm:$0xff]
    %v7612 = vld [vmem:[%s7610 + $0x8] sm:$0xff]
    %v7613 = vld [vmem:[%s7610 + $0x10] sm:$0xff]
    %v7614 = vld [vmem:[%s7610 + $0x18] sm:$0xff]
    %s7615 = scalar_lea.vmem %s53, 1
    %v7616 = vld [vmem:[%s7615] sm:$0x1]
    %s7617 = scalar_lea.vmem %s55, 64
    %v7618 = vld [vmem:[%s7617] sm:$0xff]
    %v7619 = vld [vmem:[%s7617 + $0x8] sm:$0xff]
    %v7620 = vld [vmem:[%s7617 + $0x10] sm:$0xff]
    %v7621 = vld [vmem:[%s7617 + $0x18] sm:$0xff]
    %v7622 = vld [vmem:[%s7617 + $0x20] sm:$0xff]
    %v7623 = vld [vmem:[%s7617 + $0x28] sm:$0xff]
    %v7624 = vld [vmem:[%s7617 + $0x30] sm:$0xff]
    %v7625 = vld [vmem:[%s7617 + $0x38] sm:$0xff]
    %s7626 = scalar_lea.vmem %s57, 1
    %v7627 = vld [vmem:[%s7626] sm:$0x1]
    %s7628 = scalar_lea.vmem %s59, 1
    %v7629 = vld [vmem:[%s7628] sm:$0x1]
    %s7630 = scalar_lea.vmem %s61, 1
    %v7631 = vld [vmem:[%s7630] sm:$0x1]
    %v7633 = vlaneseq
    %v7634 = vshrl.u32 %v7633, 7
    %v7635 = vsub.s32 0, %v7634
    %v7636 = vrot.slane %v7616, %v7635
    %v7639 = vsel %vm280, %v7608, 0
    %v7642 = vsel %vm280, %v7609, 0
    %7644 = vmatprep.subr.mxu0 0.0
    %7645 = vmatpush1.msra.mxu0 %v7611
    %7646 = vmatprep.subr.mxu0 0.0
    %7647 = vmatpush1.msra.mxu0 %v7612
    %7648 = vmatprep.subr.mxu0 0.0
    %7649 = vmatpush1.msra.mxu0 %v7613
    %7650 = vmatprep.subr.mxu0 0.0
    %7651 = vmatpush1.msra.mxu0 %v7614
    %7652 = vmatprep.subr.mxu0 0.0
    %7653 = vmatpush1.msra.mxu0 0.0
    %7654 = vmatprep.subr.mxu0 0.0
    %7655 = vmatpush1.msra.mxu0 0.0
    %7656 = vmatprep.subr.mxu0 0.0
    %7657 = vmatpush1.msra.mxu0 0.0
    %7658 = vmatprep.subr.mxu0 0.0
    %7659 = vmatpush1.msra.mxu0 0.0
    %7660 = vmatprep.subr.mxu0 0.0
    %7661 = vmatpush1.msra.mxu0 0.0
    %7662 = vmatprep.subr.mxu0 0.0
    %7663 = vmatpush1.msra.mxu0 0.0
    %7664 = vmatprep.subr.mxu0 0.0
    %7665 = vmatpush1.msra.mxu0 0.0
    %7666 = vmatprep.subr.mxu0 0.0
    %7667 = vmatpush1.msra.mxu0 0.0
    %7668 = vmatprep.subr.mxu0 0.0
    %7669 = vmatpush1.msra.mxu0 0.0
    %7670 = vmatprep.subr.mxu0 0.0
    %7671 = vmatpush1.msra.mxu0 0.0
    %7672 = vmatprep.subr.mxu0 0.0
    %7673 = vmatpush1.msra.mxu0 0.0
    %7674 = vmatprep.subr.mxu0 0.0
    %7675 = vmatpush1.msra.mxu0 0.0
    %7676 = vmatprep.subr.mxu0 0.0
    %7677 = vmatpush1.msra.mxu0 0.0
    %7678 = vmatprep.subr.mxu0 0.0
    %7679 = vmatpush1.msra.mxu0 0.0
    %7680 = vmatprep.subr.mxu0 0.0
    %7681 = vmatpush1.msra.mxu0 0.0
    %7682 = vmatprep.subr.mxu0 0.0
    %7683 = vmatpush1.msra.mxu0 0.0
    %7684 = vmatprep.subr.mxu0 0.0
    %7685 = vmatpush1.msra.mxu0 0.0
    %7686 = vmatprep.subr.mxu0 0.0
    %7687 = vmatpush1.msra.mxu0 0.0
    %7688 = vmatprep.subr.mxu0 0.0
    %7689 = vmatpush1.msra.mxu0 0.0
    %7690 = vmatprep.subr.mxu0 0.0
    %7691 = vmatpush1.msra.mxu0 0.0
    %7692 = vmatprep.subr.mxu0 0.0
    %7693 = vmatpush1.msra.mxu0 0.0
    %7694 = vmatprep.subr.mxu0 0.0
    %7695 = vmatpush1.msra.mxu0 0.0
    %7696 = vmatprep.subr.mxu0 0.0
    %7697 = vmatpush1.msra.mxu0 0.0
    %7698 = vmatprep.subr.mxu0 0.0
    %7699 = vmatpush1.msra.mxu0 0.0
    %7700 = vmatprep.subr.mxu0 0.0
    %7701 = vmatpush1.msra.mxu0 0.0
    %7702 = vmatprep.subr.mxu0 0.0
    %7703 = vmatpush1.msra.mxu0 0.0
    %7704 = vmatprep.subr.mxu0 0.0
    %7705 = vmatpush1.msra.mxu0 0.0
    %7706 = vmatprep.subr.mxu0 0.0
    %7707 = vmatpush1.msra.mxu0 0.0
    %7708 = vmatprep.mubr.f32.mxu0 0.0
    %7709 = vmatmul.mubr.f32.gmra.mrb[0].mxu0 %v7639
    %v7710 = vpop.f32.mrb[0].mxu0
    %v7711 = vadd.f32 %v7636, %v7710
    %v7712 = vpop.f32.mrb[0].mxu0
    %7713 = vmatprep.mubr.f32.mxu0 0.0
    %7714 = vmatmul.mubr.f32.gmra.mrb[0].mxu0 %v7642
    %v7715 = vpop.f32.mrb[0].mxu0
    %v7716 = vadd.f32 %v7636, %v7715
    %v7717 = vpop.f32.mrb[0].mxu0
    %7718 = vdwg.mxu0
    %v7719 = vmax.f32 %v7711, 0.0
    %v7720 = vmax.f32 %v7716, 0.0
    %v7722 = vlaneseq
    %v7723 = vshrl.u32 %v7722, 7
    %v7724 = vsub.s32 0, %v7723
    %v7725 = vrot.slane %v7627, %v7724
    %v7728 = vsel %vm3936, %v7719, 0
    %v7731 = vsel %vm3936, %v7720, 0
    %7733 = vmatprep.subr.mxu0 0.0
    %7734 = vmatpush1.msra.mxu0 %v7618
    %7735 = vmatprep.subr.mxu0 0.0
    %7736 = vmatpush1.msra.mxu0 %v7619
    %7737 = vmatprep.subr.mxu0 0.0
    %7738 = vmatpush1.msra.mxu0 %v7620
    %7739 = vmatprep.subr.mxu0 0.0
    %7740 = vmatpush1.msra.mxu0 %v7621
    %7741 = vmatprep.subr.mxu0 0.0
    %7742 = vmatpush1.msra.mxu0 %v7622
    %7743 = vmatprep.subr.mxu0 0.0
    %7744 = vmatpush1.msra.mxu0 %v7623
    %7745 = vmatprep.subr.mxu0 0.0
    %7746 = vmatpush1.msra.mxu0 %v7624
    %7747 = vmatprep.subr.mxu0 0.0
    %7748 = vmatpush1.msra.mxu0 %v7625
    %7749 = vmatprep.subr.mxu0 0.0
    %7750 = vmatpush1.msra.mxu0 0.0
    %7751 = vmatprep.subr.mxu0 0.0
    %7752 = vmatpush1.msra.mxu0 0.0
    %7753 = vmatprep.subr.mxu0 0.0
    %7754 = vmatpush1.msra.mxu0 0.0
    %7755 = vmatprep.subr.mxu0 0.0
    %7756 = vmatpush1.msra.mxu0 0.0
    %7757 = vmatprep.subr.mxu0 0.0
    %7758 = vmatpush1.msra.mxu0 0.0
    %7759 = vmatprep.subr.mxu0 0.0
    %7760 = vmatpush1.msra.mxu0 0.0
    %7761 = vmatprep.subr.mxu0 0.0
    %7762 = vmatpush1.msra.mxu0 0.0
    %7763 = vmatprep.subr.mxu0 0.0
    %7764 = vmatpush1.msra.mxu0 0.0
    %7765 = vmatprep.subr.mxu0 0.0
    %7766 = vmatpush1.msra.mxu0 0.0
    %7767 = vmatprep.subr.mxu0 0.0
    %7768 = vmatpush1.msra.mxu0 0.0
    %7769 = vmatprep.subr.mxu0 0.0
    %7770 = vmatpush1.msra.mxu0 0.0
    %7771 = vmatprep.subr.mxu0 0.0
    %7772 = vmatpush1.msra.mxu0 0.0
    %7773 = vmatprep.subr.mxu0 0.0
    %7774 = vmatpush1.msra.mxu0 0.0
    %7775 = vmatprep.subr.mxu0 0.0
    %7776 = vmatpush1.msra.mxu0 0.0
    %7777 = vmatprep.subr.mxu0 0.0
    %7778 = vmatpush1.msra.mxu0 0.0
    %7779 = vmatprep.subr.mxu0 0.0
    %7780 = vmatpush1.msra.mxu0 0.0
    %7781 = vmatprep.subr.mxu0 0.0
    %7782 = vmatpush1.msra.mxu0 0.0
    %7783 = vmatprep.subr.mxu0 0.0
    %7784 = vmatpush1.msra.mxu0 0.0
    %7785 = vmatprep.subr.mxu0 0.0
    %7786 = vmatpush1.msra.mxu0 0.0
    %7787 = vmatprep.subr.mxu0 0.0
    %7788 = vmatpush1.msra.mxu0 0.0
    %7789 = vmatprep.subr.mxu0 0.0
    %7790 = vmatpush1.msra.mxu0 0.0
    %7791 = vmatprep.subr.mxu0 0.0
    %7792 = vmatpush1.msra.mxu0 0.0
    %7793 = vmatprep.subr.mxu0 0.0
    %7794 = vmatpush1.msra.mxu0 0.0
    %7795 = vmatprep.subr.mxu0 0.0
    %7796 = vmatpush1.msra.mxu0 0.0
    %7797 = vmatprep.mubr.f32.mxu0 0.0
    %7798 = vmatmul.mubr.f32.gmra.mrb[0].mxu0 %v7728
    %v7799 = vpop.f32.mrb[0].mxu0
    %v7800 = vadd.f32 %v7725, %v7799
    %v7801 = vpop.f32.mrb[0].mxu0
    %7802 = vmatprep.mubr.f32.mxu0 0.0
    %7803 = vmatmul.mubr.f32.gmra.mrb[0].mxu0 %v7731
    %v7804 = vpop.f32.mrb[0].mxu0
    %v7805 = vadd.f32 %v7725, %v7804
    %v7806 = vpop.f32.mrb[0].mxu0
    %7807 = vdwg.mxu0
    %v7808 = vadd.f32 %v7800, %v7608
    %v7809 = vadd.f32 %v7805, %v7609
    %v7810 = vsel %vm280, %v7808, 0.0
    %7811 = vadd.xlane.f32.xlu0 %v7810
    %v7812 = vpop.xlane.xlu0 %7811
    %v7813 = vsel %vm280, %v7809, 0.0
    %7814 = vadd.xlane.f32.xlu0 %v7813
    %v7815 = vpop.xlane.xlu0 %7814
    %v7816 = vmul.f32 %v7812, %v2004
    %v7817 = vmul.f32 %v7815, %v2004
    %v7818 = vsub.f32 %v7808, %v7816
    %v7819 = vsub.f32 %v7809, %v7817
    %v7820 = vmul.f32 %v7818, %v7818
    %v7821 = vmul.f32 %v7819, %v7819
    %v7822 = vsel %vm280, %v7820, 0.0
    %7823 = vadd.xlane.f32.xlu0 %v7822
    %v7824 = vpop.xlane.xlu0 %7823
    %v7825 = vsel %vm280, %v7821, 0.0
    %7826 = vadd.xlane.f32.xlu0 %v7825
    %v7827 = vpop.xlane.xlu0 %7826
    %v7828 = vmul.f32 %v7824, %v2004
    %v7829 = vmul.f32 %v7827, %v2004
    %v7830 = vadd.f32 %v7828, 1e-05
    %v7831 = vadd.f32 %v7829, 1e-05
    %v7832 = vrsqrt.pop %v7830
    %v7833 = vrsqrt.pop %v7831
    %v7834 = vmul.f32 %v7818, %v7832
    %v7835 = vmul.f32 %v7819, %v7833
    %v7837 = vlaneseq
    %v7838 = vshrl.u32 %v7837, 7
    %v7839 = vsub.s32 0, %v7838
    %v7840 = vrot.slane %v7629, %v7839
    %v7842 = vmul.f32 %v7834, %v7840
    %v7843 = vmul.f32 %v7835, %v7840
    %v7845 = vlaneseq
    %v7846 = vshrl.u32 %v7845, 7
    %v7847 = vsub.s32 0, %v7846
    %v7848 = vrot.slane %v7631, %v7847
    %v7850 = vadd.f32 %v7842, %v7848
    %v7851 = vadd.f32 %v7843, %v7848
    %7852 = vst.msk [vmem:[#allocation17] sm:$0xff] %vm280, %v7850
    %7853 = vst.msk [vmem:[#allocation17 + $0x8] sm:$0xff] %vm280, %v7851
    // Predicated region
    $region158: #{decoder_forward.1} parent=1 // pred_check
      _
    $region159: #{decoder_forward.1} parent=1 // pred_check_branch
      %7855 = sbr.rel (0) target = $region161
    $region160: #{decoder_forward.1} parent=1 // pred_region
      %s7857 = ssub.s32 256, 256
      %7858 = vsyncadd [#allocation5], %s7857
      %s7859 = sshll.u32 [#allocation17], 4
      %s7860 = int_to_ptr.vmem [resolvable:$true] %s7859
      %7865 = dma.vmem_to_hbm [thread:$0]  %s7860, 256, %s63, [#allocation5], 128, 128, 8
    $region161: #{decoder_forward.1} parent=1 // pred_fallthru
      _
    // Predicated region
    $region162: #{decoder_forward.1} parent=1 // pred_check
      _
    $region163: #{decoder_forward.1} parent=1 // pred_check_branch
      %7867 = sbr.rel (0) target = $region165
    $region164: #{decoder_forward.1} parent=1 // pred_region
      %7868 = dma.done [#allocation5], 256
    $region165: #{decoder_forward.1} parent=1 // pred_fallthru
      _
    %7869 = vsyncpa [#allocation4], 1
    %7870 = vsyncpa [#allocation7], 1
    %7871 = vsyncpa [#allocation10], 1
    %7872 = vsyncpa [#allocation13], 1
    %7873 = vsyncpa [#allocation16], 1
    %7874 = vsyncpa [#allocation5], 1

</llo_original>
